<compile_context>
chip_gen: v7x
topology: tpu7x:2x2x1
jax: 0.10.0
libtpu: 0.0.40
codegen_flags: <defaults>
</compile_context>

<pallas_src>
import functools

import jax
import jax.numpy as jnp
from jax.experimental import pallas as pl
from jax.experimental.pallas import tpu as pltpu

LANE = 128  # channel padding target (TPU lane width)


# ---------------------------------------------------------------------------
# Fused kernel: [conv3x3+ReLU+pool] x 2, intermediate kept in VMEM
# ---------------------------------------------------------------------------

def _vgg_features_kernel(x_ref, w1_ref, b1_ref, w2_ref, b2_ref, o_ref,
                         patch1_ref, patch2_ref, mid_ref, *, H, W, Cp):
    """One image per grid step; both conv blocks fused.

    x_ref:      (1, H+2, W+2, Cp)        bf16 spatially padded NHWC input
    w*_ref:     (9*Cp, Cp)               bf16 weights, rows ordered (kh,kw,ci)
    b*_ref:     (1, Cp)                  f32 bias
    o_ref:      (1, H//4, W//4, Cp)      f32 block-2 pooled output (lane dense)
    patch1_ref: (H*W, 9*Cp)              bf16 im2col scratch, block 1
    patch2_ref: ((H//2)*(W//2), 9*Cp)    bf16 im2col scratch, block 2
    mid_ref:    (H//2+2, W//2+2, Cp)     f32 block-1 output + zero conv halo
    """
    Ho1, Wo1 = H // 2, W // 2

    def conv_relu_pool(patch_ref, w_ref, b_ref, h, w):
        # Single K=9*Cp matmul (one MXU stream / one result pop), f32 acc.
        acc = jnp.dot(patch_ref[...], w_ref[...],
                      preferred_element_type=jnp.float32)
        y = jnp.maximum(acc + b_ref[...], 0.0)               # (h*w, Cp) f32
        # Fused 2x2 stride-2 max-pool; lane dim Cp untouched by the reshapes.
        ho, wo = h // 2, w // 2
        yw = y.reshape(h * wo, 2, Cp)
        pw = jnp.maximum(yw[:, 0, :], yw[:, 1, :])           # pool over W
        yh = pw.reshape(ho, 2, wo, Cp)
        return jnp.maximum(yh[:, 0, :, :], yh[:, 1, :, :])   # (ho, wo, Cp)

    # ---- Block 1: conv(3->8) + ReLU + pool, result stays in VMEM ----------
    # In-VMEM im2col: 9 shifted windows of the bf16 slab, each stored to a
    # lane-aligned 128-wide column block of the patch scratch (no casts: the
    # slab is already bf16 in HBM).
    for kh in range(3):
        for kw in range(3):
            win = x_ref[0, kh:kh + H, kw:kw + W, :].reshape(H * W, Cp)
            c0 = (kh * 3 + kw) * Cp
            patch1_ref[:, c0:c0 + Cp] = win
    p1 = conv_relu_pool(patch1_ref, w1_ref, b1_ref, H, W)    # (Ho1, Wo1, Cp)

    # Halo-padded VMEM intermediate: zero border == conv padding=1 for block
    # 2.  No HBM round-trip, no XLA pad op between the blocks.
    mid_ref[...] = jnp.zeros_like(mid_ref)
    mid_ref[1:1 + Ho1, 1:1 + Wo1, :] = p1

    # ---- Block 2: conv(8->16) + ReLU + pool -> output ----------------------
    for kh in range(3):
        for kw in range(3):
            win = mid_ref[kh:kh + Ho1, kw:kw + Wo1, :].reshape(Ho1 * Wo1, Cp)
            c0 = (kh * 3 + kw) * Cp
            # Tiny (Ho1*Wo1, Cp) bf16 cast; the expensive per-window casts of
            # block 1 are gone (input slab is bf16 in HBM).
            patch2_ref[:, c0:c0 + Cp] = win.astype(patch2_ref.dtype)
    p2 = conv_relu_pool(patch2_ref, w2_ref, b2_ref, Ho1, Wo1)  # (Ho2,Wo2,Cp)
    o_ref[0] = p2.astype(o_ref.dtype)


def vgg_features_fused(x_pad_bf16, w1m, b1m, w2m, b2m):
    """(N, H+2, W+2, LANE) bf16 -> (N, H//4, W//4, LANE) f32, NHWC."""
    N, Hp2, Wp2, Cp = x_pad_bf16.shape
    H, W = Hp2 - 2, Wp2 - 2
    assert H % 4 == 0 and W % 4 == 0, (H, W)
    Ho1, Wo1 = H // 2, W // 2
    Ho2, Wo2 = Ho1 // 2, Wo1 // 2

    kernel = functools.partial(_vgg_features_kernel, H=H, W=W, Cp=Cp)
    return pl.pallas_call(
        kernel,
        out_shape=jax.ShapeDtypeStruct((N, Ho2, Wo2, Cp), jnp.float32),
        grid_spec=pltpu.PrefetchScalarGridSpec(
            num_scalar_prefetch=0,
            grid=(N,),
            in_specs=[
                pl.BlockSpec((1, Hp2, Wp2, Cp), lambda n: (n, 0, 0, 0)),
                # TODO(synk): at real VGG sizes, single-buffer these constant
                # weight/bias blocks with pipeline_mode=pl.Buffered(1).
                pl.BlockSpec((9 * Cp, Cp), lambda n: (0, 0)),
                pl.BlockSpec((1, Cp), lambda n: (0, 0)),
                pl.BlockSpec((9 * Cp, Cp), lambda n: (0, 0)),
                pl.BlockSpec((1, Cp), lambda n: (0, 0)),
            ],
            out_specs=pl.BlockSpec((1, Ho2, Wo2, Cp), lambda n: (n, 0, 0, 0)),
            scratch_shapes=[
                pltpu.VMEM((H * W, 9 * Cp), jnp.bfloat16),        # patch 1
                pltpu.VMEM((Ho1 * Wo1, 9 * Cp), jnp.bfloat16),    # patch 2
                pltpu.VMEM((Ho1 + 2, Wo1 + 2, Cp), jnp.float32),  # mid + halo
            ],
        ),
        compiler_params=pltpu.CompilerParams(
            dimension_semantics=("parallel",)),  # batch across TCs (v7x)
    )(x_pad_bf16, w1m, b1m, w2m, b2m)


# ---------------------------------------------------------------------------
# Parameter packing / init (matches VGG._initialize_weights semantics)
# ---------------------------------------------------------------------------

def pack_weight(w_oihw, cin_pad, cout_pad):
    """PyTorch (Cout, Cin, 3, 3) -> (9*cin_pad, cout_pad) bf16 matrix with
    rows ordered (kh, kw, ci); padded channels are zero."""
    cout, cin, _, _ = w_oihw.shape
    w = jnp.transpose(w_oihw, (2, 3, 1, 0))                       # (3,3,Cin,Cout)
    w = jnp.pad(w, ((0, 0), (0, 0), (0, cin_pad - cin), (0, cout_pad - cout)))
    return w.reshape(9 * cin_pad, cout_pad).astype(jnp.bfloat16)


def pack_bias(b, cout_pad):
    return jnp.pad(b, (0, cout_pad - b.shape[0])).reshape(1, cout_pad)


def init_conv_params(key, cin, cout):
    # kaiming_normal_, mode='fan_out', nonlinearity='relu':
    #   std = sqrt(2 / fan_out), fan_out = cout * kh * kw ;  bias = 0
    std = (2.0 / (cout * 3 * 3)) ** 0.5
    w = jax.random.normal(key, (cout, cin, 3, 3), dtype=jnp.float32) * std
    b = jnp.zeros((cout,), dtype=jnp.float32)
    return w, b


# ---------------------------------------------------------------------------
# VGG forward:  features = [Conv(3->8), ReLU, MaxPool, Conv(8->16), ReLU, MaxPool]
# ---------------------------------------------------------------------------

@jax.jit
def vgg_forward(x_nchw, w1, b1, w2, b2):
    cin = x_nchw.shape[1]
    cout2 = w2.shape[0]

    # Boundary transforms only: NCHW -> NHWC, one pad (spatial +1 halo AND
    # channel pad to LANE), and the single bf16 cast of the activations.
    x = jnp.transpose(x_nchw, (0, 2, 3, 1))
    x = jnp.pad(x, ((0, 0), (1, 1), (1, 1), (0, LANE - cin)))
    x = x.astype(jnp.bfloat16)

    out = vgg_features_fused(
        x,
        pack_weight(w1, LANE, LANE), pack_bias(b1, LANE),
        pack_weight(w2, LANE, LANE), pack_bias(b2, LANE))

    # Strip channel padding and convert back to NCHW at the boundary.
    return jnp.transpose(out[..., :cout2], (0, 3, 1, 2))


# ---------------------------------------------------------------------------
# Pure-JAX reference (for correctness check)
# ---------------------------------------------------------------------------

def vgg_reference(x, w1, b1, w2, b2):
    def block(x, w, b):
        y = jax.lax.conv_general_dilated(
            x, w, window_strides=(1, 1), padding=((1, 1), (1, 1)),
            dimension_numbers=("NCHW", "OIHW", "NCHW"))
        y = jnp.maximum(y + b[None, :, None, None], 0.0)
        return jax.lax.reduce_window(
            y, -jnp.inf, jax.lax.max,
            window_dimensions=(1, 1, 2, 2), window_strides=(1, 1, 2, 2),
            padding="VALID")
    return block(block(x, w1, b1), w2, b2)


if __name__ == "__main__":
    key = jax.random.PRNGKey(0)
    k_x, k_w1, k_w2 = jax.random.split(key, 3)

    # Small shapes: batch=2, RGB input, 16x16 spatial.
    x = jax.random.normal(k_x, (2, 3, 16, 16), dtype=jnp.float32)
    w1, b1 = init_conv_params(k_w1, 3, 8)
    w2, b2 = init_conv_params(k_w2, 8, 16)

    out = jax.block_until_ready(vgg_forward(x, w1, b1, w2, b2))

    assert out.shape == (2, 16, 4, 4), out.shape
    assert bool(jnp.all(jnp.isfinite(out)))
    assert bool(jnp.all(out >= 0.0))  # ReLU output

    ref = vgg_reference(x, w1, b1, w2, b2)
    max_err = float(jnp.max(jnp.abs(out - ref)))
    # Tolerance driven by the bf16 MXU inputs (accumulation is f32).
    assert bool(jnp.allclose(out, ref, atol=0.1, rtol=0.1)), max_err

    print("KERNEL_OK")
</pallas_src>

<mosaic_0001>
module attributes {stable_mosaic.version = 11 : i64} {
  func.func @_vgg_features_kernel(%arg0: i32, %arg1: memref<1x18x18x128xbf16, #tpu.memory_space<vmem>>, %arg2: memref<1152x128xbf16, #tpu.memory_space<vmem>>, %arg3: memref<1x128xf32, #tpu.memory_space<vmem>>, %arg4: memref<1152x128xbf16, #tpu.memory_space<vmem>>, %arg5: memref<1x128xf32, #tpu.memory_space<vmem>>, %arg6: memref<1x4x4x128xf32, #tpu.memory_space<vmem>>, %arg7: memref<256x1152xbf16, #tpu.memory_space<vmem>>, %arg8: memref<64x1152xbf16, #tpu.memory_space<vmem>>, %arg9: memref<10x10x128xf32, #tpu.memory_space<vmem>>) attributes {dimension_semantics = [#tpu.dimension_semantics<parallel>], iteration_bounds = array<i64: 2>, scalar_prefetch = 0 : i64, scratch_operands = 3 : i64, tpu.core_type = #tpu.core_type<tc>, window_params = [{transform_indices = @transform_0, window_bounds = array<i64: 1, 18, 18, 128>}, {pipeline_mode = #tpu.pipeline_mode<synchronous>, transform_indices = @transform_1, window_bounds = array<i64: 1152, 128>}, {pipeline_mode = #tpu.pipeline_mode<synchronous>, transform_indices = @transform_2, window_bounds = array<i64: 1, 128>}, {pipeline_mode = #tpu.pipeline_mode<synchronous>, transform_indices = @transform_3, window_bounds = array<i64: 1152, 128>}, {pipeline_mode = #tpu.pipeline_mode<synchronous>, transform_indices = @transform_4, window_bounds = array<i64: 1, 128>}, {transform_indices = @transform_5, window_bounds = array<i64: 1, 4, 4, 128>}]} {
    %c0 = arith.constant 0 : index
    %c0_0 = arith.constant 0 : index
    %c0_1 = arith.constant 0 : index
    %c0_2 = arith.constant 0 : index
    %0 = vector.load %arg1[%c0, %c0_0, %c0_1, %c0_2] : memref<1x18x18x128xbf16, #tpu.memory_space<vmem>>, vector<1x16x16x128xbf16>
    %1 = vector.shape_cast %0 : vector<1x16x16x128xbf16> to vector<16x16x128xbf16>
    %2 = vector.shape_cast %1 : vector<16x16x128xbf16> to vector<256x128xbf16>
    %c0_3 = arith.constant 0 : index
    %c0_4 = arith.constant 0 : index
    %3 = vector.load %arg7[%c0_3, %c0_4] : memref<256x1152xbf16, #tpu.memory_space<vmem>>, vector<256x128xbf16>
    tpu.vector_store %arg7[%c0_3, %c0_4], %2 {strides = array<i32>} : memref<256x1152xbf16, #tpu.memory_space<vmem>>, vector<256x128xbf16>,
    %c0_5 = arith.constant 0 : index
    %c0_6 = arith.constant 0 : index
    %c1 = arith.constant 1 : index
    %c0_7 = arith.constant 0 : index
    %4 = vector.load %arg1[%c0_5, %c0_6, %c1, %c0_7] : memref<1x18x18x128xbf16, #tpu.memory_space<vmem>>, vector<1x16x16x128xbf16>
    %5 = vector.shape_cast %4 : vector<1x16x16x128xbf16> to vector<16x16x128xbf16>
    %6 = vector.shape_cast %5 : vector<16x16x128xbf16> to vector<256x128xbf16>
    %c0_8 = arith.constant 0 : index
    %c128 = arith.constant 128 : index
    %7 = vector.load %arg7[%c0_8, %c128] : memref<256x1152xbf16, #tpu.memory_space<vmem>>, vector<256x128xbf16>
    tpu.vector_store %arg7[%c0_8, %c128], %6 {strides = array<i32>} : memref<256x1152xbf16, #tpu.memory_space<vmem>>, vector<256x128xbf16>,
    %c0_9 = arith.constant 0 : index
    %c0_10 = arith.constant 0 : index
    %c2 = arith.constant 2 : index
    %c0_11 = arith.constant 0 : index
    %8 = vector.load %arg1[%c0_9, %c0_10, %c2, %c0_11] : memref<1x18x18x128xbf16, #tpu.memory_space<vmem>>, vector<1x16x16x128xbf16>
    %9 = vector.shape_cast %8 : vector<1x16x16x128xbf16> to vector<16x16x128xbf16>
    %10 = vector.shape_cast %9 : vector<16x16x128xbf16> to vector<256x128xbf16>
    %c0_12 = arith.constant 0 : index
    %c256 = arith.constant 256 : index
    %11 = vector.load %arg7[%c0_12, %c256] : memref<256x1152xbf16, #tpu.memory_space<vmem>>, vector<256x128xbf16>
    tpu.vector_store %arg7[%c0_12, %c256], %10 {strides = array<i32>} : memref<256x1152xbf16, #tpu.memory_space<vmem>>, vector<256x128xbf16>,
    %c0_13 = arith.constant 0 : index
    %c1_14 = arith.constant 1 : index
    %c0_15 = arith.constant 0 : index
    %c0_16 = arith.constant 0 : index
    %12 = vector.load %arg1[%c0_13, %c1_14, %c0_15, %c0_16] : memref<1x18x18x128xbf16, #tpu.memory_space<vmem>>, vector<1x16x16x128xbf16>
    %13 = vector.shape_cast %12 : vector<1x16x16x128xbf16> to vector<16x16x128xbf16>
    %14 = vector.shape_cast %13 : vector<16x16x128xbf16> to vector<256x128xbf16>
    %c0_17 = arith.constant 0 : index
    %c384 = arith.constant 384 : index
    %15 = vector.load %arg7[%c0_17, %c384] : memref<256x1152xbf16, #tpu.memory_space<vmem>>, vector<256x128xbf16>
    tpu.vector_store %arg7[%c0_17, %c384], %14 {strides = array<i32>} : memref<256x1152xbf16, #tpu.memory_space<vmem>>, vector<256x128xbf16>,
    %c0_18 = arith.constant 0 : index
    %c1_19 = arith.constant 1 : index
    %c1_20 = arith.constant 1 : index
    %c0_21 = arith.constant 0 : index
    %16 = vector.load %arg1[%c0_18, %c1_19, %c1_20, %c0_21] : memref<1x18x18x128xbf16, #tpu.memory_space<vmem>>, vector<1x16x16x128xbf16>
    %17 = vector.shape_cast %16 : vector<1x16x16x128xbf16> to vector<16x16x128xbf16>
    %18 = vector.shape_cast %17 : vector<16x16x128xbf16> to vector<256x128xbf16>
    %c0_22 = arith.constant 0 : index
    %c512 = arith.constant 512 : index
    %19 = vector.load %arg7[%c0_22, %c512] : memref<256x1152xbf16, #tpu.memory_space<vmem>>, vector<256x128xbf16>
    tpu.vector_store %arg7[%c0_22, %c512], %18 {strides = array<i32>} : memref<256x1152xbf16, #tpu.memory_space<vmem>>, vector<256x128xbf16>,
    %c0_23 = arith.constant 0 : index
    %c1_24 = arith.constant 1 : index
    %c2_25 = arith.constant 2 : index
    %c0_26 = arith.constant 0 : index
    %20 = vector.load %arg1[%c0_23, %c1_24, %c2_25, %c0_26] : memref<1x18x18x128xbf16, #tpu.memory_space<vmem>>, vector<1x16x16x128xbf16>
    %21 = vector.shape_cast %20 : vector<1x16x16x128xbf16> to vector<16x16x128xbf16>
    %22 = vector.shape_cast %21 : vector<16x16x128xbf16> to vector<256x128xbf16>
    %c0_27 = arith.constant 0 : index
    %c640 = arith.constant 640 : index
    %23 = vector.load %arg7[%c0_27, %c640] : memref<256x1152xbf16, #tpu.memory_space<vmem>>, vector<256x128xbf16>
    tpu.vector_store %arg7[%c0_27, %c640], %22 {strides = array<i32>} : memref<256x1152xbf16, #tpu.memory_space<vmem>>, vector<256x128xbf16>,
    %c0_28 = arith.constant 0 : index
    %c2_29 = arith.constant 2 : index
    %c0_30 = arith.constant 0 : index
    %c0_31 = arith.constant 0 : index
    %24 = vector.load %arg1[%c0_28, %c2_29, %c0_30, %c0_31] : memref<1x18x18x128xbf16, #tpu.memory_space<vmem>>, vector<1x16x16x128xbf16>
    %25 = vector.shape_cast %24 : vector<1x16x16x128xbf16> to vector<16x16x128xbf16>
    %26 = vector.shape_cast %25 : vector<16x16x128xbf16> to vector<256x128xbf16>
    %c0_32 = arith.constant 0 : index
    %c768 = arith.constant 768 : index
    %27 = vector.load %arg7[%c0_32, %c768] : memref<256x1152xbf16, #tpu.memory_space<vmem>>, vector<256x128xbf16>
    tpu.vector_store %arg7[%c0_32, %c768], %26 {strides = array<i32>} : memref<256x1152xbf16, #tpu.memory_space<vmem>>, vector<256x128xbf16>,
    %c0_33 = arith.constant 0 : index
    %c2_34 = arith.constant 2 : index
    %c1_35 = arith.constant 1 : index
    %c0_36 = arith.constant 0 : index
    %28 = vector.load %arg1[%c0_33, %c2_34, %c1_35, %c0_36] : memref<1x18x18x128xbf16, #tpu.memory_space<vmem>>, vector<1x16x16x128xbf16>
    %29 = vector.shape_cast %28 : vector<1x16x16x128xbf16> to vector<16x16x128xbf16>
    %30 = vector.shape_cast %29 : vector<16x16x128xbf16> to vector<256x128xbf16>
    %c0_37 = arith.constant 0 : index
    %c896 = arith.constant 896 : index
    %31 = vector.load %arg7[%c0_37, %c896] : memref<256x1152xbf16, #tpu.memory_space<vmem>>, vector<256x128xbf16>
    tpu.vector_store %arg7[%c0_37, %c896], %30 {strides = array<i32>} : memref<256x1152xbf16, #tpu.memory_space<vmem>>, vector<256x128xbf16>,
    %c0_38 = arith.constant 0 : index
    %c2_39 = arith.constant 2 : index
    %c2_40 = arith.constant 2 : index
    %c0_41 = arith.constant 0 : index
    %32 = vector.load %arg1[%c0_38, %c2_39, %c2_40, %c0_41] : memref<1x18x18x128xbf16, #tpu.memory_space<vmem>>, vector<1x16x16x128xbf16>
    %33 = vector.shape_cast %32 : vector<1x16x16x128xbf16> to vector<16x16x128xbf16>
    %34 = vector.shape_cast %33 : vector<16x16x128xbf16> to vector<256x128xbf16>
    %c0_42 = arith.constant 0 : index
    %c1024 = arith.constant 1024 : index
    %35 = vector.load %arg7[%c0_42, %c1024] : memref<256x1152xbf16, #tpu.memory_space<vmem>>, vector<256x128xbf16>
    tpu.vector_store %arg7[%c0_42, %c1024], %34 {strides = array<i32>} : memref<256x1152xbf16, #tpu.memory_space<vmem>>, vector<256x128xbf16>,
    %c0_43 = arith.constant 0 : index
    %c0_44 = arith.constant 0 : index
    %36 = vector.load %arg7[%c0_43, %c0_44] : memref<256x1152xbf16, #tpu.memory_space<vmem>>, vector<256x1152xbf16>
    %c0_45 = arith.constant 0 : index
    %c0_46 = arith.constant 0 : index
    %37 = vector.load %arg2[%c0_45, %c0_46] : memref<1152x128xbf16, #tpu.memory_space<vmem>>, vector<1152x128xbf16>
    %cst = arith.constant dense<0.000000e+00> : vector<256x128xf32>
    %38 = tpu.matmul %36, %37, %cst {dimension_numbers = #tpu.dot_dimension_numbers<[1], [0], [0], [1], [0, 0, 1, 1], [], []>} : vector<256x1152xbf16>, vector<1152x128xbf16>, vector<256x128xf32> -> vector<256x128xf32>
    %c0_47 = arith.constant 0 : index
    %c0_48 = arith.constant 0 : index
    %39 = vector.load %arg3[%c0_47, %c0_48] : memref<1x128xf32, #tpu.memory_space<vmem>>, vector<1x128xf32>
    %40 = vector.broadcast %39 : vector<1x128xf32> to vector<256x128xf32>
    %41 = arith.addf %38, %40 : vector<256x128xf32>
    %cst_49 = arith.constant 0.000000e+00 : f32
    %42 = vector.broadcast %cst_49 : f32 to vector<256x128xf32>
    %43 = arith.maximumf %41, %42 : vector<256x128xf32>
    %44 = vector.shape_cast %43 : vector<256x128xf32> to vector<128x2x128xf32>
    %45 = vector.extract_strided_slice %44 {offsets = [0, 0, 0], sizes = [128, 1, 128], strides = [1, 1, 1]} : vector<128x2x128xf32> to vector<128x1x128xf32>
    %46 = vector.shape_cast %45 : vector<128x1x128xf32> to vector<128x128xf32>
    %47 = vector.extract_strided_slice %44 {offsets = [0, 1, 0], sizes = [128, 1, 128], strides = [1, 1, 1]} : vector<128x2x128xf32> to vector<128x1x128xf32>
    %48 = vector.shape_cast %47 : vector<128x1x128xf32> to vector<128x128xf32>
    %49 = arith.maximumf %46, %48 : vector<128x128xf32>
    %50 = vector.shape_cast %49 : vector<128x128xf32> to vector<8x2x8x128xf32>
    %51 = vector.extract_strided_slice %50 {offsets = [0, 0, 0, 0], sizes = [8, 1, 8, 128], strides = [1, 1, 1, 1]} : vector<8x2x8x128xf32> to vector<8x1x8x128xf32>
    %52 = vector.shape_cast %51 : vector<8x1x8x128xf32> to vector<8x8x128xf32>
    %53 = vector.extract_strided_slice %50 {offsets = [0, 1, 0, 0], sizes = [8, 1, 8, 128], strides = [1, 1, 1, 1]} : vector<8x2x8x128xf32> to vector<8x1x8x128xf32>
    %54 = vector.shape_cast %53 : vector<8x1x8x128xf32> to vector<8x8x128xf32>
    %55 = arith.maximumf %52, %54 : vector<8x8x128xf32>
    %cst_50 = arith.constant 0.000000e+00 : f32
    %56 = vector.broadcast %cst_50 : f32 to vector<10x10x128xf32>
    %c0_51 = arith.constant 0 : index
    %c0_52 = arith.constant 0 : index
    %c0_53 = arith.constant 0 : index
    %57 = vector.load %arg9[%c0_51, %c0_52, %c0_53] : memref<10x10x128xf32, #tpu.memory_space<vmem>>, vector<10x10x128xf32>
    tpu.vector_store %arg9[%c0_51, %c0_52, %c0_53], %56 {strides = array<i32>} : memref<10x10x128xf32, #tpu.memory_space<vmem>>, vector<10x10x128xf32>,
    %c1_54 = arith.constant 1 : index
    %c1_55 = arith.constant 1 : index
    %c0_56 = arith.constant 0 : index
    %58 = vector.load %arg9[%c1_54, %c1_55, %c0_56] : memref<10x10x128xf32, #tpu.memory_space<vmem>>, vector<8x8x128xf32>
    tpu.vector_store %arg9[%c1_54, %c1_55, %c0_56], %55 {strides = array<i32>} : memref<10x10x128xf32, #tpu.memory_space<vmem>>, vector<8x8x128xf32>,
    %c0_57 = arith.constant 0 : index
    %c0_58 = arith.constant 0 : index
    %c0_59 = arith.constant 0 : index
    %59 = vector.load %arg9[%c0_57, %c0_58, %c0_59] : memref<10x10x128xf32, #tpu.memory_space<vmem>>, vector<8x8x128xf32>
    %60 = vector.shape_cast %59 : vector<8x8x128xf32> to vector<64x128xf32>
    %61 = arith.truncf %60 : vector<64x128xf32> to vector<64x128xbf16>
    %c0_60 = arith.constant 0 : index
    %c0_61 = arith.constant 0 : index
    %62 = vector.load %arg8[%c0_60, %c0_61] : memref<64x1152xbf16, #tpu.memory_space<vmem>>, vector<64x128xbf16>
    tpu.vector_store %arg8[%c0_60, %c0_61], %61 {strides = array<i32>} : memref<64x1152xbf16, #tpu.memory_space<vmem>>, vector<64x128xbf16>,
    %c0_62 = arith.constant 0 : index
    %c1_63 = arith.constant 1 : index
    %c0_64 = arith.constant 0 : index
    %63 = vector.load %arg9[%c0_62, %c1_63, %c0_64] : memref<10x10x128xf32, #tpu.memory_space<vmem>>, vector<8x8x128xf32>
    %64 = vector.shape_cast %63 : vector<8x8x128xf32> to vector<64x128xf32>
    %65 = arith.truncf %64 : vector<64x128xf32> to vector<64x128xbf16>
    %c0_65 = arith.constant 0 : index
    %c128_66 = arith.constant 128 : index
    %66 = vector.load %arg8[%c0_65, %c128_66] : memref<64x1152xbf16, #tpu.memory_space<vmem>>, vector<64x128xbf16>
    tpu.vector_store %arg8[%c0_65, %c128_66], %65 {strides = array<i32>} : memref<64x1152xbf16, #tpu.memory_space<vmem>>, vector<64x128xbf16>,
    %c0_67 = arith.constant 0 : index
    %c2_68 = arith.constant 2 : index
    %c0_69 = arith.constant 0 : index
    %67 = vector.load %arg9[%c0_67, %c2_68, %c0_69] : memref<10x10x128xf32, #tpu.memory_space<vmem>>, vector<8x8x128xf32>
    %68 = vector.shape_cast %67 : vector<8x8x128xf32> to vector<64x128xf32>
    %69 = arith.truncf %68 : vector<64x128xf32> to vector<64x128xbf16>
    %c0_70 = arith.constant 0 : index
    %c256_71 = arith.constant 256 : index
    %70 = vector.load %arg8[%c0_70, %c256_71] : memref<64x1152xbf16, #tpu.memory_space<vmem>>, vector<64x128xbf16>
    tpu.vector_store %arg8[%c0_70, %c256_71], %69 {strides = array<i32>} : memref<64x1152xbf16, #tpu.memory_space<vmem>>, vector<64x128xbf16>,
    %c1_72 = arith.constant 1 : index
    %c0_73 = arith.constant 0 : index
    %c0_74 = arith.constant 0 : index
    %71 = vector.load %arg9[%c1_72, %c0_73, %c0_74] : memref<10x10x128xf32, #tpu.memory_space<vmem>>, vector<8x8x128xf32>
    %72 = vector.shape_cast %71 : vector<8x8x128xf32> to vector<64x128xf32>
    %73 = arith.truncf %72 : vector<64x128xf32> to vector<64x128xbf16>
    %c0_75 = arith.constant 0 : index
    %c384_76 = arith.constant 384 : index
    %74 = vector.load %arg8[%c0_75, %c384_76] : memref<64x1152xbf16, #tpu.memory_space<vmem>>, vector<64x128xbf16>
    tpu.vector_store %arg8[%c0_75, %c384_76], %73 {strides = array<i32>} : memref<64x1152xbf16, #tpu.memory_space<vmem>>, vector<64x128xbf16>,
    %c1_77 = arith.constant 1 : index
    %c1_78 = arith.constant 1 : index
    %c0_79 = arith.constant 0 : index
    %75 = vector.load %arg9[%c1_77, %c1_78, %c0_79] : memref<10x10x128xf32, #tpu.memory_space<vmem>>, vector<8x8x128xf32>
    %76 = vector.shape_cast %75 : vector<8x8x128xf32> to vector<64x128xf32>
    %77 = arith.truncf %76 : vector<64x128xf32> to vector<64x128xbf16>
    %c0_80 = arith.constant 0 : index
    %c512_81 = arith.constant 512 : index
    %78 = vector.load %arg8[%c0_80, %c512_81] : memref<64x1152xbf16, #tpu.memory_space<vmem>>, vector<64x128xbf16>
    tpu.vector_store %arg8[%c0_80, %c512_81], %77 {strides = array<i32>} : memref<64x1152xbf16, #tpu.memory_space<vmem>>, vector<64x128xbf16>,
    %c1_82 = arith.constant 1 : index
    %c2_83 = arith.constant 2 : index
    %c0_84 = arith.constant 0 : index
    %79 = vector.load %arg9[%c1_82, %c2_83, %c0_84] : memref<10x10x128xf32, #tpu.memory_space<vmem>>, vector<8x8x128xf32>
    %80 = vector.shape_cast %79 : vector<8x8x128xf32> to vector<64x128xf32>
    %81 = arith.truncf %80 : vector<64x128xf32> to vector<64x128xbf16>
    %c0_85 = arith.constant 0 : index
    %c640_86 = arith.constant 640 : index
    %82 = vector.load %arg8[%c0_85, %c640_86] : memref<64x1152xbf16, #tpu.memory_space<vmem>>, vector<64x128xbf16>
    tpu.vector_store %arg8[%c0_85, %c640_86], %81 {strides = array<i32>} : memref<64x1152xbf16, #tpu.memory_space<vmem>>, vector<64x128xbf16>,
    %c2_87 = arith.constant 2 : index
    %c0_88 = arith.constant 0 : index
    %c0_89 = arith.constant 0 : index
    %83 = vector.load %arg9[%c2_87, %c0_88, %c0_89] : memref<10x10x128xf32, #tpu.memory_space<vmem>>, vector<8x8x128xf32>
    %84 = vector.shape_cast %83 : vector<8x8x128xf32> to vector<64x128xf32>
    %85 = arith.truncf %84 : vector<64x128xf32> to vector<64x128xbf16>
    %c0_90 = arith.constant 0 : index
    %c768_91 = arith.constant 768 : index
    %86 = vector.load %arg8[%c0_90, %c768_91] : memref<64x1152xbf16, #tpu.memory_space<vmem>>, vector<64x128xbf16>
    tpu.vector_store %arg8[%c0_90, %c768_91], %85 {strides = array<i32>} : memref<64x1152xbf16, #tpu.memory_space<vmem>>, vector<64x128xbf16>,
    %c2_92 = arith.constant 2 : index
    %c1_93 = arith.constant 1 : index
    %c0_94 = arith.constant 0 : index
    %87 = vector.load %arg9[%c2_92, %c1_93, %c0_94] : memref<10x10x128xf32, #tpu.memory_space<vmem>>, vector<8x8x128xf32>
    %88 = vector.shape_cast %87 : vector<8x8x128xf32> to vector<64x128xf32>
    %89 = arith.truncf %88 : vector<64x128xf32> to vector<64x128xbf16>
    %c0_95 = arith.constant 0 : index
    %c896_96 = arith.constant 896 : index
    %90 = vector.load %arg8[%c0_95, %c896_96] : memref<64x1152xbf16, #tpu.memory_space<vmem>>, vector<64x128xbf16>
    tpu.vector_store %arg8[%c0_95, %c896_96], %89 {strides = array<i32>} : memref<64x1152xbf16, #tpu.memory_space<vmem>>, vector<64x128xbf16>,
    %c2_97 = arith.constant 2 : index
    %c2_98 = arith.constant 2 : index
    %c0_99 = arith.constant 0 : index
    %91 = vector.load %arg9[%c2_97, %c2_98, %c0_99] : memref<10x10x128xf32, #tpu.memory_space<vmem>>, vector<8x8x128xf32>
    %92 = vector.shape_cast %91 : vector<8x8x128xf32> to vector<64x128xf32>
    %93 = arith.truncf %92 : vector<64x128xf32> to vector<64x128xbf16>
    %c0_100 = arith.constant 0 : index
    %c1024_101 = arith.constant 1024 : index
    %94 = vector.load %arg8[%c0_100, %c1024_101] : memref<64x1152xbf16, #tpu.memory_space<vmem>>, vector<64x128xbf16>
    tpu.vector_store %arg8[%c0_100, %c1024_101], %93 {strides = array<i32>} : memref<64x1152xbf16, #tpu.memory_space<vmem>>, vector<64x128xbf16>,
    %c0_102 = arith.constant 0 : index
    %c0_103 = arith.constant 0 : index
    %95 = vector.load %arg8[%c0_102, %c0_103] : memref<64x1152xbf16, #tpu.memory_space<vmem>>, vector<64x1152xbf16>
    %c0_104 = arith.constant 0 : index
    %c0_105 = arith.constant 0 : index
    %96 = vector.load %arg4[%c0_104, %c0_105] : memref<1152x128xbf16, #tpu.memory_space<vmem>>, vector<1152x128xbf16>
    %cst_106 = arith.constant dense<0.000000e+00> : vector<64x128xf32>
    %97 = tpu.matmul %95, %96, %cst_106 {dimension_numbers = #tpu.dot_dimension_numbers<[1], [0], [0], [1], [0, 0, 1, 1], [], []>} : vector<64x1152xbf16>, vector<1152x128xbf16>, vector<64x128xf32> -> vector<64x128xf32>
    %c0_107 = arith.constant 0 : index
    %c0_108 = arith.constant 0 : index
    %98 = vector.load %arg5[%c0_107, %c0_108] : memref<1x128xf32, #tpu.memory_space<vmem>>, vector<1x128xf32>
    %99 = vector.broadcast %98 : vector<1x128xf32> to vector<64x128xf32>
    %100 = arith.addf %97, %99 : vector<64x128xf32>
    %cst_109 = arith.constant 0.000000e+00 : f32
    %101 = vector.broadcast %cst_109 : f32 to vector<64x128xf32>
    %102 = arith.maximumf %100, %101 : vector<64x128xf32>
    %103 = vector.shape_cast %102 : vector<64x128xf32> to vector<32x2x128xf32>
    %104 = vector.extract_strided_slice %103 {offsets = [0, 0, 0], sizes = [32, 1, 128], strides = [1, 1, 1]} : vector<32x2x128xf32> to vector<32x1x128xf32>
    %105 = vector.shape_cast %104 : vector<32x1x128xf32> to vector<32x128xf32>
    %106 = vector.extract_strided_slice %103 {offsets = [0, 1, 0], sizes = [32, 1, 128], strides = [1, 1, 1]} : vector<32x2x128xf32> to vector<32x1x128xf32>
    %107 = vector.shape_cast %106 : vector<32x1x128xf32> to vector<32x128xf32>
    %108 = arith.maximumf %105, %107 : vector<32x128xf32>
    %109 = vector.shape_cast %108 : vector<32x128xf32> to vector<4x2x4x128xf32>
    %110 = vector.extract_strided_slice %109 {offsets = [0, 0, 0, 0], sizes = [4, 1, 4, 128], strides = [1, 1, 1, 1]} : vector<4x2x4x128xf32> to vector<4x1x4x128xf32>
    %111 = vector.shape_cast %110 : vector<4x1x4x128xf32> to vector<4x4x128xf32>
    %112 = vector.extract_strided_slice %109 {offsets = [0, 1, 0, 0], sizes = [4, 1, 4, 128], strides = [1, 1, 1, 1]} : vector<4x2x4x128xf32> to vector<4x1x4x128xf32>
    %113 = vector.shape_cast %112 : vector<4x1x4x128xf32> to vector<4x4x128xf32>
    %114 = arith.maximumf %111, %113 : vector<4x4x128xf32>
    %c0_110 = arith.constant 0 : index
    %c0_111 = arith.constant 0 : index
    %c0_112 = arith.constant 0 : index
    %c0_113 = arith.constant 0 : index
    %115 = vector.load %arg6[%c0_110, %c0_111, %c0_112, %c0_113] : memref<1x4x4x128xf32, #tpu.memory_space<vmem>>, vector<1x4x4x128xf32>
    %116 = vector.shape_cast %115 : vector<1x4x4x128xf32> to vector<4x4x128xf32>
    %117 = vector.shape_cast %114 : vector<4x4x128xf32> to vector<1x4x4x128xf32>
    tpu.vector_store %arg6[%c0_110, %c0_111, %c0_112, %c0_113], %117 {strides = array<i32>} : memref<1x4x4x128xf32, #tpu.memory_space<vmem>>, vector<1x4x4x128xf32>,
    return
  }
  func.func @transform_0(%arg0: i32) -> (i32, i32, i32, i32) {
    %c0_i32 = arith.constant 0 : i32
    %c0_i32_0 = arith.constant 0 : i32
    %c0_i32_1 = arith.constant 0 : i32
    %c0_i32_2 = arith.constant 0 : i32
    return %arg0, %c0_i32, %c0_i32_0, %c0_i32_1 : i32, i32, i32, i32
  }
  func.func @transform_1(%arg0: i32) -> (i32, i32) {
    %c0_i32 = arith.constant 0 : i32
    %c0_i32_0 = arith.constant 0 : i32
    %c0_i32_1 = arith.constant 0 : i32
    return %c0_i32, %c0_i32_0 : i32, i32
  }
  func.func @transform_2(%arg0: i32) -> (i32, i32) {
    %c0_i32 = arith.constant 0 : i32
    %c0_i32_0 = arith.constant 0 : i32
    %c0_i32_1 = arith.constant 0 : i32
    return %c0_i32, %c0_i32_0 : i32, i32
  }
  func.func @transform_3(%arg0: i32) -> (i32, i32) {
    %c0_i32 = arith.constant 0 : i32
    %c0_i32_0 = arith.constant 0 : i32
    %c0_i32_1 = arith.constant 0 : i32
    return %c0_i32, %c0_i32_0 : i32, i32
  }
  func.func @transform_4(%arg0: i32) -> (i32, i32) {
    %c0_i32 = arith.constant 0 : i32
    %c0_i32_0 = arith.constant 0 : i32
    %c0_i32_1 = arith.constant 0 : i32
    return %c0_i32, %c0_i32_0 : i32, i32
  }
  func.func @transform_5(%arg0: i32) -> (i32, i32, i32, i32) {
    %c0_i32 = arith.constant 0 : i32
    %c0_i32_0 = arith.constant 0 : i32
    %c0_i32_1 = arith.constant 0 : i32
    %c0_i32_2 = arith.constant 0 : i32
    return %arg0, %c0_i32, %c0_i32_0, %c0_i32_1 : i32, i32, i32, i32
  }
}

</mosaic_0001>

<llo_original>
// kernel: vgg_forward.1
$region0: #{vgg_forward.1}
  #allocation0 [shape = 'u32[]', space=smem, size = 0x4, offset = 0x4, fixed_abs, tag = 'smem constant byte address 0x4 - core index']
  #allocation1 [shape = 'u32[144,128]{1,0:T(1,128)}', space=vmem, size = 0x12000, scoped, tag = 'internal scratch']
  #allocation2 [shape = 'bf16[256,1152]{1,0:T(16,128)(2,1)}', space=vmem, size = 0x90000, scoped, tag = 'scratch operand']
  #allocation3 [shape = 'bf16[64,1152]{1,0:T(16,128)(2,1)}', space=vmem, size = 0x24000, scoped, tag = 'scratch operand']
  #allocation4 [shape = 'f32[10,10,128]{2,1,0:T(8,128)}', space=vmem, size = 0x14000, scoped, tag = 'scratch operand']
  %s0 = inlined_call_operand.vmem [shape: bf16[2,18,18,128], index: 0, kind: input, shape index: {}]
  %s1 = inlined_call_operand.vmem [shape: bf16[1152,128], index: 1, kind: input, shape index: {}]
  %s2 = inlined_call_operand.vmem [shape: f32[1,128], index: 2, kind: input, shape index: {}]
  %s3 = inlined_call_operand.vmem [shape: bf16[1152,128], index: 3, kind: input, shape index: {}]
  %s4 = inlined_call_operand.vmem [shape: f32[1,128], index: 4, kind: input, shape index: {}]
  %s5 = inlined_call_operand.vmem [shape: f32[2,4,4,128], index: 5, kind: output, shape index: {}]
  %s6 = sld [smem:[#allocation0]]
  $region53: #{vgg_forward.1} parent=0
    _
  %s8 = ssub.s32 1, %s6
  %s9 = scalar_select 0, %s8, %s6
  loop: start=0, step=1, limit=4
  $region2: #{vgg_forward.1} parent=0 // loop_pre_header
    _
  $region3: #{vgg_forward.1} parent=0 // loop_header
    %s11 = sphi 0, %s15
    %p12 = scmp.ge.s32.totalorder %s11, 4
    %s21 = sphi 0, %s23
    %s24 = sphi 0, %s21
    %s25 = sphi 0, %s24
    %s41 = sphi 0, %s25
    %s45 = sphi 0, %s45
    %s47 = sphi 0, %s45
    %s48 = sphi 0, %s47
    %s62 = sphi 0, %s48
    %s66 = sphi 0, %s66
    %s68 = sphi 0, %s66
    %s69 = sphi 0, %s68
    %s83 = sphi 0, %s69
    %s87 = sphi 0, %s87
    %s89 = sphi 0, %s87
    %s90 = sphi 0, %s89
    %s104 = sphi 0, %s90
    %s108 = sphi 0, %s108
    %s110 = sphi 0, %s108
    %s111 = sphi 0, %s110
    %s125 = sphi 0, %s111
    %s131 = sphi 0, %s133
    %s134 = sphi 0, %s131
    %s135 = sphi 0, %s134
    %s151 = sphi 0, %s135
  $region4: #{vgg_forward.1} parent=0 // loop_header_branch
    %14 = sbr.rel (%p12) target = $region8
  $region5: #{vgg_forward.1} parent=0 // loop_body
    %s16 = ssub.s32 %s11, 1
    %s17 = ssub.s32 %s11, 2
    %s18 = sadd.s32 %s11, 1
    %s19 = ssub.s32 %s11, %s18
    %p20 = scmp.eq.s32.totalorder %s19, 0
    %s22 = sadd.s32 %s21, 1
    %s23 = scalar_select %p20, %s21, %s22
    %p26 = pneg %p20
    %p27 = scmp.eq.s32.totalorder %s11, 1
    %p28 = por %p26, %p27
    %p29 = scmp.ne.s32.totalorder %s21, %s24
    %p30 = scmp.eq.s32.totalorder %s11, 0
    %p31 = por %p29, %p30
    %p32 = scmp.ne.s32.totalorder %s21, %s24
    %p33 = scmp.eq.s32.totalorder %s16, 1
    %p34 = por %p32, %p33
    %p35 = scmp.ne.s32.totalorder %s24, %s25
    %p36 = scmp.eq.s32.totalorder %s16, 0
    %p37 = por %p35, %p36
    %p38 = scmp.ne.s32.totalorder %s24, %s25
    %p39 = scmp.eq.s32.totalorder %s17, 1
    %p40 = por %p38, %p39
    %p42 = scmp.ne.s32.totalorder %s25, %s41
    %p43 = scmp.eq.s32.totalorder %s17, 0
    %p44 = por %p42, %p43
    %s46 = sadd.s32 %s45, 1
    %p49 = scmp.eq.s32.totalorder %s11, 1
    %p50 = scmp.ne.s32.totalorder %s45, %s47
    %p51 = scmp.eq.s32.totalorder %s11, 0
    %p52 = por %p50, %p51
    %p53 = scmp.ne.s32.totalorder %s45, %s47
    %p54 = scmp.eq.s32.totalorder %s16, 1
    %p55 = por %p53, %p54
    %p56 = scmp.ne.s32.totalorder %s47, %s48
    %p57 = scmp.eq.s32.totalorder %s16, 0
    %p58 = por %p56, %p57
    %p59 = scmp.ne.s32.totalorder %s47, %s48
    %p60 = scmp.eq.s32.totalorder %s17, 1
    %p61 = por %p59, %p60
    %p63 = scmp.ne.s32.totalorder %s48, %s62
    %p64 = scmp.eq.s32.totalorder %s17, 0
    %p65 = por %p63, %p64
    %s67 = sadd.s32 %s66, 1
    %p70 = scmp.eq.s32.totalorder %s11, 1
    %p71 = scmp.ne.s32.totalorder %s66, %s68
    %p72 = scmp.eq.s32.totalorder %s11, 0
    %p73 = por %p71, %p72
    %p74 = scmp.ne.s32.totalorder %s66, %s68
    %p75 = scmp.eq.s32.totalorder %s16, 1
    %p76 = por %p74, %p75
    %p77 = scmp.ne.s32.totalorder %s68, %s69
    %p78 = scmp.eq.s32.totalorder %s16, 0
    %p79 = por %p77, %p78
    %p80 = scmp.ne.s32.totalorder %s68, %s69
    %p81 = scmp.eq.s32.totalorder %s17, 1
    %p82 = por %p80, %p81
    %p84 = scmp.ne.s32.totalorder %s69, %s83
    %p85 = scmp.eq.s32.totalorder %s17, 0
    %p86 = por %p84, %p85
    %s88 = sadd.s32 %s87, 1
    %p91 = scmp.eq.s32.totalorder %s11, 1
    %p92 = scmp.ne.s32.totalorder %s87, %s89
    %p93 = scmp.eq.s32.totalorder %s11, 0
    %p94 = por %p92, %p93
    %p95 = scmp.ne.s32.totalorder %s87, %s89
    %p96 = scmp.eq.s32.totalorder %s16, 1
    %p97 = por %p95, %p96
    %p98 = scmp.ne.s32.totalorder %s89, %s90
    %p99 = scmp.eq.s32.totalorder %s16, 0
    %p100 = por %p98, %p99
    %p101 = scmp.ne.s32.totalorder %s89, %s90
    %p102 = scmp.eq.s32.totalorder %s17, 1
    %p103 = por %p101, %p102
    %p105 = scmp.ne.s32.totalorder %s90, %s104
    %p106 = scmp.eq.s32.totalorder %s17, 0
    %p107 = por %p105, %p106
    %s109 = sadd.s32 %s108, 1
    %p112 = scmp.eq.s32.totalorder %s11, 1
    %p113 = scmp.ne.s32.totalorder %s108, %s110
    %p114 = scmp.eq.s32.totalorder %s11, 0
    %p115 = por %p113, %p114
    %p116 = scmp.ne.s32.totalorder %s108, %s110
    %p117 = scmp.eq.s32.totalorder %s16, 1
    %p118 = por %p116, %p117
    %p119 = scmp.ne.s32.totalorder %s110, %s111
    %p120 = scmp.eq.s32.totalorder %s16, 0
    %p121 = por %p119, %p120
    %p122 = scmp.ne.s32.totalorder %s110, %s111
    %p123 = scmp.eq.s32.totalorder %s17, 1
    %p124 = por %p122, %p123
    %p126 = scmp.ne.s32.totalorder %s111, %s125
    %p127 = scmp.eq.s32.totalorder %s17, 0
    %p128 = por %p126, %p127
    %s129 = ssub.s32 %s11, %s18
    %p130 = scmp.eq.s32.totalorder %s129, 0
    %s132 = sadd.s32 %s131, 1
    %s133 = scalar_select %p130, %s131, %s132
    %p136 = pneg %p130
    %p137 = scmp.eq.s32.totalorder %s11, 1
    %p138 = por %p136, %p137
    %p139 = scmp.ne.s32.totalorder %s131, %s134
    %p140 = scmp.eq.s32.totalorder %s11, 0
    %p141 = por %p139, %p140
    %p142 = scmp.ne.s32.totalorder %s131, %s134
    %p143 = scmp.eq.s32.totalorder %s16, 1
    %p144 = por %p142, %p143
    %p145 = scmp.ne.s32.totalorder %s134, %s135
    %p146 = scmp.eq.s32.totalorder %s16, 0
    %p147 = por %p145, %p146
    %p148 = scmp.ne.s32.totalorder %s134, %s135
    %p149 = scmp.eq.s32.totalorder %s17, 1
    %p150 = por %p148, %p149
    %p152 = scmp.ne.s32.totalorder %s135, %s151
    %p153 = scmp.eq.s32.totalorder %s17, 0
    %p154 = por %p152, %p153
    %p155 = scmp.le.s32.totalorder 1, %s11
    %p156 = scmp.lt.s32.totalorder %s11, 3
    %p157 = pnand %p155, %p156
    %p158 = pneg %p157
    // Predicated region
    $region9: #{vgg_forward.1} parent=5 // pred_check
      _
    $region10: #{vgg_forward.1} parent=5 // pred_check_branch
      %160 = sbr.rel (%p157) target = $region12
    $region11: #{vgg_forward.1} parent=5 // pred_region
      %s161 = ssub.s32 %s11, 1
      // Predicated region
      $region13: #{vgg_forward.1} parent=11 // pred_check
        %p162 = pneg %p58
      $region14: #{vgg_forward.1} parent=11 // pred_check_branch
        %164 = sbr.rel (%p162) target = $region16
      $region15: #{vgg_forward.1} parent=11 // pred_region
        _
      $region16: #{vgg_forward.1} parent=11 // pred_fallthru
        _
      // Predicated region
      $region17: #{vgg_forward.1} parent=11 // pred_check
        %p165 = pneg %p79
      $region18: #{vgg_forward.1} parent=11 // pred_check_branch
        %167 = sbr.rel (%p165) target = $region20
      $region19: #{vgg_forward.1} parent=11 // pred_region
        _
      $region20: #{vgg_forward.1} parent=11 // pred_fallthru
        _
      // Predicated region
      $region21: #{vgg_forward.1} parent=11 // pred_check
        %p168 = pneg %p100
      $region22: #{vgg_forward.1} parent=11 // pred_check_branch
        %170 = sbr.rel (%p168) target = $region24
      $region23: #{vgg_forward.1} parent=11 // pred_region
        _
      $region24: #{vgg_forward.1} parent=11 // pred_fallthru
        _
      // Predicated region
      $region25: #{vgg_forward.1} parent=11 // pred_check
        %p171 = pneg %p121
      $region26: #{vgg_forward.1} parent=11 // pred_check_branch
        %173 = sbr.rel (%p171) target = $region28
      $region27: #{vgg_forward.1} parent=11 // pred_region
        _
      $region28: #{vgg_forward.1} parent=11 // pred_fallthru
        _
    $region12: #{vgg_forward.1} parent=5 // pred_fallthru
      _
    %p174 = scmp.lt.s32.totalorder %s11, 2
    // Predicated region
    $region29: #{vgg_forward.1} parent=5 // pred_check
      %p175 = pneg %p174
    $region30: #{vgg_forward.1} parent=5 // pred_check_branch
      %177 = sbr.rel (%p175) target = $region32
    $region31: #{vgg_forward.1} parent=5 // pred_region
      // Predicated region
      $region33: #{vgg_forward.1} parent=31 // pred_check
        %p178 = pneg %p31
      $region34: #{vgg_forward.1} parent=31 // pred_check_branch
        %180 = sbr.rel (%p178) target = $region36
      $region35: #{vgg_forward.1} parent=31 // pred_region
        %p181 = scmp.lt.s32.totalorder %s11, 1
        %s182 = scalar_select %p181, %s11, 1
        %s183 = smul.addr %s182, 54
        %s184 = smul.addr %s183, 4
        %s185 = scalar_lea.vmem %s0, %s184
      $region36: #{vgg_forward.1} parent=31 // pred_fallthru
        _
    $region32: #{vgg_forward.1} parent=5 // pred_fallthru
      _
    %p186 = scmp.le.s32.totalorder 1, %s11
    %p187 = scmp.lt.s32.totalorder %s11, 3
    %p188 = pnand %p186, %p187
    %p189 = pneg %p188
    // Predicated region
    $region37: #{vgg_forward.1} parent=5 // pred_check
      _
    $region38: #{vgg_forward.1} parent=5 // pred_check_branch
      %191 = sbr.rel (%p188) target = $region40
    $region39: #{vgg_forward.1} parent=5 // pred_region
      %s192 = ssub.s32 %s11, 1
      %p193 = scmp.lt.s32.totalorder %s16, 1
      %s194 = scalar_select %p193, %s16, 1
      %s195 = smul.addr %s194, 54
      %s196 = smul.addr %s195, 4
      %s197 = scalar_lea.vmem %s0, %s196
      %p198 = pneg %p37
      %p199 = pneg %p34
      %p200 = pneg %p58
      %p201 = pneg %p55
      %p202 = pneg %p79
      %p203 = pneg %p76
      %p204 = pneg %p100
      %p205 = pneg %p97
      %p206 = pneg %p121
      %p207 = pneg %p118
      %p208 = pneg %p147
      %p209 = pneg %p144
      %p210 = scmp.lt.s32.totalorder %s16, 1
      %s211 = scalar_select %p210, %s16, 1
      %s212 = smul.addr %s211, 4
      %s213 = smul.addr %s212, 4
      %s214 = scalar_lea.vmem %s5, %s213
      %p215 = scmp.lt.s32.totalorder %s16, 1
      %s216 = scalar_select %p215, %s16, 1
      %s217 = smul.addr %s216, 54
      %s218 = smul.addr %s217, 4
      %s219 = scalar_lea.vmem %s0, %s218
      %p220 = scmp.lt.s32.totalorder %s16, 1
      %s221 = scalar_select %p220, %s16, 1
      %s222 = smul.addr %s221, 4
      %s223 = smul.addr %s222, 4
      %s224 = scalar_lea.vmem %s5, %s223
      %v226 = vld [vmem:[%s219] sm:$0xf]
      %v227 = vld [vmem:[%s219 + $0x4] sm:$0xf]
      %v228 = vld [vmem:[%s219 + $0xc] sm:$0xf]
      %v229 = vld [vmem:[%s219 + $0x10] sm:$0xf]
      %v230 = vld [vmem:[%s219 + $0x18] sm:$0xf]
      %v231 = vld [vmem:[%s219 + $0x1c] sm:$0xf]
      %v232 = vld [vmem:[%s219 + $0x24] sm:$0xf]
      %v233 = vld [vmem:[%s219 + $0x28] sm:$0xf]
      %v234 = vld [vmem:[%s219 + $0x30] sm:$0xf]
      %v235 = vld [vmem:[%s219 + $0x34] sm:$0xf]
      %v236 = vld [vmem:[%s219 + $0x3c] sm:$0xf]
      %v237 = vld [vmem:[%s219 + $0x40] sm:$0xf]
      %v238 = vld [vmem:[%s219 + $0x48] sm:$0xf]
      %v239 = vld [vmem:[%s219 + $0x4c] sm:$0xf]
      %v240 = vld [vmem:[%s219 + $0x54] sm:$0xf]
      %v241 = vld [vmem:[%s219 + $0x58] sm:$0xf]
      %v242 = vld [vmem:[%s219 + $0x60] sm:$0xf]
      %v243 = vld [vmem:[%s219 + $0x64] sm:$0xf]
      %v244 = vld [vmem:[%s219 + $0x6c] sm:$0xf]
      %v245 = vld [vmem:[%s219 + $0x70] sm:$0xf]
      %v246 = vld [vmem:[%s219 + $0x78] sm:$0xf]
      %v247 = vld [vmem:[%s219 + $0x7c] sm:$0xf]
      %v248 = vld [vmem:[%s219 + $0x84] sm:$0xf]
      %v249 = vld [vmem:[%s219 + $0x88] sm:$0xf]
      %v250 = vld [vmem:[%s219 + $0x90] sm:$0xf]
      %v251 = vld [vmem:[%s219 + $0x94] sm:$0xf]
      %v252 = vld [vmem:[%s219 + $0x9c] sm:$0xf]
      %v253 = vld [vmem:[%s219 + $0xa0] sm:$0xf]
      %v254 = vld [vmem:[%s219 + $0xa8] sm:$0xf]
      %v255 = vld [vmem:[%s219 + $0xac] sm:$0xf]
      %v256 = vld [vmem:[%s219 + $0xb4] sm:$0xf]
      %v257 = vld [vmem:[%s219 + $0xb8] sm:$0xf]
      %v290 = vunpack.c.l.b16 %v226
      %v291 = vunpack.c.l.b16 %v227
      %v292 = vunpack.c.l.b16 %v228
      %v293 = vunpack.c.l.b16 %v229
      %v294 = vunpack.c.l.b16 %v230
      %v295 = vunpack.c.l.b16 %v231
      %v296 = vunpack.c.l.b16 %v232
      %v297 = vunpack.c.l.b16 %v233
      %v298 = vunpack.c.l.b16 %v234
      %v299 = vunpack.c.l.b16 %v235
      %v300 = vunpack.c.l.b16 %v236
      %v301 = vunpack.c.l.b16 %v237
      %v302 = vunpack.c.l.b16 %v238
      %v303 = vunpack.c.l.b16 %v239
      %v304 = vunpack.c.l.b16 %v240
      %v305 = vunpack.c.l.b16 %v241
      %v306 = vunpack.c.l.b16 %v242
      %v307 = vunpack.c.l.b16 %v243
      %v308 = vunpack.c.l.b16 %v244
      %v309 = vunpack.c.l.b16 %v245
      %v310 = vunpack.c.l.b16 %v246
      %v311 = vunpack.c.l.b16 %v247
      %v312 = vunpack.c.l.b16 %v248
      %v313 = vunpack.c.l.b16 %v249
      %v314 = vunpack.c.l.b16 %v250
      %v315 = vunpack.c.l.b16 %v251
      %v316 = vunpack.c.l.b16 %v252
      %v317 = vunpack.c.l.b16 %v253
      %v318 = vunpack.c.l.b16 %v254
      %v319 = vunpack.c.l.b16 %v255
      %v320 = vunpack.c.l.b16 %v256
      %v321 = vunpack.c.l.b16 %v257
      %v322 = vpack.c.b16 %v291, %v290
      %v323 = vpack.c.b16 %v293, %v292
      %v324 = vpack.c.b16 %v295, %v294
      %v325 = vpack.c.b16 %v297, %v296
      %v326 = vpack.c.b16 %v299, %v298
      %v327 = vpack.c.b16 %v301, %v300
      %v328 = vpack.c.b16 %v303, %v302
      %v329 = vpack.c.b16 %v305, %v304
      %v330 = vpack.c.b16 %v307, %v306
      %v331 = vpack.c.b16 %v309, %v308
      %v332 = vpack.c.b16 %v311, %v310
      %v333 = vpack.c.b16 %v313, %v312
      %v334 = vpack.c.b16 %v315, %v314
      %v335 = vpack.c.b16 %v317, %v316
      %v336 = vpack.c.b16 %v319, %v318
      %v337 = vpack.c.b16 %v321, %v320
      %354 = vst [vmem:[#allocation2] sm:$0xff] %v322
      %355 = vst [vmem:[#allocation2 + $0x48] sm:$0xff] %v323
      %356 = vst [vmem:[#allocation2 + $0x90] sm:$0xff] %v324
      %357 = vst [vmem:[#allocation2 + $0xd8] sm:$0xff] %v325
      %358 = vst [vmem:[#allocation2 + $0x120] sm:$0xff] %v326
      %359 = vst [vmem:[#allocation2 + $0x168] sm:$0xff] %v327
      %360 = vst [vmem:[#allocation2 + $0x1b0] sm:$0xff] %v328
      %361 = vst [vmem:[#allocation2 + $0x1f8] sm:$0xff] %v329
      %362 = vst [vmem:[#allocation2 + $0x240] sm:$0xff] %v330
      %363 = vst [vmem:[#allocation2 + $0x288] sm:$0xff] %v331
      %364 = vst [vmem:[#allocation2 + $0x2d0] sm:$0xff] %v332
      %365 = vst [vmem:[#allocation2 + $0x318] sm:$0xff] %v333
      %366 = vst [vmem:[#allocation2 + $0x360] sm:$0xff] %v334
      %367 = vst [vmem:[#allocation2 + $0x3a8] sm:$0xff] %v335
      %368 = vst [vmem:[#allocation2 + $0x3f0] sm:$0xff] %v336
      %369 = vst [vmem:[#allocation2 + $0x438] sm:$0xff] %v337
      %v370 = vld [vmem:[%s219] sm:$0xf]
      %v371 = vld [vmem:[%s219 + $0x4] sm:$0xf]
      %v372 = vld [vmem:[%s219 + $0x8] sm:$0x1]
      %v373 = vld [vmem:[%s219 + $0xc] sm:$0xf]
      %v374 = vld [vmem:[%s219 + $0x10] sm:$0xf]
      %v375 = vld [vmem:[%s219 + $0x14] sm:$0x1]
      %v376 = vld [vmem:[%s219 + $0x18] sm:$0xf]
      %v377 = vld [vmem:[%s219 + $0x1c] sm:$0xf]
      %v378 = vld [vmem:[%s219 + $0x20] sm:$0x1]
      %v379 = vld [vmem:[%s219 + $0x24] sm:$0xf]
      %v380 = vld [vmem:[%s219 + $0x28] sm:$0xf]
      %v381 = vld [vmem:[%s219 + $0x2c] sm:$0x1]
      %v382 = vld [vmem:[%s219 + $0x30] sm:$0xf]
      %v383 = vld [vmem:[%s219 + $0x34] sm:$0xf]
      %v384 = vld [vmem:[%s219 + $0x38] sm:$0x1]
      %v385 = vld [vmem:[%s219 + $0x3c] sm:$0xf]
      %v386 = vld [vmem:[%s219 + $0x40] sm:$0xf]
      %v387 = vld [vmem:[%s219 + $0x44] sm:$0x1]
      %v388 = vld [vmem:[%s219 + $0x48] sm:$0xf]
      %v389 = vld [vmem:[%s219 + $0x4c] sm:$0xf]
      %v390 = vld [vmem:[%s219 + $0x50] sm:$0x1]
      %v391 = vld [vmem:[%s219 + $0x54] sm:$0xf]
      %v392 = vld [vmem:[%s219 + $0x58] sm:$0xf]
      %v393 = vld [vmem:[%s219 + $0x5c] sm:$0x1]
      %v394 = vld [vmem:[%s219 + $0x60] sm:$0xf]
      %v395 = vld [vmem:[%s219 + $0x64] sm:$0xf]
      %v396 = vld [vmem:[%s219 + $0x68] sm:$0x1]
      %v397 = vld [vmem:[%s219 + $0x6c] sm:$0xf]
      %v398 = vld [vmem:[%s219 + $0x70] sm:$0xf]
      %v399 = vld [vmem:[%s219 + $0x74] sm:$0x1]
      %v400 = vld [vmem:[%s219 + $0x78] sm:$0xf]
      %v401 = vld [vmem:[%s219 + $0x7c] sm:$0xf]
      %v402 = vld [vmem:[%s219 + $0x80] sm:$0x1]
      %v403 = vld [vmem:[%s219 + $0x84] sm:$0xf]
      %v404 = vld [vmem:[%s219 + $0x88] sm:$0xf]
      %v405 = vld [vmem:[%s219 + $0x8c] sm:$0x1]
      %v406 = vld [vmem:[%s219 + $0x90] sm:$0xf]
      %v407 = vld [vmem:[%s219 + $0x94] sm:$0xf]
      %v408 = vld [vmem:[%s219 + $0x98] sm:$0x1]
      %v409 = vld [vmem:[%s219 + $0x9c] sm:$0xf]
      %v410 = vld [vmem:[%s219 + $0xa0] sm:$0xf]
      %v411 = vld [vmem:[%s219 + $0xa4] sm:$0x1]
      %v412 = vld [vmem:[%s219 + $0xa8] sm:$0xf]
      %v413 = vld [vmem:[%s219 + $0xac] sm:$0xf]
      %v414 = vld [vmem:[%s219 + $0xb0] sm:$0x1]
      %v415 = vld [vmem:[%s219 + $0xb4] sm:$0xf]
      %v416 = vld [vmem:[%s219 + $0xb8] sm:$0xf]
      %v417 = vld [vmem:[%s219 + $0xbc] sm:$0x1]
      %vm418 = vsmask.f32 3328
      %vm419 = vsmask.f32 7440
      %vm420 = vmor %vm418, %vm419
      %v422 = vshrl.u32 %v370, 16
      %v424 = vrot.slane %v422, 4
      %v425 = vshll.u32 %v370, 16
      %v427 = vrot.slane %v425, 5
      %v428 = vor.u32 %v424, %v427
      %v429 = vrot.slane %v428, 4
      %v431 = vshll.u32 %v371, 16
      %v433 = vrot.slane %v431, 5
      %v434 = vsel %vm420, %v429, %v433
      %v435 = vshrl.u32 %v371, 16
      %v437 = vrot.slane %v435, 4
      %v438 = vor.u32 %v437, %v433
      %v439 = vrot.slane %v438, 4
      %v441 = vshll.u32 %v372, 16
      %v443 = vrot.slane %v441, 5
      %v444 = vsel %vm420, %v439, %v443
      %v446 = vshrl.u32 %v373, 16
      %v448 = vrot.slane %v446, 4
      %v449 = vshll.u32 %v373, 16
      %v451 = vrot.slane %v449, 5
      %v452 = vor.u32 %v448, %v451
      %v453 = vrot.slane %v452, 4
      %v455 = vshll.u32 %v374, 16
      %v457 = vrot.slane %v455, 5
      %v458 = vsel %vm420, %v453, %v457
      %v459 = vshrl.u32 %v374, 16
      %v461 = vrot.slane %v459, 4
      %v462 = vor.u32 %v461, %v457
      %v463 = vrot.slane %v462, 4
      %v465 = vshll.u32 %v375, 16
      %v467 = vrot.slane %v465, 5
      %v468 = vsel %vm420, %v463, %v467
      %v470 = vshrl.u32 %v376, 16
      %v472 = vrot.slane %v470, 4
      %v473 = vshll.u32 %v376, 16
      %v475 = vrot.slane %v473, 5
      %v476 = vor.u32 %v472, %v475
      %v477 = vrot.slane %v476, 4
      %v479 = vshll.u32 %v377, 16
      %v481 = vrot.slane %v479, 5
      %v482 = vsel %vm420, %v477, %v481
      %v483 = vshrl.u32 %v377, 16
      %v485 = vrot.slane %v483, 4
      %v486 = vor.u32 %v485, %v481
      %v487 = vrot.slane %v486, 4
      %v489 = vshll.u32 %v378, 16
      %v491 = vrot.slane %v489, 5
      %v492 = vsel %vm420, %v487, %v491
      %v494 = vshrl.u32 %v379, 16
      %v496 = vrot.slane %v494, 4
      %v497 = vshll.u32 %v379, 16
      %v499 = vrot.slane %v497, 5
      %v500 = vor.u32 %v496, %v499
      %v501 = vrot.slane %v500, 4
      %v503 = vshll.u32 %v380, 16
      %v505 = vrot.slane %v503, 5
      %v506 = vsel %vm420, %v501, %v505
      %v507 = vshrl.u32 %v380, 16
      %v509 = vrot.slane %v507, 4
      %v510 = vor.u32 %v509, %v505
      %v511 = vrot.slane %v510, 4
      %v513 = vshll.u32 %v381, 16
      %v515 = vrot.slane %v513, 5
      %v516 = vsel %vm420, %v511, %v515
      %v518 = vshrl.u32 %v382, 16
      %v520 = vrot.slane %v518, 4
      %v521 = vshll.u32 %v382, 16
      %v523 = vrot.slane %v521, 5
      %v524 = vor.u32 %v520, %v523
      %v525 = vrot.slane %v524, 4
      %v527 = vshll.u32 %v383, 16
      %v529 = vrot.slane %v527, 5
      %v530 = vsel %vm420, %v525, %v529
      %v531 = vshrl.u32 %v383, 16
      %v533 = vrot.slane %v531, 4
      %v534 = vor.u32 %v533, %v529
      %v535 = vrot.slane %v534, 4
      %v537 = vshll.u32 %v384, 16
      %v539 = vrot.slane %v537, 5
      %v540 = vsel %vm420, %v535, %v539
      %v542 = vshrl.u32 %v385, 16
      %v544 = vrot.slane %v542, 4
      %v545 = vshll.u32 %v385, 16
      %v547 = vrot.slane %v545, 5
      %v548 = vor.u32 %v544, %v547
      %v549 = vrot.slane %v548, 4
      %v551 = vshll.u32 %v386, 16
      %v553 = vrot.slane %v551, 5
      %v554 = vsel %vm420, %v549, %v553
      %v555 = vshrl.u32 %v386, 16
      %v557 = vrot.slane %v555, 4
      %v558 = vor.u32 %v557, %v553
      %v559 = vrot.slane %v558, 4
      %v561 = vshll.u32 %v387, 16
      %v563 = vrot.slane %v561, 5
      %v564 = vsel %vm420, %v559, %v563
      %v566 = vshrl.u32 %v388, 16
      %v568 = vrot.slane %v566, 4
      %v569 = vshll.u32 %v388, 16
      %v571 = vrot.slane %v569, 5
      %v572 = vor.u32 %v568, %v571
      %v573 = vrot.slane %v572, 4
      %v575 = vshll.u32 %v389, 16
      %v577 = vrot.slane %v575, 5
      %v578 = vsel %vm420, %v573, %v577
      %v579 = vshrl.u32 %v389, 16
      %v581 = vrot.slane %v579, 4
      %v582 = vor.u32 %v581, %v577
      %v583 = vrot.slane %v582, 4
      %v585 = vshll.u32 %v390, 16
      %v587 = vrot.slane %v585, 5
      %v588 = vsel %vm420, %v583, %v587
      %v590 = vshrl.u32 %v391, 16
      %v592 = vrot.slane %v590, 4
      %v593 = vshll.u32 %v391, 16
      %v595 = vrot.slane %v593, 5
      %v596 = vor.u32 %v592, %v595
      %v597 = vrot.slane %v596, 4
      %v599 = vshll.u32 %v392, 16
      %v601 = vrot.slane %v599, 5
      %v602 = vsel %vm420, %v597, %v601
      %v603 = vshrl.u32 %v392, 16
      %v605 = vrot.slane %v603, 4
      %v606 = vor.u32 %v605, %v601
      %v607 = vrot.slane %v606, 4
      %v609 = vshll.u32 %v393, 16
      %v611 = vrot.slane %v609, 5
      %v612 = vsel %vm420, %v607, %v611
      %v614 = vshrl.u32 %v394, 16
      %v616 = vrot.slane %v614, 4
      %v617 = vshll.u32 %v394, 16
      %v619 = vrot.slane %v617, 5
      %v620 = vor.u32 %v616, %v619
      %v621 = vrot.slane %v620, 4
      %v623 = vshll.u32 %v395, 16
      %v625 = vrot.slane %v623, 5
      %v626 = vsel %vm420, %v621, %v625
      %v627 = vshrl.u32 %v395, 16
      %v629 = vrot.slane %v627, 4
      %v630 = vor.u32 %v629, %v625
      %v631 = vrot.slane %v630, 4
      %v633 = vshll.u32 %v396, 16
      %v635 = vrot.slane %v633, 5
      %v636 = vsel %vm420, %v631, %v635
      %v638 = vshrl.u32 %v397, 16
      %v640 = vrot.slane %v638, 4
      %v641 = vshll.u32 %v397, 16
      %v643 = vrot.slane %v641, 5
      %v644 = vor.u32 %v640, %v643
      %v645 = vrot.slane %v644, 4
      %v647 = vshll.u32 %v398, 16
      %v649 = vrot.slane %v647, 5
      %v650 = vsel %vm420, %v645, %v649
      %v651 = vshrl.u32 %v398, 16
      %v653 = vrot.slane %v651, 4
      %v654 = vor.u32 %v653, %v649
      %v655 = vrot.slane %v654, 4
      %v657 = vshll.u32 %v399, 16
      %v659 = vrot.slane %v657, 5
      %v660 = vsel %vm420, %v655, %v659
      %v662 = vshrl.u32 %v400, 16
      %v664 = vrot.slane %v662, 4
      %v665 = vshll.u32 %v400, 16
      %v667 = vrot.slane %v665, 5
      %v668 = vor.u32 %v664, %v667
      %v669 = vrot.slane %v668, 4
      %v671 = vshll.u32 %v401, 16
      %v673 = vrot.slane %v671, 5
      %v674 = vsel %vm420, %v669, %v673
      %v675 = vshrl.u32 %v401, 16
      %v677 = vrot.slane %v675, 4
      %v678 = vor.u32 %v677, %v673
      %v679 = vrot.slane %v678, 4
      %v681 = vshll.u32 %v402, 16
      %v683 = vrot.slane %v681, 5
      %v684 = vsel %vm420, %v679, %v683
      %v686 = vshrl.u32 %v403, 16
      %v688 = vrot.slane %v686, 4
      %v689 = vshll.u32 %v403, 16
      %v691 = vrot.slane %v689, 5
      %v692 = vor.u32 %v688, %v691
      %v693 = vrot.slane %v692, 4
      %v695 = vshll.u32 %v404, 16
      %v697 = vrot.slane %v695, 5
      %v698 = vsel %vm420, %v693, %v697
      %v699 = vshrl.u32 %v404, 16
      %v701 = vrot.slane %v699, 4
      %v702 = vor.u32 %v701, %v697
      %v703 = vrot.slane %v702, 4
      %v705 = vshll.u32 %v405, 16
      %v707 = vrot.slane %v705, 5
      %v708 = vsel %vm420, %v703, %v707
      %v710 = vshrl.u32 %v406, 16
      %v712 = vrot.slane %v710, 4
      %v713 = vshll.u32 %v406, 16
      %v715 = vrot.slane %v713, 5
      %v716 = vor.u32 %v712, %v715
      %v717 = vrot.slane %v716, 4
      %v719 = vshll.u32 %v407, 16
      %v721 = vrot.slane %v719, 5
      %v722 = vsel %vm420, %v717, %v721
      %v723 = vshrl.u32 %v407, 16
      %v725 = vrot.slane %v723, 4
      %v726 = vor.u32 %v725, %v721
      %v727 = vrot.slane %v726, 4
      %v729 = vshll.u32 %v408, 16
      %v731 = vrot.slane %v729, 5
      %v732 = vsel %vm420, %v727, %v731
      %v734 = vshrl.u32 %v409, 16
      %v736 = vrot.slane %v734, 4
      %v737 = vshll.u32 %v409, 16
      %v739 = vrot.slane %v737, 5
      %v740 = vor.u32 %v736, %v739
      %v741 = vrot.slane %v740, 4
      %v743 = vshll.u32 %v410, 16
      %v745 = vrot.slane %v743, 5
      %v746 = vsel %vm420, %v741, %v745
      %v747 = vshrl.u32 %v410, 16
      %v749 = vrot.slane %v747, 4
      %v750 = vor.u32 %v749, %v745
      %v751 = vrot.slane %v750, 4
      %v753 = vshll.u32 %v411, 16
      %v755 = vrot.slane %v753, 5
      %v756 = vsel %vm420, %v751, %v755
      %v758 = vshrl.u32 %v412, 16
      %v760 = vrot.slane %v758, 4
      %v761 = vshll.u32 %v412, 16
      %v763 = vrot.slane %v761, 5
      %v764 = vor.u32 %v760, %v763
      %v765 = vrot.slane %v764, 4
      %v767 = vshll.u32 %v413, 16
      %v769 = vrot.slane %v767, 5
      %v770 = vsel %vm420, %v765, %v769
      %v771 = vshrl.u32 %v413, 16
      %v773 = vrot.slane %v771, 4
      %v774 = vor.u32 %v773, %v769
      %v775 = vrot.slane %v774, 4
      %v777 = vshll.u32 %v414, 16
      %v779 = vrot.slane %v777, 5
      %v780 = vsel %vm420, %v775, %v779
      %v782 = vshrl.u32 %v415, 16
      %v784 = vrot.slane %v782, 4
      %v785 = vshll.u32 %v415, 16
      %v787 = vrot.slane %v785, 5
      %v788 = vor.u32 %v784, %v787
      %v789 = vrot.slane %v788, 4
      %v791 = vshll.u32 %v416, 16
      %v793 = vrot.slane %v791, 5
      %v794 = vsel %vm420, %v789, %v793
      %v795 = vshrl.u32 %v416, 16
      %v797 = vrot.slane %v795, 4
      %v798 = vor.u32 %v797, %v793
      %v799 = vrot.slane %v798, 4
      %v801 = vshll.u32 %v417, 16
      %v803 = vrot.slane %v801, 5
      %v804 = vsel %vm420, %v799, %v803
      %v805 = vunpack.c.l.b16 %v434
      %v806 = vunpack.c.l.b16 %v444
      %v807 = vunpack.c.l.b16 %v458
      %v808 = vunpack.c.l.b16 %v468
      %v809 = vunpack.c.l.b16 %v482
      %v810 = vunpack.c.l.b16 %v492
      %v811 = vunpack.c.l.b16 %v506
      %v812 = vunpack.c.l.b16 %v516
      %v813 = vunpack.c.l.b16 %v530
      %v814 = vunpack.c.l.b16 %v540
      %v815 = vunpack.c.l.b16 %v554
      %v816 = vunpack.c.l.b16 %v564
      %v817 = vunpack.c.l.b16 %v578
      %v818 = vunpack.c.l.b16 %v588
      %v819 = vunpack.c.l.b16 %v602
      %v820 = vunpack.c.l.b16 %v612
      %v821 = vunpack.c.l.b16 %v626
      %v822 = vunpack.c.l.b16 %v636
      %v823 = vunpack.c.l.b16 %v650
      %v824 = vunpack.c.l.b16 %v660
      %v825 = vunpack.c.l.b16 %v674
      %v826 = vunpack.c.l.b16 %v684
      %v827 = vunpack.c.l.b16 %v698
      %v828 = vunpack.c.l.b16 %v708
      %v829 = vunpack.c.l.b16 %v722
      %v830 = vunpack.c.l.b16 %v732
      %v831 = vunpack.c.l.b16 %v746
      %v832 = vunpack.c.l.b16 %v756
      %v833 = vunpack.c.l.b16 %v770
      %v834 = vunpack.c.l.b16 %v780
      %v835 = vunpack.c.l.b16 %v794
      %v836 = vunpack.c.l.b16 %v804
      %v837 = vpack.c.b16 %v806, %v805
      %v838 = vpack.c.b16 %v808, %v807
      %v839 = vpack.c.b16 %v810, %v809
      %v840 = vpack.c.b16 %v812, %v811
      %v841 = vpack.c.b16 %v814, %v813
      %v842 = vpack.c.b16 %v816, %v815
      %v843 = vpack.c.b16 %v818, %v817
      %v844 = vpack.c.b16 %v820, %v819
      %v845 = vpack.c.b16 %v822, %v821
      %v846 = vpack.c.b16 %v824, %v823
      %v847 = vpack.c.b16 %v826, %v825
      %v848 = vpack.c.b16 %v828, %v827
      %v849 = vpack.c.b16 %v830, %v829
      %v850 = vpack.c.b16 %v832, %v831
      %v851 = vpack.c.b16 %v834, %v833
      %v852 = vpack.c.b16 %v836, %v835
      %869 = vst [vmem:[#allocation2 + $0x8] sm:$0xff] %v837
      %870 = vst [vmem:[#allocation2 + $0x50] sm:$0xff] %v838
      %871 = vst [vmem:[#allocation2 + $0x98] sm:$0xff] %v839
      %872 = vst [vmem:[#allocation2 + $0xe0] sm:$0xff] %v840
      %873 = vst [vmem:[#allocation2 + $0x128] sm:$0xff] %v841
      %874 = vst [vmem:[#allocation2 + $0x170] sm:$0xff] %v842
      %875 = vst [vmem:[#allocation2 + $0x1b8] sm:$0xff] %v843
      %876 = vst [vmem:[#allocation2 + $0x200] sm:$0xff] %v844
      %877 = vst [vmem:[#allocation2 + $0x248] sm:$0xff] %v845
      %878 = vst [vmem:[#allocation2 + $0x290] sm:$0xff] %v846
      %879 = vst [vmem:[#allocation2 + $0x2d8] sm:$0xff] %v847
      %880 = vst [vmem:[#allocation2 + $0x320] sm:$0xff] %v848
      %881 = vst [vmem:[#allocation2 + $0x368] sm:$0xff] %v849
      %882 = vst [vmem:[#allocation2 + $0x3b0] sm:$0xff] %v850
      %883 = vst [vmem:[#allocation2 + $0x3f8] sm:$0xff] %v851
      %884 = vst [vmem:[#allocation2 + $0x440] sm:$0xff] %v852
      %v885 = vld [vmem:[%s219] sm:$0xe]
      %v886 = vld [vmem:[%s219 + $0x4] sm:$0xf]
      %v887 = vld [vmem:[%s219 + $0x8] sm:$0x1]
      %v888 = vld [vmem:[%s219 + $0xc] sm:$0xe]
      %v889 = vld [vmem:[%s219 + $0x10] sm:$0xf]
      %v890 = vld [vmem:[%s219 + $0x14] sm:$0x1]
      %v891 = vld [vmem:[%s219 + $0x18] sm:$0xe]
      %v892 = vld [vmem:[%s219 + $0x1c] sm:$0xf]
      %v893 = vld [vmem:[%s219 + $0x20] sm:$0x1]
      %v894 = vld [vmem:[%s219 + $0x24] sm:$0xe]
      %v895 = vld [vmem:[%s219 + $0x28] sm:$0xf]
      %v896 = vld [vmem:[%s219 + $0x2c] sm:$0x1]
      %v897 = vld [vmem:[%s219 + $0x30] sm:$0xe]
      %v898 = vld [vmem:[%s219 + $0x34] sm:$0xf]
      %v899 = vld [vmem:[%s219 + $0x38] sm:$0x1]
      %v900 = vld [vmem:[%s219 + $0x3c] sm:$0xe]
      %v901 = vld [vmem:[%s219 + $0x40] sm:$0xf]
      %v902 = vld [vmem:[%s219 + $0x44] sm:$0x1]
      %v903 = vld [vmem:[%s219 + $0x48] sm:$0xe]
      %v904 = vld [vmem:[%s219 + $0x4c] sm:$0xf]
      %v905 = vld [vmem:[%s219 + $0x50] sm:$0x1]
      %v906 = vld [vmem:[%s219 + $0x54] sm:$0xe]
      %v907 = vld [vmem:[%s219 + $0x58] sm:$0xf]
      %v908 = vld [vmem:[%s219 + $0x5c] sm:$0x1]
      %v909 = vld [vmem:[%s219 + $0x60] sm:$0xe]
      %v910 = vld [vmem:[%s219 + $0x64] sm:$0xf]
      %v911 = vld [vmem:[%s219 + $0x68] sm:$0x1]
      %v912 = vld [vmem:[%s219 + $0x6c] sm:$0xe]
      %v913 = vld [vmem:[%s219 + $0x70] sm:$0xf]
      %v914 = vld [vmem:[%s219 + $0x74] sm:$0x1]
      %v915 = vld [vmem:[%s219 + $0x78] sm:$0xe]
      %v916 = vld [vmem:[%s219 + $0x7c] sm:$0xf]
      %v917 = vld [vmem:[%s219 + $0x80] sm:$0x1]
      %v918 = vld [vmem:[%s219 + $0x84] sm:$0xe]
      %v919 = vld [vmem:[%s219 + $0x88] sm:$0xf]
      %v920 = vld [vmem:[%s219 + $0x8c] sm:$0x1]
      %v921 = vld [vmem:[%s219 + $0x90] sm:$0xe]
      %v922 = vld [vmem:[%s219 + $0x94] sm:$0xf]
      %v923 = vld [vmem:[%s219 + $0x98] sm:$0x1]
      %v924 = vld [vmem:[%s219 + $0x9c] sm:$0xe]
      %v925 = vld [vmem:[%s219 + $0xa0] sm:$0xf]
      %v926 = vld [vmem:[%s219 + $0xa4] sm:$0x1]
      %v927 = vld [vmem:[%s219 + $0xa8] sm:$0xe]
      %v928 = vld [vmem:[%s219 + $0xac] sm:$0xf]
      %v929 = vld [vmem:[%s219 + $0xb0] sm:$0x1]
      %v930 = vld [vmem:[%s219 + $0xb4] sm:$0xe]
      %v931 = vld [vmem:[%s219 + $0xb8] sm:$0xf]
      %v932 = vld [vmem:[%s219 + $0xbc] sm:$0x1]
      %vm981 = vcmask 1042432
      %vm982 = vcmask 1046532
      %vm983 = vmor %vm981, %vm982
      %v984 = vrot.slane %v885, 5
      %v985 = vrot.slane %v984, 4
      %v986 = vrot.slane %v886, 5
      %v987 = vsel %vm983, %v985, %v986
      %v988 = vrot.slane %v986, 4
      %v989 = vrot.slane %v887, 5
      %v990 = vsel %vm983, %v988, %v989
      %v991 = vrot.slane %v888, 5
      %v992 = vrot.slane %v991, 4
      %v993 = vrot.slane %v889, 5
      %v994 = vsel %vm983, %v992, %v993
      %v995 = vrot.slane %v993, 4
      %v996 = vrot.slane %v890, 5
      %v997 = vsel %vm983, %v995, %v996
      %v998 = vrot.slane %v891, 5
      %v999 = vrot.slane %v998, 4
      %v1000 = vrot.slane %v892, 5
      %v1001 = vsel %vm983, %v999, %v1000
      %v1002 = vrot.slane %v1000, 4
      %v1003 = vrot.slane %v893, 5
      %v1004 = vsel %vm983, %v1002, %v1003
      %v1005 = vrot.slane %v894, 5
      %v1006 = vrot.slane %v1005, 4
      %v1007 = vrot.slane %v895, 5
      %v1008 = vsel %vm983, %v1006, %v1007
      %v1009 = vrot.slane %v1007, 4
      %v1010 = vrot.slane %v896, 5
      %v1011 = vsel %vm983, %v1009, %v1010
      %v1012 = vrot.slane %v897, 5
      %v1013 = vrot.slane %v1012, 4
      %v1014 = vrot.slane %v898, 5
      %v1015 = vsel %vm983, %v1013, %v1014
      %v1016 = vrot.slane %v1014, 4
      %v1017 = vrot.slane %v899, 5
      %v1018 = vsel %vm983, %v1016, %v1017
      %v1019 = vrot.slane %v900, 5
      %v1020 = vrot.slane %v1019, 4
      %v1021 = vrot.slane %v901, 5
      %v1022 = vsel %vm983, %v1020, %v1021
      %v1023 = vrot.slane %v1021, 4
      %v1024 = vrot.slane %v902, 5
      %v1025 = vsel %vm983, %v1023, %v1024
      %v1026 = vrot.slane %v903, 5
      %v1027 = vrot.slane %v1026, 4
      %v1028 = vrot.slane %v904, 5
      %v1029 = vsel %vm983, %v1027, %v1028
      %v1030 = vrot.slane %v1028, 4
      %v1031 = vrot.slane %v905, 5
      %v1032 = vsel %vm983, %v1030, %v1031
      %v1033 = vrot.slane %v906, 5
      %v1034 = vrot.slane %v1033, 4
      %v1035 = vrot.slane %v907, 5
      %v1036 = vsel %vm983, %v1034, %v1035
      %v1037 = vrot.slane %v1035, 4
      %v1038 = vrot.slane %v908, 5
      %v1039 = vsel %vm983, %v1037, %v1038
      %v1040 = vrot.slane %v909, 5
      %v1041 = vrot.slane %v1040, 4
      %v1042 = vrot.slane %v910, 5
      %v1043 = vsel %vm983, %v1041, %v1042
      %v1044 = vrot.slane %v1042, 4
      %v1045 = vrot.slane %v911, 5
      %v1046 = vsel %vm983, %v1044, %v1045
      %v1047 = vrot.slane %v912, 5
      %v1048 = vrot.slane %v1047, 4
      %v1049 = vrot.slane %v913, 5
      %v1050 = vsel %vm983, %v1048, %v1049
      %v1051 = vrot.slane %v1049, 4
      %v1052 = vrot.slane %v914, 5
      %v1053 = vsel %vm983, %v1051, %v1052
      %v1054 = vrot.slane %v915, 5
      %v1055 = vrot.slane %v1054, 4
      %v1056 = vrot.slane %v916, 5
      %v1057 = vsel %vm983, %v1055, %v1056
      %v1058 = vrot.slane %v1056, 4
      %v1059 = vrot.slane %v917, 5
      %v1060 = vsel %vm983, %v1058, %v1059
      %v1061 = vrot.slane %v918, 5
      %v1062 = vrot.slane %v1061, 4
      %v1063 = vrot.slane %v919, 5
      %v1064 = vsel %vm983, %v1062, %v1063
      %v1065 = vrot.slane %v1063, 4
      %v1066 = vrot.slane %v920, 5
      %v1067 = vsel %vm983, %v1065, %v1066
      %v1068 = vrot.slane %v921, 5
      %v1069 = vrot.slane %v1068, 4
      %v1070 = vrot.slane %v922, 5
      %v1071 = vsel %vm983, %v1069, %v1070
      %v1072 = vrot.slane %v1070, 4
      %v1073 = vrot.slane %v923, 5
      %v1074 = vsel %vm983, %v1072, %v1073
      %v1075 = vrot.slane %v924, 5
      %v1076 = vrot.slane %v1075, 4
      %v1077 = vrot.slane %v925, 5
      %v1078 = vsel %vm983, %v1076, %v1077
      %v1079 = vrot.slane %v1077, 4
      %v1080 = vrot.slane %v926, 5
      %v1081 = vsel %vm983, %v1079, %v1080
      %v1082 = vrot.slane %v927, 5
      %v1083 = vrot.slane %v1082, 4
      %v1084 = vrot.slane %v928, 5
      %v1085 = vsel %vm983, %v1083, %v1084
      %v1086 = vrot.slane %v1084, 4
      %v1087 = vrot.slane %v929, 5
      %v1088 = vsel %vm983, %v1086, %v1087
      %v1089 = vrot.slane %v930, 5
      %v1090 = vrot.slane %v1089, 4
      %v1091 = vrot.slane %v931, 5
      %v1092 = vsel %vm983, %v1090, %v1091
      %v1093 = vrot.slane %v1091, 4
      %v1094 = vrot.slane %v932, 5
      %v1095 = vsel %vm983, %v1093, %v1094
      %v1096 = vunpack.c.l.b16 %v987
      %v1097 = vunpack.c.l.b16 %v990
      %v1098 = vunpack.c.l.b16 %v994
      %v1099 = vunpack.c.l.b16 %v997
      %v1100 = vunpack.c.l.b16 %v1001
      %v1101 = vunpack.c.l.b16 %v1004
      %v1102 = vunpack.c.l.b16 %v1008
      %v1103 = vunpack.c.l.b16 %v1011
      %v1104 = vunpack.c.l.b16 %v1015
      %v1105 = vunpack.c.l.b16 %v1018
      %v1106 = vunpack.c.l.b16 %v1022
      %v1107 = vunpack.c.l.b16 %v1025
      %v1108 = vunpack.c.l.b16 %v1029
      %v1109 = vunpack.c.l.b16 %v1032
      %v1110 = vunpack.c.l.b16 %v1036
      %v1111 = vunpack.c.l.b16 %v1039
      %v1112 = vunpack.c.l.b16 %v1043
      %v1113 = vunpack.c.l.b16 %v1046
      %v1114 = vunpack.c.l.b16 %v1050
      %v1115 = vunpack.c.l.b16 %v1053
      %v1116 = vunpack.c.l.b16 %v1057
      %v1117 = vunpack.c.l.b16 %v1060
      %v1118 = vunpack.c.l.b16 %v1064
      %v1119 = vunpack.c.l.b16 %v1067
      %v1120 = vunpack.c.l.b16 %v1071
      %v1121 = vunpack.c.l.b16 %v1074
      %v1122 = vunpack.c.l.b16 %v1078
      %v1123 = vunpack.c.l.b16 %v1081
      %v1124 = vunpack.c.l.b16 %v1085
      %v1125 = vunpack.c.l.b16 %v1088
      %v1126 = vunpack.c.l.b16 %v1092
      %v1127 = vunpack.c.l.b16 %v1095
      %v1128 = vpack.c.b16 %v1097, %v1096
      %v1129 = vpack.c.b16 %v1099, %v1098
      %v1130 = vpack.c.b16 %v1101, %v1100
      %v1131 = vpack.c.b16 %v1103, %v1102
      %v1132 = vpack.c.b16 %v1105, %v1104
      %v1133 = vpack.c.b16 %v1107, %v1106
      %v1134 = vpack.c.b16 %v1109, %v1108
      %v1135 = vpack.c.b16 %v1111, %v1110
      %v1136 = vpack.c.b16 %v1113, %v1112
      %v1137 = vpack.c.b16 %v1115, %v1114
      %v1138 = vpack.c.b16 %v1117, %v1116
      %v1139 = vpack.c.b16 %v1119, %v1118
      %v1140 = vpack.c.b16 %v1121, %v1120
      %v1141 = vpack.c.b16 %v1123, %v1122
      %v1142 = vpack.c.b16 %v1125, %v1124
      %v1143 = vpack.c.b16 %v1127, %v1126
      %1160 = vst [vmem:[#allocation2 + $0x10] sm:$0xff] %v1128
      %1161 = vst [vmem:[#allocation2 + $0x58] sm:$0xff] %v1129
      %1162 = vst [vmem:[#allocation2 + $0xa0] sm:$0xff] %v1130
      %1163 = vst [vmem:[#allocation2 + $0xe8] sm:$0xff] %v1131
      %1164 = vst [vmem:[#allocation2 + $0x130] sm:$0xff] %v1132
      %1165 = vst [vmem:[#allocation2 + $0x178] sm:$0xff] %v1133
      %1166 = vst [vmem:[#allocation2 + $0x1c0] sm:$0xff] %v1134
      %1167 = vst [vmem:[#allocation2 + $0x208] sm:$0xff] %v1135
      %1168 = vst [vmem:[#allocation2 + $0x250] sm:$0xff] %v1136
      %1169 = vst [vmem:[#allocation2 + $0x298] sm:$0xff] %v1137
      %1170 = vst [vmem:[#allocation2 + $0x2e0] sm:$0xff] %v1138
      %1171 = vst [vmem:[#allocation2 + $0x328] sm:$0xff] %v1139
      %1172 = vst [vmem:[#allocation2 + $0x370] sm:$0xff] %v1140
      %1173 = vst [vmem:[#allocation2 + $0x3b8] sm:$0xff] %v1141
      %1174 = vst [vmem:[#allocation2 + $0x400] sm:$0xff] %v1142
      %1175 = vst [vmem:[#allocation2 + $0x448] sm:$0xff] %v1143
      %s1176 = scalar_lea.vmem %s219, 12
      %v1177 = vld [vmem:[%s1176] sm:$0xf]
      %v1178 = vld [vmem:[%s1176 + $0x4] sm:$0xf]
      %v1179 = vld [vmem:[%s1176 + $0xc] sm:$0xf]
      %v1180 = vld [vmem:[%s1176 + $0x10] sm:$0xf]
      %v1181 = vld [vmem:[%s1176 + $0x18] sm:$0xf]
      %v1182 = vld [vmem:[%s1176 + $0x1c] sm:$0xf]
      %v1183 = vld [vmem:[%s1176 + $0x24] sm:$0xf]
      %v1184 = vld [vmem:[%s1176 + $0x28] sm:$0xf]
      %v1185 = vld [vmem:[%s1176 + $0x30] sm:$0xf]
      %v1186 = vld [vmem:[%s1176 + $0x34] sm:$0xf]
      %v1187 = vld [vmem:[%s1176 + $0x3c] sm:$0xf]
      %v1188 = vld [vmem:[%s1176 + $0x40] sm:$0xf]
      %v1189 = vld [vmem:[%s1176 + $0x48] sm:$0xf]
      %v1190 = vld [vmem:[%s1176 + $0x4c] sm:$0xf]
      %v1191 = vld [vmem:[%s1176 + $0x54] sm:$0xf]
      %v1192 = vld [vmem:[%s1176 + $0x58] sm:$0xf]
      %v1193 = vld [vmem:[%s1176 + $0x60] sm:$0xf]
      %v1194 = vld [vmem:[%s1176 + $0x64] sm:$0xf]
      %v1195 = vld [vmem:[%s1176 + $0x6c] sm:$0xf]
      %v1196 = vld [vmem:[%s1176 + $0x70] sm:$0xf]
      %v1197 = vld [vmem:[%s1176 + $0x78] sm:$0xf]
      %v1198 = vld [vmem:[%s1176 + $0x7c] sm:$0xf]
      %v1199 = vld [vmem:[%s1176 + $0x84] sm:$0xf]
      %v1200 = vld [vmem:[%s1176 + $0x88] sm:$0xf]
      %v1201 = vld [vmem:[%s1176 + $0x90] sm:$0xf]
      %v1202 = vld [vmem:[%s1176 + $0x94] sm:$0xf]
      %v1203 = vld [vmem:[%s1176 + $0x9c] sm:$0xf]
      %v1204 = vld [vmem:[%s1176 + $0xa0] sm:$0xf]
      %v1205 = vld [vmem:[%s1176 + $0xa8] sm:$0xf]
      %v1206 = vld [vmem:[%s1176 + $0xac] sm:$0xf]
      %v1207 = vld [vmem:[%s1176 + $0xb4] sm:$0xf]
      %v1208 = vld [vmem:[%s1176 + $0xb8] sm:$0xf]
      %v1241 = vunpack.c.l.b16 %v1177
      %v1242 = vunpack.c.l.b16 %v1178
      %v1243 = vunpack.c.l.b16 %v1179
      %v1244 = vunpack.c.l.b16 %v1180
      %v1245 = vunpack.c.l.b16 %v1181
      %v1246 = vunpack.c.l.b16 %v1182
      %v1247 = vunpack.c.l.b16 %v1183
      %v1248 = vunpack.c.l.b16 %v1184
      %v1249 = vunpack.c.l.b16 %v1185
      %v1250 = vunpack.c.l.b16 %v1186
      %v1251 = vunpack.c.l.b16 %v1187
      %v1252 = vunpack.c.l.b16 %v1188
      %v1253 = vunpack.c.l.b16 %v1189
      %v1254 = vunpack.c.l.b16 %v1190
      %v1255 = vunpack.c.l.b16 %v1191
      %v1256 = vunpack.c.l.b16 %v1192
      %v1257 = vunpack.c.l.b16 %v1193
      %v1258 = vunpack.c.l.b16 %v1194
      %v1259 = vunpack.c.l.b16 %v1195
      %v1260 = vunpack.c.l.b16 %v1196
      %v1261 = vunpack.c.l.b16 %v1197
      %v1262 = vunpack.c.l.b16 %v1198
      %v1263 = vunpack.c.l.b16 %v1199
      %v1264 = vunpack.c.l.b16 %v1200
      %v1265 = vunpack.c.l.b16 %v1201
      %v1266 = vunpack.c.l.b16 %v1202
      %v1267 = vunpack.c.l.b16 %v1203
      %v1268 = vunpack.c.l.b16 %v1204
      %v1269 = vunpack.c.l.b16 %v1205
      %v1270 = vunpack.c.l.b16 %v1206
      %v1271 = vunpack.c.l.b16 %v1207
      %v1272 = vunpack.c.l.b16 %v1208
      %v1273 = vpack.c.b16 %v1242, %v1241
      %v1274 = vpack.c.b16 %v1244, %v1243
      %v1275 = vpack.c.b16 %v1246, %v1245
      %v1276 = vpack.c.b16 %v1248, %v1247
      %v1277 = vpack.c.b16 %v1250, %v1249
      %v1278 = vpack.c.b16 %v1252, %v1251
      %v1279 = vpack.c.b16 %v1254, %v1253
      %v1280 = vpack.c.b16 %v1256, %v1255
      %v1281 = vpack.c.b16 %v1258, %v1257
      %v1282 = vpack.c.b16 %v1260, %v1259
      %v1283 = vpack.c.b16 %v1262, %v1261
      %v1284 = vpack.c.b16 %v1264, %v1263
      %v1285 = vpack.c.b16 %v1266, %v1265
      %v1286 = vpack.c.b16 %v1268, %v1267
      %v1287 = vpack.c.b16 %v1270, %v1269
      %v1288 = vpack.c.b16 %v1272, %v1271
      %1305 = vst [vmem:[#allocation2 + $0x18] sm:$0xff] %v1273
      %1306 = vst [vmem:[#allocation2 + $0x60] sm:$0xff] %v1274
      %1307 = vst [vmem:[#allocation2 + $0xa8] sm:$0xff] %v1275
      %1308 = vst [vmem:[#allocation2 + $0xf0] sm:$0xff] %v1276
      %1309 = vst [vmem:[#allocation2 + $0x138] sm:$0xff] %v1277
      %1310 = vst [vmem:[#allocation2 + $0x180] sm:$0xff] %v1278
      %1311 = vst [vmem:[#allocation2 + $0x1c8] sm:$0xff] %v1279
      %1312 = vst [vmem:[#allocation2 + $0x210] sm:$0xff] %v1280
      %1313 = vst [vmem:[#allocation2 + $0x258] sm:$0xff] %v1281
      %1314 = vst [vmem:[#allocation2 + $0x2a0] sm:$0xff] %v1282
      %1315 = vst [vmem:[#allocation2 + $0x2e8] sm:$0xff] %v1283
      %1316 = vst [vmem:[#allocation2 + $0x330] sm:$0xff] %v1284
      %1317 = vst [vmem:[#allocation2 + $0x378] sm:$0xff] %v1285
      %1318 = vst [vmem:[#allocation2 + $0x3c0] sm:$0xff] %v1286
      %1319 = vst [vmem:[#allocation2 + $0x408] sm:$0xff] %v1287
      %1320 = vst [vmem:[#allocation2 + $0x450] sm:$0xff] %v1288
      %v1321 = vld [vmem:[%s1176] sm:$0xf]
      %v1322 = vld [vmem:[%s1176 + $0x4] sm:$0xf]
      %v1323 = vld [vmem:[%s1176 + $0x8] sm:$0x1]
      %v1324 = vld [vmem:[%s1176 + $0xc] sm:$0xf]
      %v1325 = vld [vmem:[%s1176 + $0x10] sm:$0xf]
      %v1326 = vld [vmem:[%s1176 + $0x14] sm:$0x1]
      %v1327 = vld [vmem:[%s1176 + $0x18] sm:$0xf]
      %v1328 = vld [vmem:[%s1176 + $0x1c] sm:$0xf]
      %v1329 = vld [vmem:[%s1176 + $0x20] sm:$0x1]
      %v1330 = vld [vmem:[%s1176 + $0x24] sm:$0xf]
      %v1331 = vld [vmem:[%s1176 + $0x28] sm:$0xf]
      %v1332 = vld [vmem:[%s1176 + $0x2c] sm:$0x1]
      %v1333 = vld [vmem:[%s1176 + $0x30] sm:$0xf]
      %v1334 = vld [vmem:[%s1176 + $0x34] sm:$0xf]
      %v1335 = vld [vmem:[%s1176 + $0x38] sm:$0x1]
      %v1336 = vld [vmem:[%s1176 + $0x3c] sm:$0xf]
      %v1337 = vld [vmem:[%s1176 + $0x40] sm:$0xf]
      %v1338 = vld [vmem:[%s1176 + $0x44] sm:$0x1]
      %v1339 = vld [vmem:[%s1176 + $0x48] sm:$0xf]
      %v1340 = vld [vmem:[%s1176 + $0x4c] sm:$0xf]
      %v1341 = vld [vmem:[%s1176 + $0x50] sm:$0x1]
      %v1342 = vld [vmem:[%s1176 + $0x54] sm:$0xf]
      %v1343 = vld [vmem:[%s1176 + $0x58] sm:$0xf]
      %v1344 = vld [vmem:[%s1176 + $0x5c] sm:$0x1]
      %v1345 = vld [vmem:[%s1176 + $0x60] sm:$0xf]
      %v1346 = vld [vmem:[%s1176 + $0x64] sm:$0xf]
      %v1347 = vld [vmem:[%s1176 + $0x68] sm:$0x1]
      %v1348 = vld [vmem:[%s1176 + $0x6c] sm:$0xf]
      %v1349 = vld [vmem:[%s1176 + $0x70] sm:$0xf]
      %v1350 = vld [vmem:[%s1176 + $0x74] sm:$0x1]
      %v1351 = vld [vmem:[%s1176 + $0x78] sm:$0xf]
      %v1352 = vld [vmem:[%s1176 + $0x7c] sm:$0xf]
      %v1353 = vld [vmem:[%s1176 + $0x80] sm:$0x1]
      %v1354 = vld [vmem:[%s1176 + $0x84] sm:$0xf]
      %v1355 = vld [vmem:[%s1176 + $0x88] sm:$0xf]
      %v1356 = vld [vmem:[%s1176 + $0x8c] sm:$0x1]
      %v1357 = vld [vmem:[%s1176 + $0x90] sm:$0xf]
      %v1358 = vld [vmem:[%s1176 + $0x94] sm:$0xf]
      %v1359 = vld [vmem:[%s1176 + $0x98] sm:$0x1]
      %v1360 = vld [vmem:[%s1176 + $0x9c] sm:$0xf]
      %v1361 = vld [vmem:[%s1176 + $0xa0] sm:$0xf]
      %v1362 = vld [vmem:[%s1176 + $0xa4] sm:$0x1]
      %v1363 = vld [vmem:[%s1176 + $0xa8] sm:$0xf]
      %v1364 = vld [vmem:[%s1176 + $0xac] sm:$0xf]
      %v1365 = vld [vmem:[%s1176 + $0xb0] sm:$0x1]
      %v1366 = vld [vmem:[%s1176 + $0xb4] sm:$0xf]
      %v1367 = vld [vmem:[%s1176 + $0xb8] sm:$0xf]
      %v1368 = vld [vmem:[%s1176 + $0xbc] sm:$0x1]
      %v1370 = vshrl.u32 %v1321, 16
      %v1372 = vrot.slane %v1370, 4
      %v1373 = vshll.u32 %v1321, 16
      %v1375 = vrot.slane %v1373, 5
      %v1376 = vor.u32 %v1372, %v1375
      %v1377 = vrot.slane %v1376, 4
      %v1379 = vshll.u32 %v1322, 16
      %v1381 = vrot.slane %v1379, 5
      %v1382 = vsel %vm420, %v1377, %v1381
      %v1383 = vshrl.u32 %v1322, 16
      %v1385 = vrot.slane %v1383, 4
      %v1386 = vor.u32 %v1385, %v1381
      %v1387 = vrot.slane %v1386, 4
      %v1389 = vshll.u32 %v1323, 16
      %v1391 = vrot.slane %v1389, 5
      %v1392 = vsel %vm420, %v1387, %v1391
      %v1394 = vshrl.u32 %v1324, 16
      %v1396 = vrot.slane %v1394, 4
      %v1397 = vshll.u32 %v1324, 16
      %v1399 = vrot.slane %v1397, 5
      %v1400 = vor.u32 %v1396, %v1399
      %v1401 = vrot.slane %v1400, 4
      %v1403 = vshll.u32 %v1325, 16
      %v1405 = vrot.slane %v1403, 5
      %v1406 = vsel %vm420, %v1401, %v1405
      %v1407 = vshrl.u32 %v1325, 16
      %v1409 = vrot.slane %v1407, 4
      %v1410 = vor.u32 %v1409, %v1405
      %v1411 = vrot.slane %v1410, 4
      %v1413 = vshll.u32 %v1326, 16
      %v1415 = vrot.slane %v1413, 5
      %v1416 = vsel %vm420, %v1411, %v1415
      %v1418 = vshrl.u32 %v1327, 16
      %v1420 = vrot.slane %v1418, 4
      %v1421 = vshll.u32 %v1327, 16
      %v1423 = vrot.slane %v1421, 5
      %v1424 = vor.u32 %v1420, %v1423
      %v1425 = vrot.slane %v1424, 4
      %v1427 = vshll.u32 %v1328, 16
      %v1429 = vrot.slane %v1427, 5
      %v1430 = vsel %vm420, %v1425, %v1429
      %v1431 = vshrl.u32 %v1328, 16
      %v1433 = vrot.slane %v1431, 4
      %v1434 = vor.u32 %v1433, %v1429
      %v1435 = vrot.slane %v1434, 4
      %v1437 = vshll.u32 %v1329, 16
      %v1439 = vrot.slane %v1437, 5
      %v1440 = vsel %vm420, %v1435, %v1439
      %v1442 = vshrl.u32 %v1330, 16
      %v1444 = vrot.slane %v1442, 4
      %v1445 = vshll.u32 %v1330, 16
      %v1447 = vrot.slane %v1445, 5
      %v1448 = vor.u32 %v1444, %v1447
      %v1449 = vrot.slane %v1448, 4
      %v1451 = vshll.u32 %v1331, 16
      %v1453 = vrot.slane %v1451, 5
      %v1454 = vsel %vm420, %v1449, %v1453
      %v1455 = vshrl.u32 %v1331, 16
      %v1457 = vrot.slane %v1455, 4
      %v1458 = vor.u32 %v1457, %v1453
      %v1459 = vrot.slane %v1458, 4
      %v1461 = vshll.u32 %v1332, 16
      %v1463 = vrot.slane %v1461, 5
      %v1464 = vsel %vm420, %v1459, %v1463
      %v1466 = vshrl.u32 %v1333, 16
      %v1468 = vrot.slane %v1466, 4
      %v1469 = vshll.u32 %v1333, 16
      %v1471 = vrot.slane %v1469, 5
      %v1472 = vor.u32 %v1468, %v1471
      %v1473 = vrot.slane %v1472, 4
      %v1475 = vshll.u32 %v1334, 16
      %v1477 = vrot.slane %v1475, 5
      %v1478 = vsel %vm420, %v1473, %v1477
      %v1479 = vshrl.u32 %v1334, 16
      %v1481 = vrot.slane %v1479, 4
      %v1482 = vor.u32 %v1481, %v1477
      %v1483 = vrot.slane %v1482, 4
      %v1485 = vshll.u32 %v1335, 16
      %v1487 = vrot.slane %v1485, 5
      %v1488 = vsel %vm420, %v1483, %v1487
      %v1490 = vshrl.u32 %v1336, 16
      %v1492 = vrot.slane %v1490, 4
      %v1493 = vshll.u32 %v1336, 16
      %v1495 = vrot.slane %v1493, 5
      %v1496 = vor.u32 %v1492, %v1495
      %v1497 = vrot.slane %v1496, 4
      %v1499 = vshll.u32 %v1337, 16
      %v1501 = vrot.slane %v1499, 5
      %v1502 = vsel %vm420, %v1497, %v1501
      %v1503 = vshrl.u32 %v1337, 16
      %v1505 = vrot.slane %v1503, 4
      %v1506 = vor.u32 %v1505, %v1501
      %v1507 = vrot.slane %v1506, 4
      %v1509 = vshll.u32 %v1338, 16
      %v1511 = vrot.slane %v1509, 5
      %v1512 = vsel %vm420, %v1507, %v1511
      %v1514 = vshrl.u32 %v1339, 16
      %v1516 = vrot.slane %v1514, 4
      %v1517 = vshll.u32 %v1339, 16
      %v1519 = vrot.slane %v1517, 5
      %v1520 = vor.u32 %v1516, %v1519
      %v1521 = vrot.slane %v1520, 4
      %v1523 = vshll.u32 %v1340, 16
      %v1525 = vrot.slane %v1523, 5
      %v1526 = vsel %vm420, %v1521, %v1525
      %v1527 = vshrl.u32 %v1340, 16
      %v1529 = vrot.slane %v1527, 4
      %v1530 = vor.u32 %v1529, %v1525
      %v1531 = vrot.slane %v1530, 4
      %v1533 = vshll.u32 %v1341, 16
      %v1535 = vrot.slane %v1533, 5
      %v1536 = vsel %vm420, %v1531, %v1535
      %v1538 = vshrl.u32 %v1342, 16
      %v1540 = vrot.slane %v1538, 4
      %v1541 = vshll.u32 %v1342, 16
      %v1543 = vrot.slane %v1541, 5
      %v1544 = vor.u32 %v1540, %v1543
      %v1545 = vrot.slane %v1544, 4
      %v1547 = vshll.u32 %v1343, 16
      %v1549 = vrot.slane %v1547, 5
      %v1550 = vsel %vm420, %v1545, %v1549
      %v1551 = vshrl.u32 %v1343, 16
      %v1553 = vrot.slane %v1551, 4
      %v1554 = vor.u32 %v1553, %v1549
      %v1555 = vrot.slane %v1554, 4
      %v1557 = vshll.u32 %v1344, 16
      %v1559 = vrot.slane %v1557, 5
      %v1560 = vsel %vm420, %v1555, %v1559
      %v1562 = vshrl.u32 %v1345, 16
      %v1564 = vrot.slane %v1562, 4
      %v1565 = vshll.u32 %v1345, 16
      %v1567 = vrot.slane %v1565, 5
      %v1568 = vor.u32 %v1564, %v1567
      %v1569 = vrot.slane %v1568, 4
      %v1571 = vshll.u32 %v1346, 16
      %v1573 = vrot.slane %v1571, 5
      %v1574 = vsel %vm420, %v1569, %v1573
      %v1575 = vshrl.u32 %v1346, 16
      %v1577 = vrot.slane %v1575, 4
      %v1578 = vor.u32 %v1577, %v1573
      %v1579 = vrot.slane %v1578, 4
      %v1581 = vshll.u32 %v1347, 16
      %v1583 = vrot.slane %v1581, 5
      %v1584 = vsel %vm420, %v1579, %v1583
      %v1586 = vshrl.u32 %v1348, 16
      %v1588 = vrot.slane %v1586, 4
      %v1589 = vshll.u32 %v1348, 16
      %v1591 = vrot.slane %v1589, 5
      %v1592 = vor.u32 %v1588, %v1591
      %v1593 = vrot.slane %v1592, 4
      %v1595 = vshll.u32 %v1349, 16
      %v1597 = vrot.slane %v1595, 5
      %v1598 = vsel %vm420, %v1593, %v1597
      %v1599 = vshrl.u32 %v1349, 16
      %v1601 = vrot.slane %v1599, 4
      %v1602 = vor.u32 %v1601, %v1597
      %v1603 = vrot.slane %v1602, 4
      %v1605 = vshll.u32 %v1350, 16
      %v1607 = vrot.slane %v1605, 5
      %v1608 = vsel %vm420, %v1603, %v1607
      %v1610 = vshrl.u32 %v1351, 16
      %v1612 = vrot.slane %v1610, 4
      %v1613 = vshll.u32 %v1351, 16
      %v1615 = vrot.slane %v1613, 5
      %v1616 = vor.u32 %v1612, %v1615
      %v1617 = vrot.slane %v1616, 4
      %v1619 = vshll.u32 %v1352, 16
      %v1621 = vrot.slane %v1619, 5
      %v1622 = vsel %vm420, %v1617, %v1621
      %v1623 = vshrl.u32 %v1352, 16
      %v1625 = vrot.slane %v1623, 4
      %v1626 = vor.u32 %v1625, %v1621
      %v1627 = vrot.slane %v1626, 4
      %v1629 = vshll.u32 %v1353, 16
      %v1631 = vrot.slane %v1629, 5
      %v1632 = vsel %vm420, %v1627, %v1631
      %v1634 = vshrl.u32 %v1354, 16
      %v1636 = vrot.slane %v1634, 4
      %v1637 = vshll.u32 %v1354, 16
      %v1639 = vrot.slane %v1637, 5
      %v1640 = vor.u32 %v1636, %v1639
      %v1641 = vrot.slane %v1640, 4
      %v1643 = vshll.u32 %v1355, 16
      %v1645 = vrot.slane %v1643, 5
      %v1646 = vsel %vm420, %v1641, %v1645
      %v1647 = vshrl.u32 %v1355, 16
      %v1649 = vrot.slane %v1647, 4
      %v1650 = vor.u32 %v1649, %v1645
      %v1651 = vrot.slane %v1650, 4
      %v1653 = vshll.u32 %v1356, 16
      %v1655 = vrot.slane %v1653, 5
      %v1656 = vsel %vm420, %v1651, %v1655
      %v1658 = vshrl.u32 %v1357, 16
      %v1660 = vrot.slane %v1658, 4
      %v1661 = vshll.u32 %v1357, 16
      %v1663 = vrot.slane %v1661, 5
      %v1664 = vor.u32 %v1660, %v1663
      %v1665 = vrot.slane %v1664, 4
      %v1667 = vshll.u32 %v1358, 16
      %v1669 = vrot.slane %v1667, 5
      %v1670 = vsel %vm420, %v1665, %v1669
      %v1671 = vshrl.u32 %v1358, 16
      %v1673 = vrot.slane %v1671, 4
      %v1674 = vor.u32 %v1673, %v1669
      %v1675 = vrot.slane %v1674, 4
      %v1677 = vshll.u32 %v1359, 16
      %v1679 = vrot.slane %v1677, 5
      %v1680 = vsel %vm420, %v1675, %v1679
      %v1682 = vshrl.u32 %v1360, 16
      %v1684 = vrot.slane %v1682, 4
      %v1685 = vshll.u32 %v1360, 16
      %v1687 = vrot.slane %v1685, 5
      %v1688 = vor.u32 %v1684, %v1687
      %v1689 = vrot.slane %v1688, 4
      %v1691 = vshll.u32 %v1361, 16
      %v1693 = vrot.slane %v1691, 5
      %v1694 = vsel %vm420, %v1689, %v1693
      %v1695 = vshrl.u32 %v1361, 16
      %v1697 = vrot.slane %v1695, 4
      %v1698 = vor.u32 %v1697, %v1693
      %v1699 = vrot.slane %v1698, 4
      %v1701 = vshll.u32 %v1362, 16
      %v1703 = vrot.slane %v1701, 5
      %v1704 = vsel %vm420, %v1699, %v1703
      %v1706 = vshrl.u32 %v1363, 16
      %v1708 = vrot.slane %v1706, 4
      %v1709 = vshll.u32 %v1363, 16
      %v1711 = vrot.slane %v1709, 5
      %v1712 = vor.u32 %v1708, %v1711
      %v1713 = vrot.slane %v1712, 4
      %v1715 = vshll.u32 %v1364, 16
      %v1717 = vrot.slane %v1715, 5
      %v1718 = vsel %vm420, %v1713, %v1717
      %v1719 = vshrl.u32 %v1364, 16
      %v1721 = vrot.slane %v1719, 4
      %v1722 = vor.u32 %v1721, %v1717
      %v1723 = vrot.slane %v1722, 4
      %v1725 = vshll.u32 %v1365, 16
      %v1727 = vrot.slane %v1725, 5
      %v1728 = vsel %vm420, %v1723, %v1727
      %v1730 = vshrl.u32 %v1366, 16
      %v1732 = vrot.slane %v1730, 4
      %v1733 = vshll.u32 %v1366, 16
      %v1735 = vrot.slane %v1733, 5
      %v1736 = vor.u32 %v1732, %v1735
      %v1737 = vrot.slane %v1736, 4
      %v1739 = vshll.u32 %v1367, 16
      %v1741 = vrot.slane %v1739, 5
      %v1742 = vsel %vm420, %v1737, %v1741
      %v1743 = vshrl.u32 %v1367, 16
      %v1745 = vrot.slane %v1743, 4
      %v1746 = vor.u32 %v1745, %v1741
      %v1747 = vrot.slane %v1746, 4
      %v1749 = vshll.u32 %v1368, 16
      %v1751 = vrot.slane %v1749, 5
      %v1752 = vsel %vm420, %v1747, %v1751
      %v1753 = vunpack.c.l.b16 %v1382
      %v1754 = vunpack.c.l.b16 %v1392
      %v1755 = vunpack.c.l.b16 %v1406
      %v1756 = vunpack.c.l.b16 %v1416
      %v1757 = vunpack.c.l.b16 %v1430
      %v1758 = vunpack.c.l.b16 %v1440
      %v1759 = vunpack.c.l.b16 %v1454
      %v1760 = vunpack.c.l.b16 %v1464
      %v1761 = vunpack.c.l.b16 %v1478
      %v1762 = vunpack.c.l.b16 %v1488
      %v1763 = vunpack.c.l.b16 %v1502
      %v1764 = vunpack.c.l.b16 %v1512
      %v1765 = vunpack.c.l.b16 %v1526
      %v1766 = vunpack.c.l.b16 %v1536
      %v1767 = vunpack.c.l.b16 %v1550
      %v1768 = vunpack.c.l.b16 %v1560
      %v1769 = vunpack.c.l.b16 %v1574
      %v1770 = vunpack.c.l.b16 %v1584
      %v1771 = vunpack.c.l.b16 %v1598
      %v1772 = vunpack.c.l.b16 %v1608
      %v1773 = vunpack.c.l.b16 %v1622
      %v1774 = vunpack.c.l.b16 %v1632
      %v1775 = vunpack.c.l.b16 %v1646
      %v1776 = vunpack.c.l.b16 %v1656
      %v1777 = vunpack.c.l.b16 %v1670
      %v1778 = vunpack.c.l.b16 %v1680
      %v1779 = vunpack.c.l.b16 %v1694
      %v1780 = vunpack.c.l.b16 %v1704
      %v1781 = vunpack.c.l.b16 %v1718
      %v1782 = vunpack.c.l.b16 %v1728
      %v1783 = vunpack.c.l.b16 %v1742
      %v1784 = vunpack.c.l.b16 %v1752
      %v1785 = vpack.c.b16 %v1754, %v1753
      %v1786 = vpack.c.b16 %v1756, %v1755
      %v1787 = vpack.c.b16 %v1758, %v1757
      %v1788 = vpack.c.b16 %v1760, %v1759
      %v1789 = vpack.c.b16 %v1762, %v1761
      %v1790 = vpack.c.b16 %v1764, %v1763
      %v1791 = vpack.c.b16 %v1766, %v1765
      %v1792 = vpack.c.b16 %v1768, %v1767
      %v1793 = vpack.c.b16 %v1770, %v1769
      %v1794 = vpack.c.b16 %v1772, %v1771
      %v1795 = vpack.c.b16 %v1774, %v1773
      %v1796 = vpack.c.b16 %v1776, %v1775
      %v1797 = vpack.c.b16 %v1778, %v1777
      %v1798 = vpack.c.b16 %v1780, %v1779
      %v1799 = vpack.c.b16 %v1782, %v1781
      %v1800 = vpack.c.b16 %v1784, %v1783
      %1817 = vst [vmem:[#allocation2 + $0x20] sm:$0xff] %v1785
      %1818 = vst [vmem:[#allocation2 + $0x68] sm:$0xff] %v1786
      %1819 = vst [vmem:[#allocation2 + $0xb0] sm:$0xff] %v1787
      %1820 = vst [vmem:[#allocation2 + $0xf8] sm:$0xff] %v1788
      %1821 = vst [vmem:[#allocation2 + $0x140] sm:$0xff] %v1789
      %1822 = vst [vmem:[#allocation2 + $0x188] sm:$0xff] %v1790
      %1823 = vst [vmem:[#allocation2 + $0x1d0] sm:$0xff] %v1791
      %1824 = vst [vmem:[#allocation2 + $0x218] sm:$0xff] %v1792
      %1825 = vst [vmem:[#allocation2 + $0x260] sm:$0xff] %v1793
      %1826 = vst [vmem:[#allocation2 + $0x2a8] sm:$0xff] %v1794
      %1827 = vst [vmem:[#allocation2 + $0x2f0] sm:$0xff] %v1795
      %1828 = vst [vmem:[#allocation2 + $0x338] sm:$0xff] %v1796
      %1829 = vst [vmem:[#allocation2 + $0x380] sm:$0xff] %v1797
      %1830 = vst [vmem:[#allocation2 + $0x3c8] sm:$0xff] %v1798
      %1831 = vst [vmem:[#allocation2 + $0x410] sm:$0xff] %v1799
      %1832 = vst [vmem:[#allocation2 + $0x458] sm:$0xff] %v1800
      %v1833 = vld [vmem:[%s1176] sm:$0xe]
      %v1834 = vld [vmem:[%s1176 + $0x4] sm:$0xf]
      %v1835 = vld [vmem:[%s1176 + $0x8] sm:$0x1]
      %v1836 = vld [vmem:[%s1176 + $0xc] sm:$0xe]
      %v1837 = vld [vmem:[%s1176 + $0x10] sm:$0xf]
      %v1838 = vld [vmem:[%s1176 + $0x14] sm:$0x1]
      %v1839 = vld [vmem:[%s1176 + $0x18] sm:$0xe]
      %v1840 = vld [vmem:[%s1176 + $0x1c] sm:$0xf]
      %v1841 = vld [vmem:[%s1176 + $0x20] sm:$0x1]
      %v1842 = vld [vmem:[%s1176 + $0x24] sm:$0xe]
      %v1843 = vld [vmem:[%s1176 + $0x28] sm:$0xf]
      %v1844 = vld [vmem:[%s1176 + $0x2c] sm:$0x1]
      %v1845 = vld [vmem:[%s1176 + $0x30] sm:$0xe]
      %v1846 = vld [vmem:[%s1176 + $0x34] sm:$0xf]
      %v1847 = vld [vmem:[%s1176 + $0x38] sm:$0x1]
      %v1848 = vld [vmem:[%s1176 + $0x3c] sm:$0xe]
      %v1849 = vld [vmem:[%s1176 + $0x40] sm:$0xf]
      %v1850 = vld [vmem:[%s1176 + $0x44] sm:$0x1]
      %v1851 = vld [vmem:[%s1176 + $0x48] sm:$0xe]
      %v1852 = vld [vmem:[%s1176 + $0x4c] sm:$0xf]
      %v1853 = vld [vmem:[%s1176 + $0x50] sm:$0x1]
      %v1854 = vld [vmem:[%s1176 + $0x54] sm:$0xe]
      %v1855 = vld [vmem:[%s1176 + $0x58] sm:$0xf]
      %v1856 = vld [vmem:[%s1176 + $0x5c] sm:$0x1]
      %v1857 = vld [vmem:[%s1176 + $0x60] sm:$0xe]
      %v1858 = vld [vmem:[%s1176 + $0x64] sm:$0xf]
      %v1859 = vld [vmem:[%s1176 + $0x68] sm:$0x1]
      %v1860 = vld [vmem:[%s1176 + $0x6c] sm:$0xe]
      %v1861 = vld [vmem:[%s1176 + $0x70] sm:$0xf]
      %v1862 = vld [vmem:[%s1176 + $0x74] sm:$0x1]
      %v1863 = vld [vmem:[%s1176 + $0x78] sm:$0xe]
      %v1864 = vld [vmem:[%s1176 + $0x7c] sm:$0xf]
      %v1865 = vld [vmem:[%s1176 + $0x80] sm:$0x1]
      %v1866 = vld [vmem:[%s1176 + $0x84] sm:$0xe]
      %v1867 = vld [vmem:[%s1176 + $0x88] sm:$0xf]
      %v1868 = vld [vmem:[%s1176 + $0x8c] sm:$0x1]
      %v1869 = vld [vmem:[%s1176 + $0x90] sm:$0xe]
      %v1870 = vld [vmem:[%s1176 + $0x94] sm:$0xf]
      %v1871 = vld [vmem:[%s1176 + $0x98] sm:$0x1]
      %v1872 = vld [vmem:[%s1176 + $0x9c] sm:$0xe]
      %v1873 = vld [vmem:[%s1176 + $0xa0] sm:$0xf]
      %v1874 = vld [vmem:[%s1176 + $0xa4] sm:$0x1]
      %v1875 = vld [vmem:[%s1176 + $0xa8] sm:$0xe]
      %v1876 = vld [vmem:[%s1176 + $0xac] sm:$0xf]
      %v1877 = vld [vmem:[%s1176 + $0xb0] sm:$0x1]
      %v1878 = vld [vmem:[%s1176 + $0xb4] sm:$0xe]
      %v1879 = vld [vmem:[%s1176 + $0xb8] sm:$0xf]
      %v1880 = vld [vmem:[%s1176 + $0xbc] sm:$0x1]
      %v1929 = vrot.slane %v1833, 5
      %v1930 = vrot.slane %v1929, 4
      %v1931 = vrot.slane %v1834, 5
      %v1932 = vsel %vm983, %v1930, %v1931
      %v1933 = vrot.slane %v1931, 4
      %v1934 = vrot.slane %v1835, 5
      %v1935 = vsel %vm983, %v1933, %v1934
      %v1936 = vrot.slane %v1836, 5
      %v1937 = vrot.slane %v1936, 4
      %v1938 = vrot.slane %v1837, 5
      %v1939 = vsel %vm983, %v1937, %v1938
      %v1940 = vrot.slane %v1938, 4
      %v1941 = vrot.slane %v1838, 5
      %v1942 = vsel %vm983, %v1940, %v1941
      %v1943 = vrot.slane %v1839, 5
      %v1944 = vrot.slane %v1943, 4
      %v1945 = vrot.slane %v1840, 5
      %v1946 = vsel %vm983, %v1944, %v1945
      %v1947 = vrot.slane %v1945, 4
      %v1948 = vrot.slane %v1841, 5
      %v1949 = vsel %vm983, %v1947, %v1948
      %v1950 = vrot.slane %v1842, 5
      %v1951 = vrot.slane %v1950, 4
      %v1952 = vrot.slane %v1843, 5
      %v1953 = vsel %vm983, %v1951, %v1952
      %v1954 = vrot.slane %v1952, 4
      %v1955 = vrot.slane %v1844, 5
      %v1956 = vsel %vm983, %v1954, %v1955
      %v1957 = vrot.slane %v1845, 5
      %v1958 = vrot.slane %v1957, 4
      %v1959 = vrot.slane %v1846, 5
      %v1960 = vsel %vm983, %v1958, %v1959
      %v1961 = vrot.slane %v1959, 4
      %v1962 = vrot.slane %v1847, 5
      %v1963 = vsel %vm983, %v1961, %v1962
      %v1964 = vrot.slane %v1848, 5
      %v1965 = vrot.slane %v1964, 4
      %v1966 = vrot.slane %v1849, 5
      %v1967 = vsel %vm983, %v1965, %v1966
      %v1968 = vrot.slane %v1966, 4
      %v1969 = vrot.slane %v1850, 5
      %v1970 = vsel %vm983, %v1968, %v1969
      %v1971 = vrot.slane %v1851, 5
      %v1972 = vrot.slane %v1971, 4
      %v1973 = vrot.slane %v1852, 5
      %v1974 = vsel %vm983, %v1972, %v1973
      %v1975 = vrot.slane %v1973, 4
      %v1976 = vrot.slane %v1853, 5
      %v1977 = vsel %vm983, %v1975, %v1976
      %v1978 = vrot.slane %v1854, 5
      %v1979 = vrot.slane %v1978, 4
      %v1980 = vrot.slane %v1855, 5
      %v1981 = vsel %vm983, %v1979, %v1980
      %v1982 = vrot.slane %v1980, 4
      %v1983 = vrot.slane %v1856, 5
      %v1984 = vsel %vm983, %v1982, %v1983
      %v1985 = vrot.slane %v1857, 5
      %v1986 = vrot.slane %v1985, 4
      %v1987 = vrot.slane %v1858, 5
      %v1988 = vsel %vm983, %v1986, %v1987
      %v1989 = vrot.slane %v1987, 4
      %v1990 = vrot.slane %v1859, 5
      %v1991 = vsel %vm983, %v1989, %v1990
      %v1992 = vrot.slane %v1860, 5
      %v1993 = vrot.slane %v1992, 4
      %v1994 = vrot.slane %v1861, 5
      %v1995 = vsel %vm983, %v1993, %v1994
      %v1996 = vrot.slane %v1994, 4
      %v1997 = vrot.slane %v1862, 5
      %v1998 = vsel %vm983, %v1996, %v1997
      %v1999 = vrot.slane %v1863, 5
      %v2000 = vrot.slane %v1999, 4
      %v2001 = vrot.slane %v1864, 5
      %v2002 = vsel %vm983, %v2000, %v2001
      %v2003 = vrot.slane %v2001, 4
      %v2004 = vrot.slane %v1865, 5
      %v2005 = vsel %vm983, %v2003, %v2004
      %v2006 = vrot.slane %v1866, 5
      %v2007 = vrot.slane %v2006, 4
      %v2008 = vrot.slane %v1867, 5
      %v2009 = vsel %vm983, %v2007, %v2008
      %v2010 = vrot.slane %v2008, 4
      %v2011 = vrot.slane %v1868, 5
      %v2012 = vsel %vm983, %v2010, %v2011
      %v2013 = vrot.slane %v1869, 5
      %v2014 = vrot.slane %v2013, 4
      %v2015 = vrot.slane %v1870, 5
      %v2016 = vsel %vm983, %v2014, %v2015
      %v2017 = vrot.slane %v2015, 4
      %v2018 = vrot.slane %v1871, 5
      %v2019 = vsel %vm983, %v2017, %v2018
      %v2020 = vrot.slane %v1872, 5
      %v2021 = vrot.slane %v2020, 4
      %v2022 = vrot.slane %v1873, 5
      %v2023 = vsel %vm983, %v2021, %v2022
      %v2024 = vrot.slane %v2022, 4
      %v2025 = vrot.slane %v1874, 5
      %v2026 = vsel %vm983, %v2024, %v2025
      %v2027 = vrot.slane %v1875, 5
      %v2028 = vrot.slane %v2027, 4
      %v2029 = vrot.slane %v1876, 5
      %v2030 = vsel %vm983, %v2028, %v2029
      %v2031 = vrot.slane %v2029, 4
      %v2032 = vrot.slane %v1877, 5
      %v2033 = vsel %vm983, %v2031, %v2032
      %v2034 = vrot.slane %v1878, 5
      %v2035 = vrot.slane %v2034, 4
      %v2036 = vrot.slane %v1879, 5
      %v2037 = vsel %vm983, %v2035, %v2036
      %v2038 = vrot.slane %v2036, 4
      %v2039 = vrot.slane %v1880, 5
      %v2040 = vsel %vm983, %v2038, %v2039
      %v2041 = vunpack.c.l.b16 %v1932
      %v2042 = vunpack.c.l.b16 %v1935
      %v2043 = vunpack.c.l.b16 %v1939
      %v2044 = vunpack.c.l.b16 %v1942
      %v2045 = vunpack.c.l.b16 %v1946
      %v2046 = vunpack.c.l.b16 %v1949
      %v2047 = vunpack.c.l.b16 %v1953
      %v2048 = vunpack.c.l.b16 %v1956
      %v2049 = vunpack.c.l.b16 %v1960
      %v2050 = vunpack.c.l.b16 %v1963
      %v2051 = vunpack.c.l.b16 %v1967
      %v2052 = vunpack.c.l.b16 %v1970
      %v2053 = vunpack.c.l.b16 %v1974
      %v2054 = vunpack.c.l.b16 %v1977
      %v2055 = vunpack.c.l.b16 %v1981
      %v2056 = vunpack.c.l.b16 %v1984
      %v2057 = vunpack.c.l.b16 %v1988
      %v2058 = vunpack.c.l.b16 %v1991
      %v2059 = vunpack.c.l.b16 %v1995
      %v2060 = vunpack.c.l.b16 %v1998
      %v2061 = vunpack.c.l.b16 %v2002
      %v2062 = vunpack.c.l.b16 %v2005
      %v2063 = vunpack.c.l.b16 %v2009
      %v2064 = vunpack.c.l.b16 %v2012
      %v2065 = vunpack.c.l.b16 %v2016
      %v2066 = vunpack.c.l.b16 %v2019
      %v2067 = vunpack.c.l.b16 %v2023
      %v2068 = vunpack.c.l.b16 %v2026
      %v2069 = vunpack.c.l.b16 %v2030
      %v2070 = vunpack.c.l.b16 %v2033
      %v2071 = vunpack.c.l.b16 %v2037
      %v2072 = vunpack.c.l.b16 %v2040
      %v2073 = vpack.c.b16 %v2042, %v2041
      %v2074 = vpack.c.b16 %v2044, %v2043
      %v2075 = vpack.c.b16 %v2046, %v2045
      %v2076 = vpack.c.b16 %v2048, %v2047
      %v2077 = vpack.c.b16 %v2050, %v2049
      %v2078 = vpack.c.b16 %v2052, %v2051
      %v2079 = vpack.c.b16 %v2054, %v2053
      %v2080 = vpack.c.b16 %v2056, %v2055
      %v2081 = vpack.c.b16 %v2058, %v2057
      %v2082 = vpack.c.b16 %v2060, %v2059
      %v2083 = vpack.c.b16 %v2062, %v2061
      %v2084 = vpack.c.b16 %v2064, %v2063
      %v2085 = vpack.c.b16 %v2066, %v2065
      %v2086 = vpack.c.b16 %v2068, %v2067
      %v2087 = vpack.c.b16 %v2070, %v2069
      %v2088 = vpack.c.b16 %v2072, %v2071
      %2105 = vst [vmem:[#allocation2 + $0x28] sm:$0xff] %v2073
      %2106 = vst [vmem:[#allocation2 + $0x70] sm:$0xff] %v2074
      %2107 = vst [vmem:[#allocation2 + $0xb8] sm:$0xff] %v2075
      %2108 = vst [vmem:[#allocation2 + $0x100] sm:$0xff] %v2076
      %2109 = vst [vmem:[#allocation2 + $0x148] sm:$0xff] %v2077
      %2110 = vst [vmem:[#allocation2 + $0x190] sm:$0xff] %v2078
      %2111 = vst [vmem:[#allocation2 + $0x1d8] sm:$0xff] %v2079
      %2112 = vst [vmem:[#allocation2 + $0x220] sm:$0xff] %v2080
      %2113 = vst [vmem:[#allocation2 + $0x268] sm:$0xff] %v2081
      %2114 = vst [vmem:[#allocation2 + $0x2b0] sm:$0xff] %v2082
      %2115 = vst [vmem:[#allocation2 + $0x2f8] sm:$0xff] %v2083
      %2116 = vst [vmem:[#allocation2 + $0x340] sm:$0xff] %v2084
      %2117 = vst [vmem:[#allocation2 + $0x388] sm:$0xff] %v2085
      %2118 = vst [vmem:[#allocation2 + $0x3d0] sm:$0xff] %v2086
      %2119 = vst [vmem:[#allocation2 + $0x418] sm:$0xff] %v2087
      %2120 = vst [vmem:[#allocation2 + $0x460] sm:$0xff] %v2088
      %s2121 = scalar_lea.vmem %s219, 24
      %v2122 = vld [vmem:[%s2121] sm:$0xf]
      %v2123 = vld [vmem:[%s2121 + $0x4] sm:$0xf]
      %v2124 = vld [vmem:[%s2121 + $0xc] sm:$0xf]
      %v2125 = vld [vmem:[%s2121 + $0x10] sm:$0xf]
      %v2126 = vld [vmem:[%s2121 + $0x18] sm:$0xf]
      %v2127 = vld [vmem:[%s2121 + $0x1c] sm:$0xf]
      %v2128 = vld [vmem:[%s2121 + $0x24] sm:$0xf]
      %v2129 = vld [vmem:[%s2121 + $0x28] sm:$0xf]
      %v2130 = vld [vmem:[%s2121 + $0x30] sm:$0xf]
      %v2131 = vld [vmem:[%s2121 + $0x34] sm:$0xf]
      %v2132 = vld [vmem:[%s2121 + $0x3c] sm:$0xf]
      %v2133 = vld [vmem:[%s2121 + $0x40] sm:$0xf]
      %v2134 = vld [vmem:[%s2121 + $0x48] sm:$0xf]
      %v2135 = vld [vmem:[%s2121 + $0x4c] sm:$0xf]
      %v2136 = vld [vmem:[%s2121 + $0x54] sm:$0xf]
      %v2137 = vld [vmem:[%s2121 + $0x58] sm:$0xf]
      %v2138 = vld [vmem:[%s2121 + $0x60] sm:$0xf]
      %v2139 = vld [vmem:[%s2121 + $0x64] sm:$0xf]
      %v2140 = vld [vmem:[%s2121 + $0x6c] sm:$0xf]
      %v2141 = vld [vmem:[%s2121 + $0x70] sm:$0xf]
      %v2142 = vld [vmem:[%s2121 + $0x78] sm:$0xf]
      %v2143 = vld [vmem:[%s2121 + $0x7c] sm:$0xf]
      %v2144 = vld [vmem:[%s2121 + $0x84] sm:$0xf]
      %v2145 = vld [vmem:[%s2121 + $0x88] sm:$0xf]
      %v2146 = vld [vmem:[%s2121 + $0x90] sm:$0xf]
      %v2147 = vld [vmem:[%s2121 + $0x94] sm:$0xf]
      %v2148 = vld [vmem:[%s2121 + $0x9c] sm:$0xf]
      %v2149 = vld [vmem:[%s2121 + $0xa0] sm:$0xf]
      %v2150 = vld [vmem:[%s2121 + $0xa8] sm:$0xf]
      %v2151 = vld [vmem:[%s2121 + $0xac] sm:$0xf]
      %v2152 = vld [vmem:[%s2121 + $0xb4] sm:$0xf]
      %v2153 = vld [vmem:[%s2121 + $0xb8] sm:$0xf]
      %v2186 = vunpack.c.l.b16 %v2122
      %v2187 = vunpack.c.l.b16 %v2123
      %v2188 = vunpack.c.l.b16 %v2124
      %v2189 = vunpack.c.l.b16 %v2125
      %v2190 = vunpack.c.l.b16 %v2126
      %v2191 = vunpack.c.l.b16 %v2127
      %v2192 = vunpack.c.l.b16 %v2128
      %v2193 = vunpack.c.l.b16 %v2129
      %v2194 = vunpack.c.l.b16 %v2130
      %v2195 = vunpack.c.l.b16 %v2131
      %v2196 = vunpack.c.l.b16 %v2132
      %v2197 = vunpack.c.l.b16 %v2133
      %v2198 = vunpack.c.l.b16 %v2134
      %v2199 = vunpack.c.l.b16 %v2135
      %v2200 = vunpack.c.l.b16 %v2136
      %v2201 = vunpack.c.l.b16 %v2137
      %v2202 = vunpack.c.l.b16 %v2138
      %v2203 = vunpack.c.l.b16 %v2139
      %v2204 = vunpack.c.l.b16 %v2140
      %v2205 = vunpack.c.l.b16 %v2141
      %v2206 = vunpack.c.l.b16 %v2142
      %v2207 = vunpack.c.l.b16 %v2143
      %v2208 = vunpack.c.l.b16 %v2144
      %v2209 = vunpack.c.l.b16 %v2145
      %v2210 = vunpack.c.l.b16 %v2146
      %v2211 = vunpack.c.l.b16 %v2147
      %v2212 = vunpack.c.l.b16 %v2148
      %v2213 = vunpack.c.l.b16 %v2149
      %v2214 = vunpack.c.l.b16 %v2150
      %v2215 = vunpack.c.l.b16 %v2151
      %v2216 = vunpack.c.l.b16 %v2152
      %v2217 = vunpack.c.l.b16 %v2153
      %v2218 = vpack.c.b16 %v2187, %v2186
      %v2219 = vpack.c.b16 %v2189, %v2188
      %v2220 = vpack.c.b16 %v2191, %v2190
      %v2221 = vpack.c.b16 %v2193, %v2192
      %v2222 = vpack.c.b16 %v2195, %v2194
      %v2223 = vpack.c.b16 %v2197, %v2196
      %v2224 = vpack.c.b16 %v2199, %v2198
      %v2225 = vpack.c.b16 %v2201, %v2200
      %v2226 = vpack.c.b16 %v2203, %v2202
      %v2227 = vpack.c.b16 %v2205, %v2204
      %v2228 = vpack.c.b16 %v2207, %v2206
      %v2229 = vpack.c.b16 %v2209, %v2208
      %v2230 = vpack.c.b16 %v2211, %v2210
      %v2231 = vpack.c.b16 %v2213, %v2212
      %v2232 = vpack.c.b16 %v2215, %v2214
      %v2233 = vpack.c.b16 %v2217, %v2216
      %2250 = vst [vmem:[#allocation2 + $0x30] sm:$0xff] %v2218
      %2251 = vst [vmem:[#allocation2 + $0x78] sm:$0xff] %v2219
      %2252 = vst [vmem:[#allocation2 + $0xc0] sm:$0xff] %v2220
      %2253 = vst [vmem:[#allocation2 + $0x108] sm:$0xff] %v2221
      %2254 = vst [vmem:[#allocation2 + $0x150] sm:$0xff] %v2222
      %2255 = vst [vmem:[#allocation2 + $0x198] sm:$0xff] %v2223
      %2256 = vst [vmem:[#allocation2 + $0x1e0] sm:$0xff] %v2224
      %2257 = vst [vmem:[#allocation2 + $0x228] sm:$0xff] %v2225
      %2258 = vst [vmem:[#allocation2 + $0x270] sm:$0xff] %v2226
      %2259 = vst [vmem:[#allocation2 + $0x2b8] sm:$0xff] %v2227
      %2260 = vst [vmem:[#allocation2 + $0x300] sm:$0xff] %v2228
      %2261 = vst [vmem:[#allocation2 + $0x348] sm:$0xff] %v2229
      %2262 = vst [vmem:[#allocation2 + $0x390] sm:$0xff] %v2230
      %2263 = vst [vmem:[#allocation2 + $0x3d8] sm:$0xff] %v2231
      %2264 = vst [vmem:[#allocation2 + $0x420] sm:$0xff] %v2232
      %2265 = vst [vmem:[#allocation2 + $0x468] sm:$0xff] %v2233
      %v2266 = vld [vmem:[%s2121] sm:$0xf]
      %v2267 = vld [vmem:[%s2121 + $0x4] sm:$0xf]
      %v2268 = vld [vmem:[%s2121 + $0x8] sm:$0x1]
      %v2269 = vld [vmem:[%s2121 + $0xc] sm:$0xf]
      %v2270 = vld [vmem:[%s2121 + $0x10] sm:$0xf]
      %v2271 = vld [vmem:[%s2121 + $0x14] sm:$0x1]
      %v2272 = vld [vmem:[%s2121 + $0x18] sm:$0xf]
      %v2273 = vld [vmem:[%s2121 + $0x1c] sm:$0xf]
      %v2274 = vld [vmem:[%s2121 + $0x20] sm:$0x1]
      %v2275 = vld [vmem:[%s2121 + $0x24] sm:$0xf]
      %v2276 = vld [vmem:[%s2121 + $0x28] sm:$0xf]
      %v2277 = vld [vmem:[%s2121 + $0x2c] sm:$0x1]
      %v2278 = vld [vmem:[%s2121 + $0x30] sm:$0xf]
      %v2279 = vld [vmem:[%s2121 + $0x34] sm:$0xf]
      %v2280 = vld [vmem:[%s2121 + $0x38] sm:$0x1]
      %v2281 = vld [vmem:[%s2121 + $0x3c] sm:$0xf]
      %v2282 = vld [vmem:[%s2121 + $0x40] sm:$0xf]
      %v2283 = vld [vmem:[%s2121 + $0x44] sm:$0x1]
      %v2284 = vld [vmem:[%s2121 + $0x48] sm:$0xf]
      %v2285 = vld [vmem:[%s2121 + $0x4c] sm:$0xf]
      %v2286 = vld [vmem:[%s2121 + $0x50] sm:$0x1]
      %v2287 = vld [vmem:[%s2121 + $0x54] sm:$0xf]
      %v2288 = vld [vmem:[%s2121 + $0x58] sm:$0xf]
      %v2289 = vld [vmem:[%s2121 + $0x5c] sm:$0x1]
      %v2290 = vld [vmem:[%s2121 + $0x60] sm:$0xf]
      %v2291 = vld [vmem:[%s2121 + $0x64] sm:$0xf]
      %v2292 = vld [vmem:[%s2121 + $0x68] sm:$0x1]
      %v2293 = vld [vmem:[%s2121 + $0x6c] sm:$0xf]
      %v2294 = vld [vmem:[%s2121 + $0x70] sm:$0xf]
      %v2295 = vld [vmem:[%s2121 + $0x74] sm:$0x1]
      %v2296 = vld [vmem:[%s2121 + $0x78] sm:$0xf]
      %v2297 = vld [vmem:[%s2121 + $0x7c] sm:$0xf]
      %v2298 = vld [vmem:[%s2121 + $0x80] sm:$0x1]
      %v2299 = vld [vmem:[%s2121 + $0x84] sm:$0xf]
      %v2300 = vld [vmem:[%s2121 + $0x88] sm:$0xf]
      %v2301 = vld [vmem:[%s2121 + $0x8c] sm:$0x1]
      %v2302 = vld [vmem:[%s2121 + $0x90] sm:$0xf]
      %v2303 = vld [vmem:[%s2121 + $0x94] sm:$0xf]
      %v2304 = vld [vmem:[%s2121 + $0x98] sm:$0x1]
      %v2305 = vld [vmem:[%s2121 + $0x9c] sm:$0xf]
      %v2306 = vld [vmem:[%s2121 + $0xa0] sm:$0xf]
      %v2307 = vld [vmem:[%s2121 + $0xa4] sm:$0x1]
      %v2308 = vld [vmem:[%s2121 + $0xa8] sm:$0xf]
      %v2309 = vld [vmem:[%s2121 + $0xac] sm:$0xf]
      %v2310 = vld [vmem:[%s2121 + $0xb0] sm:$0x1]
      %v2311 = vld [vmem:[%s2121 + $0xb4] sm:$0xf]
      %v2312 = vld [vmem:[%s2121 + $0xb8] sm:$0xf]
      %v2313 = vld [vmem:[%s2121 + $0xbc] sm:$0x1]
      %v2315 = vshrl.u32 %v2266, 16
      %v2317 = vrot.slane %v2315, 4
      %v2318 = vshll.u32 %v2266, 16
      %v2320 = vrot.slane %v2318, 5
      %v2321 = vor.u32 %v2317, %v2320
      %v2322 = vrot.slane %v2321, 4
      %v2324 = vshll.u32 %v2267, 16
      %v2326 = vrot.slane %v2324, 5
      %v2327 = vsel %vm420, %v2322, %v2326
      %v2328 = vshrl.u32 %v2267, 16
      %v2330 = vrot.slane %v2328, 4
      %v2331 = vor.u32 %v2330, %v2326
      %v2332 = vrot.slane %v2331, 4
      %v2334 = vshll.u32 %v2268, 16
      %v2336 = vrot.slane %v2334, 5
      %v2337 = vsel %vm420, %v2332, %v2336
      %v2339 = vshrl.u32 %v2269, 16
      %v2341 = vrot.slane %v2339, 4
      %v2342 = vshll.u32 %v2269, 16
      %v2344 = vrot.slane %v2342, 5
      %v2345 = vor.u32 %v2341, %v2344
      %v2346 = vrot.slane %v2345, 4
      %v2348 = vshll.u32 %v2270, 16
      %v2350 = vrot.slane %v2348, 5
      %v2351 = vsel %vm420, %v2346, %v2350
      %v2352 = vshrl.u32 %v2270, 16
      %v2354 = vrot.slane %v2352, 4
      %v2355 = vor.u32 %v2354, %v2350
      %v2356 = vrot.slane %v2355, 4
      %v2358 = vshll.u32 %v2271, 16
      %v2360 = vrot.slane %v2358, 5
      %v2361 = vsel %vm420, %v2356, %v2360
      %v2363 = vshrl.u32 %v2272, 16
      %v2365 = vrot.slane %v2363, 4
      %v2366 = vshll.u32 %v2272, 16
      %v2368 = vrot.slane %v2366, 5
      %v2369 = vor.u32 %v2365, %v2368
      %v2370 = vrot.slane %v2369, 4
      %v2372 = vshll.u32 %v2273, 16
      %v2374 = vrot.slane %v2372, 5
      %v2375 = vsel %vm420, %v2370, %v2374
      %v2376 = vshrl.u32 %v2273, 16
      %v2378 = vrot.slane %v2376, 4
      %v2379 = vor.u32 %v2378, %v2374
      %v2380 = vrot.slane %v2379, 4
      %v2382 = vshll.u32 %v2274, 16
      %v2384 = vrot.slane %v2382, 5
      %v2385 = vsel %vm420, %v2380, %v2384
      %v2387 = vshrl.u32 %v2275, 16
      %v2389 = vrot.slane %v2387, 4
      %v2390 = vshll.u32 %v2275, 16
      %v2392 = vrot.slane %v2390, 5
      %v2393 = vor.u32 %v2389, %v2392
      %v2394 = vrot.slane %v2393, 4
      %v2396 = vshll.u32 %v2276, 16
      %v2398 = vrot.slane %v2396, 5
      %v2399 = vsel %vm420, %v2394, %v2398
      %v2400 = vshrl.u32 %v2276, 16
      %v2402 = vrot.slane %v2400, 4
      %v2403 = vor.u32 %v2402, %v2398
      %v2404 = vrot.slane %v2403, 4
      %v2406 = vshll.u32 %v2277, 16
      %v2408 = vrot.slane %v2406, 5
      %v2409 = vsel %vm420, %v2404, %v2408
      %v2411 = vshrl.u32 %v2278, 16
      %v2413 = vrot.slane %v2411, 4
      %v2414 = vshll.u32 %v2278, 16
      %v2416 = vrot.slane %v2414, 5
      %v2417 = vor.u32 %v2413, %v2416
      %v2418 = vrot.slane %v2417, 4
      %v2420 = vshll.u32 %v2279, 16
      %v2422 = vrot.slane %v2420, 5
      %v2423 = vsel %vm420, %v2418, %v2422
      %v2424 = vshrl.u32 %v2279, 16
      %v2426 = vrot.slane %v2424, 4
      %v2427 = vor.u32 %v2426, %v2422
      %v2428 = vrot.slane %v2427, 4
      %v2430 = vshll.u32 %v2280, 16
      %v2432 = vrot.slane %v2430, 5
      %v2433 = vsel %vm420, %v2428, %v2432
      %v2435 = vshrl.u32 %v2281, 16
      %v2437 = vrot.slane %v2435, 4
      %v2438 = vshll.u32 %v2281, 16
      %v2440 = vrot.slane %v2438, 5
      %v2441 = vor.u32 %v2437, %v2440
      %v2442 = vrot.slane %v2441, 4
      %v2444 = vshll.u32 %v2282, 16
      %v2446 = vrot.slane %v2444, 5
      %v2447 = vsel %vm420, %v2442, %v2446
      %v2448 = vshrl.u32 %v2282, 16
      %v2450 = vrot.slane %v2448, 4
      %v2451 = vor.u32 %v2450, %v2446
      %v2452 = vrot.slane %v2451, 4
      %v2454 = vshll.u32 %v2283, 16
      %v2456 = vrot.slane %v2454, 5
      %v2457 = vsel %vm420, %v2452, %v2456
      %v2459 = vshrl.u32 %v2284, 16
      %v2461 = vrot.slane %v2459, 4
      %v2462 = vshll.u32 %v2284, 16
      %v2464 = vrot.slane %v2462, 5
      %v2465 = vor.u32 %v2461, %v2464
      %v2466 = vrot.slane %v2465, 4
      %v2468 = vshll.u32 %v2285, 16
      %v2470 = vrot.slane %v2468, 5
      %v2471 = vsel %vm420, %v2466, %v2470
      %v2472 = vshrl.u32 %v2285, 16
      %v2474 = vrot.slane %v2472, 4
      %v2475 = vor.u32 %v2474, %v2470
      %v2476 = vrot.slane %v2475, 4
      %v2478 = vshll.u32 %v2286, 16
      %v2480 = vrot.slane %v2478, 5
      %v2481 = vsel %vm420, %v2476, %v2480
      %v2483 = vshrl.u32 %v2287, 16
      %v2485 = vrot.slane %v2483, 4
      %v2486 = vshll.u32 %v2287, 16
      %v2488 = vrot.slane %v2486, 5
      %v2489 = vor.u32 %v2485, %v2488
      %v2490 = vrot.slane %v2489, 4
      %v2492 = vshll.u32 %v2288, 16
      %v2494 = vrot.slane %v2492, 5
      %v2495 = vsel %vm420, %v2490, %v2494
      %v2496 = vshrl.u32 %v2288, 16
      %v2498 = vrot.slane %v2496, 4
      %v2499 = vor.u32 %v2498, %v2494
      %v2500 = vrot.slane %v2499, 4
      %v2502 = vshll.u32 %v2289, 16
      %v2504 = vrot.slane %v2502, 5
      %v2505 = vsel %vm420, %v2500, %v2504
      %v2507 = vshrl.u32 %v2290, 16
      %v2509 = vrot.slane %v2507, 4
      %v2510 = vshll.u32 %v2290, 16
      %v2512 = vrot.slane %v2510, 5
      %v2513 = vor.u32 %v2509, %v2512
      %v2514 = vrot.slane %v2513, 4
      %v2516 = vshll.u32 %v2291, 16
      %v2518 = vrot.slane %v2516, 5
      %v2519 = vsel %vm420, %v2514, %v2518
      %v2520 = vshrl.u32 %v2291, 16
      %v2522 = vrot.slane %v2520, 4
      %v2523 = vor.u32 %v2522, %v2518
      %v2524 = vrot.slane %v2523, 4
      %v2526 = vshll.u32 %v2292, 16
      %v2528 = vrot.slane %v2526, 5
      %v2529 = vsel %vm420, %v2524, %v2528
      %v2531 = vshrl.u32 %v2293, 16
      %v2533 = vrot.slane %v2531, 4
      %v2534 = vshll.u32 %v2293, 16
      %v2536 = vrot.slane %v2534, 5
      %v2537 = vor.u32 %v2533, %v2536
      %v2538 = vrot.slane %v2537, 4
      %v2540 = vshll.u32 %v2294, 16
      %v2542 = vrot.slane %v2540, 5
      %v2543 = vsel %vm420, %v2538, %v2542
      %v2544 = vshrl.u32 %v2294, 16
      %v2546 = vrot.slane %v2544, 4
      %v2547 = vor.u32 %v2546, %v2542
      %v2548 = vrot.slane %v2547, 4
      %v2550 = vshll.u32 %v2295, 16
      %v2552 = vrot.slane %v2550, 5
      %v2553 = vsel %vm420, %v2548, %v2552
      %v2555 = vshrl.u32 %v2296, 16
      %v2557 = vrot.slane %v2555, 4
      %v2558 = vshll.u32 %v2296, 16
      %v2560 = vrot.slane %v2558, 5
      %v2561 = vor.u32 %v2557, %v2560
      %v2562 = vrot.slane %v2561, 4
      %v2564 = vshll.u32 %v2297, 16
      %v2566 = vrot.slane %v2564, 5
      %v2567 = vsel %vm420, %v2562, %v2566
      %v2568 = vshrl.u32 %v2297, 16
      %v2570 = vrot.slane %v2568, 4
      %v2571 = vor.u32 %v2570, %v2566
      %v2572 = vrot.slane %v2571, 4
      %v2574 = vshll.u32 %v2298, 16
      %v2576 = vrot.slane %v2574, 5
      %v2577 = vsel %vm420, %v2572, %v2576
      %v2579 = vshrl.u32 %v2299, 16
      %v2581 = vrot.slane %v2579, 4
      %v2582 = vshll.u32 %v2299, 16
      %v2584 = vrot.slane %v2582, 5
      %v2585 = vor.u32 %v2581, %v2584
      %v2586 = vrot.slane %v2585, 4
      %v2588 = vshll.u32 %v2300, 16
      %v2590 = vrot.slane %v2588, 5
      %v2591 = vsel %vm420, %v2586, %v2590
      %v2592 = vshrl.u32 %v2300, 16
      %v2594 = vrot.slane %v2592, 4
      %v2595 = vor.u32 %v2594, %v2590
      %v2596 = vrot.slane %v2595, 4
      %v2598 = vshll.u32 %v2301, 16
      %v2600 = vrot.slane %v2598, 5
      %v2601 = vsel %vm420, %v2596, %v2600
      %v2603 = vshrl.u32 %v2302, 16
      %v2605 = vrot.slane %v2603, 4
      %v2606 = vshll.u32 %v2302, 16
      %v2608 = vrot.slane %v2606, 5
      %v2609 = vor.u32 %v2605, %v2608
      %v2610 = vrot.slane %v2609, 4
      %v2612 = vshll.u32 %v2303, 16
      %v2614 = vrot.slane %v2612, 5
      %v2615 = vsel %vm420, %v2610, %v2614
      %v2616 = vshrl.u32 %v2303, 16
      %v2618 = vrot.slane %v2616, 4
      %v2619 = vor.u32 %v2618, %v2614
      %v2620 = vrot.slane %v2619, 4
      %v2622 = vshll.u32 %v2304, 16
      %v2624 = vrot.slane %v2622, 5
      %v2625 = vsel %vm420, %v2620, %v2624
      %v2627 = vshrl.u32 %v2305, 16
      %v2629 = vrot.slane %v2627, 4
      %v2630 = vshll.u32 %v2305, 16
      %v2632 = vrot.slane %v2630, 5
      %v2633 = vor.u32 %v2629, %v2632
      %v2634 = vrot.slane %v2633, 4
      %v2636 = vshll.u32 %v2306, 16
      %v2638 = vrot.slane %v2636, 5
      %v2639 = vsel %vm420, %v2634, %v2638
      %v2640 = vshrl.u32 %v2306, 16
      %v2642 = vrot.slane %v2640, 4
      %v2643 = vor.u32 %v2642, %v2638
      %v2644 = vrot.slane %v2643, 4
      %v2646 = vshll.u32 %v2307, 16
      %v2648 = vrot.slane %v2646, 5
      %v2649 = vsel %vm420, %v2644, %v2648
      %v2651 = vshrl.u32 %v2308, 16
      %v2653 = vrot.slane %v2651, 4
      %v2654 = vshll.u32 %v2308, 16
      %v2656 = vrot.slane %v2654, 5
      %v2657 = vor.u32 %v2653, %v2656
      %v2658 = vrot.slane %v2657, 4
      %v2660 = vshll.u32 %v2309, 16
      %v2662 = vrot.slane %v2660, 5
      %v2663 = vsel %vm420, %v2658, %v2662
      %v2664 = vshrl.u32 %v2309, 16
      %v2666 = vrot.slane %v2664, 4
      %v2667 = vor.u32 %v2666, %v2662
      %v2668 = vrot.slane %v2667, 4
      %v2670 = vshll.u32 %v2310, 16
      %v2672 = vrot.slane %v2670, 5
      %v2673 = vsel %vm420, %v2668, %v2672
      %v2675 = vshrl.u32 %v2311, 16
      %v2677 = vrot.slane %v2675, 4
      %v2678 = vshll.u32 %v2311, 16
      %v2680 = vrot.slane %v2678, 5
      %v2681 = vor.u32 %v2677, %v2680
      %v2682 = vrot.slane %v2681, 4
      %v2684 = vshll.u32 %v2312, 16
      %v2686 = vrot.slane %v2684, 5
      %v2687 = vsel %vm420, %v2682, %v2686
      %v2688 = vshrl.u32 %v2312, 16
      %v2690 = vrot.slane %v2688, 4
      %v2691 = vor.u32 %v2690, %v2686
      %v2692 = vrot.slane %v2691, 4
      %v2694 = vshll.u32 %v2313, 16
      %v2696 = vrot.slane %v2694, 5
      %v2697 = vsel %vm420, %v2692, %v2696
      %v2698 = vunpack.c.l.b16 %v2327
      %v2699 = vunpack.c.l.b16 %v2337
      %v2700 = vunpack.c.l.b16 %v2351
      %v2701 = vunpack.c.l.b16 %v2361
      %v2702 = vunpack.c.l.b16 %v2375
      %v2703 = vunpack.c.l.b16 %v2385
      %v2704 = vunpack.c.l.b16 %v2399
      %v2705 = vunpack.c.l.b16 %v2409
      %v2706 = vunpack.c.l.b16 %v2423
      %v2707 = vunpack.c.l.b16 %v2433
      %v2708 = vunpack.c.l.b16 %v2447
      %v2709 = vunpack.c.l.b16 %v2457
      %v2710 = vunpack.c.l.b16 %v2471
      %v2711 = vunpack.c.l.b16 %v2481
      %v2712 = vunpack.c.l.b16 %v2495
      %v2713 = vunpack.c.l.b16 %v2505
      %v2714 = vunpack.c.l.b16 %v2519
      %v2715 = vunpack.c.l.b16 %v2529
      %v2716 = vunpack.c.l.b16 %v2543
      %v2717 = vunpack.c.l.b16 %v2553
      %v2718 = vunpack.c.l.b16 %v2567
      %v2719 = vunpack.c.l.b16 %v2577
      %v2720 = vunpack.c.l.b16 %v2591
      %v2721 = vunpack.c.l.b16 %v2601
      %v2722 = vunpack.c.l.b16 %v2615
      %v2723 = vunpack.c.l.b16 %v2625
      %v2724 = vunpack.c.l.b16 %v2639
      %v2725 = vunpack.c.l.b16 %v2649
      %v2726 = vunpack.c.l.b16 %v2663
      %v2727 = vunpack.c.l.b16 %v2673
      %v2728 = vunpack.c.l.b16 %v2687
      %v2729 = vunpack.c.l.b16 %v2697
      %v2730 = vpack.c.b16 %v2699, %v2698
      %v2731 = vpack.c.b16 %v2701, %v2700
      %v2732 = vpack.c.b16 %v2703, %v2702
      %v2733 = vpack.c.b16 %v2705, %v2704
      %v2734 = vpack.c.b16 %v2707, %v2706
      %v2735 = vpack.c.b16 %v2709, %v2708
      %v2736 = vpack.c.b16 %v2711, %v2710
      %v2737 = vpack.c.b16 %v2713, %v2712
      %v2738 = vpack.c.b16 %v2715, %v2714
      %v2739 = vpack.c.b16 %v2717, %v2716
      %v2740 = vpack.c.b16 %v2719, %v2718
      %v2741 = vpack.c.b16 %v2721, %v2720
      %v2742 = vpack.c.b16 %v2723, %v2722
      %v2743 = vpack.c.b16 %v2725, %v2724
      %v2744 = vpack.c.b16 %v2727, %v2726
      %v2745 = vpack.c.b16 %v2729, %v2728
      %2762 = vst [vmem:[#allocation2 + $0x38] sm:$0xff] %v2730
      %2763 = vst [vmem:[#allocation2 + $0x80] sm:$0xff] %v2731
      %2764 = vst [vmem:[#allocation2 + $0xc8] sm:$0xff] %v2732
      %2765 = vst [vmem:[#allocation2 + $0x110] sm:$0xff] %v2733
      %2766 = vst [vmem:[#allocation2 + $0x158] sm:$0xff] %v2734
      %2767 = vst [vmem:[#allocation2 + $0x1a0] sm:$0xff] %v2735
      %2768 = vst [vmem:[#allocation2 + $0x1e8] sm:$0xff] %v2736
      %2769 = vst [vmem:[#allocation2 + $0x230] sm:$0xff] %v2737
      %2770 = vst [vmem:[#allocation2 + $0x278] sm:$0xff] %v2738
      %2771 = vst [vmem:[#allocation2 + $0x2c0] sm:$0xff] %v2739
      %2772 = vst [vmem:[#allocation2 + $0x308] sm:$0xff] %v2740
      %2773 = vst [vmem:[#allocation2 + $0x350] sm:$0xff] %v2741
      %2774 = vst [vmem:[#allocation2 + $0x398] sm:$0xff] %v2742
      %2775 = vst [vmem:[#allocation2 + $0x3e0] sm:$0xff] %v2743
      %2776 = vst [vmem:[#allocation2 + $0x428] sm:$0xff] %v2744
      %2777 = vst [vmem:[#allocation2 + $0x470] sm:$0xff] %v2745
      %v2778 = vld [vmem:[%s2121] sm:$0xe]
      %v2779 = vld [vmem:[%s2121 + $0x4] sm:$0xf]
      %v2780 = vld [vmem:[%s2121 + $0x8] sm:$0x1]
      %v2781 = vld [vmem:[%s2121 + $0xc] sm:$0xe]
      %v2782 = vld [vmem:[%s2121 + $0x10] sm:$0xf]
      %v2783 = vld [vmem:[%s2121 + $0x14] sm:$0x1]
      %v2784 = vld [vmem:[%s2121 + $0x18] sm:$0xe]
      %v2785 = vld [vmem:[%s2121 + $0x1c] sm:$0xf]
      %v2786 = vld [vmem:[%s2121 + $0x20] sm:$0x1]
      %v2787 = vld [vmem:[%s2121 + $0x24] sm:$0xe]
      %v2788 = vld [vmem:[%s2121 + $0x28] sm:$0xf]
      %v2789 = vld [vmem:[%s2121 + $0x2c] sm:$0x1]
      %v2790 = vld [vmem:[%s2121 + $0x30] sm:$0xe]
      %v2791 = vld [vmem:[%s2121 + $0x34] sm:$0xf]
      %v2792 = vld [vmem:[%s2121 + $0x38] sm:$0x1]
      %v2793 = vld [vmem:[%s2121 + $0x3c] sm:$0xe]
      %v2794 = vld [vmem:[%s2121 + $0x40] sm:$0xf]
      %v2795 = vld [vmem:[%s2121 + $0x44] sm:$0x1]
      %v2796 = vld [vmem:[%s2121 + $0x48] sm:$0xe]
      %v2797 = vld [vmem:[%s2121 + $0x4c] sm:$0xf]
      %v2798 = vld [vmem:[%s2121 + $0x50] sm:$0x1]
      %v2799 = vld [vmem:[%s2121 + $0x54] sm:$0xe]
      %v2800 = vld [vmem:[%s2121 + $0x58] sm:$0xf]
      %v2801 = vld [vmem:[%s2121 + $0x5c] sm:$0x1]
      %v2802 = vld [vmem:[%s2121 + $0x60] sm:$0xe]
      %v2803 = vld [vmem:[%s2121 + $0x64] sm:$0xf]
      %v2804 = vld [vmem:[%s2121 + $0x68] sm:$0x1]
      %v2805 = vld [vmem:[%s2121 + $0x6c] sm:$0xe]
      %v2806 = vld [vmem:[%s2121 + $0x70] sm:$0xf]
      %v2807 = vld [vmem:[%s2121 + $0x74] sm:$0x1]
      %v2808 = vld [vmem:[%s2121 + $0x78] sm:$0xe]
      %v2809 = vld [vmem:[%s2121 + $0x7c] sm:$0xf]
      %v2810 = vld [vmem:[%s2121 + $0x80] sm:$0x1]
      %v2811 = vld [vmem:[%s2121 + $0x84] sm:$0xe]
      %v2812 = vld [vmem:[%s2121 + $0x88] sm:$0xf]
      %v2813 = vld [vmem:[%s2121 + $0x8c] sm:$0x1]
      %v2814 = vld [vmem:[%s2121 + $0x90] sm:$0xe]
      %v2815 = vld [vmem:[%s2121 + $0x94] sm:$0xf]
      %v2816 = vld [vmem:[%s2121 + $0x98] sm:$0x1]
      %v2817 = vld [vmem:[%s2121 + $0x9c] sm:$0xe]
      %v2818 = vld [vmem:[%s2121 + $0xa0] sm:$0xf]
      %v2819 = vld [vmem:[%s2121 + $0xa4] sm:$0x1]
      %v2820 = vld [vmem:[%s2121 + $0xa8] sm:$0xe]
      %v2821 = vld [vmem:[%s2121 + $0xac] sm:$0xf]
      %v2822 = vld [vmem:[%s2121 + $0xb0] sm:$0x1]
      %v2823 = vld [vmem:[%s2121 + $0xb4] sm:$0xe]
      %v2824 = vld [vmem:[%s2121 + $0xb8] sm:$0xf]
      %v2825 = vld [vmem:[%s2121 + $0xbc] sm:$0x1]
      %v2874 = vrot.slane %v2778, 5
      %v2875 = vrot.slane %v2874, 4
      %v2876 = vrot.slane %v2779, 5
      %v2877 = vsel %vm983, %v2875, %v2876
      %v2878 = vrot.slane %v2876, 4
      %v2879 = vrot.slane %v2780, 5
      %v2880 = vsel %vm983, %v2878, %v2879
      %v2881 = vrot.slane %v2781, 5
      %v2882 = vrot.slane %v2881, 4
      %v2883 = vrot.slane %v2782, 5
      %v2884 = vsel %vm983, %v2882, %v2883
      %v2885 = vrot.slane %v2883, 4
      %v2886 = vrot.slane %v2783, 5
      %v2887 = vsel %vm983, %v2885, %v2886
      %v2888 = vrot.slane %v2784, 5
      %v2889 = vrot.slane %v2888, 4
      %v2890 = vrot.slane %v2785, 5
      %v2891 = vsel %vm983, %v2889, %v2890
      %v2892 = vrot.slane %v2890, 4
      %v2893 = vrot.slane %v2786, 5
      %v2894 = vsel %vm983, %v2892, %v2893
      %v2895 = vrot.slane %v2787, 5
      %v2896 = vrot.slane %v2895, 4
      %v2897 = vrot.slane %v2788, 5
      %v2898 = vsel %vm983, %v2896, %v2897
      %v2899 = vrot.slane %v2897, 4
      %v2900 = vrot.slane %v2789, 5
      %v2901 = vsel %vm983, %v2899, %v2900
      %v2902 = vrot.slane %v2790, 5
      %v2903 = vrot.slane %v2902, 4
      %v2904 = vrot.slane %v2791, 5
      %v2905 = vsel %vm983, %v2903, %v2904
      %v2906 = vrot.slane %v2904, 4
      %v2907 = vrot.slane %v2792, 5
      %v2908 = vsel %vm983, %v2906, %v2907
      %v2909 = vrot.slane %v2793, 5
      %v2910 = vrot.slane %v2909, 4
      %v2911 = vrot.slane %v2794, 5
      %v2912 = vsel %vm983, %v2910, %v2911
      %v2913 = vrot.slane %v2911, 4
      %v2914 = vrot.slane %v2795, 5
      %v2915 = vsel %vm983, %v2913, %v2914
      %v2916 = vrot.slane %v2796, 5
      %v2917 = vrot.slane %v2916, 4
      %v2918 = vrot.slane %v2797, 5
      %v2919 = vsel %vm983, %v2917, %v2918
      %v2920 = vrot.slane %v2918, 4
      %v2921 = vrot.slane %v2798, 5
      %v2922 = vsel %vm983, %v2920, %v2921
      %v2923 = vrot.slane %v2799, 5
      %v2924 = vrot.slane %v2923, 4
      %v2925 = vrot.slane %v2800, 5
      %v2926 = vsel %vm983, %v2924, %v2925
      %v2927 = vrot.slane %v2925, 4
      %v2928 = vrot.slane %v2801, 5
      %v2929 = vsel %vm983, %v2927, %v2928
      %v2930 = vrot.slane %v2802, 5
      %v2931 = vrot.slane %v2930, 4
      %v2932 = vrot.slane %v2803, 5
      %v2933 = vsel %vm983, %v2931, %v2932
      %v2934 = vrot.slane %v2932, 4
      %v2935 = vrot.slane %v2804, 5
      %v2936 = vsel %vm983, %v2934, %v2935
      %v2937 = vrot.slane %v2805, 5
      %v2938 = vrot.slane %v2937, 4
      %v2939 = vrot.slane %v2806, 5
      %v2940 = vsel %vm983, %v2938, %v2939
      %v2941 = vrot.slane %v2939, 4
      %v2942 = vrot.slane %v2807, 5
      %v2943 = vsel %vm983, %v2941, %v2942
      %v2944 = vrot.slane %v2808, 5
      %v2945 = vrot.slane %v2944, 4
      %v2946 = vrot.slane %v2809, 5
      %v2947 = vsel %vm983, %v2945, %v2946
      %v2948 = vrot.slane %v2946, 4
      %v2949 = vrot.slane %v2810, 5
      %v2950 = vsel %vm983, %v2948, %v2949
      %v2951 = vrot.slane %v2811, 5
      %v2952 = vrot.slane %v2951, 4
      %v2953 = vrot.slane %v2812, 5
      %v2954 = vsel %vm983, %v2952, %v2953
      %v2955 = vrot.slane %v2953, 4
      %v2956 = vrot.slane %v2813, 5
      %v2957 = vsel %vm983, %v2955, %v2956
      %v2958 = vrot.slane %v2814, 5
      %v2959 = vrot.slane %v2958, 4
      %v2960 = vrot.slane %v2815, 5
      %v2961 = vsel %vm983, %v2959, %v2960
      %v2962 = vrot.slane %v2960, 4
      %v2963 = vrot.slane %v2816, 5
      %v2964 = vsel %vm983, %v2962, %v2963
      %v2965 = vrot.slane %v2817, 5
      %v2966 = vrot.slane %v2965, 4
      %v2967 = vrot.slane %v2818, 5
      %v2968 = vsel %vm983, %v2966, %v2967
      %v2969 = vrot.slane %v2967, 4
      %v2970 = vrot.slane %v2819, 5
      %v2971 = vsel %vm983, %v2969, %v2970
      %v2972 = vrot.slane %v2820, 5
      %v2973 = vrot.slane %v2972, 4
      %v2974 = vrot.slane %v2821, 5
      %v2975 = vsel %vm983, %v2973, %v2974
      %v2976 = vrot.slane %v2974, 4
      %v2977 = vrot.slane %v2822, 5
      %v2978 = vsel %vm983, %v2976, %v2977
      %v2979 = vrot.slane %v2823, 5
      %v2980 = vrot.slane %v2979, 4
      %v2981 = vrot.slane %v2824, 5
      %v2982 = vsel %vm983, %v2980, %v2981
      %v2983 = vrot.slane %v2981, 4
      %v2984 = vrot.slane %v2825, 5
      %v2985 = vsel %vm983, %v2983, %v2984
      %v2986 = vunpack.c.l.b16 %v2877
      %v2987 = vunpack.c.l.b16 %v2880
      %v2988 = vunpack.c.l.b16 %v2884
      %v2989 = vunpack.c.l.b16 %v2887
      %v2990 = vunpack.c.l.b16 %v2891
      %v2991 = vunpack.c.l.b16 %v2894
      %v2992 = vunpack.c.l.b16 %v2898
      %v2993 = vunpack.c.l.b16 %v2901
      %v2994 = vunpack.c.l.b16 %v2905
      %v2995 = vunpack.c.l.b16 %v2908
      %v2996 = vunpack.c.l.b16 %v2912
      %v2997 = vunpack.c.l.b16 %v2915
      %v2998 = vunpack.c.l.b16 %v2919
      %v2999 = vunpack.c.l.b16 %v2922
      %v3000 = vunpack.c.l.b16 %v2926
      %v3001 = vunpack.c.l.b16 %v2929
      %v3002 = vunpack.c.l.b16 %v2933
      %v3003 = vunpack.c.l.b16 %v2936
      %v3004 = vunpack.c.l.b16 %v2940
      %v3005 = vunpack.c.l.b16 %v2943
      %v3006 = vunpack.c.l.b16 %v2947
      %v3007 = vunpack.c.l.b16 %v2950
      %v3008 = vunpack.c.l.b16 %v2954
      %v3009 = vunpack.c.l.b16 %v2957
      %v3010 = vunpack.c.l.b16 %v2961
      %v3011 = vunpack.c.l.b16 %v2964
      %v3012 = vunpack.c.l.b16 %v2968
      %v3013 = vunpack.c.l.b16 %v2971
      %v3014 = vunpack.c.l.b16 %v2975
      %v3015 = vunpack.c.l.b16 %v2978
      %v3016 = vunpack.c.l.b16 %v2982
      %v3017 = vunpack.c.l.b16 %v2985
      %v3018 = vpack.c.b16 %v2987, %v2986
      %v3019 = vpack.c.b16 %v2989, %v2988
      %v3020 = vpack.c.b16 %v2991, %v2990
      %v3021 = vpack.c.b16 %v2993, %v2992
      %v3022 = vpack.c.b16 %v2995, %v2994
      %v3023 = vpack.c.b16 %v2997, %v2996
      %v3024 = vpack.c.b16 %v2999, %v2998
      %v3025 = vpack.c.b16 %v3001, %v3000
      %v3026 = vpack.c.b16 %v3003, %v3002
      %v3027 = vpack.c.b16 %v3005, %v3004
      %v3028 = vpack.c.b16 %v3007, %v3006
      %v3029 = vpack.c.b16 %v3009, %v3008
      %v3030 = vpack.c.b16 %v3011, %v3010
      %v3031 = vpack.c.b16 %v3013, %v3012
      %v3032 = vpack.c.b16 %v3015, %v3014
      %v3033 = vpack.c.b16 %v3017, %v3016
      %3050 = vst [vmem:[#allocation2 + $0x40] sm:$0xff] %v3018
      %3051 = vst [vmem:[#allocation2 + $0x88] sm:$0xff] %v3019
      %3052 = vst [vmem:[#allocation2 + $0xd0] sm:$0xff] %v3020
      %3053 = vst [vmem:[#allocation2 + $0x118] sm:$0xff] %v3021
      %3054 = vst [vmem:[#allocation2 + $0x160] sm:$0xff] %v3022
      %3055 = vst [vmem:[#allocation2 + $0x1a8] sm:$0xff] %v3023
      %3056 = vst [vmem:[#allocation2 + $0x1f0] sm:$0xff] %v3024
      %3057 = vst [vmem:[#allocation2 + $0x238] sm:$0xff] %v3025
      %3058 = vst [vmem:[#allocation2 + $0x280] sm:$0xff] %v3026
      %3059 = vst [vmem:[#allocation2 + $0x2c8] sm:$0xff] %v3027
      %3060 = vst [vmem:[#allocation2 + $0x310] sm:$0xff] %v3028
      %3061 = vst [vmem:[#allocation2 + $0x358] sm:$0xff] %v3029
      %3062 = vst [vmem:[#allocation2 + $0x3a0] sm:$0xff] %v3030
      %3063 = vst [vmem:[#allocation2 + $0x3e8] sm:$0xff] %v3031
      %3064 = vst [vmem:[#allocation2 + $0x430] sm:$0xff] %v3032
      %3065 = vst [vmem:[#allocation2 + $0x478] sm:$0xff] %v3033
      %v3066 = vld [vmem:[#allocation2] sm:$0xff]
      %v3067 = vld [vmem:[#allocation2 + $0x8] sm:$0xff]
      %v3068 = vld [vmem:[#allocation2 + $0x10] sm:$0xff]
      %v3069 = vld [vmem:[#allocation2 + $0x18] sm:$0xff]
      %v3070 = vld [vmem:[#allocation2 + $0x20] sm:$0xff]
      %v3071 = vld [vmem:[#allocation2 + $0x28] sm:$0xff]
      %v3072 = vld [vmem:[#allocation2 + $0x30] sm:$0xff]
      %v3073 = vld [vmem:[#allocation2 + $0x38] sm:$0xff]
      %v3074 = vld [vmem:[#allocation2 + $0x40] sm:$0xff]
      %v3075 = vld [vmem:[#allocation2 + $0x48] sm:$0xff]
      %v3076 = vld [vmem:[#allocation2 + $0x50] sm:$0xff]
      %v3077 = vld [vmem:[#allocation2 + $0x58] sm:$0xff]
      %v3078 = vld [vmem:[#allocation2 + $0x60] sm:$0xff]
      %v3079 = vld [vmem:[#allocation2 + $0x68] sm:$0xff]
      %v3080 = vld [vmem:[#allocation2 + $0x70] sm:$0xff]
      %v3081 = vld [vmem:[#allocation2 + $0x78] sm:$0xff]
      %v3082 = vld [vmem:[#allocation2 + $0x80] sm:$0xff]
      %v3083 = vld [vmem:[#allocation2 + $0x88] sm:$0xff]
      %v3084 = vld [vmem:[#allocation2 + $0x90] sm:$0xff]
      %v3085 = vld [vmem:[#allocation2 + $0x98] sm:$0xff]
      %v3086 = vld [vmem:[#allocation2 + $0xa0] sm:$0xff]
      %v3087 = vld [vmem:[#allocation2 + $0xa8] sm:$0xff]
      %v3088 = vld [vmem:[#allocation2 + $0xb0] sm:$0xff]
      %v3089 = vld [vmem:[#allocation2 + $0xb8] sm:$0xff]
      %v3090 = vld [vmem:[#allocation2 + $0xc0] sm:$0xff]
      %v3091 = vld [vmem:[#allocation2 + $0xc8] sm:$0xff]
      %v3092 = vld [vmem:[#allocation2 + $0xd0] sm:$0xff]
      %v3093 = vld [vmem:[#allocation2 + $0xd8] sm:$0xff]
      %v3094 = vld [vmem:[#allocation2 + $0xe0] sm:$0xff]
      %v3095 = vld [vmem:[#allocation2 + $0xe8] sm:$0xff]
      %v3096 = vld [vmem:[#allocation2 + $0xf0] sm:$0xff]
      %v3097 = vld [vmem:[#allocation2 + $0xf8] sm:$0xff]
      %v3098 = vld [vmem:[#allocation2 + $0x100] sm:$0xff]
      %v3099 = vld [vmem:[#allocation2 + $0x108] sm:$0xff]
      %v3100 = vld [vmem:[#allocation2 + $0x110] sm:$0xff]
      %v3101 = vld [vmem:[#allocation2 + $0x118] sm:$0xff]
      %v3102 = vld [vmem:[#allocation2 + $0x120] sm:$0xff]
      %v3103 = vld [vmem:[#allocation2 + $0x128] sm:$0xff]
      %v3104 = vld [vmem:[#allocation2 + $0x130] sm:$0xff]
      %v3105 = vld [vmem:[#allocation2 + $0x138] sm:$0xff]
      %v3106 = vld [vmem:[#allocation2 + $0x140] sm:$0xff]
      %v3107 = vld [vmem:[#allocation2 + $0x148] sm:$0xff]
      %v3108 = vld [vmem:[#allocation2 + $0x150] sm:$0xff]
      %v3109 = vld [vmem:[#allocation2 + $0x158] sm:$0xff]
      %v3110 = vld [vmem:[#allocation2 + $0x160] sm:$0xff]
      %v3111 = vld [vmem:[#allocation2 + $0x168] sm:$0xff]
      %v3112 = vld [vmem:[#allocation2 + $0x170] sm:$0xff]
      %v3113 = vld [vmem:[#allocation2 + $0x178] sm:$0xff]
      %v3114 = vld [vmem:[#allocation2 + $0x180] sm:$0xff]
      %v3115 = vld [vmem:[#allocation2 + $0x188] sm:$0xff]
      %v3116 = vld [vmem:[#allocation2 + $0x190] sm:$0xff]
      %v3117 = vld [vmem:[#allocation2 + $0x198] sm:$0xff]
      %v3118 = vld [vmem:[#allocation2 + $0x1a0] sm:$0xff]
      %v3119 = vld [vmem:[#allocation2 + $0x1a8] sm:$0xff]
      %v3120 = vld [vmem:[#allocation2 + $0x1b0] sm:$0xff]
      %v3121 = vld [vmem:[#allocation2 + $0x1b8] sm:$0xff]
      %v3122 = vld [vmem:[#allocation2 + $0x1c0] sm:$0xff]
      %v3123 = vld [vmem:[#allocation2 + $0x1c8] sm:$0xff]
      %v3124 = vld [vmem:[#allocation2 + $0x1d0] sm:$0xff]
      %v3125 = vld [vmem:[#allocation2 + $0x1d8] sm:$0xff]
      %v3126 = vld [vmem:[#allocation2 + $0x1e0] sm:$0xff]
      %v3127 = vld [vmem:[#allocation2 + $0x1e8] sm:$0xff]
      %v3128 = vld [vmem:[#allocation2 + $0x1f0] sm:$0xff]
      %v3129 = vld [vmem:[#allocation2 + $0x1f8] sm:$0xff]
      %v3130 = vld [vmem:[#allocation2 + $0x200] sm:$0xff]
      %v3131 = vld [vmem:[#allocation2 + $0x208] sm:$0xff]
      %v3132 = vld [vmem:[#allocation2 + $0x210] sm:$0xff]
      %v3133 = vld [vmem:[#allocation2 + $0x218] sm:$0xff]
      %v3134 = vld [vmem:[#allocation2 + $0x220] sm:$0xff]
      %v3135 = vld [vmem:[#allocation2 + $0x228] sm:$0xff]
      %v3136 = vld [vmem:[#allocation2 + $0x230] sm:$0xff]
      %v3137 = vld [vmem:[#allocation2 + $0x238] sm:$0xff]
      %v3138 = vld [vmem:[#allocation2 + $0x240] sm:$0xff]
      %v3139 = vld [vmem:[#allocation2 + $0x248] sm:$0xff]
      %v3140 = vld [vmem:[#allocation2 + $0x250] sm:$0xff]
      %v3141 = vld [vmem:[#allocation2 + $0x258] sm:$0xff]
      %v3142 = vld [vmem:[#allocation2 + $0x260] sm:$0xff]
      %v3143 = vld [vmem:[#allocation2 + $0x268] sm:$0xff]
      %v3144 = vld [vmem:[#allocation2 + $0x270] sm:$0xff]
      %v3145 = vld [vmem:[#allocation2 + $0x278] sm:$0xff]
      %v3146 = vld [vmem:[#allocation2 + $0x280] sm:$0xff]
      %v3147 = vld [vmem:[#allocation2 + $0x288] sm:$0xff]
      %v3148 = vld [vmem:[#allocation2 + $0x290] sm:$0xff]
      %v3149 = vld [vmem:[#allocation2 + $0x298] sm:$0xff]
      %v3150 = vld [vmem:[#allocation2 + $0x2a0] sm:$0xff]
      %v3151 = vld [vmem:[#allocation2 + $0x2a8] sm:$0xff]
      %v3152 = vld [vmem:[#allocation2 + $0x2b0] sm:$0xff]
      %v3153 = vld [vmem:[#allocation2 + $0x2b8] sm:$0xff]
      %v3154 = vld [vmem:[#allocation2 + $0x2c0] sm:$0xff]
      %v3155 = vld [vmem:[#allocation2 + $0x2c8] sm:$0xff]
      %v3156 = vld [vmem:[#allocation2 + $0x2d0] sm:$0xff]
      %v3157 = vld [vmem:[#allocation2 + $0x2d8] sm:$0xff]
      %v3158 = vld [vmem:[#allocation2 + $0x2e0] sm:$0xff]
      %v3159 = vld [vmem:[#allocation2 + $0x2e8] sm:$0xff]
      %v3160 = vld [vmem:[#allocation2 + $0x2f0] sm:$0xff]
      %v3161 = vld [vmem:[#allocation2 + $0x2f8] sm:$0xff]
      %v3162 = vld [vmem:[#allocation2 + $0x300] sm:$0xff]
      %v3163 = vld [vmem:[#allocation2 + $0x308] sm:$0xff]
      %v3164 = vld [vmem:[#allocation2 + $0x310] sm:$0xff]
      %v3165 = vld [vmem:[#allocation2 + $0x318] sm:$0xff]
      %v3166 = vld [vmem:[#allocation2 + $0x320] sm:$0xff]
      %v3167 = vld [vmem:[#allocation2 + $0x328] sm:$0xff]
      %v3168 = vld [vmem:[#allocation2 + $0x330] sm:$0xff]
      %v3169 = vld [vmem:[#allocation2 + $0x338] sm:$0xff]
      %v3170 = vld [vmem:[#allocation2 + $0x340] sm:$0xff]
      %v3171 = vld [vmem:[#allocation2 + $0x348] sm:$0xff]
      %v3172 = vld [vmem:[#allocation2 + $0x350] sm:$0xff]
      %v3173 = vld [vmem:[#allocation2 + $0x358] sm:$0xff]
      %v3174 = vld [vmem:[#allocation2 + $0x360] sm:$0xff]
      %v3175 = vld [vmem:[#allocation2 + $0x368] sm:$0xff]
      %v3176 = vld [vmem:[#allocation2 + $0x370] sm:$0xff]
      %v3177 = vld [vmem:[#allocation2 + $0x378] sm:$0xff]
      %v3178 = vld [vmem:[#allocation2 + $0x380] sm:$0xff]
      %v3179 = vld [vmem:[#allocation2 + $0x388] sm:$0xff]
      %v3180 = vld [vmem:[#allocation2 + $0x390] sm:$0xff]
      %v3181 = vld [vmem:[#allocation2 + $0x398] sm:$0xff]
      %v3182 = vld [vmem:[#allocation2 + $0x3a0] sm:$0xff]
      %v3183 = vld [vmem:[#allocation2 + $0x3a8] sm:$0xff]
      %v3184 = vld [vmem:[#allocation2 + $0x3b0] sm:$0xff]
      %v3185 = vld [vmem:[#allocation2 + $0x3b8] sm:$0xff]
      %v3186 = vld [vmem:[#allocation2 + $0x3c0] sm:$0xff]
      %v3187 = vld [vmem:[#allocation2 + $0x3c8] sm:$0xff]
      %v3188 = vld [vmem:[#allocation2 + $0x3d0] sm:$0xff]
      %v3189 = vld [vmem:[#allocation2 + $0x3d8] sm:$0xff]
      %v3190 = vld [vmem:[#allocation2 + $0x3e0] sm:$0xff]
      %v3191 = vld [vmem:[#allocation2 + $0x3e8] sm:$0xff]
      %v3192 = vld [vmem:[#allocation2 + $0x3f0] sm:$0xff]
      %v3193 = vld [vmem:[#allocation2 + $0x3f8] sm:$0xff]
      %v3194 = vld [vmem:[#allocation2 + $0x400] sm:$0xff]
      %v3195 = vld [vmem:[#allocation2 + $0x408] sm:$0xff]
      %v3196 = vld [vmem:[#allocation2 + $0x410] sm:$0xff]
      %v3197 = vld [vmem:[#allocation2 + $0x418] sm:$0xff]
      %v3198 = vld [vmem:[#allocation2 + $0x420] sm:$0xff]
      %v3199 = vld [vmem:[#allocation2 + $0x428] sm:$0xff]
      %v3200 = vld [vmem:[#allocation2 + $0x430] sm:$0xff]
      %v3201 = vld [vmem:[#allocation2 + $0x438] sm:$0xff]
      %v3202 = vld [vmem:[#allocation2 + $0x440] sm:$0xff]
      %v3203 = vld [vmem:[#allocation2 + $0x448] sm:$0xff]
      %v3204 = vld [vmem:[#allocation2 + $0x450] sm:$0xff]
      %v3205 = vld [vmem:[#allocation2 + $0x458] sm:$0xff]
      %v3206 = vld [vmem:[#allocation2 + $0x460] sm:$0xff]
      %v3207 = vld [vmem:[#allocation2 + $0x468] sm:$0xff]
      %v3208 = vld [vmem:[#allocation2 + $0x470] sm:$0xff]
      %v3209 = vld [vmem:[#allocation2 + $0x478] sm:$0xff]
      %v3210 = vld [vmem:[%s1] sm:$0xf]
      %v3211 = vld [vmem:[%s1 + $0x4] sm:$0xf]
      %v3212 = vld [vmem:[%s1 + $0x8] sm:$0xf]
      %v3213 = vld [vmem:[%s1 + $0xc] sm:$0xf]
      %v3214 = vld [vmem:[%s1 + $0x10] sm:$0xf]
      %v3215 = vld [vmem:[%s1 + $0x14] sm:$0xf]
      %v3216 = vld [vmem:[%s1 + $0x18] sm:$0xf]
      %v3217 = vld [vmem:[%s1 + $0x1c] sm:$0xf]
      %v3218 = vld [vmem:[%s1 + $0x20] sm:$0xf]
      %v3219 = vld [vmem:[%s1 + $0x24] sm:$0xf]
      %v3220 = vld [vmem:[%s1 + $0x28] sm:$0xf]
      %v3221 = vld [vmem:[%s1 + $0x2c] sm:$0xf]
      %v3222 = vld [vmem:[%s1 + $0x30] sm:$0xf]
      %v3223 = vld [vmem:[%s1 + $0x34] sm:$0xf]
      %v3224 = vld [vmem:[%s1 + $0x38] sm:$0xf]
      %v3225 = vld [vmem:[%s1 + $0x3c] sm:$0xf]
      %v3226 = vld [vmem:[%s1 + $0x40] sm:$0xf]
      %v3227 = vld [vmem:[%s1 + $0x44] sm:$0xf]
      %v3228 = vld [vmem:[%s1 + $0x48] sm:$0xf]
      %v3229 = vld [vmem:[%s1 + $0x4c] sm:$0xf]
      %v3230 = vld [vmem:[%s1 + $0x50] sm:$0xf]
      %v3231 = vld [vmem:[%s1 + $0x54] sm:$0xf]
      %v3232 = vld [vmem:[%s1 + $0x58] sm:$0xf]
      %v3233 = vld [vmem:[%s1 + $0x5c] sm:$0xf]
      %v3234 = vld [vmem:[%s1 + $0x60] sm:$0xf]
      %v3235 = vld [vmem:[%s1 + $0x64] sm:$0xf]
      %v3236 = vld [vmem:[%s1 + $0x68] sm:$0xf]
      %v3237 = vld [vmem:[%s1 + $0x6c] sm:$0xf]
      %v3238 = vld [vmem:[%s1 + $0x70] sm:$0xf]
      %v3239 = vld [vmem:[%s1 + $0x74] sm:$0xf]
      %v3240 = vld [vmem:[%s1 + $0x78] sm:$0xf]
      %v3241 = vld [vmem:[%s1 + $0x7c] sm:$0xf]
      %v3242 = vld [vmem:[%s1 + $0x80] sm:$0xf]
      %v3243 = vld [vmem:[%s1 + $0x84] sm:$0xf]
      %v3244 = vld [vmem:[%s1 + $0x88] sm:$0xf]
      %v3245 = vld [vmem:[%s1 + $0x8c] sm:$0xf]
      %v3246 = vld [vmem:[%s1 + $0x90] sm:$0xf]
      %v3247 = vld [vmem:[%s1 + $0x94] sm:$0xf]
      %v3248 = vld [vmem:[%s1 + $0x98] sm:$0xf]
      %v3249 = vld [vmem:[%s1 + $0x9c] sm:$0xf]
      %v3250 = vld [vmem:[%s1 + $0xa0] sm:$0xf]
      %v3251 = vld [vmem:[%s1 + $0xa4] sm:$0xf]
      %v3252 = vld [vmem:[%s1 + $0xa8] sm:$0xf]
      %v3253 = vld [vmem:[%s1 + $0xac] sm:$0xf]
      %v3254 = vld [vmem:[%s1 + $0xb0] sm:$0xf]
      %v3255 = vld [vmem:[%s1 + $0xb4] sm:$0xf]
      %v3256 = vld [vmem:[%s1 + $0xb8] sm:$0xf]
      %v3257 = vld [vmem:[%s1 + $0xbc] sm:$0xf]
      %v3258 = vld [vmem:[%s1 + $0xc0] sm:$0xf]
      %v3259 = vld [vmem:[%s1 + $0xc4] sm:$0xf]
      %v3260 = vld [vmem:[%s1 + $0xc8] sm:$0xf]
      %v3261 = vld [vmem:[%s1 + $0xcc] sm:$0xf]
      %v3262 = vld [vmem:[%s1 + $0xd0] sm:$0xf]
      %v3263 = vld [vmem:[%s1 + $0xd4] sm:$0xf]
      %v3264 = vld [vmem:[%s1 + $0xd8] sm:$0xf]
      %v3265 = vld [vmem:[%s1 + $0xdc] sm:$0xf]
      %v3266 = vld [vmem:[%s1 + $0xe0] sm:$0xf]
      %v3267 = vld [vmem:[%s1 + $0xe4] sm:$0xf]
      %v3268 = vld [vmem:[%s1 + $0xe8] sm:$0xf]
      %v3269 = vld [vmem:[%s1 + $0xec] sm:$0xf]
      %v3270 = vld [vmem:[%s1 + $0xf0] sm:$0xf]
      %v3271 = vld [vmem:[%s1 + $0xf4] sm:$0xf]
      %v3272 = vld [vmem:[%s1 + $0xf8] sm:$0xf]
      %v3273 = vld [vmem:[%s1 + $0xfc] sm:$0xf]
      %v3274 = vld [vmem:[%s1 + $0x100] sm:$0xf]
      %v3275 = vld [vmem:[%s1 + $0x104] sm:$0xf]
      %v3276 = vld [vmem:[%s1 + $0x108] sm:$0xf]
      %v3277 = vld [vmem:[%s1 + $0x10c] sm:$0xf]
      %v3278 = vld [vmem:[%s1 + $0x110] sm:$0xf]
      %v3279 = vld [vmem:[%s1 + $0x114] sm:$0xf]
      %v3280 = vld [vmem:[%s1 + $0x118] sm:$0xf]
      %v3281 = vld [vmem:[%s1 + $0x11c] sm:$0xf]
      %v3282 = vld [vmem:[%s1 + $0x120] sm:$0xf]
      %v3283 = vld [vmem:[%s1 + $0x124] sm:$0xf]
      %v3284 = vld [vmem:[%s1 + $0x128] sm:$0xf]
      %v3285 = vld [vmem:[%s1 + $0x12c] sm:$0xf]
      %v3286 = vld [vmem:[%s1 + $0x130] sm:$0xf]
      %v3287 = vld [vmem:[%s1 + $0x134] sm:$0xf]
      %v3288 = vld [vmem:[%s1 + $0x138] sm:$0xf]
      %v3289 = vld [vmem:[%s1 + $0x13c] sm:$0xf]
      %v3290 = vld [vmem:[%s1 + $0x140] sm:$0xf]
      %v3291 = vld [vmem:[%s1 + $0x144] sm:$0xf]
      %v3292 = vld [vmem:[%s1 + $0x148] sm:$0xf]
      %v3293 = vld [vmem:[%s1 + $0x14c] sm:$0xf]
      %v3294 = vld [vmem:[%s1 + $0x150] sm:$0xf]
      %v3295 = vld [vmem:[%s1 + $0x154] sm:$0xf]
      %v3296 = vld [vmem:[%s1 + $0x158] sm:$0xf]
      %v3297 = vld [vmem:[%s1 + $0x15c] sm:$0xf]
      %v3298 = vld [vmem:[%s1 + $0x160] sm:$0xf]
      %v3299 = vld [vmem:[%s1 + $0x164] sm:$0xf]
      %v3300 = vld [vmem:[%s1 + $0x168] sm:$0xf]
      %v3301 = vld [vmem:[%s1 + $0x16c] sm:$0xf]
      %v3302 = vld [vmem:[%s1 + $0x170] sm:$0xf]
      %v3303 = vld [vmem:[%s1 + $0x174] sm:$0xf]
      %v3304 = vld [vmem:[%s1 + $0x178] sm:$0xf]
      %v3305 = vld [vmem:[%s1 + $0x17c] sm:$0xf]
      %v3306 = vld [vmem:[%s1 + $0x180] sm:$0xf]
      %v3307 = vld [vmem:[%s1 + $0x184] sm:$0xf]
      %v3308 = vld [vmem:[%s1 + $0x188] sm:$0xf]
      %v3309 = vld [vmem:[%s1 + $0x18c] sm:$0xf]
      %v3310 = vld [vmem:[%s1 + $0x190] sm:$0xf]
      %v3311 = vld [vmem:[%s1 + $0x194] sm:$0xf]
      %v3312 = vld [vmem:[%s1 + $0x198] sm:$0xf]
      %v3313 = vld [vmem:[%s1 + $0x19c] sm:$0xf]
      %v3314 = vld [vmem:[%s1 + $0x1a0] sm:$0xf]
      %v3315 = vld [vmem:[%s1 + $0x1a4] sm:$0xf]
      %v3316 = vld [vmem:[%s1 + $0x1a8] sm:$0xf]
      %v3317 = vld [vmem:[%s1 + $0x1ac] sm:$0xf]
      %v3318 = vld [vmem:[%s1 + $0x1b0] sm:$0xf]
      %v3319 = vld [vmem:[%s1 + $0x1b4] sm:$0xf]
      %v3320 = vld [vmem:[%s1 + $0x1b8] sm:$0xf]
      %v3321 = vld [vmem:[%s1 + $0x1bc] sm:$0xf]
      %v3322 = vld [vmem:[%s1 + $0x1c0] sm:$0xf]
      %v3323 = vld [vmem:[%s1 + $0x1c4] sm:$0xf]
      %v3324 = vld [vmem:[%s1 + $0x1c8] sm:$0xf]
      %v3325 = vld [vmem:[%s1 + $0x1cc] sm:$0xf]
      %v3326 = vld [vmem:[%s1 + $0x1d0] sm:$0xf]
      %v3327 = vld [vmem:[%s1 + $0x1d4] sm:$0xf]
      %v3328 = vld [vmem:[%s1 + $0x1d8] sm:$0xf]
      %v3329 = vld [vmem:[%s1 + $0x1dc] sm:$0xf]
      %v3330 = vld [vmem:[%s1 + $0x1e0] sm:$0xf]
      %v3331 = vld [vmem:[%s1 + $0x1e4] sm:$0xf]
      %v3332 = vld [vmem:[%s1 + $0x1e8] sm:$0xf]
      %v3333 = vld [vmem:[%s1 + $0x1ec] sm:$0xf]
      %v3334 = vld [vmem:[%s1 + $0x1f0] sm:$0xf]
      %v3335 = vld [vmem:[%s1 + $0x1f4] sm:$0xf]
      %v3336 = vld [vmem:[%s1 + $0x1f8] sm:$0xf]
      %v3337 = vld [vmem:[%s1 + $0x1fc] sm:$0xf]
      %v3338 = vld [vmem:[%s1 + $0x200] sm:$0xf]
      %v3339 = vld [vmem:[%s1 + $0x204] sm:$0xf]
      %v3340 = vld [vmem:[%s1 + $0x208] sm:$0xf]
      %v3341 = vld [vmem:[%s1 + $0x20c] sm:$0xf]
      %v3342 = vld [vmem:[%s1 + $0x210] sm:$0xf]
      %v3343 = vld [vmem:[%s1 + $0x214] sm:$0xf]
      %v3344 = vld [vmem:[%s1 + $0x218] sm:$0xf]
      %v3345 = vld [vmem:[%s1 + $0x21c] sm:$0xf]
      %v3346 = vld [vmem:[%s1 + $0x220] sm:$0xf]
      %v3347 = vld [vmem:[%s1 + $0x224] sm:$0xf]
      %v3348 = vld [vmem:[%s1 + $0x228] sm:$0xf]
      %v3349 = vld [vmem:[%s1 + $0x22c] sm:$0xf]
      %v3350 = vld [vmem:[%s1 + $0x230] sm:$0xf]
      %v3351 = vld [vmem:[%s1 + $0x234] sm:$0xf]
      %v3352 = vld [vmem:[%s1 + $0x238] sm:$0xf]
      %v3353 = vld [vmem:[%s1 + $0x23c] sm:$0xf]
      %v3354 = vld [vmem:[%s2] sm:$0x1]
      %v3356 = vlaneseq
      %v3357 = vshrl.u32 %v3356, 7
      %v3358 = vsub.s32 0, %v3357
      %v3359 = vrot.slane %v3354, %v3358
      %v3505 = vunpack.c.l.b16 %v3210
      %v3506 = vunpack.c.l.b16 %v3211
      %v3507 = vunpack.c.l.b16 %v3212
      %v3508 = vunpack.c.l.b16 %v3213
      %v3509 = vunpack.c.l.b16 %v3214
      %v3510 = vunpack.c.l.b16 %v3215
      %v3511 = vunpack.c.l.b16 %v3216
      %v3512 = vunpack.c.l.b16 %v3217
      %v3513 = vunpack.c.l.b16 %v3218
      %v3514 = vunpack.c.l.b16 %v3219
      %v3515 = vunpack.c.l.b16 %v3220
      %v3516 = vunpack.c.l.b16 %v3221
      %v3517 = vunpack.c.l.b16 %v3222
      %v3518 = vunpack.c.l.b16 %v3223
      %v3519 = vunpack.c.l.b16 %v3224
      %v3520 = vunpack.c.l.b16 %v3225
      %v3521 = vunpack.c.l.b16 %v3226
      %v3522 = vunpack.c.l.b16 %v3227
      %v3523 = vunpack.c.l.b16 %v3228
      %v3524 = vunpack.c.l.b16 %v3229
      %v3525 = vunpack.c.l.b16 %v3230
      %v3526 = vunpack.c.l.b16 %v3231
      %v3527 = vunpack.c.l.b16 %v3232
      %v3528 = vunpack.c.l.b16 %v3233
      %v3529 = vunpack.c.l.b16 %v3234
      %v3530 = vunpack.c.l.b16 %v3235
      %v3531 = vunpack.c.l.b16 %v3236
      %v3532 = vunpack.c.l.b16 %v3237
      %v3533 = vunpack.c.l.b16 %v3238
      %v3534 = vunpack.c.l.b16 %v3239
      %v3535 = vunpack.c.l.b16 %v3240
      %v3536 = vunpack.c.l.b16 %v3241
      %v3537 = vunpack.c.l.b16 %v3242
      %v3538 = vunpack.c.l.b16 %v3243
      %v3539 = vunpack.c.l.b16 %v3244
      %v3540 = vunpack.c.l.b16 %v3245
      %v3541 = vunpack.c.l.b16 %v3246
      %v3542 = vunpack.c.l.b16 %v3247
      %v3543 = vunpack.c.l.b16 %v3248
      %v3544 = vunpack.c.l.b16 %v3249
      %v3545 = vunpack.c.l.b16 %v3250
      %v3546 = vunpack.c.l.b16 %v3251
      %v3547 = vunpack.c.l.b16 %v3252
      %v3548 = vunpack.c.l.b16 %v3253
      %v3549 = vunpack.c.l.b16 %v3254
      %v3550 = vunpack.c.l.b16 %v3255
      %v3551 = vunpack.c.l.b16 %v3256
      %v3552 = vunpack.c.l.b16 %v3257
      %v3553 = vunpack.c.l.b16 %v3258
      %v3554 = vunpack.c.l.b16 %v3259
      %v3555 = vunpack.c.l.b16 %v3260
      %v3556 = vunpack.c.l.b16 %v3261
      %v3557 = vunpack.c.l.b16 %v3262
      %v3558 = vunpack.c.l.b16 %v3263
      %v3559 = vunpack.c.l.b16 %v3264
      %v3560 = vunpack.c.l.b16 %v3265
      %v3561 = vunpack.c.l.b16 %v3266
      %v3562 = vunpack.c.l.b16 %v3267
      %v3563 = vunpack.c.l.b16 %v3268
      %v3564 = vunpack.c.l.b16 %v3269
      %v3565 = vunpack.c.l.b16 %v3270
      %v3566 = vunpack.c.l.b16 %v3271
      %v3567 = vunpack.c.l.b16 %v3272
      %v3568 = vunpack.c.l.b16 %v3273
      %v3569 = vunpack.c.l.b16 %v3274
      %v3570 = vunpack.c.l.b16 %v3275
      %v3571 = vunpack.c.l.b16 %v3276
      %v3572 = vunpack.c.l.b16 %v3277
      %v3573 = vunpack.c.l.b16 %v3278
      %v3574 = vunpack.c.l.b16 %v3279
      %v3575 = vunpack.c.l.b16 %v3280
      %v3576 = vunpack.c.l.b16 %v3281
      %v3577 = vunpack.c.l.b16 %v3282
      %v3578 = vunpack.c.l.b16 %v3283
      %v3579 = vunpack.c.l.b16 %v3284
      %v3580 = vunpack.c.l.b16 %v3285
      %v3581 = vunpack.c.l.b16 %v3286
      %v3582 = vunpack.c.l.b16 %v3287
      %v3583 = vunpack.c.l.b16 %v3288
      %v3584 = vunpack.c.l.b16 %v3289
      %v3585 = vunpack.c.l.b16 %v3290
      %v3586 = vunpack.c.l.b16 %v3291
      %v3587 = vunpack.c.l.b16 %v3292
      %v3588 = vunpack.c.l.b16 %v3293
      %v3589 = vunpack.c.l.b16 %v3294
      %v3590 = vunpack.c.l.b16 %v3295
      %v3591 = vunpack.c.l.b16 %v3296
      %v3592 = vunpack.c.l.b16 %v3297
      %v3593 = vunpack.c.l.b16 %v3298
      %v3594 = vunpack.c.l.b16 %v3299
      %v3595 = vunpack.c.l.b16 %v3300
      %v3596 = vunpack.c.l.b16 %v3301
      %v3597 = vunpack.c.l.b16 %v3302
      %v3598 = vunpack.c.l.b16 %v3303
      %v3599 = vunpack.c.l.b16 %v3304
      %v3600 = vunpack.c.l.b16 %v3305
      %v3601 = vunpack.c.l.b16 %v3306
      %v3602 = vunpack.c.l.b16 %v3307
      %v3603 = vunpack.c.l.b16 %v3308
      %v3604 = vunpack.c.l.b16 %v3309
      %v3605 = vunpack.c.l.b16 %v3310
      %v3606 = vunpack.c.l.b16 %v3311
      %v3607 = vunpack.c.l.b16 %v3312
      %v3608 = vunpack.c.l.b16 %v3313
      %v3609 = vunpack.c.l.b16 %v3314
      %v3610 = vunpack.c.l.b16 %v3315
      %v3611 = vunpack.c.l.b16 %v3316
      %v3612 = vunpack.c.l.b16 %v3317
      %v3613 = vunpack.c.l.b16 %v3318
      %v3614 = vunpack.c.l.b16 %v3319
      %v3615 = vunpack.c.l.b16 %v3320
      %v3616 = vunpack.c.l.b16 %v3321
      %v3617 = vunpack.c.l.b16 %v3322
      %v3618 = vunpack.c.l.b16 %v3323
      %v3619 = vunpack.c.l.b16 %v3324
      %v3620 = vunpack.c.l.b16 %v3325
      %v3621 = vunpack.c.l.b16 %v3326
      %v3622 = vunpack.c.l.b16 %v3327
      %v3623 = vunpack.c.l.b16 %v3328
      %v3624 = vunpack.c.l.b16 %v3329
      %v3625 = vunpack.c.l.b16 %v3330
      %v3626 = vunpack.c.l.b16 %v3331
      %v3627 = vunpack.c.l.b16 %v3332
      %v3628 = vunpack.c.l.b16 %v3333
      %v3629 = vunpack.c.l.b16 %v3334
      %v3630 = vunpack.c.l.b16 %v3335
      %v3631 = vunpack.c.l.b16 %v3336
      %v3632 = vunpack.c.l.b16 %v3337
      %v3633 = vunpack.c.l.b16 %v3338
      %v3634 = vunpack.c.l.b16 %v3339
      %v3635 = vunpack.c.l.b16 %v3340
      %v3636 = vunpack.c.l.b16 %v3341
      %v3637 = vunpack.c.l.b16 %v3342
      %v3638 = vunpack.c.l.b16 %v3343
      %v3639 = vunpack.c.l.b16 %v3344
      %v3640 = vunpack.c.l.b16 %v3345
      %v3641 = vunpack.c.l.b16 %v3346
      %v3642 = vunpack.c.l.b16 %v3347
      %v3643 = vunpack.c.l.b16 %v3348
      %v3644 = vunpack.c.l.b16 %v3349
      %v3645 = vunpack.c.l.b16 %v3350
      %v3646 = vunpack.c.l.b16 %v3351
      %v3647 = vunpack.c.l.b16 %v3352
      %v3648 = vunpack.c.l.b16 %v3353
      %v3649 = vpack.c.b16 %v3506, %v3505
      %v3650 = vpack.c.b16 %v3508, %v3507
      %v3651 = vpack.c.b16 %v3510, %v3509
      %v3652 = vpack.c.b16 %v3512, %v3511
      %v3653 = vpack.c.b16 %v3514, %v3513
      %v3654 = vpack.c.b16 %v3516, %v3515
      %v3655 = vpack.c.b16 %v3518, %v3517
      %v3656 = vpack.c.b16 %v3520, %v3519
      %v3657 = vpack.c.b16 %v3522, %v3521
      %v3658 = vpack.c.b16 %v3524, %v3523
      %v3659 = vpack.c.b16 %v3526, %v3525
      %v3660 = vpack.c.b16 %v3528, %v3527
      %v3661 = vpack.c.b16 %v3530, %v3529
      %v3662 = vpack.c.b16 %v3532, %v3531
      %v3663 = vpack.c.b16 %v3534, %v3533
      %v3664 = vpack.c.b16 %v3536, %v3535
      %v3665 = vpack.c.b16 %v3538, %v3537
      %v3666 = vpack.c.b16 %v3540, %v3539
      %v3667 = vpack.c.b16 %v3542, %v3541
      %v3668 = vpack.c.b16 %v3544, %v3543
      %v3669 = vpack.c.b16 %v3546, %v3545
      %v3670 = vpack.c.b16 %v3548, %v3547
      %v3671 = vpack.c.b16 %v3550, %v3549
      %v3672 = vpack.c.b16 %v3552, %v3551
      %v3673 = vpack.c.b16 %v3554, %v3553
      %v3674 = vpack.c.b16 %v3556, %v3555
      %v3675 = vpack.c.b16 %v3558, %v3557
      %v3676 = vpack.c.b16 %v3560, %v3559
      %v3677 = vpack.c.b16 %v3562, %v3561
      %v3678 = vpack.c.b16 %v3564, %v3563
      %v3679 = vpack.c.b16 %v3566, %v3565
      %v3680 = vpack.c.b16 %v3568, %v3567
      %v3681 = vpack.c.b16 %v3570, %v3569
      %v3682 = vpack.c.b16 %v3572, %v3571
      %v3683 = vpack.c.b16 %v3574, %v3573
      %v3684 = vpack.c.b16 %v3576, %v3575
      %v3685 = vpack.c.b16 %v3578, %v3577
      %v3686 = vpack.c.b16 %v3580, %v3579
      %v3687 = vpack.c.b16 %v3582, %v3581
      %v3688 = vpack.c.b16 %v3584, %v3583
      %v3689 = vpack.c.b16 %v3586, %v3585
      %v3690 = vpack.c.b16 %v3588, %v3587
      %v3691 = vpack.c.b16 %v3590, %v3589
      %v3692 = vpack.c.b16 %v3592, %v3591
      %v3693 = vpack.c.b16 %v3594, %v3593
      %v3694 = vpack.c.b16 %v3596, %v3595
      %v3695 = vpack.c.b16 %v3598, %v3597
      %v3696 = vpack.c.b16 %v3600, %v3599
      %v3697 = vpack.c.b16 %v3602, %v3601
      %v3698 = vpack.c.b16 %v3604, %v3603
      %v3699 = vpack.c.b16 %v3606, %v3605
      %v3700 = vpack.c.b16 %v3608, %v3607
      %v3701 = vpack.c.b16 %v3610, %v3609
      %v3702 = vpack.c.b16 %v3612, %v3611
      %v3703 = vpack.c.b16 %v3614, %v3613
      %v3704 = vpack.c.b16 %v3616, %v3615
      %v3705 = vpack.c.b16 %v3618, %v3617
      %v3706 = vpack.c.b16 %v3620, %v3619
      %v3707 = vpack.c.b16 %v3622, %v3621
      %v3708 = vpack.c.b16 %v3624, %v3623
      %v3709 = vpack.c.b16 %v3626, %v3625
      %v3710 = vpack.c.b16 %v3628, %v3627
      %v3711 = vpack.c.b16 %v3630, %v3629
      %v3712 = vpack.c.b16 %v3632, %v3631
      %v3713 = vpack.c.b16 %v3634, %v3633
      %v3714 = vpack.c.b16 %v3636, %v3635
      %v3715 = vpack.c.b16 %v3638, %v3637
      %v3716 = vpack.c.b16 %v3640, %v3639
      %v3717 = vpack.c.b16 %v3642, %v3641
      %v3718 = vpack.c.b16 %v3644, %v3643
      %v3719 = vpack.c.b16 %v3646, %v3645
      %v3720 = vpack.c.b16 %v3648, %v3647
      %3793 = vmatprep.subr.bf16.mxu0 0
      %3794 = vmatpush1.bf16.msra.mxu0 %v3649
      %3795 = vmatprep.subr.bf16.mxu0 0
      %3796 = vmatpush1.bf16.msra.mxu0 %v3650
      %3797 = vmatprep.subr.bf16.mxu0 0
      %3798 = vmatpush1.bf16.msra.mxu0 %v3651
      %3799 = vmatprep.subr.bf16.mxu0 0
      %3800 = vmatpush1.bf16.msra.mxu0 %v3652
      %3801 = vmatprep.subr.bf16.mxu0 0
      %3802 = vmatpush1.bf16.msra.mxu0 %v3653
      %3803 = vmatprep.subr.bf16.mxu0 0
      %3804 = vmatpush1.bf16.msra.mxu0 %v3654
      %3805 = vmatprep.subr.bf16.mxu0 0
      %3806 = vmatpush1.bf16.msra.mxu0 %v3655
      %3807 = vmatprep.subr.bf16.mxu0 0
      %3808 = vmatpush1.bf16.msra.mxu0 %v3656
      %3809 = vmatprep.subr.bf16.mxu0 0
      %3810 = vmatpush1.bf16.msra.mxu0 %v3657
      %3811 = vmatprep.subr.bf16.mxu0 0
      %3812 = vmatpush1.bf16.msra.mxu0 %v3658
      %3813 = vmatprep.subr.bf16.mxu0 0
      %3814 = vmatpush1.bf16.msra.mxu0 %v3659
      %3815 = vmatprep.subr.bf16.mxu0 0
      %3816 = vmatpush1.bf16.msra.mxu0 %v3660
      %3817 = vmatprep.subr.bf16.mxu0 0
      %3818 = vmatpush1.bf16.msra.mxu0 %v3661
      %3819 = vmatprep.subr.bf16.mxu0 0
      %3820 = vmatpush1.bf16.msra.mxu0 %v3662
      %3821 = vmatprep.subr.bf16.mxu0 0
      %3822 = vmatpush1.bf16.msra.mxu0 %v3663
      %3823 = vmatprep.subr.bf16.mxu0 0
      %3824 = vmatpush1.bf16.msra.mxu0 %v3664
      %3825 = vmatprep.mubr.bf16.mxu0 %v3067
      %3826 = vmatmul.mubr.bf16.gmra.mrb[0].mxu0 %v3066
      %v3827 = vpop.f32.mrb[0].mxu0
      %v3828 = vadd.f32 %v3359, %v3827
      %v3829 = vpop.f32.mrb[0].mxu0
      %v3830 = vpop.f32.mrb[0].mxu0
      %v3831 = vadd.f32 %v3359, %v3830
      %v3832 = vpop.f32.mrb[0].mxu0
      %3833 = vmatprep.mubr.bf16.mxu0 %v3076
      %3834 = vmatmul.mubr.bf16.gmra.mrb[0].mxu0 %v3075
      %v3835 = vpop.f32.mrb[0].mxu0
      %v3836 = vadd.f32 %v3359, %v3835
      %v3837 = vpop.f32.mrb[0].mxu0
      %v3838 = vpop.f32.mrb[0].mxu0
      %v3839 = vadd.f32 %v3359, %v3838
      %v3840 = vpop.f32.mrb[0].mxu0
      %3841 = vmatprep.mubr.bf16.mxu0 %v3085
      %3842 = vmatmul.mubr.bf16.gmra.mrb[0].mxu0 %v3084
      %v3843 = vpop.f32.mrb[0].mxu0
      %v3844 = vadd.f32 %v3359, %v3843
      %v3845 = vpop.f32.mrb[0].mxu0
      %v3846 = vpop.f32.mrb[0].mxu0
      %v3847 = vadd.f32 %v3359, %v3846
      %v3848 = vpop.f32.mrb[0].mxu0
      %3849 = vmatprep.mubr.bf16.mxu0 %v3094
      %3850 = vmatmul.mubr.bf16.gmra.mrb[0].mxu0 %v3093
      %v3851 = vpop.f32.mrb[0].mxu0
      %v3852 = vadd.f32 %v3359, %v3851
      %v3853 = vpop.f32.mrb[0].mxu0
      %v3854 = vpop.f32.mrb[0].mxu0
      %v3855 = vadd.f32 %v3359, %v3854
      %v3856 = vpop.f32.mrb[0].mxu0
      %3857 = vmatprep.mubr.bf16.mxu0 %v3103
      %3858 = vmatmul.mubr.bf16.gmra.mrb[0].mxu0 %v3102
      %v3859 = vpop.f32.mrb[0].mxu0
      %v3860 = vadd.f32 %v3359, %v3859
      %v3861 = vpop.f32.mrb[0].mxu0
      %v3862 = vpop.f32.mrb[0].mxu0
      %v3863 = vadd.f32 %v3359, %v3862
      %v3864 = vpop.f32.mrb[0].mxu0
      %3865 = vmatprep.mubr.bf16.mxu0 %v3112
      %3866 = vmatmul.mubr.bf16.gmra.mrb[0].mxu0 %v3111
      %v3867 = vpop.f32.mrb[0].mxu0
      %v3868 = vadd.f32 %v3359, %v3867
      %v3869 = vpop.f32.mrb[0].mxu0
      %v3870 = vpop.f32.mrb[0].mxu0
      %v3871 = vadd.f32 %v3359, %v3870
      %v3872 = vpop.f32.mrb[0].mxu0
      %3873 = vmatprep.mubr.bf16.mxu0 %v3121
      %3874 = vmatmul.mubr.bf16.gmra.mrb[0].mxu0 %v3120
      %v3875 = vpop.f32.mrb[0].mxu0
      %v3876 = vadd.f32 %v3359, %v3875
      %v3877 = vpop.f32.mrb[0].mxu0
      %v3878 = vpop.f32.mrb[0].mxu0
      %v3879 = vadd.f32 %v3359, %v3878
      %v3880 = vpop.f32.mrb[0].mxu0
      %3881 = vmatprep.mubr.bf16.mxu0 %v3130
      %3882 = vmatmul.mubr.bf16.gmra.mrb[0].mxu0 %v3129
      %v3883 = vpop.f32.mrb[0].mxu0
      %v3884 = vadd.f32 %v3359, %v3883
      %v3885 = vpop.f32.mrb[0].mxu0
      %v3886 = vpop.f32.mrb[0].mxu0
      %v3887 = vadd.f32 %v3359, %v3886
      %v3888 = vpop.f32.mrb[0].mxu0
      %3889 = vmatprep.mubr.bf16.mxu0 %v3139
      %3890 = vmatmul.mubr.bf16.gmra.mrb[0].mxu0 %v3138
      %v3891 = vpop.f32.mrb[0].mxu0
      %v3892 = vadd.f32 %v3359, %v3891
      %v3893 = vpop.f32.mrb[0].mxu0
      %v3894 = vpop.f32.mrb[0].mxu0
      %v3895 = vadd.f32 %v3359, %v3894
      %v3896 = vpop.f32.mrb[0].mxu0
      %3897 = vmatprep.mubr.bf16.mxu0 %v3148
      %3898 = vmatmul.mubr.bf16.gmra.mrb[0].mxu0 %v3147
      %v3899 = vpop.f32.mrb[0].mxu0
      %v3900 = vadd.f32 %v3359, %v3899
      %v3901 = vpop.f32.mrb[0].mxu0
      %v3902 = vpop.f32.mrb[0].mxu0
      %v3903 = vadd.f32 %v3359, %v3902
      %v3904 = vpop.f32.mrb[0].mxu0
      %3905 = vmatprep.mubr.bf16.mxu0 %v3157
      %3906 = vmatmul.mubr.bf16.gmra.mrb[0].mxu0 %v3156
      %v3907 = vpop.f32.mrb[0].mxu0
      %v3908 = vadd.f32 %v3359, %v3907
      %v3909 = vpop.f32.mrb[0].mxu0
      %v3910 = vpop.f32.mrb[0].mxu0
      %v3911 = vadd.f32 %v3359, %v3910
      %v3912 = vpop.f32.mrb[0].mxu0
      %3913 = vmatprep.mubr.bf16.mxu0 %v3166
      %3914 = vmatmul.mubr.bf16.gmra.mrb[0].mxu0 %v3165
      %v3915 = vpop.f32.mrb[0].mxu0
      %v3916 = vadd.f32 %v3359, %v3915
      %v3917 = vpop.f32.mrb[0].mxu0
      %v3918 = vpop.f32.mrb[0].mxu0
      %v3919 = vadd.f32 %v3359, %v3918
      %v3920 = vpop.f32.mrb[0].mxu0
      %3921 = vmatprep.mubr.bf16.mxu0 %v3175
      %3922 = vmatmul.mubr.bf16.gmra.mrb[0].mxu0 %v3174
      %v3923 = vpop.f32.mrb[0].mxu0
      %v3924 = vadd.f32 %v3359, %v3923
      %v3925 = vpop.f32.mrb[0].mxu0
      %v3926 = vpop.f32.mrb[0].mxu0
      %v3927 = vadd.f32 %v3359, %v3926
      %v3928 = vpop.f32.mrb[0].mxu0
      %3929 = vmatprep.mubr.bf16.mxu0 %v3184
      %3930 = vmatmul.mubr.bf16.gmra.mrb[0].mxu0 %v3183
      %v3931 = vpop.f32.mrb[0].mxu0
      %v3932 = vadd.f32 %v3359, %v3931
      %v3933 = vpop.f32.mrb[0].mxu0
      %v3934 = vpop.f32.mrb[0].mxu0
      %v3935 = vadd.f32 %v3359, %v3934
      %v3936 = vpop.f32.mrb[0].mxu0
      %3937 = vmatprep.mubr.bf16.mxu0 %v3193
      %3938 = vmatmul.mubr.bf16.gmra.mrb[0].mxu0 %v3192
      %v3939 = vpop.f32.mrb[0].mxu0
      %v3940 = vadd.f32 %v3359, %v3939
      %v3941 = vpop.f32.mrb[0].mxu0
      %v3942 = vpop.f32.mrb[0].mxu0
      %v3943 = vadd.f32 %v3359, %v3942
      %v3944 = vpop.f32.mrb[0].mxu0
      %3945 = vmatprep.mubr.bf16.mxu0 %v3202
      %3946 = vmatmul.mubr.bf16.gmra.mrb[0].mxu0 %v3201
      %v3947 = vpop.f32.mrb[0].mxu0
      %v3948 = vadd.f32 %v3359, %v3947
      %v3949 = vpop.f32.mrb[0].mxu0
      %v3950 = vpop.f32.mrb[0].mxu0
      %v3951 = vadd.f32 %v3359, %v3950
      %v3952 = vpop.f32.mrb[0].mxu0
      %3953 = vdwg.mxu0
      %3954 = vmatprep.subr.bf16.mxu0 0
      %3955 = vmatpush1.bf16.msra.mxu0 %v3665
      %3956 = vmatprep.subr.bf16.mxu0 0
      %3957 = vmatpush1.bf16.msra.mxu0 %v3666
      %3958 = vmatprep.subr.bf16.mxu0 0
      %3959 = vmatpush1.bf16.msra.mxu0 %v3667
      %3960 = vmatprep.subr.bf16.mxu0 0
      %3961 = vmatpush1.bf16.msra.mxu0 %v3668
      %3962 = vmatprep.subr.bf16.mxu0 0
      %3963 = vmatpush1.bf16.msra.mxu0 %v3669
      %3964 = vmatprep.subr.bf16.mxu0 0
      %3965 = vmatpush1.bf16.msra.mxu0 %v3670
      %3966 = vmatprep.subr.bf16.mxu0 0
      %3967 = vmatpush1.bf16.msra.mxu0 %v3671
      %3968 = vmatprep.subr.bf16.mxu0 0
      %3969 = vmatpush1.bf16.msra.mxu0 %v3672
      %3970 = vmatprep.subr.bf16.mxu0 0
      %3971 = vmatpush1.bf16.msra.mxu0 %v3673
      %3972 = vmatprep.subr.bf16.mxu0 0
      %3973 = vmatpush1.bf16.msra.mxu0 %v3674
      %3974 = vmatprep.subr.bf16.mxu0 0
      %3975 = vmatpush1.bf16.msra.mxu0 %v3675
      %3976 = vmatprep.subr.bf16.mxu0 0
      %3977 = vmatpush1.bf16.msra.mxu0 %v3676
      %3978 = vmatprep.subr.bf16.mxu0 0
      %3979 = vmatpush1.bf16.msra.mxu0 %v3677
      %3980 = vmatprep.subr.bf16.mxu0 0
      %3981 = vmatpush1.bf16.msra.mxu0 %v3678
      %3982 = vmatprep.subr.bf16.mxu0 0
      %3983 = vmatpush1.bf16.msra.mxu0 %v3679
      %3984 = vmatprep.subr.bf16.mxu0 0
      %3985 = vmatpush1.bf16.msra.mxu0 %v3680
      %3986 = vmatprep.mubr.bf16.mxu0 %v3069
      %3987 = vmatmul.mubr.bf16.gmra.mrb[0].mxu0 %v3068
      %v3988 = vpop.f32.mrb[0].mxu0
      %v3989 = vadd.f32 %v3828, %v3988
      %v3990 = vpop.f32.mrb[0].mxu0
      %v3991 = vpop.f32.mrb[0].mxu0
      %v3992 = vadd.f32 %v3831, %v3991
      %v3993 = vpop.f32.mrb[0].mxu0
      %3994 = vmatprep.mubr.bf16.mxu0 %v3078
      %3995 = vmatmul.mubr.bf16.gmra.mrb[0].mxu0 %v3077
      %v3996 = vpop.f32.mrb[0].mxu0
      %v3997 = vadd.f32 %v3836, %v3996
      %v3998 = vpop.f32.mrb[0].mxu0
      %v3999 = vpop.f32.mrb[0].mxu0
      %v4000 = vadd.f32 %v3839, %v3999
      %v4001 = vpop.f32.mrb[0].mxu0
      %4002 = vmatprep.mubr.bf16.mxu0 %v3087
      %4003 = vmatmul.mubr.bf16.gmra.mrb[0].mxu0 %v3086
      %v4004 = vpop.f32.mrb[0].mxu0
      %v4005 = vadd.f32 %v3844, %v4004
      %v4006 = vpop.f32.mrb[0].mxu0
      %v4007 = vpop.f32.mrb[0].mxu0
      %v4008 = vadd.f32 %v3847, %v4007
      %v4009 = vpop.f32.mrb[0].mxu0
      %4010 = vmatprep.mubr.bf16.mxu0 %v3096
      %4011 = vmatmul.mubr.bf16.gmra.mrb[0].mxu0 %v3095
      %v4012 = vpop.f32.mrb[0].mxu0
      %v4013 = vadd.f32 %v3852, %v4012
      %v4014 = vpop.f32.mrb[0].mxu0
      %v4015 = vpop.f32.mrb[0].mxu0
      %v4016 = vadd.f32 %v3855, %v4015
      %v4017 = vpop.f32.mrb[0].mxu0
      %4018 = vmatprep.mubr.bf16.mxu0 %v3105
      %4019 = vmatmul.mubr.bf16.gmra.mrb[0].mxu0 %v3104
      %v4020 = vpop.f32.mrb[0].mxu0
      %v4021 = vadd.f32 %v3860, %v4020
      %v4022 = vpop.f32.mrb[0].mxu0
      %v4023 = vpop.f32.mrb[0].mxu0
      %v4024 = vadd.f32 %v3863, %v4023
      %v4025 = vpop.f32.mrb[0].mxu0
      %4026 = vmatprep.mubr.bf16.mxu0 %v3114
      %4027 = vmatmul.mubr.bf16.gmra.mrb[0].mxu0 %v3113
      %v4028 = vpop.f32.mrb[0].mxu0
      %v4029 = vadd.f32 %v3868, %v4028
      %v4030 = vpop.f32.mrb[0].mxu0
      %v4031 = vpop.f32.mrb[0].mxu0
      %v4032 = vadd.f32 %v3871, %v4031
      %v4033 = vpop.f32.mrb[0].mxu0
      %4034 = vmatprep.mubr.bf16.mxu0 %v3123
      %4035 = vmatmul.mubr.bf16.gmra.mrb[0].mxu0 %v3122
      %v4036 = vpop.f32.mrb[0].mxu0
      %v4037 = vadd.f32 %v3876, %v4036
      %v4038 = vpop.f32.mrb[0].mxu0
      %v4039 = vpop.f32.mrb[0].mxu0
      %v4040 = vadd.f32 %v3879, %v4039
      %v4041 = vpop.f32.mrb[0].mxu0
      %4042 = vmatprep.mubr.bf16.mxu0 %v3132
      %4043 = vmatmul.mubr.bf16.gmra.mrb[0].mxu0 %v3131
      %v4044 = vpop.f32.mrb[0].mxu0
      %v4045 = vadd.f32 %v3884, %v4044
      %v4046 = vpop.f32.mrb[0].mxu0
      %v4047 = vpop.f32.mrb[0].mxu0
      %v4048 = vadd.f32 %v3887, %v4047
      %v4049 = vpop.f32.mrb[0].mxu0
      %4050 = vmatprep.mubr.bf16.mxu0 %v3141
      %4051 = vmatmul.mubr.bf16.gmra.mrb[0].mxu0 %v3140
      %v4052 = vpop.f32.mrb[0].mxu0
      %v4053 = vadd.f32 %v3892, %v4052
      %v4054 = vpop.f32.mrb[0].mxu0
      %v4055 = vpop.f32.mrb[0].mxu0
      %v4056 = vadd.f32 %v3895, %v4055
      %v4057 = vpop.f32.mrb[0].mxu0
      %4058 = vmatprep.mubr.bf16.mxu0 %v3150
      %4059 = vmatmul.mubr.bf16.gmra.mrb[0].mxu0 %v3149
      %v4060 = vpop.f32.mrb[0].mxu0
      %v4061 = vadd.f32 %v3900, %v4060
      %v4062 = vpop.f32.mrb[0].mxu0
      %v4063 = vpop.f32.mrb[0].mxu0
      %v4064 = vadd.f32 %v3903, %v4063
      %v4065 = vpop.f32.mrb[0].mxu0
      %4066 = vmatprep.mubr.bf16.mxu0 %v3159
      %4067 = vmatmul.mubr.bf16.gmra.mrb[0].mxu0 %v3158
      %v4068 = vpop.f32.mrb[0].mxu0
      %v4069 = vadd.f32 %v3908, %v4068
      %v4070 = vpop.f32.mrb[0].mxu0
      %v4071 = vpop.f32.mrb[0].mxu0
      %v4072 = vadd.f32 %v3911, %v4071
      %v4073 = vpop.f32.mrb[0].mxu0
      %4074 = vmatprep.mubr.bf16.mxu0 %v3168
      %4075 = vmatmul.mubr.bf16.gmra.mrb[0].mxu0 %v3167
      %v4076 = vpop.f32.mrb[0].mxu0
      %v4077 = vadd.f32 %v3916, %v4076
      %v4078 = vpop.f32.mrb[0].mxu0
      %v4079 = vpop.f32.mrb[0].mxu0
      %v4080 = vadd.f32 %v3919, %v4079
      %v4081 = vpop.f32.mrb[0].mxu0
      %4082 = vmatprep.mubr.bf16.mxu0 %v3177
      %4083 = vmatmul.mubr.bf16.gmra.mrb[0].mxu0 %v3176
      %v4084 = vpop.f32.mrb[0].mxu0
      %v4085 = vadd.f32 %v3924, %v4084
      %v4086 = vpop.f32.mrb[0].mxu0
      %v4087 = vpop.f32.mrb[0].mxu0
      %v4088 = vadd.f32 %v3927, %v4087
      %v4089 = vpop.f32.mrb[0].mxu0
      %4090 = vmatprep.mubr.bf16.mxu0 %v3186
      %4091 = vmatmul.mubr.bf16.gmra.mrb[0].mxu0 %v3185
      %v4092 = vpop.f32.mrb[0].mxu0
      %v4093 = vadd.f32 %v3932, %v4092
      %v4094 = vpop.f32.mrb[0].mxu0
      %v4095 = vpop.f32.mrb[0].mxu0
      %v4096 = vadd.f32 %v3935, %v4095
      %v4097 = vpop.f32.mrb[0].mxu0
      %4098 = vmatprep.mubr.bf16.mxu0 %v3195
      %4099 = vmatmul.mubr.bf16.gmra.mrb[0].mxu0 %v3194
      %v4100 = vpop.f32.mrb[0].mxu0
      %v4101 = vadd.f32 %v3940, %v4100
      %v4102 = vpop.f32.mrb[0].mxu0
      %v4103 = vpop.f32.mrb[0].mxu0
      %v4104 = vadd.f32 %v3943, %v4103
      %v4105 = vpop.f32.mrb[0].mxu0
      %4106 = vmatprep.mubr.bf16.mxu0 %v3204
      %4107 = vmatmul.mubr.bf16.gmra.mrb[0].mxu0 %v3203
      %v4108 = vpop.f32.mrb[0].mxu0
      %v4109 = vadd.f32 %v3948, %v4108
      %v4110 = vpop.f32.mrb[0].mxu0
      %v4111 = vpop.f32.mrb[0].mxu0
      %v4112 = vadd.f32 %v3951, %v4111
      %v4113 = vpop.f32.mrb[0].mxu0
      %4114 = vdwg.mxu0
      %4115 = vmatprep.subr.bf16.mxu0 0
      %4116 = vmatpush1.bf16.msra.mxu0 %v3681
      %4117 = vmatprep.subr.bf16.mxu0 0
      %4118 = vmatpush1.bf16.msra.mxu0 %v3682
      %4119 = vmatprep.subr.bf16.mxu0 0
      %4120 = vmatpush1.bf16.msra.mxu0 %v3683
      %4121 = vmatprep.subr.bf16.mxu0 0
      %4122 = vmatpush1.bf16.msra.mxu0 %v3684
      %4123 = vmatprep.subr.bf16.mxu0 0
      %4124 = vmatpush1.bf16.msra.mxu0 %v3685
      %4125 = vmatprep.subr.bf16.mxu0 0
      %4126 = vmatpush1.bf16.msra.mxu0 %v3686
      %4127 = vmatprep.subr.bf16.mxu0 0
      %4128 = vmatpush1.bf16.msra.mxu0 %v3687
      %4129 = vmatprep.subr.bf16.mxu0 0
      %4130 = vmatpush1.bf16.msra.mxu0 %v3688
      %4131 = vmatprep.subr.bf16.mxu0 0
      %4132 = vmatpush1.bf16.msra.mxu0 %v3689
      %4133 = vmatprep.subr.bf16.mxu0 0
      %4134 = vmatpush1.bf16.msra.mxu0 %v3690
      %4135 = vmatprep.subr.bf16.mxu0 0
      %4136 = vmatpush1.bf16.msra.mxu0 %v3691
      %4137 = vmatprep.subr.bf16.mxu0 0
      %4138 = vmatpush1.bf16.msra.mxu0 %v3692
      %4139 = vmatprep.subr.bf16.mxu0 0
      %4140 = vmatpush1.bf16.msra.mxu0 %v3693
      %4141 = vmatprep.subr.bf16.mxu0 0
      %4142 = vmatpush1.bf16.msra.mxu0 %v3694
      %4143 = vmatprep.subr.bf16.mxu0 0
      %4144 = vmatpush1.bf16.msra.mxu0 %v3695
      %4145 = vmatprep.subr.bf16.mxu0 0
      %4146 = vmatpush1.bf16.msra.mxu0 %v3696
      %4147 = vmatprep.mubr.bf16.mxu0 %v3071
      %4148 = vmatmul.mubr.bf16.gmra.mrb[0].mxu0 %v3070
      %v4149 = vpop.f32.mrb[0].mxu0
      %v4150 = vadd.f32 %v3989, %v4149
      %v4151 = vpop.f32.mrb[0].mxu0
      %v4152 = vpop.f32.mrb[0].mxu0
      %v4153 = vadd.f32 %v3992, %v4152
      %v4154 = vpop.f32.mrb[0].mxu0
      %4155 = vmatprep.mubr.bf16.mxu0 %v3080
      %4156 = vmatmul.mubr.bf16.gmra.mrb[0].mxu0 %v3079
      %v4157 = vpop.f32.mrb[0].mxu0
      %v4158 = vadd.f32 %v3997, %v4157
      %v4159 = vpop.f32.mrb[0].mxu0
      %v4160 = vpop.f32.mrb[0].mxu0
      %v4161 = vadd.f32 %v4000, %v4160
      %v4162 = vpop.f32.mrb[0].mxu0
      %4163 = vmatprep.mubr.bf16.mxu0 %v3089
      %4164 = vmatmul.mubr.bf16.gmra.mrb[0].mxu0 %v3088
      %v4165 = vpop.f32.mrb[0].mxu0
      %v4166 = vadd.f32 %v4005, %v4165
      %v4167 = vpop.f32.mrb[0].mxu0
      %v4168 = vpop.f32.mrb[0].mxu0
      %v4169 = vadd.f32 %v4008, %v4168
      %v4170 = vpop.f32.mrb[0].mxu0
      %4171 = vmatprep.mubr.bf16.mxu0 %v3098
      %4172 = vmatmul.mubr.bf16.gmra.mrb[0].mxu0 %v3097
      %v4173 = vpop.f32.mrb[0].mxu0
      %v4174 = vadd.f32 %v4013, %v4173
      %v4175 = vpop.f32.mrb[0].mxu0
      %v4176 = vpop.f32.mrb[0].mxu0
      %v4177 = vadd.f32 %v4016, %v4176
      %v4178 = vpop.f32.mrb[0].mxu0
      %4179 = vmatprep.mubr.bf16.mxu0 %v3107
      %4180 = vmatmul.mubr.bf16.gmra.mrb[0].mxu0 %v3106
      %v4181 = vpop.f32.mrb[0].mxu0
      %v4182 = vadd.f32 %v4021, %v4181
      %v4183 = vpop.f32.mrb[0].mxu0
      %v4184 = vpop.f32.mrb[0].mxu0
      %v4185 = vadd.f32 %v4024, %v4184
      %v4186 = vpop.f32.mrb[0].mxu0
      %4187 = vmatprep.mubr.bf16.mxu0 %v3116
      %4188 = vmatmul.mubr.bf16.gmra.mrb[0].mxu0 %v3115
      %v4189 = vpop.f32.mrb[0].mxu0
      %v4190 = vadd.f32 %v4029, %v4189
      %v4191 = vpop.f32.mrb[0].mxu0
      %v4192 = vpop.f32.mrb[0].mxu0
      %v4193 = vadd.f32 %v4032, %v4192
      %v4194 = vpop.f32.mrb[0].mxu0
      %4195 = vmatprep.mubr.bf16.mxu0 %v3125
      %4196 = vmatmul.mubr.bf16.gmra.mrb[0].mxu0 %v3124
      %v4197 = vpop.f32.mrb[0].mxu0
      %v4198 = vadd.f32 %v4037, %v4197
      %v4199 = vpop.f32.mrb[0].mxu0
      %v4200 = vpop.f32.mrb[0].mxu0
      %v4201 = vadd.f32 %v4040, %v4200
      %v4202 = vpop.f32.mrb[0].mxu0
      %4203 = vmatprep.mubr.bf16.mxu0 %v3134
      %4204 = vmatmul.mubr.bf16.gmra.mrb[0].mxu0 %v3133
      %v4205 = vpop.f32.mrb[0].mxu0
      %v4206 = vadd.f32 %v4045, %v4205
      %v4207 = vpop.f32.mrb[0].mxu0
      %v4208 = vpop.f32.mrb[0].mxu0
      %v4209 = vadd.f32 %v4048, %v4208
      %v4210 = vpop.f32.mrb[0].mxu0
      %4211 = vmatprep.mubr.bf16.mxu0 %v3143
      %4212 = vmatmul.mubr.bf16.gmra.mrb[0].mxu0 %v3142
      %v4213 = vpop.f32.mrb[0].mxu0
      %v4214 = vadd.f32 %v4053, %v4213
      %v4215 = vpop.f32.mrb[0].mxu0
      %v4216 = vpop.f32.mrb[0].mxu0
      %v4217 = vadd.f32 %v4056, %v4216
      %v4218 = vpop.f32.mrb[0].mxu0
      %4219 = vmatprep.mubr.bf16.mxu0 %v3152
      %4220 = vmatmul.mubr.bf16.gmra.mrb[0].mxu0 %v3151
      %v4221 = vpop.f32.mrb[0].mxu0
      %v4222 = vadd.f32 %v4061, %v4221
      %v4223 = vpop.f32.mrb[0].mxu0
      %v4224 = vpop.f32.mrb[0].mxu0
      %v4225 = vadd.f32 %v4064, %v4224
      %v4226 = vpop.f32.mrb[0].mxu0
      %4227 = vmatprep.mubr.bf16.mxu0 %v3161
      %4228 = vmatmul.mubr.bf16.gmra.mrb[0].mxu0 %v3160
      %v4229 = vpop.f32.mrb[0].mxu0
      %v4230 = vadd.f32 %v4069, %v4229
      %v4231 = vpop.f32.mrb[0].mxu0
      %v4232 = vpop.f32.mrb[0].mxu0
      %v4233 = vadd.f32 %v4072, %v4232
      %v4234 = vpop.f32.mrb[0].mxu0
      %4235 = vmatprep.mubr.bf16.mxu0 %v3170
      %4236 = vmatmul.mubr.bf16.gmra.mrb[0].mxu0 %v3169
      %v4237 = vpop.f32.mrb[0].mxu0
      %v4238 = vadd.f32 %v4077, %v4237
      %v4239 = vpop.f32.mrb[0].mxu0
      %v4240 = vpop.f32.mrb[0].mxu0
      %v4241 = vadd.f32 %v4080, %v4240
      %v4242 = vpop.f32.mrb[0].mxu0
      %4243 = vmatprep.mubr.bf16.mxu0 %v3179
      %4244 = vmatmul.mubr.bf16.gmra.mrb[0].mxu0 %v3178
      %v4245 = vpop.f32.mrb[0].mxu0
      %v4246 = vadd.f32 %v4085, %v4245
      %v4247 = vpop.f32.mrb[0].mxu0
      %v4248 = vpop.f32.mrb[0].mxu0
      %v4249 = vadd.f32 %v4088, %v4248
      %v4250 = vpop.f32.mrb[0].mxu0
      %4251 = vmatprep.mubr.bf16.mxu0 %v3188
      %4252 = vmatmul.mubr.bf16.gmra.mrb[0].mxu0 %v3187
      %v4253 = vpop.f32.mrb[0].mxu0
      %v4254 = vadd.f32 %v4093, %v4253
      %v4255 = vpop.f32.mrb[0].mxu0
      %v4256 = vpop.f32.mrb[0].mxu0
      %v4257 = vadd.f32 %v4096, %v4256
      %v4258 = vpop.f32.mrb[0].mxu0
      %4259 = vmatprep.mubr.bf16.mxu0 %v3197
      %4260 = vmatmul.mubr.bf16.gmra.mrb[0].mxu0 %v3196
      %v4261 = vpop.f32.mrb[0].mxu0
      %v4262 = vadd.f32 %v4101, %v4261
      %v4263 = vpop.f32.mrb[0].mxu0
      %v4264 = vpop.f32.mrb[0].mxu0
      %v4265 = vadd.f32 %v4104, %v4264
      %v4266 = vpop.f32.mrb[0].mxu0
      %4267 = vmatprep.mubr.bf16.mxu0 %v3206
      %4268 = vmatmul.mubr.bf16.gmra.mrb[0].mxu0 %v3205
      %v4269 = vpop.f32.mrb[0].mxu0
      %v4270 = vadd.f32 %v4109, %v4269
      %v4271 = vpop.f32.mrb[0].mxu0
      %v4272 = vpop.f32.mrb[0].mxu0
      %v4273 = vadd.f32 %v4112, %v4272
      %v4274 = vpop.f32.mrb[0].mxu0
      %4275 = vdwg.mxu0
      %4276 = vmatprep.subr.bf16.mxu0 0
      %4277 = vmatpush1.bf16.msra.mxu0 %v3697
      %4278 = vmatprep.subr.bf16.mxu0 0
      %4279 = vmatpush1.bf16.msra.mxu0 %v3698
      %4280 = vmatprep.subr.bf16.mxu0 0
      %4281 = vmatpush1.bf16.msra.mxu0 %v3699
      %4282 = vmatprep.subr.bf16.mxu0 0
      %4283 = vmatpush1.bf16.msra.mxu0 %v3700
      %4284 = vmatprep.subr.bf16.mxu0 0
      %4285 = vmatpush1.bf16.msra.mxu0 %v3701
      %4286 = vmatprep.subr.bf16.mxu0 0
      %4287 = vmatpush1.bf16.msra.mxu0 %v3702
      %4288 = vmatprep.subr.bf16.mxu0 0
      %4289 = vmatpush1.bf16.msra.mxu0 %v3703
      %4290 = vmatprep.subr.bf16.mxu0 0
      %4291 = vmatpush1.bf16.msra.mxu0 %v3704
      %4292 = vmatprep.subr.bf16.mxu0 0
      %4293 = vmatpush1.bf16.msra.mxu0 %v3705
      %4294 = vmatprep.subr.bf16.mxu0 0
      %4295 = vmatpush1.bf16.msra.mxu0 %v3706
      %4296 = vmatprep.subr.bf16.mxu0 0
      %4297 = vmatpush1.bf16.msra.mxu0 %v3707
      %4298 = vmatprep.subr.bf16.mxu0 0
      %4299 = vmatpush1.bf16.msra.mxu0 %v3708
      %4300 = vmatprep.subr.bf16.mxu0 0
      %4301 = vmatpush1.bf16.msra.mxu0 %v3709
      %4302 = vmatprep.subr.bf16.mxu0 0
      %4303 = vmatpush1.bf16.msra.mxu0 %v3710
      %4304 = vmatprep.subr.bf16.mxu0 0
      %4305 = vmatpush1.bf16.msra.mxu0 %v3711
      %4306 = vmatprep.subr.bf16.mxu0 0
      %4307 = vmatpush1.bf16.msra.mxu0 %v3712
      %4308 = vmatprep.mubr.bf16.mxu0 %v3073
      %4309 = vmatmul.mubr.bf16.gmra.mrb[0].mxu0 %v3072
      %v4310 = vpop.f32.mrb[0].mxu0
      %v4311 = vadd.f32 %v4150, %v4310
      %v4312 = vpop.f32.mrb[0].mxu0
      %v4313 = vpop.f32.mrb[0].mxu0
      %v4314 = vadd.f32 %v4153, %v4313
      %v4315 = vpop.f32.mrb[0].mxu0
      %4316 = vmatprep.mubr.bf16.mxu0 %v3082
      %4317 = vmatmul.mubr.bf16.gmra.mrb[0].mxu0 %v3081
      %v4318 = vpop.f32.mrb[0].mxu0
      %v4319 = vadd.f32 %v4158, %v4318
      %v4320 = vpop.f32.mrb[0].mxu0
      %v4321 = vpop.f32.mrb[0].mxu0
      %v4322 = vadd.f32 %v4161, %v4321
      %v4323 = vpop.f32.mrb[0].mxu0
      %4324 = vmatprep.mubr.bf16.mxu0 %v3091
      %4325 = vmatmul.mubr.bf16.gmra.mrb[0].mxu0 %v3090
      %v4326 = vpop.f32.mrb[0].mxu0
      %v4327 = vadd.f32 %v4166, %v4326
      %v4328 = vpop.f32.mrb[0].mxu0
      %v4329 = vpop.f32.mrb[0].mxu0
      %v4330 = vadd.f32 %v4169, %v4329
      %v4331 = vpop.f32.mrb[0].mxu0
      %4332 = vmatprep.mubr.bf16.mxu0 %v3100
      %4333 = vmatmul.mubr.bf16.gmra.mrb[0].mxu0 %v3099
      %v4334 = vpop.f32.mrb[0].mxu0
      %v4335 = vadd.f32 %v4174, %v4334
      %v4336 = vpop.f32.mrb[0].mxu0
      %v4337 = vpop.f32.mrb[0].mxu0
      %v4338 = vadd.f32 %v4177, %v4337
      %v4339 = vpop.f32.mrb[0].mxu0
      %4340 = vmatprep.mubr.bf16.mxu0 %v3109
      %4341 = vmatmul.mubr.bf16.gmra.mrb[0].mxu0 %v3108
      %v4342 = vpop.f32.mrb[0].mxu0
      %v4343 = vadd.f32 %v4182, %v4342
      %v4344 = vpop.f32.mrb[0].mxu0
      %v4345 = vpop.f32.mrb[0].mxu0
      %v4346 = vadd.f32 %v4185, %v4345
      %v4347 = vpop.f32.mrb[0].mxu0
      %4348 = vmatprep.mubr.bf16.mxu0 %v3118
      %4349 = vmatmul.mubr.bf16.gmra.mrb[0].mxu0 %v3117
      %v4350 = vpop.f32.mrb[0].mxu0
      %v4351 = vadd.f32 %v4190, %v4350
      %v4352 = vpop.f32.mrb[0].mxu0
      %v4353 = vpop.f32.mrb[0].mxu0
      %v4354 = vadd.f32 %v4193, %v4353
      %v4355 = vpop.f32.mrb[0].mxu0
      %4356 = vmatprep.mubr.bf16.mxu0 %v3127
      %4357 = vmatmul.mubr.bf16.gmra.mrb[0].mxu0 %v3126
      %v4358 = vpop.f32.mrb[0].mxu0
      %v4359 = vadd.f32 %v4198, %v4358
      %v4360 = vpop.f32.mrb[0].mxu0
      %v4361 = vpop.f32.mrb[0].mxu0
      %v4362 = vadd.f32 %v4201, %v4361
      %v4363 = vpop.f32.mrb[0].mxu0
      %4364 = vmatprep.mubr.bf16.mxu0 %v3136
      %4365 = vmatmul.mubr.bf16.gmra.mrb[0].mxu0 %v3135
      %v4366 = vpop.f32.mrb[0].mxu0
      %v4367 = vadd.f32 %v4206, %v4366
      %v4368 = vpop.f32.mrb[0].mxu0
      %v4369 = vpop.f32.mrb[0].mxu0
      %v4370 = vadd.f32 %v4209, %v4369
      %v4371 = vpop.f32.mrb[0].mxu0
      %4372 = vmatprep.mubr.bf16.mxu0 %v3145
      %4373 = vmatmul.mubr.bf16.gmra.mrb[0].mxu0 %v3144
      %v4374 = vpop.f32.mrb[0].mxu0
      %v4375 = vadd.f32 %v4214, %v4374
      %v4376 = vpop.f32.mrb[0].mxu0
      %v4377 = vpop.f32.mrb[0].mxu0
      %v4378 = vadd.f32 %v4217, %v4377
      %v4379 = vpop.f32.mrb[0].mxu0
      %4380 = vmatprep.mubr.bf16.mxu0 %v3154
      %4381 = vmatmul.mubr.bf16.gmra.mrb[0].mxu0 %v3153
      %v4382 = vpop.f32.mrb[0].mxu0
      %v4383 = vadd.f32 %v4222, %v4382
      %v4384 = vpop.f32.mrb[0].mxu0
      %v4385 = vpop.f32.mrb[0].mxu0
      %v4386 = vadd.f32 %v4225, %v4385
      %v4387 = vpop.f32.mrb[0].mxu0
      %4388 = vmatprep.mubr.bf16.mxu0 %v3163
      %4389 = vmatmul.mubr.bf16.gmra.mrb[0].mxu0 %v3162
      %v4390 = vpop.f32.mrb[0].mxu0
      %v4391 = vadd.f32 %v4230, %v4390
      %v4392 = vpop.f32.mrb[0].mxu0
      %v4393 = vpop.f32.mrb[0].mxu0
      %v4394 = vadd.f32 %v4233, %v4393
      %v4395 = vpop.f32.mrb[0].mxu0
      %4396 = vmatprep.mubr.bf16.mxu0 %v3172
      %4397 = vmatmul.mubr.bf16.gmra.mrb[0].mxu0 %v3171
      %v4398 = vpop.f32.mrb[0].mxu0
      %v4399 = vadd.f32 %v4238, %v4398
      %v4400 = vpop.f32.mrb[0].mxu0
      %v4401 = vpop.f32.mrb[0].mxu0
      %v4402 = vadd.f32 %v4241, %v4401
      %v4403 = vpop.f32.mrb[0].mxu0
      %4404 = vmatprep.mubr.bf16.mxu0 %v3181
      %4405 = vmatmul.mubr.bf16.gmra.mrb[0].mxu0 %v3180
      %v4406 = vpop.f32.mrb[0].mxu0
      %v4407 = vadd.f32 %v4246, %v4406
      %v4408 = vpop.f32.mrb[0].mxu0
      %v4409 = vpop.f32.mrb[0].mxu0
      %v4410 = vadd.f32 %v4249, %v4409
      %v4411 = vpop.f32.mrb[0].mxu0
      %4412 = vmatprep.mubr.bf16.mxu0 %v3190
      %4413 = vmatmul.mubr.bf16.gmra.mrb[0].mxu0 %v3189
      %v4414 = vpop.f32.mrb[0].mxu0
      %v4415 = vadd.f32 %v4254, %v4414
      %v4416 = vpop.f32.mrb[0].mxu0
      %v4417 = vpop.f32.mrb[0].mxu0
      %v4418 = vadd.f32 %v4257, %v4417
      %v4419 = vpop.f32.mrb[0].mxu0
      %4420 = vmatprep.mubr.bf16.mxu0 %v3199
      %4421 = vmatmul.mubr.bf16.gmra.mrb[0].mxu0 %v3198
      %v4422 = vpop.f32.mrb[0].mxu0
      %v4423 = vadd.f32 %v4262, %v4422
      %v4424 = vpop.f32.mrb[0].mxu0
      %v4425 = vpop.f32.mrb[0].mxu0
      %v4426 = vadd.f32 %v4265, %v4425
      %v4427 = vpop.f32.mrb[0].mxu0
      %4428 = vmatprep.mubr.bf16.mxu0 %v3208
      %4429 = vmatmul.mubr.bf16.gmra.mrb[0].mxu0 %v3207
      %v4430 = vpop.f32.mrb[0].mxu0
      %v4431 = vadd.f32 %v4270, %v4430
      %v4432 = vpop.f32.mrb[0].mxu0
      %v4433 = vpop.f32.mrb[0].mxu0
      %v4434 = vadd.f32 %v4273, %v4433
      %v4435 = vpop.f32.mrb[0].mxu0
      %4436 = vdwg.mxu0
      %4437 = vmatprep.subr.bf16.mxu0 0
      %4438 = vmatpush1.bf16.msra.mxu0 %v3713
      %4439 = vmatprep.subr.bf16.mxu0 0
      %4440 = vmatpush1.bf16.msra.mxu0 %v3714
      %4441 = vmatprep.subr.bf16.mxu0 0
      %4442 = vmatpush1.bf16.msra.mxu0 %v3715
      %4443 = vmatprep.subr.bf16.mxu0 0
      %4444 = vmatpush1.bf16.msra.mxu0 %v3716
      %4445 = vmatprep.subr.bf16.mxu0 0
      %4446 = vmatpush1.bf16.msra.mxu0 %v3717
      %4447 = vmatprep.subr.bf16.mxu0 0
      %4448 = vmatpush1.bf16.msra.mxu0 %v3718
      %4449 = vmatprep.subr.bf16.mxu0 0
      %4450 = vmatpush1.bf16.msra.mxu0 %v3719
      %4451 = vmatprep.subr.bf16.mxu0 0
      %4452 = vmatpush1.bf16.msra.mxu0 %v3720
      %4453 = vmatprep.subr.bf16.mxu0 0
      %4454 = vmatpush1.bf16.msra.mxu0 0
      %4455 = vmatprep.subr.bf16.mxu0 0
      %4456 = vmatpush1.bf16.msra.mxu0 0
      %4457 = vmatprep.subr.bf16.mxu0 0
      %4458 = vmatpush1.bf16.msra.mxu0 0
      %4459 = vmatprep.subr.bf16.mxu0 0
      %4460 = vmatpush1.bf16.msra.mxu0 0
      %4461 = vmatprep.subr.bf16.mxu0 0
      %4462 = vmatpush1.bf16.msra.mxu0 0
      %4463 = vmatprep.subr.bf16.mxu0 0
      %4464 = vmatpush1.bf16.msra.mxu0 0
      %4465 = vmatprep.subr.bf16.mxu0 0
      %4466 = vmatpush1.bf16.msra.mxu0 0
      %4467 = vmatprep.subr.bf16.mxu0 0
      %4468 = vmatpush1.bf16.msra.mxu0 0
      %4469 = vmatprep.mubr.bf16.mxu0 0
      %4470 = vmatmul.mubr.bf16.gmra.mrb[0].mxu0 %v3074
      %v4471 = vpop.f32.mrb[0].mxu0
      %v4472 = vadd.f32 %v4311, %v4471
      %v4473 = vpop.f32.mrb[0].mxu0
      %v4474 = vpop.f32.mrb[0].mxu0
      %v4475 = vadd.f32 %v4314, %v4474
      %v4476 = vpop.f32.mrb[0].mxu0
      %4477 = vmatprep.mubr.bf16.mxu0 0
      %4478 = vmatmul.mubr.bf16.gmra.mrb[0].mxu0 %v3083
      %v4479 = vpop.f32.mrb[0].mxu0
      %v4480 = vadd.f32 %v4319, %v4479
      %v4481 = vpop.f32.mrb[0].mxu0
      %v4482 = vpop.f32.mrb[0].mxu0
      %v4483 = vadd.f32 %v4322, %v4482
      %v4484 = vpop.f32.mrb[0].mxu0
      %4485 = vmatprep.mubr.bf16.mxu0 0
      %4486 = vmatmul.mubr.bf16.gmra.mrb[0].mxu0 %v3092
      %v4487 = vpop.f32.mrb[0].mxu0
      %v4488 = vadd.f32 %v4327, %v4487
      %v4489 = vpop.f32.mrb[0].mxu0
      %v4490 = vpop.f32.mrb[0].mxu0
      %v4491 = vadd.f32 %v4330, %v4490
      %v4492 = vpop.f32.mrb[0].mxu0
      %4493 = vmatprep.mubr.bf16.mxu0 0
      %4494 = vmatmul.mubr.bf16.gmra.mrb[0].mxu0 %v3101
      %v4495 = vpop.f32.mrb[0].mxu0
      %v4496 = vadd.f32 %v4335, %v4495
      %v4497 = vpop.f32.mrb[0].mxu0
      %v4498 = vpop.f32.mrb[0].mxu0
      %v4499 = vadd.f32 %v4338, %v4498
      %v4500 = vpop.f32.mrb[0].mxu0
      %4501 = vmatprep.mubr.bf16.mxu0 0
      %4502 = vmatmul.mubr.bf16.gmra.mrb[0].mxu0 %v3110
      %v4503 = vpop.f32.mrb[0].mxu0
      %v4504 = vadd.f32 %v4343, %v4503
      %v4505 = vpop.f32.mrb[0].mxu0
      %v4506 = vpop.f32.mrb[0].mxu0
      %v4507 = vadd.f32 %v4346, %v4506
      %v4508 = vpop.f32.mrb[0].mxu0
      %4509 = vmatprep.mubr.bf16.mxu0 0
      %4510 = vmatmul.mubr.bf16.gmra.mrb[0].mxu0 %v3119
      %v4511 = vpop.f32.mrb[0].mxu0
      %v4512 = vadd.f32 %v4351, %v4511
      %v4513 = vpop.f32.mrb[0].mxu0
      %v4514 = vpop.f32.mrb[0].mxu0
      %v4515 = vadd.f32 %v4354, %v4514
      %v4516 = vpop.f32.mrb[0].mxu0
      %4517 = vmatprep.mubr.bf16.mxu0 0
      %4518 = vmatmul.mubr.bf16.gmra.mrb[0].mxu0 %v3128
      %v4519 = vpop.f32.mrb[0].mxu0
      %v4520 = vadd.f32 %v4359, %v4519
      %v4521 = vpop.f32.mrb[0].mxu0
      %v4522 = vpop.f32.mrb[0].mxu0
      %v4523 = vadd.f32 %v4362, %v4522
      %v4524 = vpop.f32.mrb[0].mxu0
      %4525 = vmatprep.mubr.bf16.mxu0 0
      %4526 = vmatmul.mubr.bf16.gmra.mrb[0].mxu0 %v3137
      %v4527 = vpop.f32.mrb[0].mxu0
      %v4528 = vadd.f32 %v4367, %v4527
      %v4529 = vpop.f32.mrb[0].mxu0
      %v4530 = vpop.f32.mrb[0].mxu0
      %v4531 = vadd.f32 %v4370, %v4530
      %v4532 = vpop.f32.mrb[0].mxu0
      %4533 = vmatprep.mubr.bf16.mxu0 0
      %4534 = vmatmul.mubr.bf16.gmra.mrb[0].mxu0 %v3146
      %v4535 = vpop.f32.mrb[0].mxu0
      %v4536 = vadd.f32 %v4375, %v4535
      %v4537 = vpop.f32.mrb[0].mxu0
      %v4538 = vpop.f32.mrb[0].mxu0
      %v4539 = vadd.f32 %v4378, %v4538
      %v4540 = vpop.f32.mrb[0].mxu0
      %4541 = vmatprep.mubr.bf16.mxu0 0
      %4542 = vmatmul.mubr.bf16.gmra.mrb[0].mxu0 %v3155
      %v4543 = vpop.f32.mrb[0].mxu0
      %v4544 = vadd.f32 %v4383, %v4543
      %v4545 = vpop.f32.mrb[0].mxu0
      %v4546 = vpop.f32.mrb[0].mxu0
      %v4547 = vadd.f32 %v4386, %v4546
      %v4548 = vpop.f32.mrb[0].mxu0
      %4549 = vmatprep.mubr.bf16.mxu0 0
      %4550 = vmatmul.mubr.bf16.gmra.mrb[0].mxu0 %v3164
      %v4551 = vpop.f32.mrb[0].mxu0
      %v4552 = vadd.f32 %v4391, %v4551
      %v4553 = vpop.f32.mrb[0].mxu0
      %v4554 = vpop.f32.mrb[0].mxu0
      %v4555 = vadd.f32 %v4394, %v4554
      %v4556 = vpop.f32.mrb[0].mxu0
      %4557 = vmatprep.mubr.bf16.mxu0 0
      %4558 = vmatmul.mubr.bf16.gmra.mrb[0].mxu0 %v3173
      %v4559 = vpop.f32.mrb[0].mxu0
      %v4560 = vadd.f32 %v4399, %v4559
      %v4561 = vpop.f32.mrb[0].mxu0
      %v4562 = vpop.f32.mrb[0].mxu0
      %v4563 = vadd.f32 %v4402, %v4562
      %v4564 = vpop.f32.mrb[0].mxu0
      %4565 = vmatprep.mubr.bf16.mxu0 0
      %4566 = vmatmul.mubr.bf16.gmra.mrb[0].mxu0 %v3182
      %v4567 = vpop.f32.mrb[0].mxu0
      %v4568 = vadd.f32 %v4407, %v4567
      %v4569 = vpop.f32.mrb[0].mxu0
      %v4570 = vpop.f32.mrb[0].mxu0
      %v4571 = vadd.f32 %v4410, %v4570
      %v4572 = vpop.f32.mrb[0].mxu0
      %4573 = vmatprep.mubr.bf16.mxu0 0
      %4574 = vmatmul.mubr.bf16.gmra.mrb[0].mxu0 %v3191
      %v4575 = vpop.f32.mrb[0].mxu0
      %v4576 = vadd.f32 %v4415, %v4575
      %v4577 = vpop.f32.mrb[0].mxu0
      %v4578 = vpop.f32.mrb[0].mxu0
      %v4579 = vadd.f32 %v4418, %v4578
      %v4580 = vpop.f32.mrb[0].mxu0
      %4581 = vmatprep.mubr.bf16.mxu0 0
      %4582 = vmatmul.mubr.bf16.gmra.mrb[0].mxu0 %v3200
      %v4583 = vpop.f32.mrb[0].mxu0
      %v4584 = vadd.f32 %v4423, %v4583
      %v4585 = vpop.f32.mrb[0].mxu0
      %v4586 = vpop.f32.mrb[0].mxu0
      %v4587 = vadd.f32 %v4426, %v4586
      %v4588 = vpop.f32.mrb[0].mxu0
      %4589 = vmatprep.mubr.bf16.mxu0 0
      %4590 = vmatmul.mubr.bf16.gmra.mrb[0].mxu0 %v3209
      %v4591 = vpop.f32.mrb[0].mxu0
      %v4592 = vadd.f32 %v4431, %v4591
      %v4593 = vpop.f32.mrb[0].mxu0
      %v4594 = vpop.f32.mrb[0].mxu0
      %v4595 = vadd.f32 %v4434, %v4594
      %v4596 = vpop.f32.mrb[0].mxu0
      %4597 = vdwg.mxu0
      %v4598 = vmax.f32 %v4472, 0.0
      %v4599 = vmax.f32 %v4475, 0.0
      %v4600 = vmax.f32 %v4480, 0.0
      %v4601 = vmax.f32 %v4483, 0.0
      %v4602 = vmax.f32 %v4488, 0.0
      %v4603 = vmax.f32 %v4491, 0.0
      %v4604 = vmax.f32 %v4496, 0.0
      %v4605 = vmax.f32 %v4499, 0.0
      %v4606 = vmax.f32 %v4504, 0.0
      %v4607 = vmax.f32 %v4507, 0.0
      %v4608 = vmax.f32 %v4512, 0.0
      %v4609 = vmax.f32 %v4515, 0.0
      %v4610 = vmax.f32 %v4520, 0.0
      %v4611 = vmax.f32 %v4523, 0.0
      %v4612 = vmax.f32 %v4528, 0.0
      %v4613 = vmax.f32 %v4531, 0.0
      %v4614 = vmax.f32 %v4536, 0.0
      %v4615 = vmax.f32 %v4539, 0.0
      %v4616 = vmax.f32 %v4544, 0.0
      %v4617 = vmax.f32 %v4547, 0.0
      %v4618 = vmax.f32 %v4552, 0.0
      %v4619 = vmax.f32 %v4555, 0.0
      %v4620 = vmax.f32 %v4560, 0.0
      %v4621 = vmax.f32 %v4563, 0.0
      %v4622 = vmax.f32 %v4568, 0.0
      %v4623 = vmax.f32 %v4571, 0.0
      %v4624 = vmax.f32 %v4576, 0.0
      %v4625 = vmax.f32 %v4579, 0.0
      %v4626 = vmax.f32 %v4584, 0.0
      %v4627 = vmax.f32 %v4587, 0.0
      %v4628 = vmax.f32 %v4592, 0.0
      %v4629 = vmax.f32 %v4595, 0.0
      %v4662 = vcombine.high %v4598, %v4598
      %v4664 = vunpack.c.l.s4 1983009808
      %v4665 = vunpack.c.0.s8 %v4664
      %v4666 = vlaneseq
      %v4667 = vshrl.u32 %v4666, 7
      %v4668 = vsub.s32 %v4665, %v4667
      %v4669 = vrot.slane %v4598, %v4668
      %v4671 = vunpack.c.l.s4 1983009808
      %v4672 = vunpack.c.0.s8 %v4671
      %v4673 = vlaneseq
      %v4674 = vshrl.u32 %v4673, 7
      %v4675 = vsub.s32 %v4672, %v4674
      %v4676 = vrot.slane %v4662, %v4675
      %v4677 = vcombine.high %v4669, %v4669
      %v4678 = vcombine.high %v4676, %v4676
      %v4679 = vcombine.high %v4599, %v4599
      %v4681 = vunpack.c.l.s4 1983009808
      %v4682 = vunpack.c.0.s8 %v4681
      %v4683 = vlaneseq
      %v4684 = vshrl.u32 %v4683, 7
      %v4685 = vsub.s32 %v4682, %v4684
      %v4686 = vrot.slane %v4599, %v4685
      %v4688 = vunpack.c.l.s4 1983009808
      %v4689 = vunpack.c.0.s8 %v4688
      %v4690 = vlaneseq
      %v4691 = vshrl.u32 %v4690, 7
      %v4692 = vsub.s32 %v4689, %v4691
      %v4693 = vrot.slane %v4679, %v4692
      %v4694 = vcombine.high %v4686, %v4686
      %v4695 = vcombine.high %v4693, %v4693
      %v4696 = vcombine.high %v4600, %v4600
      %v4698 = vunpack.c.l.s4 1983009808
      %v4699 = vunpack.c.0.s8 %v4698
      %v4700 = vlaneseq
      %v4701 = vshrl.u32 %v4700, 7
      %v4702 = vsub.s32 %v4699, %v4701
      %v4703 = vrot.slane %v4600, %v4702
      %v4705 = vunpack.c.l.s4 1983009808
      %v4706 = vunpack.c.0.s8 %v4705
      %v4707 = vlaneseq
      %v4708 = vshrl.u32 %v4707, 7
      %v4709 = vsub.s32 %v4706, %v4708
      %v4710 = vrot.slane %v4696, %v4709
      %v4711 = vcombine.high %v4703, %v4703
      %v4712 = vcombine.high %v4710, %v4710
      %v4713 = vcombine.high %v4601, %v4601
      %v4715 = vunpack.c.l.s4 1983009808
      %v4716 = vunpack.c.0.s8 %v4715
      %v4717 = vlaneseq
      %v4718 = vshrl.u32 %v4717, 7
      %v4719 = vsub.s32 %v4716, %v4718
      %v4720 = vrot.slane %v4601, %v4719
      %v4722 = vunpack.c.l.s4 1983009808
      %v4723 = vunpack.c.0.s8 %v4722
      %v4724 = vlaneseq
      %v4725 = vshrl.u32 %v4724, 7
      %v4726 = vsub.s32 %v4723, %v4725
      %v4727 = vrot.slane %v4713, %v4726
      %v4728 = vcombine.high %v4720, %v4720
      %v4729 = vcombine.high %v4727, %v4727
      %v4730 = vcombine.high %v4602, %v4602
      %v4732 = vunpack.c.l.s4 1983009808
      %v4733 = vunpack.c.0.s8 %v4732
      %v4734 = vlaneseq
      %v4735 = vshrl.u32 %v4734, 7
      %v4736 = vsub.s32 %v4733, %v4735
      %v4737 = vrot.slane %v4602, %v4736
      %v4739 = vunpack.c.l.s4 1983009808
      %v4740 = vunpack.c.0.s8 %v4739
      %v4741 = vlaneseq
      %v4742 = vshrl.u32 %v4741, 7
      %v4743 = vsub.s32 %v4740, %v4742
      %v4744 = vrot.slane %v4730, %v4743
      %v4745 = vcombine.high %v4737, %v4737
      %v4746 = vcombine.high %v4744, %v4744
      %v4747 = vcombine.high %v4603, %v4603
      %v4749 = vunpack.c.l.s4 1983009808
      %v4750 = vunpack.c.0.s8 %v4749
      %v4751 = vlaneseq
      %v4752 = vshrl.u32 %v4751, 7
      %v4753 = vsub.s32 %v4750, %v4752
      %v4754 = vrot.slane %v4603, %v4753
      %v4756 = vunpack.c.l.s4 1983009808
      %v4757 = vunpack.c.0.s8 %v4756
      %v4758 = vlaneseq
      %v4759 = vshrl.u32 %v4758, 7
      %v4760 = vsub.s32 %v4757, %v4759
      %v4761 = vrot.slane %v4747, %v4760
      %v4762 = vcombine.high %v4754, %v4754
      %v4763 = vcombine.high %v4761, %v4761
      %v4764 = vcombine.high %v4604, %v4604
      %v4766 = vunpack.c.l.s4 1983009808
      %v4767 = vunpack.c.0.s8 %v4766
      %v4768 = vlaneseq
      %v4769 = vshrl.u32 %v4768, 7
      %v4770 = vsub.s32 %v4767, %v4769
      %v4771 = vrot.slane %v4604, %v4770
      %v4773 = vunpack.c.l.s4 1983009808
      %v4774 = vunpack.c.0.s8 %v4773
      %v4775 = vlaneseq
      %v4776 = vshrl.u32 %v4775, 7
      %v4777 = vsub.s32 %v4774, %v4776
      %v4778 = vrot.slane %v4764, %v4777
      %v4779 = vcombine.high %v4771, %v4771
      %v4780 = vcombine.high %v4778, %v4778
      %v4781 = vcombine.high %v4605, %v4605
      %v4783 = vunpack.c.l.s4 1983009808
      %v4784 = vunpack.c.0.s8 %v4783
      %v4785 = vlaneseq
      %v4786 = vshrl.u32 %v4785, 7
      %v4787 = vsub.s32 %v4784, %v4786
      %v4788 = vrot.slane %v4605, %v4787
      %v4790 = vunpack.c.l.s4 1983009808
      %v4791 = vunpack.c.0.s8 %v4790
      %v4792 = vlaneseq
      %v4793 = vshrl.u32 %v4792, 7
      %v4794 = vsub.s32 %v4791, %v4793
      %v4795 = vrot.slane %v4781, %v4794
      %v4796 = vcombine.high %v4788, %v4788
      %v4797 = vcombine.high %v4795, %v4795
      %v4798 = vcombine.high %v4606, %v4606
      %v4800 = vunpack.c.l.s4 1983009808
      %v4801 = vunpack.c.0.s8 %v4800
      %v4802 = vlaneseq
      %v4803 = vshrl.u32 %v4802, 7
      %v4804 = vsub.s32 %v4801, %v4803
      %v4805 = vrot.slane %v4606, %v4804
      %v4807 = vunpack.c.l.s4 1983009808
      %v4808 = vunpack.c.0.s8 %v4807
      %v4809 = vlaneseq
      %v4810 = vshrl.u32 %v4809, 7
      %v4811 = vsub.s32 %v4808, %v4810
      %v4812 = vrot.slane %v4798, %v4811
      %v4813 = vcombine.high %v4805, %v4805
      %v4814 = vcombine.high %v4812, %v4812
      %v4815 = vcombine.high %v4607, %v4607
      %v4817 = vunpack.c.l.s4 1983009808
      %v4818 = vunpack.c.0.s8 %v4817
      %v4819 = vlaneseq
      %v4820 = vshrl.u32 %v4819, 7
      %v4821 = vsub.s32 %v4818, %v4820
      %v4822 = vrot.slane %v4607, %v4821
      %v4824 = vunpack.c.l.s4 1983009808
      %v4825 = vunpack.c.0.s8 %v4824
      %v4826 = vlaneseq
      %v4827 = vshrl.u32 %v4826, 7
      %v4828 = vsub.s32 %v4825, %v4827
      %v4829 = vrot.slane %v4815, %v4828
      %v4830 = vcombine.high %v4822, %v4822
      %v4831 = vcombine.high %v4829, %v4829
      %v4832 = vcombine.high %v4608, %v4608
      %v4834 = vunpack.c.l.s4 1983009808
      %v4835 = vunpack.c.0.s8 %v4834
      %v4836 = vlaneseq
      %v4837 = vshrl.u32 %v4836, 7
      %v4838 = vsub.s32 %v4835, %v4837
      %v4839 = vrot.slane %v4608, %v4838
      %v4841 = vunpack.c.l.s4 1983009808
      %v4842 = vunpack.c.0.s8 %v4841
      %v4843 = vlaneseq
      %v4844 = vshrl.u32 %v4843, 7
      %v4845 = vsub.s32 %v4842, %v4844
      %v4846 = vrot.slane %v4832, %v4845
      %v4847 = vcombine.high %v4839, %v4839
      %v4848 = vcombine.high %v4846, %v4846
      %v4849 = vcombine.high %v4609, %v4609
      %v4851 = vunpack.c.l.s4 1983009808
      %v4852 = vunpack.c.0.s8 %v4851
      %v4853 = vlaneseq
      %v4854 = vshrl.u32 %v4853, 7
      %v4855 = vsub.s32 %v4852, %v4854
      %v4856 = vrot.slane %v4609, %v4855
      %v4858 = vunpack.c.l.s4 1983009808
      %v4859 = vunpack.c.0.s8 %v4858
      %v4860 = vlaneseq
      %v4861 = vshrl.u32 %v4860, 7
      %v4862 = vsub.s32 %v4859, %v4861
      %v4863 = vrot.slane %v4849, %v4862
      %v4864 = vcombine.high %v4856, %v4856
      %v4865 = vcombine.high %v4863, %v4863
      %v4866 = vcombine.high %v4610, %v4610
      %v4868 = vunpack.c.l.s4 1983009808
      %v4869 = vunpack.c.0.s8 %v4868
      %v4870 = vlaneseq
      %v4871 = vshrl.u32 %v4870, 7
      %v4872 = vsub.s32 %v4869, %v4871
      %v4873 = vrot.slane %v4610, %v4872
      %v4875 = vunpack.c.l.s4 1983009808
      %v4876 = vunpack.c.0.s8 %v4875
      %v4877 = vlaneseq
      %v4878 = vshrl.u32 %v4877, 7
      %v4879 = vsub.s32 %v4876, %v4878
      %v4880 = vrot.slane %v4866, %v4879
      %v4881 = vcombine.high %v4873, %v4873
      %v4882 = vcombine.high %v4880, %v4880
      %v4883 = vcombine.high %v4611, %v4611
      %v4885 = vunpack.c.l.s4 1983009808
      %v4886 = vunpack.c.0.s8 %v4885
      %v4887 = vlaneseq
      %v4888 = vshrl.u32 %v4887, 7
      %v4889 = vsub.s32 %v4886, %v4888
      %v4890 = vrot.slane %v4611, %v4889
      %v4892 = vunpack.c.l.s4 1983009808
      %v4893 = vunpack.c.0.s8 %v4892
      %v4894 = vlaneseq
      %v4895 = vshrl.u32 %v4894, 7
      %v4896 = vsub.s32 %v4893, %v4895
      %v4897 = vrot.slane %v4883, %v4896
      %v4898 = vcombine.high %v4890, %v4890
      %v4899 = vcombine.high %v4897, %v4897
      %v4900 = vcombine.high %v4612, %v4612
      %v4902 = vunpack.c.l.s4 1983009808
      %v4903 = vunpack.c.0.s8 %v4902
      %v4904 = vlaneseq
      %v4905 = vshrl.u32 %v4904, 7
      %v4906 = vsub.s32 %v4903, %v4905
      %v4907 = vrot.slane %v4612, %v4906
      %v4909 = vunpack.c.l.s4 1983009808
      %v4910 = vunpack.c.0.s8 %v4909
      %v4911 = vlaneseq
      %v4912 = vshrl.u32 %v4911, 7
      %v4913 = vsub.s32 %v4910, %v4912
      %v4914 = vrot.slane %v4900, %v4913
      %v4915 = vcombine.high %v4907, %v4907
      %v4916 = vcombine.high %v4914, %v4914
      %v4917 = vcombine.high %v4613, %v4613
      %v4919 = vunpack.c.l.s4 1983009808
      %v4920 = vunpack.c.0.s8 %v4919
      %v4921 = vlaneseq
      %v4922 = vshrl.u32 %v4921, 7
      %v4923 = vsub.s32 %v4920, %v4922
      %v4924 = vrot.slane %v4613, %v4923
      %v4926 = vunpack.c.l.s4 1983009808
      %v4927 = vunpack.c.0.s8 %v4926
      %v4928 = vlaneseq
      %v4929 = vshrl.u32 %v4928, 7
      %v4930 = vsub.s32 %v4927, %v4929
      %v4931 = vrot.slane %v4917, %v4930
      %v4932 = vcombine.high %v4924, %v4924
      %v4933 = vcombine.high %v4931, %v4931
      %v4934 = vcombine.high %v4614, %v4614
      %v4936 = vunpack.c.l.s4 1983009808
      %v4937 = vunpack.c.0.s8 %v4936
      %v4938 = vlaneseq
      %v4939 = vshrl.u32 %v4938, 7
      %v4940 = vsub.s32 %v4937, %v4939
      %v4941 = vrot.slane %v4614, %v4940
      %v4943 = vunpack.c.l.s4 1983009808
      %v4944 = vunpack.c.0.s8 %v4943
      %v4945 = vlaneseq
      %v4946 = vshrl.u32 %v4945, 7
      %v4947 = vsub.s32 %v4944, %v4946
      %v4948 = vrot.slane %v4934, %v4947
      %v4949 = vcombine.high %v4941, %v4941
      %v4950 = vcombine.high %v4948, %v4948
      %v4951 = vcombine.high %v4615, %v4615
      %v4953 = vunpack.c.l.s4 1983009808
      %v4954 = vunpack.c.0.s8 %v4953
      %v4955 = vlaneseq
      %v4956 = vshrl.u32 %v4955, 7
      %v4957 = vsub.s32 %v4954, %v4956
      %v4958 = vrot.slane %v4615, %v4957
      %v4960 = vunpack.c.l.s4 1983009808
      %v4961 = vunpack.c.0.s8 %v4960
      %v4962 = vlaneseq
      %v4963 = vshrl.u32 %v4962, 7
      %v4964 = vsub.s32 %v4961, %v4963
      %v4965 = vrot.slane %v4951, %v4964
      %v4966 = vcombine.high %v4958, %v4958
      %v4967 = vcombine.high %v4965, %v4965
      %v4968 = vcombine.high %v4616, %v4616
      %v4970 = vunpack.c.l.s4 1983009808
      %v4971 = vunpack.c.0.s8 %v4970
      %v4972 = vlaneseq
      %v4973 = vshrl.u32 %v4972, 7
      %v4974 = vsub.s32 %v4971, %v4973
      %v4975 = vrot.slane %v4616, %v4974
      %v4977 = vunpack.c.l.s4 1983009808
      %v4978 = vunpack.c.0.s8 %v4977
      %v4979 = vlaneseq
      %v4980 = vshrl.u32 %v4979, 7
      %v4981 = vsub.s32 %v4978, %v4980
      %v4982 = vrot.slane %v4968, %v4981
      %v4983 = vcombine.high %v4975, %v4975
      %v4984 = vcombine.high %v4982, %v4982
      %v4985 = vcombine.high %v4617, %v4617
      %v4987 = vunpack.c.l.s4 1983009808
      %v4988 = vunpack.c.0.s8 %v4987
      %v4989 = vlaneseq
      %v4990 = vshrl.u32 %v4989, 7
      %v4991 = vsub.s32 %v4988, %v4990
      %v4992 = vrot.slane %v4617, %v4991
      %v4994 = vunpack.c.l.s4 1983009808
      %v4995 = vunpack.c.0.s8 %v4994
      %v4996 = vlaneseq
      %v4997 = vshrl.u32 %v4996, 7
      %v4998 = vsub.s32 %v4995, %v4997
      %v4999 = vrot.slane %v4985, %v4998
      %v5000 = vcombine.high %v4992, %v4992
      %v5001 = vcombine.high %v4999, %v4999
      %v5002 = vcombine.high %v4618, %v4618
      %v5004 = vunpack.c.l.s4 1983009808
      %v5005 = vunpack.c.0.s8 %v5004
      %v5006 = vlaneseq
      %v5007 = vshrl.u32 %v5006, 7
      %v5008 = vsub.s32 %v5005, %v5007
      %v5009 = vrot.slane %v4618, %v5008
      %v5011 = vunpack.c.l.s4 1983009808
      %v5012 = vunpack.c.0.s8 %v5011
      %v5013 = vlaneseq
      %v5014 = vshrl.u32 %v5013, 7
      %v5015 = vsub.s32 %v5012, %v5014
      %v5016 = vrot.slane %v5002, %v5015
      %v5017 = vcombine.high %v5009, %v5009
      %v5018 = vcombine.high %v5016, %v5016
      %v5019 = vcombine.high %v4619, %v4619
      %v5021 = vunpack.c.l.s4 1983009808
      %v5022 = vunpack.c.0.s8 %v5021
      %v5023 = vlaneseq
      %v5024 = vshrl.u32 %v5023, 7
      %v5025 = vsub.s32 %v5022, %v5024
      %v5026 = vrot.slane %v4619, %v5025
      %v5028 = vunpack.c.l.s4 1983009808
      %v5029 = vunpack.c.0.s8 %v5028
      %v5030 = vlaneseq
      %v5031 = vshrl.u32 %v5030, 7
      %v5032 = vsub.s32 %v5029, %v5031
      %v5033 = vrot.slane %v5019, %v5032
      %v5034 = vcombine.high %v5026, %v5026
      %v5035 = vcombine.high %v5033, %v5033
      %v5036 = vcombine.high %v4620, %v4620
      %v5038 = vunpack.c.l.s4 1983009808
      %v5039 = vunpack.c.0.s8 %v5038
      %v5040 = vlaneseq
      %v5041 = vshrl.u32 %v5040, 7
      %v5042 = vsub.s32 %v5039, %v5041
      %v5043 = vrot.slane %v4620, %v5042
      %v5045 = vunpack.c.l.s4 1983009808
      %v5046 = vunpack.c.0.s8 %v5045
      %v5047 = vlaneseq
      %v5048 = vshrl.u32 %v5047, 7
      %v5049 = vsub.s32 %v5046, %v5048
      %v5050 = vrot.slane %v5036, %v5049
      %v5051 = vcombine.high %v5043, %v5043
      %v5052 = vcombine.high %v5050, %v5050
      %v5053 = vcombine.high %v4621, %v4621
      %v5055 = vunpack.c.l.s4 1983009808
      %v5056 = vunpack.c.0.s8 %v5055
      %v5057 = vlaneseq
      %v5058 = vshrl.u32 %v5057, 7
      %v5059 = vsub.s32 %v5056, %v5058
      %v5060 = vrot.slane %v4621, %v5059
      %v5062 = vunpack.c.l.s4 1983009808
      %v5063 = vunpack.c.0.s8 %v5062
      %v5064 = vlaneseq
      %v5065 = vshrl.u32 %v5064, 7
      %v5066 = vsub.s32 %v5063, %v5065
      %v5067 = vrot.slane %v5053, %v5066
      %v5068 = vcombine.high %v5060, %v5060
      %v5069 = vcombine.high %v5067, %v5067
      %v5070 = vcombine.high %v4622, %v4622
      %v5072 = vunpack.c.l.s4 1983009808
      %v5073 = vunpack.c.0.s8 %v5072
      %v5074 = vlaneseq
      %v5075 = vshrl.u32 %v5074, 7
      %v5076 = vsub.s32 %v5073, %v5075
      %v5077 = vrot.slane %v4622, %v5076
      %v5079 = vunpack.c.l.s4 1983009808
      %v5080 = vunpack.c.0.s8 %v5079
      %v5081 = vlaneseq
      %v5082 = vshrl.u32 %v5081, 7
      %v5083 = vsub.s32 %v5080, %v5082
      %v5084 = vrot.slane %v5070, %v5083
      %v5085 = vcombine.high %v5077, %v5077
      %v5086 = vcombine.high %v5084, %v5084
      %v5087 = vcombine.high %v4623, %v4623
      %v5089 = vunpack.c.l.s4 1983009808
      %v5090 = vunpack.c.0.s8 %v5089
      %v5091 = vlaneseq
      %v5092 = vshrl.u32 %v5091, 7
      %v5093 = vsub.s32 %v5090, %v5092
      %v5094 = vrot.slane %v4623, %v5093
      %v5096 = vunpack.c.l.s4 1983009808
      %v5097 = vunpack.c.0.s8 %v5096
      %v5098 = vlaneseq
      %v5099 = vshrl.u32 %v5098, 7
      %v5100 = vsub.s32 %v5097, %v5099
      %v5101 = vrot.slane %v5087, %v5100
      %v5102 = vcombine.high %v5094, %v5094
      %v5103 = vcombine.high %v5101, %v5101
      %v5104 = vcombine.high %v4624, %v4624
      %v5106 = vunpack.c.l.s4 1983009808
      %v5107 = vunpack.c.0.s8 %v5106
      %v5108 = vlaneseq
      %v5109 = vshrl.u32 %v5108, 7
      %v5110 = vsub.s32 %v5107, %v5109
      %v5111 = vrot.slane %v4624, %v5110
      %v5113 = vunpack.c.l.s4 1983009808
      %v5114 = vunpack.c.0.s8 %v5113
      %v5115 = vlaneseq
      %v5116 = vshrl.u32 %v5115, 7
      %v5117 = vsub.s32 %v5114, %v5116
      %v5118 = vrot.slane %v5104, %v5117
      %v5119 = vcombine.high %v5111, %v5111
      %v5120 = vcombine.high %v5118, %v5118
      %v5121 = vcombine.high %v4625, %v4625
      %v5123 = vunpack.c.l.s4 1983009808
      %v5124 = vunpack.c.0.s8 %v5123
      %v5125 = vlaneseq
      %v5126 = vshrl.u32 %v5125, 7
      %v5127 = vsub.s32 %v5124, %v5126
      %v5128 = vrot.slane %v4625, %v5127
      %v5130 = vunpack.c.l.s4 1983009808
      %v5131 = vunpack.c.0.s8 %v5130
      %v5132 = vlaneseq
      %v5133 = vshrl.u32 %v5132, 7
      %v5134 = vsub.s32 %v5131, %v5133
      %v5135 = vrot.slane %v5121, %v5134
      %v5136 = vcombine.high %v5128, %v5128
      %v5137 = vcombine.high %v5135, %v5135
      %v5138 = vcombine.high %v4626, %v4626
      %v5140 = vunpack.c.l.s4 1983009808
      %v5141 = vunpack.c.0.s8 %v5140
      %v5142 = vlaneseq
      %v5143 = vshrl.u32 %v5142, 7
      %v5144 = vsub.s32 %v5141, %v5143
      %v5145 = vrot.slane %v4626, %v5144
      %v5147 = vunpack.c.l.s4 1983009808
      %v5148 = vunpack.c.0.s8 %v5147
      %v5149 = vlaneseq
      %v5150 = vshrl.u32 %v5149, 7
      %v5151 = vsub.s32 %v5148, %v5150
      %v5152 = vrot.slane %v5138, %v5151
      %v5153 = vcombine.high %v5145, %v5145
      %v5154 = vcombine.high %v5152, %v5152
      %v5155 = vcombine.high %v4627, %v4627
      %v5157 = vunpack.c.l.s4 1983009808
      %v5158 = vunpack.c.0.s8 %v5157
      %v5159 = vlaneseq
      %v5160 = vshrl.u32 %v5159, 7
      %v5161 = vsub.s32 %v5158, %v5160
      %v5162 = vrot.slane %v4627, %v5161
      %v5164 = vunpack.c.l.s4 1983009808
      %v5165 = vunpack.c.0.s8 %v5164
      %v5166 = vlaneseq
      %v5167 = vshrl.u32 %v5166, 7
      %v5168 = vsub.s32 %v5165, %v5167
      %v5169 = vrot.slane %v5155, %v5168
      %v5170 = vcombine.high %v5162, %v5162
      %v5171 = vcombine.high %v5169, %v5169
      %v5172 = vcombine.high %v4628, %v4628
      %v5174 = vunpack.c.l.s4 1983009808
      %v5175 = vunpack.c.0.s8 %v5174
      %v5176 = vlaneseq
      %v5177 = vshrl.u32 %v5176, 7
      %v5178 = vsub.s32 %v5175, %v5177
      %v5179 = vrot.slane %v4628, %v5178
      %v5181 = vunpack.c.l.s4 1983009808
      %v5182 = vunpack.c.0.s8 %v5181
      %v5183 = vlaneseq
      %v5184 = vshrl.u32 %v5183, 7
      %v5185 = vsub.s32 %v5182, %v5184
      %v5186 = vrot.slane %v5172, %v5185
      %v5187 = vcombine.high %v5179, %v5179
      %v5188 = vcombine.high %v5186, %v5186
      %v5189 = vcombine.high %v4629, %v4629
      %v5191 = vunpack.c.l.s4 1983009808
      %v5192 = vunpack.c.0.s8 %v5191
      %v5193 = vlaneseq
      %v5194 = vshrl.u32 %v5193, 7
      %v5195 = vsub.s32 %v5192, %v5194
      %v5196 = vrot.slane %v4629, %v5195
      %v5198 = vunpack.c.l.s4 1983009808
      %v5199 = vunpack.c.0.s8 %v5198
      %v5200 = vlaneseq
      %v5201 = vshrl.u32 %v5200, 7
      %v5202 = vsub.s32 %v5199, %v5201
      %v5203 = vrot.slane %v5189, %v5202
      %v5204 = vcombine.high %v5196, %v5196
      %v5205 = vcombine.high %v5203, %v5203
      %v5334 = vrot.slane %v4669, 7
      %v5335 = vrot.slane %v5334, 2
      %v5336 = vrot.slane %v4677, 7
      %v5337 = vrot.slane %v5336, 2
      %v5338 = vrot.slane %v4676, 7
      %v5339 = vrot.slane %v5338, 2
      %v5340 = vrot.slane %v4678, 7
      %v5341 = vrot.slane %v5340, 2
      %v5342 = vrot.slane %v4686, 7
      %v5343 = vrot.slane %v5342, 2
      %v5344 = vrot.slane %v4694, 7
      %v5345 = vrot.slane %v5344, 2
      %v5346 = vrot.slane %v4693, 7
      %v5347 = vrot.slane %v5346, 2
      %v5348 = vrot.slane %v4695, 7
      %v5349 = vrot.slane %v5348, 2
      %v5350 = vrot.slane %v4703, 7
      %v5351 = vrot.slane %v5350, 2
      %v5352 = vrot.slane %v4711, 7
      %v5353 = vrot.slane %v5352, 2
      %v5354 = vrot.slane %v4710, 7
      %v5355 = vrot.slane %v5354, 2
      %v5356 = vrot.slane %v4712, 7
      %v5357 = vrot.slane %v5356, 2
      %v5358 = vrot.slane %v4720, 7
      %v5359 = vrot.slane %v5358, 2
      %v5360 = vrot.slane %v4728, 7
      %v5361 = vrot.slane %v5360, 2
      %v5362 = vrot.slane %v4727, 7
      %v5363 = vrot.slane %v5362, 2
      %v5364 = vrot.slane %v4729, 7
      %v5365 = vrot.slane %v5364, 2
      %v5366 = vrot.slane %v4737, 7
      %v5367 = vrot.slane %v5366, 2
      %v5368 = vrot.slane %v4745, 7
      %v5369 = vrot.slane %v5368, 2
      %v5370 = vrot.slane %v4744, 7
      %v5371 = vrot.slane %v5370, 2
      %v5372 = vrot.slane %v4746, 7
      %v5373 = vrot.slane %v5372, 2
      %v5374 = vrot.slane %v4754, 7
      %v5375 = vrot.slane %v5374, 2
      %v5376 = vrot.slane %v4762, 7
      %v5377 = vrot.slane %v5376, 2
      %v5378 = vrot.slane %v4761, 7
      %v5379 = vrot.slane %v5378, 2
      %v5380 = vrot.slane %v4763, 7
      %v5381 = vrot.slane %v5380, 2
      %v5382 = vrot.slane %v4771, 7
      %v5383 = vrot.slane %v5382, 2
      %v5384 = vrot.slane %v4779, 7
      %v5385 = vrot.slane %v5384, 2
      %v5386 = vrot.slane %v4778, 7
      %v5387 = vrot.slane %v5386, 2
      %v5388 = vrot.slane %v4780, 7
      %v5389 = vrot.slane %v5388, 2
      %v5390 = vrot.slane %v4788, 7
      %v5391 = vrot.slane %v5390, 2
      %v5392 = vrot.slane %v4796, 7
      %v5393 = vrot.slane %v5392, 2
      %v5394 = vrot.slane %v4795, 7
      %v5395 = vrot.slane %v5394, 2
      %v5396 = vrot.slane %v4797, 7
      %v5397 = vrot.slane %v5396, 2
      %v5398 = vrot.slane %v4805, 7
      %v5399 = vrot.slane %v5398, 2
      %v5400 = vrot.slane %v4813, 7
      %v5401 = vrot.slane %v5400, 2
      %v5402 = vrot.slane %v4812, 7
      %v5403 = vrot.slane %v5402, 2
      %v5404 = vrot.slane %v4814, 7
      %v5405 = vrot.slane %v5404, 2
      %v5406 = vrot.slane %v4822, 7
      %v5407 = vrot.slane %v5406, 2
      %v5408 = vrot.slane %v4830, 7
      %v5409 = vrot.slane %v5408, 2
      %v5410 = vrot.slane %v4829, 7
      %v5411 = vrot.slane %v5410, 2
      %v5412 = vrot.slane %v4831, 7
      %v5413 = vrot.slane %v5412, 2
      %v5414 = vrot.slane %v4839, 7
      %v5415 = vrot.slane %v5414, 2
      %v5416 = vrot.slane %v4847, 7
      %v5417 = vrot.slane %v5416, 2
      %v5418 = vrot.slane %v4846, 7
      %v5419 = vrot.slane %v5418, 2
      %v5420 = vrot.slane %v4848, 7
      %v5421 = vrot.slane %v5420, 2
      %v5422 = vrot.slane %v4856, 7
      %v5423 = vrot.slane %v5422, 2
      %v5424 = vrot.slane %v4864, 7
      %v5425 = vrot.slane %v5424, 2
      %v5426 = vrot.slane %v4863, 7
      %v5427 = vrot.slane %v5426, 2
      %v5428 = vrot.slane %v4865, 7
      %v5429 = vrot.slane %v5428, 2
      %v5430 = vrot.slane %v4873, 7
      %v5431 = vrot.slane %v5430, 2
      %v5432 = vrot.slane %v4881, 7
      %v5433 = vrot.slane %v5432, 2
      %v5434 = vrot.slane %v4880, 7
      %v5435 = vrot.slane %v5434, 2
      %v5436 = vrot.slane %v4882, 7
      %v5437 = vrot.slane %v5436, 2
      %v5438 = vrot.slane %v4890, 7
      %v5439 = vrot.slane %v5438, 2
      %v5440 = vrot.slane %v4898, 7
      %v5441 = vrot.slane %v5440, 2
      %v5442 = vrot.slane %v4897, 7
      %v5443 = vrot.slane %v5442, 2
      %v5444 = vrot.slane %v4899, 7
      %v5445 = vrot.slane %v5444, 2
      %v5446 = vrot.slane %v4907, 7
      %v5447 = vrot.slane %v5446, 2
      %v5448 = vrot.slane %v4915, 7
      %v5449 = vrot.slane %v5448, 2
      %v5450 = vrot.slane %v4914, 7
      %v5451 = vrot.slane %v5450, 2
      %v5452 = vrot.slane %v4916, 7
      %v5453 = vrot.slane %v5452, 2
      %v5454 = vrot.slane %v4924, 7
      %v5455 = vrot.slane %v5454, 2
      %v5456 = vrot.slane %v4932, 7
      %v5457 = vrot.slane %v5456, 2
      %v5458 = vrot.slane %v4931, 7
      %v5459 = vrot.slane %v5458, 2
      %v5460 = vrot.slane %v4933, 7
      %v5461 = vrot.slane %v5460, 2
      %v5462 = vrot.slane %v4941, 7
      %v5463 = vrot.slane %v5462, 2
      %v5464 = vrot.slane %v4949, 7
      %v5465 = vrot.slane %v5464, 2
      %v5466 = vrot.slane %v4948, 7
      %v5467 = vrot.slane %v5466, 2
      %v5468 = vrot.slane %v4950, 7
      %v5469 = vrot.slane %v5468, 2
      %v5470 = vrot.slane %v4958, 7
      %v5471 = vrot.slane %v5470, 2
      %v5472 = vrot.slane %v4966, 7
      %v5473 = vrot.slane %v5472, 2
      %v5474 = vrot.slane %v4965, 7
      %v5475 = vrot.slane %v5474, 2
      %v5476 = vrot.slane %v4967, 7
      %v5477 = vrot.slane %v5476, 2
      %v5478 = vrot.slane %v4975, 7
      %v5479 = vrot.slane %v5478, 2
      %v5480 = vrot.slane %v4983, 7
      %v5481 = vrot.slane %v5480, 2
      %v5482 = vrot.slane %v4982, 7
      %v5483 = vrot.slane %v5482, 2
      %v5484 = vrot.slane %v4984, 7
      %v5485 = vrot.slane %v5484, 2
      %v5486 = vrot.slane %v4992, 7
      %v5487 = vrot.slane %v5486, 2
      %v5488 = vrot.slane %v5000, 7
      %v5489 = vrot.slane %v5488, 2
      %v5490 = vrot.slane %v4999, 7
      %v5491 = vrot.slane %v5490, 2
      %v5492 = vrot.slane %v5001, 7
      %v5493 = vrot.slane %v5492, 2
      %v5494 = vrot.slane %v5009, 7
      %v5495 = vrot.slane %v5494, 2
      %v5496 = vrot.slane %v5017, 7
      %v5497 = vrot.slane %v5496, 2
      %v5498 = vrot.slane %v5016, 7
      %v5499 = vrot.slane %v5498, 2
      %v5500 = vrot.slane %v5018, 7
      %v5501 = vrot.slane %v5500, 2
      %v5502 = vrot.slane %v5026, 7
      %v5503 = vrot.slane %v5502, 2
      %v5504 = vrot.slane %v5034, 7
      %v5505 = vrot.slane %v5504, 2
      %v5506 = vrot.slane %v5033, 7
      %v5507 = vrot.slane %v5506, 2
      %v5508 = vrot.slane %v5035, 7
      %v5509 = vrot.slane %v5508, 2
      %v5510 = vrot.slane %v5043, 7
      %v5511 = vrot.slane %v5510, 2
      %v5512 = vrot.slane %v5051, 7
      %v5513 = vrot.slane %v5512, 2
      %v5514 = vrot.slane %v5050, 7
      %v5515 = vrot.slane %v5514, 2
      %v5516 = vrot.slane %v5052, 7
      %v5517 = vrot.slane %v5516, 2
      %v5518 = vrot.slane %v5060, 7
      %v5519 = vrot.slane %v5518, 2
      %v5520 = vrot.slane %v5068, 7
      %v5521 = vrot.slane %v5520, 2
      %v5522 = vrot.slane %v5067, 7
      %v5523 = vrot.slane %v5522, 2
      %v5524 = vrot.slane %v5069, 7
      %v5525 = vrot.slane %v5524, 2
      %v5526 = vrot.slane %v5077, 7
      %v5527 = vrot.slane %v5526, 2
      %v5528 = vrot.slane %v5085, 7
      %v5529 = vrot.slane %v5528, 2
      %v5530 = vrot.slane %v5084, 7
      %v5531 = vrot.slane %v5530, 2
      %v5532 = vrot.slane %v5086, 7
      %v5533 = vrot.slane %v5532, 2
      %v5534 = vrot.slane %v5094, 7
      %v5535 = vrot.slane %v5534, 2
      %v5536 = vrot.slane %v5102, 7
      %v5537 = vrot.slane %v5536, 2
      %v5538 = vrot.slane %v5101, 7
      %v5539 = vrot.slane %v5538, 2
      %v5540 = vrot.slane %v5103, 7
      %v5541 = vrot.slane %v5540, 2
      %v5542 = vrot.slane %v5111, 7
      %v5543 = vrot.slane %v5542, 2
      %v5544 = vrot.slane %v5119, 7
      %v5545 = vrot.slane %v5544, 2
      %v5546 = vrot.slane %v5118, 7
      %v5547 = vrot.slane %v5546, 2
      %v5548 = vrot.slane %v5120, 7
      %v5549 = vrot.slane %v5548, 2
      %v5550 = vrot.slane %v5128, 7
      %v5551 = vrot.slane %v5550, 2
      %v5552 = vrot.slane %v5136, 7
      %v5553 = vrot.slane %v5552, 2
      %v5554 = vrot.slane %v5135, 7
      %v5555 = vrot.slane %v5554, 2
      %v5556 = vrot.slane %v5137, 7
      %v5557 = vrot.slane %v5556, 2
      %v5558 = vrot.slane %v5145, 7
      %v5559 = vrot.slane %v5558, 2
      %v5560 = vrot.slane %v5153, 7
      %v5561 = vrot.slane %v5560, 2
      %v5562 = vrot.slane %v5152, 7
      %v5563 = vrot.slane %v5562, 2
      %v5564 = vrot.slane %v5154, 7
      %v5565 = vrot.slane %v5564, 2
      %v5566 = vrot.slane %v5162, 7
      %v5567 = vrot.slane %v5566, 2
      %v5568 = vrot.slane %v5170, 7
      %v5569 = vrot.slane %v5568, 2
      %v5570 = vrot.slane %v5169, 7
      %v5571 = vrot.slane %v5570, 2
      %v5572 = vrot.slane %v5171, 7
      %v5573 = vrot.slane %v5572, 2
      %v5574 = vrot.slane %v5179, 7
      %v5575 = vrot.slane %v5574, 2
      %v5576 = vrot.slane %v5187, 7
      %v5577 = vrot.slane %v5576, 2
      %v5578 = vrot.slane %v5186, 7
      %v5579 = vrot.slane %v5578, 2
      %v5580 = vrot.slane %v5188, 7
      %v5581 = vrot.slane %v5580, 2
      %v5582 = vrot.slane %v5196, 7
      %v5583 = vrot.slane %v5582, 2
      %v5584 = vrot.slane %v5204, 7
      %v5585 = vrot.slane %v5584, 2
      %v5586 = vrot.slane %v5203, 7
      %v5587 = vrot.slane %v5586, 2
      %v5588 = vrot.slane %v5205, 7
      %v5589 = vrot.slane %v5588, 2
      %v5718 = vmax.f32 %v4669, %v5335
      %v5719 = vmax.f32 %v4677, %v5337
      %v5720 = vmax.f32 %v4676, %v5339
      %v5721 = vmax.f32 %v4678, %v5341
      %v5722 = vmax.f32 %v4686, %v5343
      %v5723 = vmax.f32 %v4694, %v5345
      %v5724 = vmax.f32 %v4693, %v5347
      %v5725 = vmax.f32 %v4695, %v5349
      %v5726 = vmax.f32 %v4703, %v5351
      %v5727 = vmax.f32 %v4711, %v5353
      %v5728 = vmax.f32 %v4710, %v5355
      %v5729 = vmax.f32 %v4712, %v5357
      %v5730 = vmax.f32 %v4720, %v5359
      %v5731 = vmax.f32 %v4728, %v5361
      %v5732 = vmax.f32 %v4727, %v5363
      %v5733 = vmax.f32 %v4729, %v5365
      %v5734 = vmax.f32 %v4737, %v5367
      %v5735 = vmax.f32 %v4745, %v5369
      %v5736 = vmax.f32 %v4744, %v5371
      %v5737 = vmax.f32 %v4746, %v5373
      %v5738 = vmax.f32 %v4754, %v5375
      %v5739 = vmax.f32 %v4762, %v5377
      %v5740 = vmax.f32 %v4761, %v5379
      %v5741 = vmax.f32 %v4763, %v5381
      %v5742 = vmax.f32 %v4771, %v5383
      %v5743 = vmax.f32 %v4779, %v5385
      %v5744 = vmax.f32 %v4778, %v5387
      %v5745 = vmax.f32 %v4780, %v5389
      %v5746 = vmax.f32 %v4788, %v5391
      %v5747 = vmax.f32 %v4796, %v5393
      %v5748 = vmax.f32 %v4795, %v5395
      %v5749 = vmax.f32 %v4797, %v5397
      %v5750 = vmax.f32 %v4805, %v5399
      %v5751 = vmax.f32 %v4813, %v5401
      %v5752 = vmax.f32 %v4812, %v5403
      %v5753 = vmax.f32 %v4814, %v5405
      %v5754 = vmax.f32 %v4822, %v5407
      %v5755 = vmax.f32 %v4830, %v5409
      %v5756 = vmax.f32 %v4829, %v5411
      %v5757 = vmax.f32 %v4831, %v5413
      %v5758 = vmax.f32 %v4839, %v5415
      %v5759 = vmax.f32 %v4847, %v5417
      %v5760 = vmax.f32 %v4846, %v5419
      %v5761 = vmax.f32 %v4848, %v5421
      %v5762 = vmax.f32 %v4856, %v5423
      %v5763 = vmax.f32 %v4864, %v5425
      %v5764 = vmax.f32 %v4863, %v5427
      %v5765 = vmax.f32 %v4865, %v5429
      %v5766 = vmax.f32 %v4873, %v5431
      %v5767 = vmax.f32 %v4881, %v5433
      %v5768 = vmax.f32 %v4880, %v5435
      %v5769 = vmax.f32 %v4882, %v5437
      %v5770 = vmax.f32 %v4890, %v5439
      %v5771 = vmax.f32 %v4898, %v5441
      %v5772 = vmax.f32 %v4897, %v5443
      %v5773 = vmax.f32 %v4899, %v5445
      %v5774 = vmax.f32 %v4907, %v5447
      %v5775 = vmax.f32 %v4915, %v5449
      %v5776 = vmax.f32 %v4914, %v5451
      %v5777 = vmax.f32 %v4916, %v5453
      %v5778 = vmax.f32 %v4924, %v5455
      %v5779 = vmax.f32 %v4932, %v5457
      %v5780 = vmax.f32 %v4931, %v5459
      %v5781 = vmax.f32 %v4933, %v5461
      %v5782 = vmax.f32 %v4941, %v5463
      %v5783 = vmax.f32 %v4949, %v5465
      %v5784 = vmax.f32 %v4948, %v5467
      %v5785 = vmax.f32 %v4950, %v5469
      %v5786 = vmax.f32 %v4958, %v5471
      %v5787 = vmax.f32 %v4966, %v5473
      %v5788 = vmax.f32 %v4965, %v5475
      %v5789 = vmax.f32 %v4967, %v5477
      %v5790 = vmax.f32 %v4975, %v5479
      %v5791 = vmax.f32 %v4983, %v5481
      %v5792 = vmax.f32 %v4982, %v5483
      %v5793 = vmax.f32 %v4984, %v5485
      %v5794 = vmax.f32 %v4992, %v5487
      %v5795 = vmax.f32 %v5000, %v5489
      %v5796 = vmax.f32 %v4999, %v5491
      %v5797 = vmax.f32 %v5001, %v5493
      %v5798 = vmax.f32 %v5009, %v5495
      %v5799 = vmax.f32 %v5017, %v5497
      %v5800 = vmax.f32 %v5016, %v5499
      %v5801 = vmax.f32 %v5018, %v5501
      %v5802 = vmax.f32 %v5026, %v5503
      %v5803 = vmax.f32 %v5034, %v5505
      %v5804 = vmax.f32 %v5033, %v5507
      %v5805 = vmax.f32 %v5035, %v5509
      %v5806 = vmax.f32 %v5043, %v5511
      %v5807 = vmax.f32 %v5051, %v5513
      %v5808 = vmax.f32 %v5050, %v5515
      %v5809 = vmax.f32 %v5052, %v5517
      %v5810 = vmax.f32 %v5060, %v5519
      %v5811 = vmax.f32 %v5068, %v5521
      %v5812 = vmax.f32 %v5067, %v5523
      %v5813 = vmax.f32 %v5069, %v5525
      %v5814 = vmax.f32 %v5077, %v5527
      %v5815 = vmax.f32 %v5085, %v5529
      %v5816 = vmax.f32 %v5084, %v5531
      %v5817 = vmax.f32 %v5086, %v5533
      %v5818 = vmax.f32 %v5094, %v5535
      %v5819 = vmax.f32 %v5102, %v5537
      %v5820 = vmax.f32 %v5101, %v5539
      %v5821 = vmax.f32 %v5103, %v5541
      %v5822 = vmax.f32 %v5111, %v5543
      %v5823 = vmax.f32 %v5119, %v5545
      %v5824 = vmax.f32 %v5118, %v5547
      %v5825 = vmax.f32 %v5120, %v5549
      %v5826 = vmax.f32 %v5128, %v5551
      %v5827 = vmax.f32 %v5136, %v5553
      %v5828 = vmax.f32 %v5135, %v5555
      %v5829 = vmax.f32 %v5137, %v5557
      %v5830 = vmax.f32 %v5145, %v5559
      %v5831 = vmax.f32 %v5153, %v5561
      %v5832 = vmax.f32 %v5152, %v5563
      %v5833 = vmax.f32 %v5154, %v5565
      %v5834 = vmax.f32 %v5162, %v5567
      %v5835 = vmax.f32 %v5170, %v5569
      %v5836 = vmax.f32 %v5169, %v5571
      %v5837 = vmax.f32 %v5171, %v5573
      %v5838 = vmax.f32 %v5179, %v5575
      %v5839 = vmax.f32 %v5187, %v5577
      %v5840 = vmax.f32 %v5186, %v5579
      %v5841 = vmax.f32 %v5188, %v5581
      %v5842 = vmax.f32 %v5196, %v5583
      %v5843 = vmax.f32 %v5204, %v5585
      %v5844 = vmax.f32 %v5203, %v5587
      %v5845 = vmax.f32 %v5205, %v5589
      %v5846 = vmax.f32 %v5718, %v5726
      %v5847 = vmax.f32 %v5719, %v5727
      %v5848 = vmax.f32 %v5720, %v5728
      %v5849 = vmax.f32 %v5721, %v5729
      %v5850 = vmax.f32 %v5722, %v5730
      %v5851 = vmax.f32 %v5723, %v5731
      %v5852 = vmax.f32 %v5724, %v5732
      %v5853 = vmax.f32 %v5725, %v5733
      %v5854 = vmax.f32 %v5734, %v5742
      %v5855 = vmax.f32 %v5735, %v5743
      %v5856 = vmax.f32 %v5736, %v5744
      %v5857 = vmax.f32 %v5737, %v5745
      %v5858 = vmax.f32 %v5738, %v5746
      %v5859 = vmax.f32 %v5739, %v5747
      %v5860 = vmax.f32 %v5740, %v5748
      %v5861 = vmax.f32 %v5741, %v5749
      %v5862 = vmax.f32 %v5750, %v5758
      %v5863 = vmax.f32 %v5751, %v5759
      %v5864 = vmax.f32 %v5752, %v5760
      %v5865 = vmax.f32 %v5753, %v5761
      %v5866 = vmax.f32 %v5754, %v5762
      %v5867 = vmax.f32 %v5755, %v5763
      %v5868 = vmax.f32 %v5756, %v5764
      %v5869 = vmax.f32 %v5757, %v5765
      %v5870 = vmax.f32 %v5766, %v5774
      %v5871 = vmax.f32 %v5767, %v5775
      %v5872 = vmax.f32 %v5768, %v5776
      %v5873 = vmax.f32 %v5769, %v5777
      %v5874 = vmax.f32 %v5770, %v5778
      %v5875 = vmax.f32 %v5771, %v5779
      %v5876 = vmax.f32 %v5772, %v5780
      %v5877 = vmax.f32 %v5773, %v5781
      %v5878 = vmax.f32 %v5782, %v5790
      %v5879 = vmax.f32 %v5783, %v5791
      %v5880 = vmax.f32 %v5784, %v5792
      %v5881 = vmax.f32 %v5785, %v5793
      %v5882 = vmax.f32 %v5786, %v5794
      %v5883 = vmax.f32 %v5787, %v5795
      %v5884 = vmax.f32 %v5788, %v5796
      %v5885 = vmax.f32 %v5789, %v5797
      %v5886 = vmax.f32 %v5798, %v5806
      %v5887 = vmax.f32 %v5799, %v5807
      %v5888 = vmax.f32 %v5800, %v5808
      %v5889 = vmax.f32 %v5801, %v5809
      %v5890 = vmax.f32 %v5802, %v5810
      %v5891 = vmax.f32 %v5803, %v5811
      %v5892 = vmax.f32 %v5804, %v5812
      %v5893 = vmax.f32 %v5805, %v5813
      %v5894 = vmax.f32 %v5814, %v5822
      %v5895 = vmax.f32 %v5815, %v5823
      %v5896 = vmax.f32 %v5816, %v5824
      %v5897 = vmax.f32 %v5817, %v5825
      %v5898 = vmax.f32 %v5818, %v5826
      %v5899 = vmax.f32 %v5819, %v5827
      %v5900 = vmax.f32 %v5820, %v5828
      %v5901 = vmax.f32 %v5821, %v5829
      %v5902 = vmax.f32 %v5830, %v5838
      %v5903 = vmax.f32 %v5831, %v5839
      %v5904 = vmax.f32 %v5832, %v5840
      %v5905 = vmax.f32 %v5833, %v5841
      %v5906 = vmax.f32 %v5834, %v5842
      %v5907 = vmax.f32 %v5835, %v5843
      %v5908 = vmax.f32 %v5836, %v5844
      %v5909 = vmax.f32 %v5837, %v5845
      %5910 = vst [vmem:[#allocation4] sm:$0xff] 0.0
      %5911 = vst [vmem:[#allocation4 + $0x8] sm:$0x3] 0.0
      %5912 = vst [vmem:[#allocation4 + $0x10] sm:$0xff] 0.0
      %5913 = vst [vmem:[#allocation4 + $0x18] sm:$0x3] 0.0
      %5914 = vst [vmem:[#allocation4 + $0x20] sm:$0xff] 0.0
      %5915 = vst [vmem:[#allocation4 + $0x28] sm:$0x3] 0.0
      %5916 = vst [vmem:[#allocation4 + $0x30] sm:$0xff] 0.0
      %5917 = vst [vmem:[#allocation4 + $0x38] sm:$0x3] 0.0
      %5918 = vst [vmem:[#allocation4 + $0x40] sm:$0xff] 0.0
      %5919 = vst [vmem:[#allocation4 + $0x48] sm:$0x3] 0.0
      %5920 = vst [vmem:[#allocation4 + $0x50] sm:$0xff] 0.0
      %5921 = vst [vmem:[#allocation4 + $0x58] sm:$0x3] 0.0
      %5922 = vst [vmem:[#allocation4 + $0x60] sm:$0xff] 0.0
      %5923 = vst [vmem:[#allocation4 + $0x68] sm:$0x3] 0.0
      %5924 = vst [vmem:[#allocation4 + $0x70] sm:$0xff] 0.0
      %5925 = vst [vmem:[#allocation4 + $0x78] sm:$0x3] 0.0
      %5926 = vst [vmem:[#allocation4 + $0x80] sm:$0xff] 0.0
      %5927 = vst [vmem:[#allocation4 + $0x88] sm:$0x3] 0.0
      %5928 = vst [vmem:[#allocation4 + $0x90] sm:$0xff] 0.0
      %5929 = vst [vmem:[#allocation4 + $0x98] sm:$0x3] 0.0
      %v5994 = vlaneseq
      %v5995 = vshrl.u32 %v5994, 7
      %v5996 = vsub.s32 0, %v5995
      %v5997 = vrot.slane %v5846, %v5996
      %v5998 = vlaneseq
      %v5999 = vshrl.u32 %v5998, 7
      %v6000 = vsub.s32 0, %v5999
      %v6001 = vrot.slane %v5847, %v6000
      %v6002 = vlaneseq
      %v6003 = vshrl.u32 %v6002, 7
      %v6004 = vsub.s32 0, %v6003
      %v6005 = vrot.slane %v5848, %v6004
      %v6006 = vlaneseq
      %v6007 = vshrl.u32 %v6006, 7
      %v6008 = vsub.s32 0, %v6007
      %v6009 = vrot.slane %v5849, %v6008
      %v6010 = vlaneseq
      %v6011 = vshrl.u32 %v6010, 7
      %v6012 = vsub.s32 0, %v6011
      %v6013 = vrot.slane %v5850, %v6012
      %v6014 = vlaneseq
      %v6015 = vshrl.u32 %v6014, 7
      %v6016 = vsub.s32 0, %v6015
      %v6017 = vrot.slane %v5851, %v6016
      %v6018 = vlaneseq
      %v6019 = vshrl.u32 %v6018, 7
      %v6020 = vsub.s32 0, %v6019
      %v6021 = vrot.slane %v5852, %v6020
      %v6022 = vlaneseq
      %v6023 = vshrl.u32 %v6022, 7
      %v6024 = vsub.s32 0, %v6023
      %v6025 = vrot.slane %v5853, %v6024
      %v6026 = vlaneseq
      %v6027 = vshrl.u32 %v6026, 7
      %v6028 = vsub.s32 0, %v6027
      %v6029 = vrot.slane %v5854, %v6028
      %v6030 = vlaneseq
      %v6031 = vshrl.u32 %v6030, 7
      %v6032 = vsub.s32 0, %v6031
      %v6033 = vrot.slane %v5855, %v6032
      %v6034 = vlaneseq
      %v6035 = vshrl.u32 %v6034, 7
      %v6036 = vsub.s32 0, %v6035
      %v6037 = vrot.slane %v5856, %v6036
      %v6038 = vlaneseq
      %v6039 = vshrl.u32 %v6038, 7
      %v6040 = vsub.s32 0, %v6039
      %v6041 = vrot.slane %v5857, %v6040
      %v6042 = vlaneseq
      %v6043 = vshrl.u32 %v6042, 7
      %v6044 = vsub.s32 0, %v6043
      %v6045 = vrot.slane %v5858, %v6044
      %v6046 = vlaneseq
      %v6047 = vshrl.u32 %v6046, 7
      %v6048 = vsub.s32 0, %v6047
      %v6049 = vrot.slane %v5859, %v6048
      %v6050 = vlaneseq
      %v6051 = vshrl.u32 %v6050, 7
      %v6052 = vsub.s32 0, %v6051
      %v6053 = vrot.slane %v5860, %v6052
      %v6054 = vlaneseq
      %v6055 = vshrl.u32 %v6054, 7
      %v6056 = vsub.s32 0, %v6055
      %v6057 = vrot.slane %v5861, %v6056
      %v6058 = vlaneseq
      %v6059 = vshrl.u32 %v6058, 7
      %v6060 = vsub.s32 0, %v6059
      %v6061 = vrot.slane %v5862, %v6060
      %v6062 = vlaneseq
      %v6063 = vshrl.u32 %v6062, 7
      %v6064 = vsub.s32 0, %v6063
      %v6065 = vrot.slane %v5863, %v6064
      %v6066 = vlaneseq
      %v6067 = vshrl.u32 %v6066, 7
      %v6068 = vsub.s32 0, %v6067
      %v6069 = vrot.slane %v5864, %v6068
      %v6070 = vlaneseq
      %v6071 = vshrl.u32 %v6070, 7
      %v6072 = vsub.s32 0, %v6071
      %v6073 = vrot.slane %v5865, %v6072
      %v6074 = vlaneseq
      %v6075 = vshrl.u32 %v6074, 7
      %v6076 = vsub.s32 0, %v6075
      %v6077 = vrot.slane %v5866, %v6076
      %v6078 = vlaneseq
      %v6079 = vshrl.u32 %v6078, 7
      %v6080 = vsub.s32 0, %v6079
      %v6081 = vrot.slane %v5867, %v6080
      %v6082 = vlaneseq
      %v6083 = vshrl.u32 %v6082, 7
      %v6084 = vsub.s32 0, %v6083
      %v6085 = vrot.slane %v5868, %v6084
      %v6086 = vlaneseq
      %v6087 = vshrl.u32 %v6086, 7
      %v6088 = vsub.s32 0, %v6087
      %v6089 = vrot.slane %v5869, %v6088
      %v6090 = vlaneseq
      %v6091 = vshrl.u32 %v6090, 7
      %v6092 = vsub.s32 0, %v6091
      %v6093 = vrot.slane %v5870, %v6092
      %v6094 = vlaneseq
      %v6095 = vshrl.u32 %v6094, 7
      %v6096 = vsub.s32 0, %v6095
      %v6097 = vrot.slane %v5871, %v6096
      %v6098 = vlaneseq
      %v6099 = vshrl.u32 %v6098, 7
      %v6100 = vsub.s32 0, %v6099
      %v6101 = vrot.slane %v5872, %v6100
      %v6102 = vlaneseq
      %v6103 = vshrl.u32 %v6102, 7
      %v6104 = vsub.s32 0, %v6103
      %v6105 = vrot.slane %v5873, %v6104
      %v6106 = vlaneseq
      %v6107 = vshrl.u32 %v6106, 7
      %v6108 = vsub.s32 0, %v6107
      %v6109 = vrot.slane %v5874, %v6108
      %v6110 = vlaneseq
      %v6111 = vshrl.u32 %v6110, 7
      %v6112 = vsub.s32 0, %v6111
      %v6113 = vrot.slane %v5875, %v6112
      %v6114 = vlaneseq
      %v6115 = vshrl.u32 %v6114, 7
      %v6116 = vsub.s32 0, %v6115
      %v6117 = vrot.slane %v5876, %v6116
      %v6118 = vlaneseq
      %v6119 = vshrl.u32 %v6118, 7
      %v6120 = vsub.s32 0, %v6119
      %v6121 = vrot.slane %v5877, %v6120
      %v6122 = vlaneseq
      %v6123 = vshrl.u32 %v6122, 7
      %v6124 = vsub.s32 0, %v6123
      %v6125 = vrot.slane %v5878, %v6124
      %v6126 = vlaneseq
      %v6127 = vshrl.u32 %v6126, 7
      %v6128 = vsub.s32 0, %v6127
      %v6129 = vrot.slane %v5879, %v6128
      %v6130 = vlaneseq
      %v6131 = vshrl.u32 %v6130, 7
      %v6132 = vsub.s32 0, %v6131
      %v6133 = vrot.slane %v5880, %v6132
      %v6134 = vlaneseq
      %v6135 = vshrl.u32 %v6134, 7
      %v6136 = vsub.s32 0, %v6135
      %v6137 = vrot.slane %v5881, %v6136
      %v6138 = vlaneseq
      %v6139 = vshrl.u32 %v6138, 7
      %v6140 = vsub.s32 0, %v6139
      %v6141 = vrot.slane %v5882, %v6140
      %v6142 = vlaneseq
      %v6143 = vshrl.u32 %v6142, 7
      %v6144 = vsub.s32 0, %v6143
      %v6145 = vrot.slane %v5883, %v6144
      %v6146 = vlaneseq
      %v6147 = vshrl.u32 %v6146, 7
      %v6148 = vsub.s32 0, %v6147
      %v6149 = vrot.slane %v5884, %v6148
      %v6150 = vlaneseq
      %v6151 = vshrl.u32 %v6150, 7
      %v6152 = vsub.s32 0, %v6151
      %v6153 = vrot.slane %v5885, %v6152
      %v6154 = vlaneseq
      %v6155 = vshrl.u32 %v6154, 7
      %v6156 = vsub.s32 0, %v6155
      %v6157 = vrot.slane %v5886, %v6156
      %v6158 = vlaneseq
      %v6159 = vshrl.u32 %v6158, 7
      %v6160 = vsub.s32 0, %v6159
      %v6161 = vrot.slane %v5887, %v6160
      %v6162 = vlaneseq
      %v6163 = vshrl.u32 %v6162, 7
      %v6164 = vsub.s32 0, %v6163
      %v6165 = vrot.slane %v5888, %v6164
      %v6166 = vlaneseq
      %v6167 = vshrl.u32 %v6166, 7
      %v6168 = vsub.s32 0, %v6167
      %v6169 = vrot.slane %v5889, %v6168
      %v6170 = vlaneseq
      %v6171 = vshrl.u32 %v6170, 7
      %v6172 = vsub.s32 0, %v6171
      %v6173 = vrot.slane %v5890, %v6172
      %v6174 = vlaneseq
      %v6175 = vshrl.u32 %v6174, 7
      %v6176 = vsub.s32 0, %v6175
      %v6177 = vrot.slane %v5891, %v6176
      %v6178 = vlaneseq
      %v6179 = vshrl.u32 %v6178, 7
      %v6180 = vsub.s32 0, %v6179
      %v6181 = vrot.slane %v5892, %v6180
      %v6182 = vlaneseq
      %v6183 = vshrl.u32 %v6182, 7
      %v6184 = vsub.s32 0, %v6183
      %v6185 = vrot.slane %v5893, %v6184
      %v6186 = vlaneseq
      %v6187 = vshrl.u32 %v6186, 7
      %v6188 = vsub.s32 0, %v6187
      %v6189 = vrot.slane %v5894, %v6188
      %v6190 = vlaneseq
      %v6191 = vshrl.u32 %v6190, 7
      %v6192 = vsub.s32 0, %v6191
      %v6193 = vrot.slane %v5895, %v6192
      %v6194 = vlaneseq
      %v6195 = vshrl.u32 %v6194, 7
      %v6196 = vsub.s32 0, %v6195
      %v6197 = vrot.slane %v5896, %v6196
      %v6198 = vlaneseq
      %v6199 = vshrl.u32 %v6198, 7
      %v6200 = vsub.s32 0, %v6199
      %v6201 = vrot.slane %v5897, %v6200
      %v6202 = vlaneseq
      %v6203 = vshrl.u32 %v6202, 7
      %v6204 = vsub.s32 0, %v6203
      %v6205 = vrot.slane %v5898, %v6204
      %v6206 = vlaneseq
      %v6207 = vshrl.u32 %v6206, 7
      %v6208 = vsub.s32 0, %v6207
      %v6209 = vrot.slane %v5899, %v6208
      %v6210 = vlaneseq
      %v6211 = vshrl.u32 %v6210, 7
      %v6212 = vsub.s32 0, %v6211
      %v6213 = vrot.slane %v5900, %v6212
      %v6214 = vlaneseq
      %v6215 = vshrl.u32 %v6214, 7
      %v6216 = vsub.s32 0, %v6215
      %v6217 = vrot.slane %v5901, %v6216
      %v6218 = vlaneseq
      %v6219 = vshrl.u32 %v6218, 7
      %v6220 = vsub.s32 0, %v6219
      %v6221 = vrot.slane %v5902, %v6220
      %v6222 = vlaneseq
      %v6223 = vshrl.u32 %v6222, 7
      %v6224 = vsub.s32 0, %v6223
      %v6225 = vrot.slane %v5903, %v6224
      %v6226 = vlaneseq
      %v6227 = vshrl.u32 %v6226, 7
      %v6228 = vsub.s32 0, %v6227
      %v6229 = vrot.slane %v5904, %v6228
      %v6230 = vlaneseq
      %v6231 = vshrl.u32 %v6230, 7
      %v6232 = vsub.s32 0, %v6231
      %v6233 = vrot.slane %v5905, %v6232
      %v6234 = vlaneseq
      %v6235 = vshrl.u32 %v6234, 7
      %v6236 = vsub.s32 0, %v6235
      %v6237 = vrot.slane %v5906, %v6236
      %v6238 = vlaneseq
      %v6239 = vshrl.u32 %v6238, 7
      %v6240 = vsub.s32 0, %v6239
      %v6241 = vrot.slane %v5907, %v6240
      %v6242 = vlaneseq
      %v6243 = vshrl.u32 %v6242, 7
      %v6244 = vsub.s32 0, %v6243
      %v6245 = vrot.slane %v5908, %v6244
      %v6246 = vlaneseq
      %v6247 = vshrl.u32 %v6246, 7
      %v6248 = vsub.s32 0, %v6247
      %v6249 = vrot.slane %v5909, %v6248
      %vm6250 = vcmask 1041409
      %v6251 = vsel %vm6250, %v6001, %v5997
      %vm6252 = vcmask 1042434
      %v6253 = vsel %vm6252, %v6005, %v6251
      %vm6254 = vcmask 1043459
      %v6255 = vsel %vm6254, %v6009, %v6253
      %vm6256 = vcmask 1044484
      %v6257 = vsel %vm6256, %v6013, %v6255
      %vm6258 = vcmask 1045509
      %v6259 = vsel %vm6258, %v6017, %v6257
      %vm6260 = vcmask 1046534
      %v6261 = vsel %vm6260, %v6021, %v6259
      %vm6262 = vcmask 1047559
      %v6263 = vsel %vm6262, %v6025, %v6261
      %v6264 = vsel %vm6250, %v6033, %v6029
      %v6265 = vsel %vm6252, %v6037, %v6264
      %v6266 = vsel %vm6254, %v6041, %v6265
      %v6267 = vsel %vm6256, %v6045, %v6266
      %v6268 = vsel %vm6258, %v6049, %v6267
      %v6269 = vsel %vm6260, %v6053, %v6268
      %v6270 = vsel %vm6262, %v6057, %v6269
      %v6271 = vsel %vm6250, %v6065, %v6061
      %v6272 = vsel %vm6252, %v6069, %v6271
      %v6273 = vsel %vm6254, %v6073, %v6272
      %v6274 = vsel %vm6256, %v6077, %v6273
      %v6275 = vsel %vm6258, %v6081, %v6274
      %v6276 = vsel %vm6260, %v6085, %v6275
      %v6277 = vsel %vm6262, %v6089, %v6276
      %v6278 = vsel %vm6250, %v6097, %v6093
      %v6279 = vsel %vm6252, %v6101, %v6278
      %v6280 = vsel %vm6254, %v6105, %v6279
      %v6281 = vsel %vm6256, %v6109, %v6280
      %v6282 = vsel %vm6258, %v6113, %v6281
      %v6283 = vsel %vm6260, %v6117, %v6282
      %v6284 = vsel %vm6262, %v6121, %v6283
      %v6285 = vsel %vm6250, %v6129, %v6125
      %v6286 = vsel %vm6252, %v6133, %v6285
      %v6287 = vsel %vm6254, %v6137, %v6286
      %v6288 = vsel %vm6256, %v6141, %v6287
      %v6289 = vsel %vm6258, %v6145, %v6288
      %v6290 = vsel %vm6260, %v6149, %v6289
      %v6291 = vsel %vm6262, %v6153, %v6290
      %v6292 = vsel %vm6250, %v6161, %v6157
      %v6293 = vsel %vm6252, %v6165, %v6292
      %v6294 = vsel %vm6254, %v6169, %v6293
      %v6295 = vsel %vm6256, %v6173, %v6294
      %v6296 = vsel %vm6258, %v6177, %v6295
      %v6297 = vsel %vm6260, %v6181, %v6296
      %v6298 = vsel %vm6262, %v6185, %v6297
      %v6299 = vsel %vm6250, %v6193, %v6189
      %v6300 = vsel %vm6252, %v6197, %v6299
      %v6301 = vsel %vm6254, %v6201, %v6300
      %v6302 = vsel %vm6256, %v6205, %v6301
      %v6303 = vsel %vm6258, %v6209, %v6302
      %v6304 = vsel %vm6260, %v6213, %v6303
      %v6305 = vsel %vm6262, %v6217, %v6304
      %v6306 = vsel %vm6250, %v6225, %v6221
      %v6307 = vsel %vm6252, %v6229, %v6306
      %v6308 = vsel %vm6254, %v6233, %v6307
      %v6309 = vsel %vm6256, %v6237, %v6308
      %v6310 = vsel %vm6258, %v6241, %v6309
      %v6311 = vsel %vm6260, %v6245, %v6310
      %v6312 = vsel %vm6262, %v6249, %v6311
      %s6321 = scalar_lea.vmem [#allocation4], 16
      %6322 = vst [vmem:[%s6321 + $0x1] sm:$0xff] %v6263
      %6323 = vst [vmem:[%s6321 + $0x11] sm:$0xff] %v6270
      %6324 = vst [vmem:[%s6321 + $0x21] sm:$0xff] %v6277
      %6325 = vst [vmem:[%s6321 + $0x31] sm:$0xff] %v6284
      %6326 = vst [vmem:[%s6321 + $0x41] sm:$0xff] %v6291
      %6327 = vst [vmem:[%s6321 + $0x51] sm:$0xff] %v6298
      %6328 = vst [vmem:[%s6321 + $0x61] sm:$0xff] %v6305
      %6329 = vst [vmem:[%s6321 + $0x71] sm:$0xff] %v6312
      %v6330 = vld [vmem:[#allocation4] sm:$0xff]
      %v6331 = vld [vmem:[#allocation4 + $0x10] sm:$0xff]
      %v6332 = vld [vmem:[#allocation4 + $0x20] sm:$0xff]
      %v6333 = vld [vmem:[#allocation4 + $0x30] sm:$0xff]
      %v6334 = vld [vmem:[#allocation4 + $0x40] sm:$0xff]
      %v6335 = vld [vmem:[#allocation4 + $0x50] sm:$0xff]
      %v6336 = vld [vmem:[#allocation4 + $0x60] sm:$0xff]
      %v6337 = vld [vmem:[#allocation4 + $0x70] sm:$0xff]
      %v6338 = vpack.c.bf16 %v6331, %v6330
      %v6339 = vpack.c.bf16 %v6333, %v6332
      %v6340 = vpack.c.bf16 %v6335, %v6334
      %v6341 = vpack.c.bf16 %v6337, %v6336
      %6342 = vst [vmem:[#allocation3] sm:$0xff] %v6338
      %6343 = vst [vmem:[#allocation3 + $0x48] sm:$0xff] %v6339
      %6344 = vst [vmem:[#allocation3 + $0x90] sm:$0xff] %v6340
      %6345 = vst [vmem:[#allocation3 + $0xd8] sm:$0xff] %v6341
      %v6346 = vld [vmem:[#allocation4 + $0x1] sm:$0xff]
      %v6347 = vld [vmem:[#allocation4 + $0x11] sm:$0xff]
      %v6348 = vld [vmem:[#allocation4 + $0x21] sm:$0xff]
      %v6349 = vld [vmem:[#allocation4 + $0x31] sm:$0xff]
      %v6350 = vld [vmem:[#allocation4 + $0x41] sm:$0xff]
      %v6351 = vld [vmem:[#allocation4 + $0x51] sm:$0xff]
      %v6352 = vld [vmem:[#allocation4 + $0x61] sm:$0xff]
      %v6353 = vld [vmem:[#allocation4 + $0x71] sm:$0xff]
      %v6354 = vpack.c.bf16 %v6347, %v6346
      %v6355 = vpack.c.bf16 %v6349, %v6348
      %v6356 = vpack.c.bf16 %v6351, %v6350
      %v6357 = vpack.c.bf16 %v6353, %v6352
      %6358 = vst [vmem:[#allocation3 + $0x8] sm:$0xff] %v6354
      %6359 = vst [vmem:[#allocation3 + $0x50] sm:$0xff] %v6355
      %6360 = vst [vmem:[#allocation3 + $0x98] sm:$0xff] %v6356
      %6361 = vst [vmem:[#allocation3 + $0xe0] sm:$0xff] %v6357
      %v6362 = vld [vmem:[#allocation4 + $0x2] sm:$0xff]
      %v6363 = vld [vmem:[#allocation4 + $0x12] sm:$0xff]
      %v6364 = vld [vmem:[#allocation4 + $0x22] sm:$0xff]
      %v6365 = vld [vmem:[#allocation4 + $0x32] sm:$0xff]
      %v6366 = vld [vmem:[#allocation4 + $0x42] sm:$0xff]
      %v6367 = vld [vmem:[#allocation4 + $0x52] sm:$0xff]
      %v6368 = vld [vmem:[#allocation4 + $0x62] sm:$0xff]
      %v6369 = vld [vmem:[#allocation4 + $0x72] sm:$0xff]
      %v6370 = vpack.c.bf16 %v6363, %v6362
      %v6371 = vpack.c.bf16 %v6365, %v6364
      %v6372 = vpack.c.bf16 %v6367, %v6366
      %v6373 = vpack.c.bf16 %v6369, %v6368
      %6374 = vst [vmem:[#allocation3 + $0x10] sm:$0xff] %v6370
      %6375 = vst [vmem:[#allocation3 + $0x58] sm:$0xff] %v6371
      %6376 = vst [vmem:[#allocation3 + $0xa0] sm:$0xff] %v6372
      %6377 = vst [vmem:[#allocation3 + $0xe8] sm:$0xff] %v6373
      %v6378 = vld [vmem:[%s6321] sm:$0xff]
      %v6379 = vld [vmem:[%s6321 + $0x10] sm:$0xff]
      %v6380 = vld [vmem:[%s6321 + $0x20] sm:$0xff]
      %v6381 = vld [vmem:[%s6321 + $0x30] sm:$0xff]
      %v6382 = vld [vmem:[%s6321 + $0x40] sm:$0xff]
      %v6383 = vld [vmem:[%s6321 + $0x50] sm:$0xff]
      %v6384 = vld [vmem:[%s6321 + $0x60] sm:$0xff]
      %v6385 = vld [vmem:[%s6321 + $0x70] sm:$0xff]
      %v6386 = vpack.c.bf16 %v6379, %v6378
      %v6387 = vpack.c.bf16 %v6381, %v6380
      %v6388 = vpack.c.bf16 %v6383, %v6382
      %v6389 = vpack.c.bf16 %v6385, %v6384
      %6390 = vst [vmem:[#allocation3 + $0x18] sm:$0xff] %v6386
      %6391 = vst [vmem:[#allocation3 + $0x60] sm:$0xff] %v6387
      %6392 = vst [vmem:[#allocation3 + $0xa8] sm:$0xff] %v6388
      %6393 = vst [vmem:[#allocation3 + $0xf0] sm:$0xff] %v6389
      %v6394 = vld [vmem:[%s6321 + $0x1] sm:$0xff]
      %v6395 = vld [vmem:[%s6321 + $0x11] sm:$0xff]
      %v6396 = vld [vmem:[%s6321 + $0x21] sm:$0xff]
      %v6397 = vld [vmem:[%s6321 + $0x31] sm:$0xff]
      %v6398 = vld [vmem:[%s6321 + $0x41] sm:$0xff]
      %v6399 = vld [vmem:[%s6321 + $0x51] sm:$0xff]
      %v6400 = vld [vmem:[%s6321 + $0x61] sm:$0xff]
      %v6401 = vld [vmem:[%s6321 + $0x71] sm:$0xff]
      %v6402 = vpack.c.bf16 %v6395, %v6394
      %v6403 = vpack.c.bf16 %v6397, %v6396
      %v6404 = vpack.c.bf16 %v6399, %v6398
      %v6405 = vpack.c.bf16 %v6401, %v6400
      %6406 = vst [vmem:[#allocation3 + $0x20] sm:$0xff] %v6402
      %6407 = vst [vmem:[#allocation3 + $0x68] sm:$0xff] %v6403
      %6408 = vst [vmem:[#allocation3 + $0xb0] sm:$0xff] %v6404
      %6409 = vst [vmem:[#allocation3 + $0xf8] sm:$0xff] %v6405
      %v6410 = vld [vmem:[%s6321 + $0x2] sm:$0xff]
      %v6411 = vld [vmem:[%s6321 + $0x12] sm:$0xff]
      %v6412 = vld [vmem:[%s6321 + $0x22] sm:$0xff]
      %v6413 = vld [vmem:[%s6321 + $0x32] sm:$0xff]
      %v6414 = vld [vmem:[%s6321 + $0x42] sm:$0xff]
      %v6415 = vld [vmem:[%s6321 + $0x52] sm:$0xff]
      %v6416 = vld [vmem:[%s6321 + $0x62] sm:$0xff]
      %v6417 = vld [vmem:[%s6321 + $0x72] sm:$0xff]
      %v6418 = vpack.c.bf16 %v6411, %v6410
      %v6419 = vpack.c.bf16 %v6413, %v6412
      %v6420 = vpack.c.bf16 %v6415, %v6414
      %v6421 = vpack.c.bf16 %v6417, %v6416
      %6422 = vst [vmem:[#allocation3 + $0x28] sm:$0xff] %v6418
      %6423 = vst [vmem:[#allocation3 + $0x70] sm:$0xff] %v6419
      %6424 = vst [vmem:[#allocation3 + $0xb8] sm:$0xff] %v6420
      %6425 = vst [vmem:[#allocation3 + $0x100] sm:$0xff] %v6421
      %s6426 = scalar_lea.vmem [#allocation4], 32
      %v6427 = vld [vmem:[%s6426] sm:$0xff]
      %v6428 = vld [vmem:[%s6426 + $0x10] sm:$0xff]
      %v6429 = vld [vmem:[%s6426 + $0x20] sm:$0xff]
      %v6430 = vld [vmem:[%s6426 + $0x30] sm:$0xff]
      %v6431 = vld [vmem:[%s6426 + $0x40] sm:$0xff]
      %v6432 = vld [vmem:[%s6426 + $0x50] sm:$0xff]
      %v6433 = vld [vmem:[%s6426 + $0x60] sm:$0xff]
      %v6434 = vld [vmem:[%s6426 + $0x70] sm:$0xff]
      %v6435 = vpack.c.bf16 %v6428, %v6427
      %v6436 = vpack.c.bf16 %v6430, %v6429
      %v6437 = vpack.c.bf16 %v6432, %v6431
      %v6438 = vpack.c.bf16 %v6434, %v6433
      %6439 = vst [vmem:[#allocation3 + $0x30] sm:$0xff] %v6435
      %6440 = vst [vmem:[#allocation3 + $0x78] sm:$0xff] %v6436
      %6441 = vst [vmem:[#allocation3 + $0xc0] sm:$0xff] %v6437
      %6442 = vst [vmem:[#allocation3 + $0x108] sm:$0xff] %v6438
      %v6443 = vld [vmem:[%s6426 + $0x1] sm:$0xff]
      %v6444 = vld [vmem:[%s6426 + $0x11] sm:$0xff]
      %v6445 = vld [vmem:[%s6426 + $0x21] sm:$0xff]
      %v6446 = vld [vmem:[%s6426 + $0x31] sm:$0xff]
      %v6447 = vld [vmem:[%s6426 + $0x41] sm:$0xff]
      %v6448 = vld [vmem:[%s6426 + $0x51] sm:$0xff]
      %v6449 = vld [vmem:[%s6426 + $0x61] sm:$0xff]
      %v6450 = vld [vmem:[%s6426 + $0x71] sm:$0xff]
      %v6451 = vpack.c.bf16 %v6444, %v6443
      %v6452 = vpack.c.bf16 %v6446, %v6445
      %v6453 = vpack.c.bf16 %v6448, %v6447
      %v6454 = vpack.c.bf16 %v6450, %v6449
      %6455 = vst [vmem:[#allocation3 + $0x38] sm:$0xff] %v6451
      %6456 = vst [vmem:[#allocation3 + $0x80] sm:$0xff] %v6452
      %6457 = vst [vmem:[#allocation3 + $0xc8] sm:$0xff] %v6453
      %6458 = vst [vmem:[#allocation3 + $0x110] sm:$0xff] %v6454
      %v6459 = vld [vmem:[%s6426 + $0x2] sm:$0xff]
      %v6460 = vld [vmem:[%s6426 + $0x12] sm:$0xff]
      %v6461 = vld [vmem:[%s6426 + $0x22] sm:$0xff]
      %v6462 = vld [vmem:[%s6426 + $0x32] sm:$0xff]
      %v6463 = vld [vmem:[%s6426 + $0x42] sm:$0xff]
      %v6464 = vld [vmem:[%s6426 + $0x52] sm:$0xff]
      %v6465 = vld [vmem:[%s6426 + $0x62] sm:$0xff]
      %v6466 = vld [vmem:[%s6426 + $0x72] sm:$0xff]
      %v6467 = vpack.c.bf16 %v6460, %v6459
      %v6468 = vpack.c.bf16 %v6462, %v6461
      %v6469 = vpack.c.bf16 %v6464, %v6463
      %v6470 = vpack.c.bf16 %v6466, %v6465
      %6471 = vst [vmem:[#allocation3 + $0x40] sm:$0xff] %v6467
      %6472 = vst [vmem:[#allocation3 + $0x88] sm:$0xff] %v6468
      %6473 = vst [vmem:[#allocation3 + $0xd0] sm:$0xff] %v6469
      %6474 = vst [vmem:[#allocation3 + $0x118] sm:$0xff] %v6470
      %v6475 = vld [vmem:[#allocation3] sm:$0xff]
      %v6476 = vld [vmem:[#allocation3 + $0x8] sm:$0xff]
      %v6477 = vld [vmem:[#allocation3 + $0x10] sm:$0xff]
      %v6478 = vld [vmem:[#allocation3 + $0x18] sm:$0xff]
      %v6479 = vld [vmem:[#allocation3 + $0x20] sm:$0xff]
      %v6480 = vld [vmem:[#allocation3 + $0x28] sm:$0xff]
      %v6481 = vld [vmem:[#allocation3 + $0x30] sm:$0xff]
      %v6482 = vld [vmem:[#allocation3 + $0x38] sm:$0xff]
      %v6483 = vld [vmem:[#allocation3 + $0x40] sm:$0xff]
      %v6484 = vld [vmem:[#allocation3 + $0x48] sm:$0xff]
      %v6485 = vld [vmem:[#allocation3 + $0x50] sm:$0xff]
      %v6486 = vld [vmem:[#allocation3 + $0x58] sm:$0xff]
      %v6487 = vld [vmem:[#allocation3 + $0x60] sm:$0xff]
      %v6488 = vld [vmem:[#allocation3 + $0x68] sm:$0xff]
      %v6489 = vld [vmem:[#allocation3 + $0x70] sm:$0xff]
      %v6490 = vld [vmem:[#allocation3 + $0x78] sm:$0xff]
      %v6491 = vld [vmem:[#allocation3 + $0x80] sm:$0xff]
      %v6492 = vld [vmem:[#allocation3 + $0x88] sm:$0xff]
      %v6493 = vld [vmem:[#allocation3 + $0x90] sm:$0xff]
      %v6494 = vld [vmem:[#allocation3 + $0x98] sm:$0xff]
      %v6495 = vld [vmem:[#allocation3 + $0xa0] sm:$0xff]
      %v6496 = vld [vmem:[#allocation3 + $0xa8] sm:$0xff]
      %v6497 = vld [vmem:[#allocation3 + $0xb0] sm:$0xff]
      %v6498 = vld [vmem:[#allocation3 + $0xb8] sm:$0xff]
      %v6499 = vld [vmem:[#allocation3 + $0xc0] sm:$0xff]
      %v6500 = vld [vmem:[#allocation3 + $0xc8] sm:$0xff]
      %v6501 = vld [vmem:[#allocation3 + $0xd0] sm:$0xff]
      %v6502 = vld [vmem:[#allocation3 + $0xd8] sm:$0xff]
      %v6503 = vld [vmem:[#allocation3 + $0xe0] sm:$0xff]
      %v6504 = vld [vmem:[#allocation3 + $0xe8] sm:$0xff]
      %v6505 = vld [vmem:[#allocation3 + $0xf0] sm:$0xff]
      %v6506 = vld [vmem:[#allocation3 + $0xf8] sm:$0xff]
      %v6507 = vld [vmem:[#allocation3 + $0x100] sm:$0xff]
      %v6508 = vld [vmem:[#allocation3 + $0x108] sm:$0xff]
      %v6509 = vld [vmem:[#allocation3 + $0x110] sm:$0xff]
      %v6510 = vld [vmem:[#allocation3 + $0x118] sm:$0xff]
      %v6511 = vld [vmem:[%s3] sm:$0xf]
      %v6512 = vld [vmem:[%s3 + $0x4] sm:$0xf]
      %v6513 = vld [vmem:[%s3 + $0x8] sm:$0xf]
      %v6514 = vld [vmem:[%s3 + $0xc] sm:$0xf]
      %v6515 = vld [vmem:[%s3 + $0x10] sm:$0xf]
      %v6516 = vld [vmem:[%s3 + $0x14] sm:$0xf]
      %v6517 = vld [vmem:[%s3 + $0x18] sm:$0xf]
      %v6518 = vld [vmem:[%s3 + $0x1c] sm:$0xf]
      %v6519 = vld [vmem:[%s3 + $0x20] sm:$0xf]
      %v6520 = vld [vmem:[%s3 + $0x24] sm:$0xf]
      %v6521 = vld [vmem:[%s3 + $0x28] sm:$0xf]
      %v6522 = vld [vmem:[%s3 + $0x2c] sm:$0xf]
      %v6523 = vld [vmem:[%s3 + $0x30] sm:$0xf]
      %v6524 = vld [vmem:[%s3 + $0x34] sm:$0xf]
      %v6525 = vld [vmem:[%s3 + $0x38] sm:$0xf]
      %v6526 = vld [vmem:[%s3 + $0x3c] sm:$0xf]
      %v6527 = vld [vmem:[%s3 + $0x40] sm:$0xf]
      %v6528 = vld [vmem:[%s3 + $0x44] sm:$0xf]
      %v6529 = vld [vmem:[%s3 + $0x48] sm:$0xf]
      %v6530 = vld [vmem:[%s3 + $0x4c] sm:$0xf]
      %v6531 = vld [vmem:[%s3 + $0x50] sm:$0xf]
      %v6532 = vld [vmem:[%s3 + $0x54] sm:$0xf]
      %v6533 = vld [vmem:[%s3 + $0x58] sm:$0xf]
      %v6534 = vld [vmem:[%s3 + $0x5c] sm:$0xf]
      %v6535 = vld [vmem:[%s3 + $0x60] sm:$0xf]
      %v6536 = vld [vmem:[%s3 + $0x64] sm:$0xf]
      %v6537 = vld [vmem:[%s3 + $0x68] sm:$0xf]
      %v6538 = vld [vmem:[%s3 + $0x6c] sm:$0xf]
      %v6539 = vld [vmem:[%s3 + $0x70] sm:$0xf]
      %v6540 = vld [vmem:[%s3 + $0x74] sm:$0xf]
      %v6541 = vld [vmem:[%s3 + $0x78] sm:$0xf]
      %v6542 = vld [vmem:[%s3 + $0x7c] sm:$0xf]
      %v6543 = vld [vmem:[%s3 + $0x80] sm:$0xf]
      %v6544 = vld [vmem:[%s3 + $0x84] sm:$0xf]
      %v6545 = vld [vmem:[%s3 + $0x88] sm:$0xf]
      %v6546 = vld [vmem:[%s3 + $0x8c] sm:$0xf]
      %v6547 = vld [vmem:[%s3 + $0x90] sm:$0xf]
      %v6548 = vld [vmem:[%s3 + $0x94] sm:$0xf]
      %v6549 = vld [vmem:[%s3 + $0x98] sm:$0xf]
      %v6550 = vld [vmem:[%s3 + $0x9c] sm:$0xf]
      %v6551 = vld [vmem:[%s3 + $0xa0] sm:$0xf]
      %v6552 = vld [vmem:[%s3 + $0xa4] sm:$0xf]
      %v6553 = vld [vmem:[%s3 + $0xa8] sm:$0xf]
      %v6554 = vld [vmem:[%s3 + $0xac] sm:$0xf]
      %v6555 = vld [vmem:[%s3 + $0xb0] sm:$0xf]
      %v6556 = vld [vmem:[%s3 + $0xb4] sm:$0xf]
      %v6557 = vld [vmem:[%s3 + $0xb8] sm:$0xf]
      %v6558 = vld [vmem:[%s3 + $0xbc] sm:$0xf]
      %v6559 = vld [vmem:[%s3 + $0xc0] sm:$0xf]
      %v6560 = vld [vmem:[%s3 + $0xc4] sm:$0xf]
      %v6561 = vld [vmem:[%s3 + $0xc8] sm:$0xf]
      %v6562 = vld [vmem:[%s3 + $0xcc] sm:$0xf]
      %v6563 = vld [vmem:[%s3 + $0xd0] sm:$0xf]
      %v6564 = vld [vmem:[%s3 + $0xd4] sm:$0xf]
      %v6565 = vld [vmem:[%s3 + $0xd8] sm:$0xf]
      %v6566 = vld [vmem:[%s3 + $0xdc] sm:$0xf]
      %v6567 = vld [vmem:[%s3 + $0xe0] sm:$0xf]
      %v6568 = vld [vmem:[%s3 + $0xe4] sm:$0xf]
      %v6569 = vld [vmem:[%s3 + $0xe8] sm:$0xf]
      %v6570 = vld [vmem:[%s3 + $0xec] sm:$0xf]
      %v6571 = vld [vmem:[%s3 + $0xf0] sm:$0xf]
      %v6572 = vld [vmem:[%s3 + $0xf4] sm:$0xf]
      %v6573 = vld [vmem:[%s3 + $0xf8] sm:$0xf]
      %v6574 = vld [vmem:[%s3 + $0xfc] sm:$0xf]
      %v6575 = vld [vmem:[%s3 + $0x100] sm:$0xf]
      %v6576 = vld [vmem:[%s3 + $0x104] sm:$0xf]
      %v6577 = vld [vmem:[%s3 + $0x108] sm:$0xf]
      %v6578 = vld [vmem:[%s3 + $0x10c] sm:$0xf]
      %v6579 = vld [vmem:[%s3 + $0x110] sm:$0xf]
      %v6580 = vld [vmem:[%s3 + $0x114] sm:$0xf]
      %v6581 = vld [vmem:[%s3 + $0x118] sm:$0xf]
      %v6582 = vld [vmem:[%s3 + $0x11c] sm:$0xf]
      %v6583 = vld [vmem:[%s3 + $0x120] sm:$0xf]
      %v6584 = vld [vmem:[%s3 + $0x124] sm:$0xf]
      %v6585 = vld [vmem:[%s3 + $0x128] sm:$0xf]
      %v6586 = vld [vmem:[%s3 + $0x12c] sm:$0xf]
      %v6587 = vld [vmem:[%s3 + $0x130] sm:$0xf]
      %v6588 = vld [vmem:[%s3 + $0x134] sm:$0xf]
      %v6589 = vld [vmem:[%s3 + $0x138] sm:$0xf]
      %v6590 = vld [vmem:[%s3 + $0x13c] sm:$0xf]
      %v6591 = vld [vmem:[%s3 + $0x140] sm:$0xf]
      %v6592 = vld [vmem:[%s3 + $0x144] sm:$0xf]
      %v6593 = vld [vmem:[%s3 + $0x148] sm:$0xf]
      %v6594 = vld [vmem:[%s3 + $0x14c] sm:$0xf]
      %v6595 = vld [vmem:[%s3 + $0x150] sm:$0xf]
      %v6596 = vld [vmem:[%s3 + $0x154] sm:$0xf]
      %v6597 = vld [vmem:[%s3 + $0x158] sm:$0xf]
      %v6598 = vld [vmem:[%s3 + $0x15c] sm:$0xf]
      %v6599 = vld [vmem:[%s3 + $0x160] sm:$0xf]
      %v6600 = vld [vmem:[%s3 + $0x164] sm:$0xf]
      %v6601 = vld [vmem:[%s3 + $0x168] sm:$0xf]
      %v6602 = vld [vmem:[%s3 + $0x16c] sm:$0xf]
      %v6603 = vld [vmem:[%s3 + $0x170] sm:$0xf]
      %v6604 = vld [vmem:[%s3 + $0x174] sm:$0xf]
      %v6605 = vld [vmem:[%s3 + $0x178] sm:$0xf]
      %v6606 = vld [vmem:[%s3 + $0x17c] sm:$0xf]
      %v6607 = vld [vmem:[%s3 + $0x180] sm:$0xf]
      %v6608 = vld [vmem:[%s3 + $0x184] sm:$0xf]
      %v6609 = vld [vmem:[%s3 + $0x188] sm:$0xf]
      %v6610 = vld [vmem:[%s3 + $0x18c] sm:$0xf]
      %v6611 = vld [vmem:[%s3 + $0x190] sm:$0xf]
      %v6612 = vld [vmem:[%s3 + $0x194] sm:$0xf]
      %v6613 = vld [vmem:[%s3 + $0x198] sm:$0xf]
      %v6614 = vld [vmem:[%s3 + $0x19c] sm:$0xf]
      %v6615 = vld [vmem:[%s3 + $0x1a0] sm:$0xf]
      %v6616 = vld [vmem:[%s3 + $0x1a4] sm:$0xf]
      %v6617 = vld [vmem:[%s3 + $0x1a8] sm:$0xf]
      %v6618 = vld [vmem:[%s3 + $0x1ac] sm:$0xf]
      %v6619 = vld [vmem:[%s3 + $0x1b0] sm:$0xf]
      %v6620 = vld [vmem:[%s3 + $0x1b4] sm:$0xf]
      %v6621 = vld [vmem:[%s3 + $0x1b8] sm:$0xf]
      %v6622 = vld [vmem:[%s3 + $0x1bc] sm:$0xf]
      %v6623 = vld [vmem:[%s3 + $0x1c0] sm:$0xf]
      %v6624 = vld [vmem:[%s3 + $0x1c4] sm:$0xf]
      %v6625 = vld [vmem:[%s3 + $0x1c8] sm:$0xf]
      %v6626 = vld [vmem:[%s3 + $0x1cc] sm:$0xf]
      %v6627 = vld [vmem:[%s3 + $0x1d0] sm:$0xf]
      %v6628 = vld [vmem:[%s3 + $0x1d4] sm:$0xf]
      %v6629 = vld [vmem:[%s3 + $0x1d8] sm:$0xf]
      %v6630 = vld [vmem:[%s3 + $0x1dc] sm:$0xf]
      %v6631 = vld [vmem:[%s3 + $0x1e0] sm:$0xf]
      %v6632 = vld [vmem:[%s3 + $0x1e4] sm:$0xf]
      %v6633 = vld [vmem:[%s3 + $0x1e8] sm:$0xf]
      %v6634 = vld [vmem:[%s3 + $0x1ec] sm:$0xf]
      %v6635 = vld [vmem:[%s3 + $0x1f0] sm:$0xf]
      %v6636 = vld [vmem:[%s3 + $0x1f4] sm:$0xf]
      %v6637 = vld [vmem:[%s3 + $0x1f8] sm:$0xf]
      %v6638 = vld [vmem:[%s3 + $0x1fc] sm:$0xf]
      %v6639 = vld [vmem:[%s3 + $0x200] sm:$0xf]
      %v6640 = vld [vmem:[%s3 + $0x204] sm:$0xf]
      %v6641 = vld [vmem:[%s3 + $0x208] sm:$0xf]
      %v6642 = vld [vmem:[%s3 + $0x20c] sm:$0xf]
      %v6643 = vld [vmem:[%s3 + $0x210] sm:$0xf]
      %v6644 = vld [vmem:[%s3 + $0x214] sm:$0xf]
      %v6645 = vld [vmem:[%s3 + $0x218] sm:$0xf]
      %v6646 = vld [vmem:[%s3 + $0x21c] sm:$0xf]
      %v6647 = vld [vmem:[%s3 + $0x220] sm:$0xf]
      %v6648 = vld [vmem:[%s3 + $0x224] sm:$0xf]
      %v6649 = vld [vmem:[%s3 + $0x228] sm:$0xf]
      %v6650 = vld [vmem:[%s3 + $0x22c] sm:$0xf]
      %v6651 = vld [vmem:[%s3 + $0x230] sm:$0xf]
      %v6652 = vld [vmem:[%s3 + $0x234] sm:$0xf]
      %v6653 = vld [vmem:[%s3 + $0x238] sm:$0xf]
      %v6654 = vld [vmem:[%s3 + $0x23c] sm:$0xf]
      %v6655 = vld [vmem:[%s4] sm:$0x1]
      %v6657 = vlaneseq
      %v6658 = vshrl.u32 %v6657, 7
      %v6659 = vsub.s32 0, %v6658
      %v6660 = vrot.slane %v6655, %v6659
      %v6806 = vunpack.c.l.b16 %v6511
      %v6807 = vunpack.c.l.b16 %v6512
      %v6808 = vunpack.c.l.b16 %v6513
      %v6809 = vunpack.c.l.b16 %v6514
      %v6810 = vunpack.c.l.b16 %v6515
      %v6811 = vunpack.c.l.b16 %v6516
      %v6812 = vunpack.c.l.b16 %v6517
      %v6813 = vunpack.c.l.b16 %v6518
      %v6814 = vunpack.c.l.b16 %v6519
      %v6815 = vunpack.c.l.b16 %v6520
      %v6816 = vunpack.c.l.b16 %v6521
      %v6817 = vunpack.c.l.b16 %v6522
      %v6818 = vunpack.c.l.b16 %v6523
      %v6819 = vunpack.c.l.b16 %v6524
      %v6820 = vunpack.c.l.b16 %v6525
      %v6821 = vunpack.c.l.b16 %v6526
      %v6822 = vunpack.c.l.b16 %v6527
      %v6823 = vunpack.c.l.b16 %v6528
      %v6824 = vunpack.c.l.b16 %v6529
      %v6825 = vunpack.c.l.b16 %v6530
      %v6826 = vunpack.c.l.b16 %v6531
      %v6827 = vunpack.c.l.b16 %v6532
      %v6828 = vunpack.c.l.b16 %v6533
      %v6829 = vunpack.c.l.b16 %v6534
      %v6830 = vunpack.c.l.b16 %v6535
      %v6831 = vunpack.c.l.b16 %v6536
      %v6832 = vunpack.c.l.b16 %v6537
      %v6833 = vunpack.c.l.b16 %v6538
      %v6834 = vunpack.c.l.b16 %v6539
      %v6835 = vunpack.c.l.b16 %v6540
      %v6836 = vunpack.c.l.b16 %v6541
      %v6837 = vunpack.c.l.b16 %v6542
      %v6838 = vunpack.c.l.b16 %v6543
      %v6839 = vunpack.c.l.b16 %v6544
      %v6840 = vunpack.c.l.b16 %v6545
      %v6841 = vunpack.c.l.b16 %v6546
      %v6842 = vunpack.c.l.b16 %v6547
      %v6843 = vunpack.c.l.b16 %v6548
      %v6844 = vunpack.c.l.b16 %v6549
      %v6845 = vunpack.c.l.b16 %v6550
      %v6846 = vunpack.c.l.b16 %v6551
      %v6847 = vunpack.c.l.b16 %v6552
      %v6848 = vunpack.c.l.b16 %v6553
      %v6849 = vunpack.c.l.b16 %v6554
      %v6850 = vunpack.c.l.b16 %v6555
      %v6851 = vunpack.c.l.b16 %v6556
      %v6852 = vunpack.c.l.b16 %v6557
      %v6853 = vunpack.c.l.b16 %v6558
      %v6854 = vunpack.c.l.b16 %v6559
      %v6855 = vunpack.c.l.b16 %v6560
      %v6856 = vunpack.c.l.b16 %v6561
      %v6857 = vunpack.c.l.b16 %v6562
      %v6858 = vunpack.c.l.b16 %v6563
      %v6859 = vunpack.c.l.b16 %v6564
      %v6860 = vunpack.c.l.b16 %v6565
      %v6861 = vunpack.c.l.b16 %v6566
      %v6862 = vunpack.c.l.b16 %v6567
      %v6863 = vunpack.c.l.b16 %v6568
      %v6864 = vunpack.c.l.b16 %v6569
      %v6865 = vunpack.c.l.b16 %v6570
      %v6866 = vunpack.c.l.b16 %v6571
      %v6867 = vunpack.c.l.b16 %v6572
      %v6868 = vunpack.c.l.b16 %v6573
      %v6869 = vunpack.c.l.b16 %v6574
      %v6870 = vunpack.c.l.b16 %v6575
      %v6871 = vunpack.c.l.b16 %v6576
      %v6872 = vunpack.c.l.b16 %v6577
      %v6873 = vunpack.c.l.b16 %v6578
      %v6874 = vunpack.c.l.b16 %v6579
      %v6875 = vunpack.c.l.b16 %v6580
      %v6876 = vunpack.c.l.b16 %v6581
      %v6877 = vunpack.c.l.b16 %v6582
      %v6878 = vunpack.c.l.b16 %v6583
      %v6879 = vunpack.c.l.b16 %v6584
      %v6880 = vunpack.c.l.b16 %v6585
      %v6881 = vunpack.c.l.b16 %v6586
      %v6882 = vunpack.c.l.b16 %v6587
      %v6883 = vunpack.c.l.b16 %v6588
      %v6884 = vunpack.c.l.b16 %v6589
      %v6885 = vunpack.c.l.b16 %v6590
      %v6886 = vunpack.c.l.b16 %v6591
      %v6887 = vunpack.c.l.b16 %v6592
      %v6888 = vunpack.c.l.b16 %v6593
      %v6889 = vunpack.c.l.b16 %v6594
      %v6890 = vunpack.c.l.b16 %v6595
      %v6891 = vunpack.c.l.b16 %v6596
      %v6892 = vunpack.c.l.b16 %v6597
      %v6893 = vunpack.c.l.b16 %v6598
      %v6894 = vunpack.c.l.b16 %v6599
      %v6895 = vunpack.c.l.b16 %v6600
      %v6896 = vunpack.c.l.b16 %v6601
      %v6897 = vunpack.c.l.b16 %v6602
      %v6898 = vunpack.c.l.b16 %v6603
      %v6899 = vunpack.c.l.b16 %v6604
      %v6900 = vunpack.c.l.b16 %v6605
      %v6901 = vunpack.c.l.b16 %v6606
      %v6902 = vunpack.c.l.b16 %v6607
      %v6903 = vunpack.c.l.b16 %v6608
      %v6904 = vunpack.c.l.b16 %v6609
      %v6905 = vunpack.c.l.b16 %v6610
      %v6906 = vunpack.c.l.b16 %v6611
      %v6907 = vunpack.c.l.b16 %v6612
      %v6908 = vunpack.c.l.b16 %v6613
      %v6909 = vunpack.c.l.b16 %v6614
      %v6910 = vunpack.c.l.b16 %v6615
      %v6911 = vunpack.c.l.b16 %v6616
      %v6912 = vunpack.c.l.b16 %v6617
      %v6913 = vunpack.c.l.b16 %v6618
      %v6914 = vunpack.c.l.b16 %v6619
      %v6915 = vunpack.c.l.b16 %v6620
      %v6916 = vunpack.c.l.b16 %v6621
      %v6917 = vunpack.c.l.b16 %v6622
      %v6918 = vunpack.c.l.b16 %v6623
      %v6919 = vunpack.c.l.b16 %v6624
      %v6920 = vunpack.c.l.b16 %v6625
      %v6921 = vunpack.c.l.b16 %v6626
      %v6922 = vunpack.c.l.b16 %v6627
      %v6923 = vunpack.c.l.b16 %v6628
      %v6924 = vunpack.c.l.b16 %v6629
      %v6925 = vunpack.c.l.b16 %v6630
      %v6926 = vunpack.c.l.b16 %v6631
      %v6927 = vunpack.c.l.b16 %v6632
      %v6928 = vunpack.c.l.b16 %v6633
      %v6929 = vunpack.c.l.b16 %v6634
      %v6930 = vunpack.c.l.b16 %v6635
      %v6931 = vunpack.c.l.b16 %v6636
      %v6932 = vunpack.c.l.b16 %v6637
      %v6933 = vunpack.c.l.b16 %v6638
      %v6934 = vunpack.c.l.b16 %v6639
      %v6935 = vunpack.c.l.b16 %v6640
      %v6936 = vunpack.c.l.b16 %v6641
      %v6937 = vunpack.c.l.b16 %v6642
      %v6938 = vunpack.c.l.b16 %v6643
      %v6939 = vunpack.c.l.b16 %v6644
      %v6940 = vunpack.c.l.b16 %v6645
      %v6941 = vunpack.c.l.b16 %v6646
      %v6942 = vunpack.c.l.b16 %v6647
      %v6943 = vunpack.c.l.b16 %v6648
      %v6944 = vunpack.c.l.b16 %v6649
      %v6945 = vunpack.c.l.b16 %v6650
      %v6946 = vunpack.c.l.b16 %v6651
      %v6947 = vunpack.c.l.b16 %v6652
      %v6948 = vunpack.c.l.b16 %v6653
      %v6949 = vunpack.c.l.b16 %v6654
      %v6950 = vpack.c.b16 %v6807, %v6806
      %v6951 = vpack.c.b16 %v6809, %v6808
      %v6952 = vpack.c.b16 %v6811, %v6810
      %v6953 = vpack.c.b16 %v6813, %v6812
      %v6954 = vpack.c.b16 %v6815, %v6814
      %v6955 = vpack.c.b16 %v6817, %v6816
      %v6956 = vpack.c.b16 %v6819, %v6818
      %v6957 = vpack.c.b16 %v6821, %v6820
      %v6958 = vpack.c.b16 %v6823, %v6822
      %v6959 = vpack.c.b16 %v6825, %v6824
      %v6960 = vpack.c.b16 %v6827, %v6826
      %v6961 = vpack.c.b16 %v6829, %v6828
      %v6962 = vpack.c.b16 %v6831, %v6830
      %v6963 = vpack.c.b16 %v6833, %v6832
      %v6964 = vpack.c.b16 %v6835, %v6834
      %v6965 = vpack.c.b16 %v6837, %v6836
      %v6966 = vpack.c.b16 %v6839, %v6838
      %v6967 = vpack.c.b16 %v6841, %v6840
      %v6968 = vpack.c.b16 %v6843, %v6842
      %v6969 = vpack.c.b16 %v6845, %v6844
      %v6970 = vpack.c.b16 %v6847, %v6846
      %v6971 = vpack.c.b16 %v6849, %v6848
      %v6972 = vpack.c.b16 %v6851, %v6850
      %v6973 = vpack.c.b16 %v6853, %v6852
      %v6974 = vpack.c.b16 %v6855, %v6854
      %v6975 = vpack.c.b16 %v6857, %v6856
      %v6976 = vpack.c.b16 %v6859, %v6858
      %v6977 = vpack.c.b16 %v6861, %v6860
      %v6978 = vpack.c.b16 %v6863, %v6862
      %v6979 = vpack.c.b16 %v6865, %v6864
      %v6980 = vpack.c.b16 %v6867, %v6866
      %v6981 = vpack.c.b16 %v6869, %v6868
      %v6982 = vpack.c.b16 %v6871, %v6870
      %v6983 = vpack.c.b16 %v6873, %v6872
      %v6984 = vpack.c.b16 %v6875, %v6874
      %v6985 = vpack.c.b16 %v6877, %v6876
      %v6986 = vpack.c.b16 %v6879, %v6878
      %v6987 = vpack.c.b16 %v6881, %v6880
      %v6988 = vpack.c.b16 %v6883, %v6882
      %v6989 = vpack.c.b16 %v6885, %v6884
      %v6990 = vpack.c.b16 %v6887, %v6886
      %v6991 = vpack.c.b16 %v6889, %v6888
      %v6992 = vpack.c.b16 %v6891, %v6890
      %v6993 = vpack.c.b16 %v6893, %v6892
      %v6994 = vpack.c.b16 %v6895, %v6894
      %v6995 = vpack.c.b16 %v6897, %v6896
      %v6996 = vpack.c.b16 %v6899, %v6898
      %v6997 = vpack.c.b16 %v6901, %v6900
      %v6998 = vpack.c.b16 %v6903, %v6902
      %v6999 = vpack.c.b16 %v6905, %v6904
      %v7000 = vpack.c.b16 %v6907, %v6906
      %v7001 = vpack.c.b16 %v6909, %v6908
      %v7002 = vpack.c.b16 %v6911, %v6910
      %v7003 = vpack.c.b16 %v6913, %v6912
      %v7004 = vpack.c.b16 %v6915, %v6914
      %v7005 = vpack.c.b16 %v6917, %v6916
      %v7006 = vpack.c.b16 %v6919, %v6918
      %v7007 = vpack.c.b16 %v6921, %v6920
      %v7008 = vpack.c.b16 %v6923, %v6922
      %v7009 = vpack.c.b16 %v6925, %v6924
      %v7010 = vpack.c.b16 %v6927, %v6926
      %v7011 = vpack.c.b16 %v6929, %v6928
      %v7012 = vpack.c.b16 %v6931, %v6930
      %v7013 = vpack.c.b16 %v6933, %v6932
      %v7014 = vpack.c.b16 %v6935, %v6934
      %v7015 = vpack.c.b16 %v6937, %v6936
      %v7016 = vpack.c.b16 %v6939, %v6938
      %v7017 = vpack.c.b16 %v6941, %v6940
      %v7018 = vpack.c.b16 %v6943, %v6942
      %v7019 = vpack.c.b16 %v6945, %v6944
      %v7020 = vpack.c.b16 %v6947, %v6946
      %v7021 = vpack.c.b16 %v6949, %v6948
      %7094 = vmatprep.subr.bf16.mxu0 0
      %7095 = vmatpush1.bf16.msra.mxu0 %v6950
      %7096 = vmatprep.subr.bf16.mxu0 0
      %7097 = vmatpush1.bf16.msra.mxu0 %v6951
      %7098 = vmatprep.subr.bf16.mxu0 0
      %7099 = vmatpush1.bf16.msra.mxu0 %v6952
      %7100 = vmatprep.subr.bf16.mxu0 0
      %7101 = vmatpush1.bf16.msra.mxu0 %v6953
      %7102 = vmatprep.subr.bf16.mxu0 0
      %7103 = vmatpush1.bf16.msra.mxu0 %v6954
      %7104 = vmatprep.subr.bf16.mxu0 0
      %7105 = vmatpush1.bf16.msra.mxu0 %v6955
      %7106 = vmatprep.subr.bf16.mxu0 0
      %7107 = vmatpush1.bf16.msra.mxu0 %v6956
      %7108 = vmatprep.subr.bf16.mxu0 0
      %7109 = vmatpush1.bf16.msra.mxu0 %v6957
      %7110 = vmatprep.subr.bf16.mxu0 0
      %7111 = vmatpush1.bf16.msra.mxu0 %v6958
      %7112 = vmatprep.subr.bf16.mxu0 0
      %7113 = vmatpush1.bf16.msra.mxu0 %v6959
      %7114 = vmatprep.subr.bf16.mxu0 0
      %7115 = vmatpush1.bf16.msra.mxu0 %v6960
      %7116 = vmatprep.subr.bf16.mxu0 0
      %7117 = vmatpush1.bf16.msra.mxu0 %v6961
      %7118 = vmatprep.subr.bf16.mxu0 0
      %7119 = vmatpush1.bf16.msra.mxu0 %v6962
      %7120 = vmatprep.subr.bf16.mxu0 0
      %7121 = vmatpush1.bf16.msra.mxu0 %v6963
      %7122 = vmatprep.subr.bf16.mxu0 0
      %7123 = vmatpush1.bf16.msra.mxu0 %v6964
      %7124 = vmatprep.subr.bf16.mxu0 0
      %7125 = vmatpush1.bf16.msra.mxu0 %v6965
      %7126 = vmatprep.mubr.bf16.mxu0 %v6476
      %7127 = vmatmul.mubr.bf16.gmra.mrb[0].mxu0 %v6475
      %v7128 = vpop.f32.mrb[0].mxu0
      %v7129 = vadd.f32 %v6660, %v7128
      %v7130 = vpop.f32.mrb[0].mxu0
      %v7131 = vpop.f32.mrb[0].mxu0
      %v7132 = vadd.f32 %v6660, %v7131
      %v7133 = vpop.f32.mrb[0].mxu0
      %7134 = vmatprep.mubr.bf16.mxu0 %v6485
      %7135 = vmatmul.mubr.bf16.gmra.mrb[0].mxu0 %v6484
      %v7136 = vpop.f32.mrb[0].mxu0
      %v7137 = vadd.f32 %v6660, %v7136
      %v7138 = vpop.f32.mrb[0].mxu0
      %v7139 = vpop.f32.mrb[0].mxu0
      %v7140 = vadd.f32 %v6660, %v7139
      %v7141 = vpop.f32.mrb[0].mxu0
      %7142 = vmatprep.mubr.bf16.mxu0 %v6494
      %7143 = vmatmul.mubr.bf16.gmra.mrb[0].mxu0 %v6493
      %v7144 = vpop.f32.mrb[0].mxu0
      %v7145 = vadd.f32 %v6660, %v7144
      %v7146 = vpop.f32.mrb[0].mxu0
      %v7147 = vpop.f32.mrb[0].mxu0
      %v7148 = vadd.f32 %v6660, %v7147
      %v7149 = vpop.f32.mrb[0].mxu0
      %7150 = vmatprep.mubr.bf16.mxu0 %v6503
      %7151 = vmatmul.mubr.bf16.gmra.mrb[0].mxu0 %v6502
      %v7152 = vpop.f32.mrb[0].mxu0
      %v7153 = vadd.f32 %v6660, %v7152
      %v7154 = vpop.f32.mrb[0].mxu0
      %v7155 = vpop.f32.mrb[0].mxu0
      %v7156 = vadd.f32 %v6660, %v7155
      %v7157 = vpop.f32.mrb[0].mxu0
      %7158 = vdwg.mxu0
      %7159 = vmatprep.subr.bf16.mxu0 0
      %7160 = vmatpush1.bf16.msra.mxu0 %v6966
      %7161 = vmatprep.subr.bf16.mxu0 0
      %7162 = vmatpush1.bf16.msra.mxu0 %v6967
      %7163 = vmatprep.subr.bf16.mxu0 0
      %7164 = vmatpush1.bf16.msra.mxu0 %v6968
      %7165 = vmatprep.subr.bf16.mxu0 0
      %7166 = vmatpush1.bf16.msra.mxu0 %v6969
      %7167 = vmatprep.subr.bf16.mxu0 0
      %7168 = vmatpush1.bf16.msra.mxu0 %v6970
      %7169 = vmatprep.subr.bf16.mxu0 0
      %7170 = vmatpush1.bf16.msra.mxu0 %v6971
      %7171 = vmatprep.subr.bf16.mxu0 0
      %7172 = vmatpush1.bf16.msra.mxu0 %v6972
      %7173 = vmatprep.subr.bf16.mxu0 0
      %7174 = vmatpush1.bf16.msra.mxu0 %v6973
      %7175 = vmatprep.subr.bf16.mxu0 0
      %7176 = vmatpush1.bf16.msra.mxu0 %v6974
      %7177 = vmatprep.subr.bf16.mxu0 0
      %7178 = vmatpush1.bf16.msra.mxu0 %v6975
      %7179 = vmatprep.subr.bf16.mxu0 0
      %7180 = vmatpush1.bf16.msra.mxu0 %v6976
      %7181 = vmatprep.subr.bf16.mxu0 0
      %7182 = vmatpush1.bf16.msra.mxu0 %v6977
      %7183 = vmatprep.subr.bf16.mxu0 0
      %7184 = vmatpush1.bf16.msra.mxu0 %v6978
      %7185 = vmatprep.subr.bf16.mxu0 0
      %7186 = vmatpush1.bf16.msra.mxu0 %v6979
      %7187 = vmatprep.subr.bf16.mxu0 0
      %7188 = vmatpush1.bf16.msra.mxu0 %v6980
      %7189 = vmatprep.subr.bf16.mxu0 0
      %7190 = vmatpush1.bf16.msra.mxu0 %v6981
      %7191 = vmatprep.mubr.bf16.mxu0 %v6478
      %7192 = vmatmul.mubr.bf16.gmra.mrb[0].mxu0 %v6477
      %v7193 = vpop.f32.mrb[0].mxu0
      %v7194 = vadd.f32 %v7129, %v7193
      %v7195 = vpop.f32.mrb[0].mxu0
      %v7196 = vpop.f32.mrb[0].mxu0
      %v7197 = vadd.f32 %v7132, %v7196
      %v7198 = vpop.f32.mrb[0].mxu0
      %7199 = vmatprep.mubr.bf16.mxu0 %v6487
      %7200 = vmatmul.mubr.bf16.gmra.mrb[0].mxu0 %v6486
      %v7201 = vpop.f32.mrb[0].mxu0
      %v7202 = vadd.f32 %v7137, %v7201
      %v7203 = vpop.f32.mrb[0].mxu0
      %v7204 = vpop.f32.mrb[0].mxu0
      %v7205 = vadd.f32 %v7140, %v7204
      %v7206 = vpop.f32.mrb[0].mxu0
      %7207 = vmatprep.mubr.bf16.mxu0 %v6496
      %7208 = vmatmul.mubr.bf16.gmra.mrb[0].mxu0 %v6495
      %v7209 = vpop.f32.mrb[0].mxu0
      %v7210 = vadd.f32 %v7145, %v7209
      %v7211 = vpop.f32.mrb[0].mxu0
      %v7212 = vpop.f32.mrb[0].mxu0
      %v7213 = vadd.f32 %v7148, %v7212
      %v7214 = vpop.f32.mrb[0].mxu0
      %7215 = vmatprep.mubr.bf16.mxu0 %v6505
      %7216 = vmatmul.mubr.bf16.gmra.mrb[0].mxu0 %v6504
      %v7217 = vpop.f32.mrb[0].mxu0
      %v7218 = vadd.f32 %v7153, %v7217
      %v7219 = vpop.f32.mrb[0].mxu0
      %v7220 = vpop.f32.mrb[0].mxu0
      %v7221 = vadd.f32 %v7156, %v7220
      %v7222 = vpop.f32.mrb[0].mxu0
      %7223 = vdwg.mxu0
      %7224 = vmatprep.subr.bf16.mxu0 0
      %7225 = vmatpush1.bf16.msra.mxu0 %v6982
      %7226 = vmatprep.subr.bf16.mxu0 0
      %7227 = vmatpush1.bf16.msra.mxu0 %v6983
      %7228 = vmatprep.subr.bf16.mxu0 0
      %7229 = vmatpush1.bf16.msra.mxu0 %v6984
      %7230 = vmatprep.subr.bf16.mxu0 0
      %7231 = vmatpush1.bf16.msra.mxu0 %v6985
      %7232 = vmatprep.subr.bf16.mxu0 0
      %7233 = vmatpush1.bf16.msra.mxu0 %v6986
      %7234 = vmatprep.subr.bf16.mxu0 0
      %7235 = vmatpush1.bf16.msra.mxu0 %v6987
      %7236 = vmatprep.subr.bf16.mxu0 0
      %7237 = vmatpush1.bf16.msra.mxu0 %v6988
      %7238 = vmatprep.subr.bf16.mxu0 0
      %7239 = vmatpush1.bf16.msra.mxu0 %v6989
      %7240 = vmatprep.subr.bf16.mxu0 0
      %7241 = vmatpush1.bf16.msra.mxu0 %v6990
      %7242 = vmatprep.subr.bf16.mxu0 0
      %7243 = vmatpush1.bf16.msra.mxu0 %v6991
      %7244 = vmatprep.subr.bf16.mxu0 0
      %7245 = vmatpush1.bf16.msra.mxu0 %v6992
      %7246 = vmatprep.subr.bf16.mxu0 0
      %7247 = vmatpush1.bf16.msra.mxu0 %v6993
      %7248 = vmatprep.subr.bf16.mxu0 0
      %7249 = vmatpush1.bf16.msra.mxu0 %v6994
      %7250 = vmatprep.subr.bf16.mxu0 0
      %7251 = vmatpush1.bf16.msra.mxu0 %v6995
      %7252 = vmatprep.subr.bf16.mxu0 0
      %7253 = vmatpush1.bf16.msra.mxu0 %v6996
      %7254 = vmatprep.subr.bf16.mxu0 0
      %7255 = vmatpush1.bf16.msra.mxu0 %v6997
      %7256 = vmatprep.mubr.bf16.mxu0 %v6480
      %7257 = vmatmul.mubr.bf16.gmra.mrb[0].mxu0 %v6479
      %v7258 = vpop.f32.mrb[0].mxu0
      %v7259 = vadd.f32 %v7194, %v7258
      %v7260 = vpop.f32.mrb[0].mxu0
      %v7261 = vpop.f32.mrb[0].mxu0
      %v7262 = vadd.f32 %v7197, %v7261
      %v7263 = vpop.f32.mrb[0].mxu0
      %7264 = vmatprep.mubr.bf16.mxu0 %v6489
      %7265 = vmatmul.mubr.bf16.gmra.mrb[0].mxu0 %v6488
      %v7266 = vpop.f32.mrb[0].mxu0
      %v7267 = vadd.f32 %v7202, %v7266
      %v7268 = vpop.f32.mrb[0].mxu0
      %v7269 = vpop.f32.mrb[0].mxu0
      %v7270 = vadd.f32 %v7205, %v7269
      %v7271 = vpop.f32.mrb[0].mxu0
      %7272 = vmatprep.mubr.bf16.mxu0 %v6498
      %7273 = vmatmul.mubr.bf16.gmra.mrb[0].mxu0 %v6497
      %v7274 = vpop.f32.mrb[0].mxu0
      %v7275 = vadd.f32 %v7210, %v7274
      %v7276 = vpop.f32.mrb[0].mxu0
      %v7277 = vpop.f32.mrb[0].mxu0
      %v7278 = vadd.f32 %v7213, %v7277
      %v7279 = vpop.f32.mrb[0].mxu0
      %7280 = vmatprep.mubr.bf16.mxu0 %v6507
      %7281 = vmatmul.mubr.bf16.gmra.mrb[0].mxu0 %v6506
      %v7282 = vpop.f32.mrb[0].mxu0
      %v7283 = vadd.f32 %v7218, %v7282
      %v7284 = vpop.f32.mrb[0].mxu0
      %v7285 = vpop.f32.mrb[0].mxu0
      %v7286 = vadd.f32 %v7221, %v7285
      %v7287 = vpop.f32.mrb[0].mxu0
      %7288 = vdwg.mxu0
      %7289 = vmatprep.subr.bf16.mxu0 0
      %7290 = vmatpush1.bf16.msra.mxu0 %v6998
      %7291 = vmatprep.subr.bf16.mxu0 0
      %7292 = vmatpush1.bf16.msra.mxu0 %v6999
      %7293 = vmatprep.subr.bf16.mxu0 0
      %7294 = vmatpush1.bf16.msra.mxu0 %v7000
      %7295 = vmatprep.subr.bf16.mxu0 0
      %7296 = vmatpush1.bf16.msra.mxu0 %v7001
      %7297 = vmatprep.subr.bf16.mxu0 0
      %7298 = vmatpush1.bf16.msra.mxu0 %v7002
      %7299 = vmatprep.subr.bf16.mxu0 0
      %7300 = vmatpush1.bf16.msra.mxu0 %v7003
      %7301 = vmatprep.subr.bf16.mxu0 0
      %7302 = vmatpush1.bf16.msra.mxu0 %v7004
      %7303 = vmatprep.subr.bf16.mxu0 0
      %7304 = vmatpush1.bf16.msra.mxu0 %v7005
      %7305 = vmatprep.subr.bf16.mxu0 0
      %7306 = vmatpush1.bf16.msra.mxu0 %v7006
      %7307 = vmatprep.subr.bf16.mxu0 0
      %7308 = vmatpush1.bf16.msra.mxu0 %v7007
      %7309 = vmatprep.subr.bf16.mxu0 0
      %7310 = vmatpush1.bf16.msra.mxu0 %v7008
      %7311 = vmatprep.subr.bf16.mxu0 0
      %7312 = vmatpush1.bf16.msra.mxu0 %v7009
      %7313 = vmatprep.subr.bf16.mxu0 0
      %7314 = vmatpush1.bf16.msra.mxu0 %v7010
      %7315 = vmatprep.subr.bf16.mxu0 0
      %7316 = vmatpush1.bf16.msra.mxu0 %v7011
      %7317 = vmatprep.subr.bf16.mxu0 0
      %7318 = vmatpush1.bf16.msra.mxu0 %v7012
      %7319 = vmatprep.subr.bf16.mxu0 0
      %7320 = vmatpush1.bf16.msra.mxu0 %v7013
      %7321 = vmatprep.mubr.bf16.mxu0 %v6482
      %7322 = vmatmul.mubr.bf16.gmra.mrb[0].mxu0 %v6481
      %v7323 = vpop.f32.mrb[0].mxu0
      %v7324 = vadd.f32 %v7259, %v7323
      %v7325 = vpop.f32.mrb[0].mxu0
      %v7326 = vpop.f32.mrb[0].mxu0
      %v7327 = vadd.f32 %v7262, %v7326
      %v7328 = vpop.f32.mrb[0].mxu0
      %7329 = vmatprep.mubr.bf16.mxu0 %v6491
      %7330 = vmatmul.mubr.bf16.gmra.mrb[0].mxu0 %v6490
      %v7331 = vpop.f32.mrb[0].mxu0
      %v7332 = vadd.f32 %v7267, %v7331
      %v7333 = vpop.f32.mrb[0].mxu0
      %v7334 = vpop.f32.mrb[0].mxu0
      %v7335 = vadd.f32 %v7270, %v7334
      %v7336 = vpop.f32.mrb[0].mxu0
      %7337 = vmatprep.mubr.bf16.mxu0 %v6500
      %7338 = vmatmul.mubr.bf16.gmra.mrb[0].mxu0 %v6499
      %v7339 = vpop.f32.mrb[0].mxu0
      %v7340 = vadd.f32 %v7275, %v7339
      %v7341 = vpop.f32.mrb[0].mxu0
      %v7342 = vpop.f32.mrb[0].mxu0
      %v7343 = vadd.f32 %v7278, %v7342
      %v7344 = vpop.f32.mrb[0].mxu0
      %7345 = vmatprep.mubr.bf16.mxu0 %v6509
      %7346 = vmatmul.mubr.bf16.gmra.mrb[0].mxu0 %v6508
      %v7347 = vpop.f32.mrb[0].mxu0
      %v7348 = vadd.f32 %v7283, %v7347
      %v7349 = vpop.f32.mrb[0].mxu0
      %v7350 = vpop.f32.mrb[0].mxu0
      %v7351 = vadd.f32 %v7286, %v7350
      %v7352 = vpop.f32.mrb[0].mxu0
      %7353 = vdwg.mxu0
      %7354 = vmatprep.subr.bf16.mxu0 0
      %7355 = vmatpush1.bf16.msra.mxu0 %v7014
      %7356 = vmatprep.subr.bf16.mxu0 0
      %7357 = vmatpush1.bf16.msra.mxu0 %v7015
      %7358 = vmatprep.subr.bf16.mxu0 0
      %7359 = vmatpush1.bf16.msra.mxu0 %v7016
      %7360 = vmatprep.subr.bf16.mxu0 0
      %7361 = vmatpush1.bf16.msra.mxu0 %v7017
      %7362 = vmatprep.subr.bf16.mxu0 0
      %7363 = vmatpush1.bf16.msra.mxu0 %v7018
      %7364 = vmatprep.subr.bf16.mxu0 0
      %7365 = vmatpush1.bf16.msra.mxu0 %v7019
      %7366 = vmatprep.subr.bf16.mxu0 0
      %7367 = vmatpush1.bf16.msra.mxu0 %v7020
      %7368 = vmatprep.subr.bf16.mxu0 0
      %7369 = vmatpush1.bf16.msra.mxu0 %v7021
      %7370 = vmatprep.subr.bf16.mxu0 0
      %7371 = vmatpush1.bf16.msra.mxu0 0
      %7372 = vmatprep.subr.bf16.mxu0 0
      %7373 = vmatpush1.bf16.msra.mxu0 0
      %7374 = vmatprep.subr.bf16.mxu0 0
      %7375 = vmatpush1.bf16.msra.mxu0 0
      %7376 = vmatprep.subr.bf16.mxu0 0
      %7377 = vmatpush1.bf16.msra.mxu0 0
      %7378 = vmatprep.subr.bf16.mxu0 0
      %7379 = vmatpush1.bf16.msra.mxu0 0
      %7380 = vmatprep.subr.bf16.mxu0 0
      %7381 = vmatpush1.bf16.msra.mxu0 0
      %7382 = vmatprep.subr.bf16.mxu0 0
      %7383 = vmatpush1.bf16.msra.mxu0 0
      %7384 = vmatprep.subr.bf16.mxu0 0
      %7385 = vmatpush1.bf16.msra.mxu0 0
      %7386 = vmatprep.mubr.bf16.mxu0 0
      %7387 = vmatmul.mubr.bf16.gmra.mrb[0].mxu0 %v6483
      %v7388 = vpop.f32.mrb[0].mxu0
      %v7389 = vadd.f32 %v7324, %v7388
      %v7390 = vpop.f32.mrb[0].mxu0
      %v7391 = vpop.f32.mrb[0].mxu0
      %v7392 = vadd.f32 %v7327, %v7391
      %v7393 = vpop.f32.mrb[0].mxu0
      %7394 = vmatprep.mubr.bf16.mxu0 0
      %7395 = vmatmul.mubr.bf16.gmra.mrb[0].mxu0 %v6492
      %v7396 = vpop.f32.mrb[0].mxu0
      %v7397 = vadd.f32 %v7332, %v7396
      %v7398 = vpop.f32.mrb[0].mxu0
      %v7399 = vpop.f32.mrb[0].mxu0
      %v7400 = vadd.f32 %v7335, %v7399
      %v7401 = vpop.f32.mrb[0].mxu0
      %7402 = vmatprep.mubr.bf16.mxu0 0
      %7403 = vmatmul.mubr.bf16.gmra.mrb[0].mxu0 %v6501
      %v7404 = vpop.f32.mrb[0].mxu0
      %v7405 = vadd.f32 %v7340, %v7404
      %v7406 = vpop.f32.mrb[0].mxu0
      %v7407 = vpop.f32.mrb[0].mxu0
      %v7408 = vadd.f32 %v7343, %v7407
      %v7409 = vpop.f32.mrb[0].mxu0
      %7410 = vmatprep.mubr.bf16.mxu0 0
      %7411 = vmatmul.mubr.bf16.gmra.mrb[0].mxu0 %v6510
      %v7412 = vpop.f32.mrb[0].mxu0
      %v7413 = vadd.f32 %v7348, %v7412
      %v7414 = vpop.f32.mrb[0].mxu0
      %v7415 = vpop.f32.mrb[0].mxu0
      %v7416 = vadd.f32 %v7351, %v7415
      %v7417 = vpop.f32.mrb[0].mxu0
      %7418 = vdwg.mxu0
      %v7419 = vmax.f32 %v7389, 0.0
      %v7420 = vmax.f32 %v7392, 0.0
      %v7421 = vmax.f32 %v7397, 0.0
      %v7422 = vmax.f32 %v7400, 0.0
      %v7423 = vmax.f32 %v7405, 0.0
      %v7424 = vmax.f32 %v7408, 0.0
      %v7425 = vmax.f32 %v7413, 0.0
      %v7426 = vmax.f32 %v7416, 0.0
      %v7435 = vcombine.high %v7419, %v7419
      %v7437 = vunpack.c.l.s4 1983009808
      %v7438 = vunpack.c.0.s8 %v7437
      %v7439 = vlaneseq
      %v7440 = vshrl.u32 %v7439, 7
      %v7441 = vsub.s32 %v7438, %v7440
      %v7442 = vrot.slane %v7419, %v7441
      %v7444 = vunpack.c.l.s4 1983009808
      %v7445 = vunpack.c.0.s8 %v7444
      %v7446 = vlaneseq
      %v7447 = vshrl.u32 %v7446, 7
      %v7448 = vsub.s32 %v7445, %v7447
      %v7449 = vrot.slane %v7435, %v7448
      %v7450 = vcombine.high %v7442, %v7442
      %v7451 = vcombine.high %v7449, %v7449
      %v7452 = vcombine.high %v7420, %v7420
      %v7454 = vunpack.c.l.s4 1983009808
      %v7455 = vunpack.c.0.s8 %v7454
      %v7456 = vlaneseq
      %v7457 = vshrl.u32 %v7456, 7
      %v7458 = vsub.s32 %v7455, %v7457
      %v7459 = vrot.slane %v7420, %v7458
      %v7461 = vunpack.c.l.s4 1983009808
      %v7462 = vunpack.c.0.s8 %v7461
      %v7463 = vlaneseq
      %v7464 = vshrl.u32 %v7463, 7
      %v7465 = vsub.s32 %v7462, %v7464
      %v7466 = vrot.slane %v7452, %v7465
      %v7467 = vcombine.high %v7459, %v7459
      %v7468 = vcombine.high %v7466, %v7466
      %v7469 = vcombine.high %v7421, %v7421
      %v7471 = vunpack.c.l.s4 1983009808
      %v7472 = vunpack.c.0.s8 %v7471
      %v7473 = vlaneseq
      %v7474 = vshrl.u32 %v7473, 7
      %v7475 = vsub.s32 %v7472, %v7474
      %v7476 = vrot.slane %v7421, %v7475
      %v7478 = vunpack.c.l.s4 1983009808
      %v7479 = vunpack.c.0.s8 %v7478
      %v7480 = vlaneseq
      %v7481 = vshrl.u32 %v7480, 7
      %v7482 = vsub.s32 %v7479, %v7481
      %v7483 = vrot.slane %v7469, %v7482
      %v7484 = vcombine.high %v7476, %v7476
      %v7485 = vcombine.high %v7483, %v7483
      %v7486 = vcombine.high %v7422, %v7422
      %v7488 = vunpack.c.l.s4 1983009808
      %v7489 = vunpack.c.0.s8 %v7488
      %v7490 = vlaneseq
      %v7491 = vshrl.u32 %v7490, 7
      %v7492 = vsub.s32 %v7489, %v7491
      %v7493 = vrot.slane %v7422, %v7492
      %v7495 = vunpack.c.l.s4 1983009808
      %v7496 = vunpack.c.0.s8 %v7495
      %v7497 = vlaneseq
      %v7498 = vshrl.u32 %v7497, 7
      %v7499 = vsub.s32 %v7496, %v7498
      %v7500 = vrot.slane %v7486, %v7499
      %v7501 = vcombine.high %v7493, %v7493
      %v7502 = vcombine.high %v7500, %v7500
      %v7503 = vcombine.high %v7423, %v7423
      %v7505 = vunpack.c.l.s4 1983009808
      %v7506 = vunpack.c.0.s8 %v7505
      %v7507 = vlaneseq
      %v7508 = vshrl.u32 %v7507, 7
      %v7509 = vsub.s32 %v7506, %v7508
      %v7510 = vrot.slane %v7423, %v7509
      %v7512 = vunpack.c.l.s4 1983009808
      %v7513 = vunpack.c.0.s8 %v7512
      %v7514 = vlaneseq
      %v7515 = vshrl.u32 %v7514, 7
      %v7516 = vsub.s32 %v7513, %v7515
      %v7517 = vrot.slane %v7503, %v7516
      %v7518 = vcombine.high %v7510, %v7510
      %v7519 = vcombine.high %v7517, %v7517
      %v7520 = vcombine.high %v7424, %v7424
      %v7522 = vunpack.c.l.s4 1983009808
      %v7523 = vunpack.c.0.s8 %v7522
      %v7524 = vlaneseq
      %v7525 = vshrl.u32 %v7524, 7
      %v7526 = vsub.s32 %v7523, %v7525
      %v7527 = vrot.slane %v7424, %v7526
      %v7529 = vunpack.c.l.s4 1983009808
      %v7530 = vunpack.c.0.s8 %v7529
      %v7531 = vlaneseq
      %v7532 = vshrl.u32 %v7531, 7
      %v7533 = vsub.s32 %v7530, %v7532
      %v7534 = vrot.slane %v7520, %v7533
      %v7535 = vcombine.high %v7527, %v7527
      %v7536 = vcombine.high %v7534, %v7534
      %v7537 = vcombine.high %v7425, %v7425
      %v7539 = vunpack.c.l.s4 1983009808
      %v7540 = vunpack.c.0.s8 %v7539
      %v7541 = vlaneseq
      %v7542 = vshrl.u32 %v7541, 7
      %v7543 = vsub.s32 %v7540, %v7542
      %v7544 = vrot.slane %v7425, %v7543
      %v7546 = vunpack.c.l.s4 1983009808
      %v7547 = vunpack.c.0.s8 %v7546
      %v7548 = vlaneseq
      %v7549 = vshrl.u32 %v7548, 7
      %v7550 = vsub.s32 %v7547, %v7549
      %v7551 = vrot.slane %v7537, %v7550
      %v7552 = vcombine.high %v7544, %v7544
      %v7553 = vcombine.high %v7551, %v7551
      %v7554 = vcombine.high %v7426, %v7426
      %v7556 = vunpack.c.l.s4 1983009808
      %v7557 = vunpack.c.0.s8 %v7556
      %v7558 = vlaneseq
      %v7559 = vshrl.u32 %v7558, 7
      %v7560 = vsub.s32 %v7557, %v7559
      %v7561 = vrot.slane %v7426, %v7560
      %v7563 = vunpack.c.l.s4 1983009808
      %v7564 = vunpack.c.0.s8 %v7563
      %v7565 = vlaneseq
      %v7566 = vshrl.u32 %v7565, 7
      %v7567 = vsub.s32 %v7564, %v7566
      %v7568 = vrot.slane %v7554, %v7567
      %v7569 = vcombine.high %v7561, %v7561
      %v7570 = vcombine.high %v7568, %v7568
      %v7603 = vrot.slane %v7442, 7
      %v7604 = vrot.slane %v7603, 2
      %v7605 = vrot.slane %v7450, 7
      %v7606 = vrot.slane %v7605, 2
      %v7607 = vrot.slane %v7449, 7
      %v7608 = vrot.slane %v7607, 2
      %v7609 = vrot.slane %v7451, 7
      %v7610 = vrot.slane %v7609, 2
      %v7611 = vrot.slane %v7459, 7
      %v7612 = vrot.slane %v7611, 2
      %v7613 = vrot.slane %v7467, 7
      %v7614 = vrot.slane %v7613, 2
      %v7615 = vrot.slane %v7466, 7
      %v7616 = vrot.slane %v7615, 2
      %v7617 = vrot.slane %v7468, 7
      %v7618 = vrot.slane %v7617, 2
      %v7619 = vrot.slane %v7476, 7
      %v7620 = vrot.slane %v7619, 2
      %v7621 = vrot.slane %v7484, 7
      %v7622 = vrot.slane %v7621, 2
      %v7623 = vrot.slane %v7483, 7
      %v7624 = vrot.slane %v7623, 2
      %v7625 = vrot.slane %v7485, 7
      %v7626 = vrot.slane %v7625, 2
      %v7627 = vrot.slane %v7493, 7
      %v7628 = vrot.slane %v7627, 2
      %v7629 = vrot.slane %v7501, 7
      %v7630 = vrot.slane %v7629, 2
      %v7631 = vrot.slane %v7500, 7
      %v7632 = vrot.slane %v7631, 2
      %v7633 = vrot.slane %v7502, 7
      %v7634 = vrot.slane %v7633, 2
      %v7635 = vrot.slane %v7510, 7
      %v7636 = vrot.slane %v7635, 2
      %v7637 = vrot.slane %v7518, 7
      %v7638 = vrot.slane %v7637, 2
      %v7639 = vrot.slane %v7517, 7
      %v7640 = vrot.slane %v7639, 2
      %v7641 = vrot.slane %v7519, 7
      %v7642 = vrot.slane %v7641, 2
      %v7643 = vrot.slane %v7527, 7
      %v7644 = vrot.slane %v7643, 2
      %v7645 = vrot.slane %v7535, 7
      %v7646 = vrot.slane %v7645, 2
      %v7647 = vrot.slane %v7534, 7
      %v7648 = vrot.slane %v7647, 2
      %v7649 = vrot.slane %v7536, 7
      %v7650 = vrot.slane %v7649, 2
      %v7651 = vrot.slane %v7544, 7
      %v7652 = vrot.slane %v7651, 2
      %v7653 = vrot.slane %v7552, 7
      %v7654 = vrot.slane %v7653, 2
      %v7655 = vrot.slane %v7551, 7
      %v7656 = vrot.slane %v7655, 2
      %v7657 = vrot.slane %v7553, 7
      %v7658 = vrot.slane %v7657, 2
      %v7659 = vrot.slane %v7561, 7
      %v7660 = vrot.slane %v7659, 2
      %v7661 = vrot.slane %v7569, 7
      %v7662 = vrot.slane %v7661, 2
      %v7663 = vrot.slane %v7568, 7
      %v7664 = vrot.slane %v7663, 2
      %v7665 = vrot.slane %v7570, 7
      %v7666 = vrot.slane %v7665, 2
      %v7699 = vmax.f32 %v7442, %v7604
      %v7700 = vmax.f32 %v7450, %v7606
      %v7701 = vmax.f32 %v7449, %v7608
      %v7702 = vmax.f32 %v7451, %v7610
      %v7703 = vmax.f32 %v7459, %v7612
      %v7704 = vmax.f32 %v7467, %v7614
      %v7705 = vmax.f32 %v7466, %v7616
      %v7706 = vmax.f32 %v7468, %v7618
      %v7707 = vmax.f32 %v7476, %v7620
      %v7708 = vmax.f32 %v7484, %v7622
      %v7709 = vmax.f32 %v7483, %v7624
      %v7710 = vmax.f32 %v7485, %v7626
      %v7711 = vmax.f32 %v7493, %v7628
      %v7712 = vmax.f32 %v7501, %v7630
      %v7713 = vmax.f32 %v7500, %v7632
      %v7714 = vmax.f32 %v7502, %v7634
      %v7715 = vmax.f32 %v7510, %v7636
      %v7716 = vmax.f32 %v7518, %v7638
      %v7717 = vmax.f32 %v7517, %v7640
      %v7718 = vmax.f32 %v7519, %v7642
      %v7719 = vmax.f32 %v7527, %v7644
      %v7720 = vmax.f32 %v7535, %v7646
      %v7721 = vmax.f32 %v7534, %v7648
      %v7722 = vmax.f32 %v7536, %v7650
      %v7723 = vmax.f32 %v7544, %v7652
      %v7724 = vmax.f32 %v7552, %v7654
      %v7725 = vmax.f32 %v7551, %v7656
      %v7726 = vmax.f32 %v7553, %v7658
      %v7727 = vmax.f32 %v7561, %v7660
      %v7728 = vmax.f32 %v7569, %v7662
      %v7729 = vmax.f32 %v7568, %v7664
      %v7730 = vmax.f32 %v7570, %v7666
      %v7731 = vmax.f32 %v7699, %v7703
      %v7732 = vmax.f32 %v7700, %v7704
      %v7733 = vmax.f32 %v7701, %v7705
      %v7734 = vmax.f32 %v7702, %v7706
      %v7735 = vmax.f32 %v7707, %v7711
      %v7736 = vmax.f32 %v7708, %v7712
      %v7737 = vmax.f32 %v7709, %v7713
      %v7738 = vmax.f32 %v7710, %v7714
      %v7739 = vmax.f32 %v7715, %v7719
      %v7740 = vmax.f32 %v7716, %v7720
      %v7741 = vmax.f32 %v7717, %v7721
      %v7742 = vmax.f32 %v7718, %v7722
      %v7743 = vmax.f32 %v7723, %v7727
      %v7744 = vmax.f32 %v7724, %v7728
      %v7745 = vmax.f32 %v7725, %v7729
      %v7746 = vmax.f32 %v7726, %v7730
      %v7763 = vlaneseq
      %v7764 = vshrl.u32 %v7763, 7
      %v7765 = vsub.s32 0, %v7764
      %v7766 = vrot.slane %v7731, %v7765
      %v7767 = vlaneseq
      %v7768 = vshrl.u32 %v7767, 7
      %v7769 = vsub.s32 0, %v7768
      %v7770 = vrot.slane %v7732, %v7769
      %v7771 = vlaneseq
      %v7772 = vshrl.u32 %v7771, 7
      %v7773 = vsub.s32 0, %v7772
      %v7774 = vrot.slane %v7733, %v7773
      %v7775 = vlaneseq
      %v7776 = vshrl.u32 %v7775, 7
      %v7777 = vsub.s32 0, %v7776
      %v7778 = vrot.slane %v7734, %v7777
      %v7779 = vlaneseq
      %v7780 = vshrl.u32 %v7779, 7
      %v7781 = vsub.s32 0, %v7780
      %v7782 = vrot.slane %v7735, %v7781
      %v7783 = vlaneseq
      %v7784 = vshrl.u32 %v7783, 7
      %v7785 = vsub.s32 0, %v7784
      %v7786 = vrot.slane %v7736, %v7785
      %v7787 = vlaneseq
      %v7788 = vshrl.u32 %v7787, 7
      %v7789 = vsub.s32 0, %v7788
      %v7790 = vrot.slane %v7737, %v7789
      %v7791 = vlaneseq
      %v7792 = vshrl.u32 %v7791, 7
      %v7793 = vsub.s32 0, %v7792
      %v7794 = vrot.slane %v7738, %v7793
      %v7795 = vlaneseq
      %v7796 = vshrl.u32 %v7795, 7
      %v7797 = vsub.s32 0, %v7796
      %v7798 = vrot.slane %v7739, %v7797
      %v7799 = vlaneseq
      %v7800 = vshrl.u32 %v7799, 7
      %v7801 = vsub.s32 0, %v7800
      %v7802 = vrot.slane %v7740, %v7801
      %v7803 = vlaneseq
      %v7804 = vshrl.u32 %v7803, 7
      %v7805 = vsub.s32 0, %v7804
      %v7806 = vrot.slane %v7741, %v7805
      %v7807 = vlaneseq
      %v7808 = vshrl.u32 %v7807, 7
      %v7809 = vsub.s32 0, %v7808
      %v7810 = vrot.slane %v7742, %v7809
      %v7811 = vlaneseq
      %v7812 = vshrl.u32 %v7811, 7
      %v7813 = vsub.s32 0, %v7812
      %v7814 = vrot.slane %v7743, %v7813
      %v7815 = vlaneseq
      %v7816 = vshrl.u32 %v7815, 7
      %v7817 = vsub.s32 0, %v7816
      %v7818 = vrot.slane %v7744, %v7817
      %v7819 = vlaneseq
      %v7820 = vshrl.u32 %v7819, 7
      %v7821 = vsub.s32 0, %v7820
      %v7822 = vrot.slane %v7745, %v7821
      %v7823 = vlaneseq
      %v7824 = vshrl.u32 %v7823, 7
      %v7825 = vsub.s32 0, %v7824
      %v7826 = vrot.slane %v7746, %v7825
      %v7827 = vsel %vm6250, %v7770, %v7766
      %v7828 = vsel %vm6252, %v7774, %v7827
      %v7829 = vsel %vm6254, %v7778, %v7828
      %v7830 = vsel %vm6250, %v7786, %v7782
      %v7831 = vsel %vm6252, %v7790, %v7830
      %v7832 = vsel %vm6254, %v7794, %v7831
      %v7833 = vsel %vm6250, %v7802, %v7798
      %v7834 = vsel %vm6252, %v7806, %v7833
      %v7835 = vsel %vm6254, %v7810, %v7834
      %v7836 = vsel %vm6250, %v7818, %v7814
      %v7837 = vsel %vm6252, %v7822, %v7836
      %v7838 = vsel %vm6254, %v7826, %v7837
      %7843 = vst [vmem:[%s224] sm:$0xf] %v7829
      %7844 = vst [vmem:[%s224 + $0x4] sm:$0xf] %v7832
      %7845 = vst [vmem:[%s224 + $0x8] sm:$0xf] %v7835
      %7846 = vst [vmem:[%s224 + $0xc] sm:$0xf] %v7838
      %p7847 = scmp.lt.s32.totalorder %s16, 1
      %s7848 = scalar_select %p7847, %s16, 1
      %s7849 = smul.addr %s7848, 4
      %s7850 = smul.addr %s7849, 4
      %s7851 = scalar_lea.vmem %s5, %s7850
      // Predicated region
      $region41: #{vgg_forward.1} parent=39 // pred_check
        %p7852 = pneg %p144
      $region42: #{vgg_forward.1} parent=39 // pred_check_branch
        %7854 = sbr.rel (%p7852) target = $region44
      $region43: #{vgg_forward.1} parent=39 // pred_region
        _
      $region44: #{vgg_forward.1} parent=39 // pred_fallthru
        _
    $region40: #{vgg_forward.1} parent=5 // pred_fallthru
      _
    %p7855 = scmp.le.s32.totalorder 2, %s11
    // Predicated region
    $region45: #{vgg_forward.1} parent=5 // pred_check
      %p7856 = pneg %p7855
    $region46: #{vgg_forward.1} parent=5 // pred_check_branch
      %7858 = sbr.rel (%p7856) target = $region48
    $region47: #{vgg_forward.1} parent=5 // pred_region
      %s7859 = ssub.s32 %s11, 2
      // Predicated region
      $region49: #{vgg_forward.1} parent=47 // pred_check
        %p7860 = pneg %p150
      $region50: #{vgg_forward.1} parent=47 // pred_check_branch
        %7862 = sbr.rel (%p7860) target = $region52
      $region51: #{vgg_forward.1} parent=47 // pred_region
        %p7863 = scmp.lt.s32.totalorder %s17, 1
        %s7864 = scalar_select %p7863, %s17, 1
        %s7865 = smul.addr %s7864, 4
        %s7866 = smul.addr %s7865, 4
        %s7867 = scalar_lea.vmem %s5, %s7866
      $region52: #{vgg_forward.1} parent=47 // pred_fallthru
        _
    $region48: #{vgg_forward.1} parent=5 // pred_fallthru
      _
  $region6: #{vgg_forward.1} parent=0 // loop_footer
    %s15 = sadd.s32 1, %s11
  $region7: #{vgg_forward.1} parent=0 // loop_footer_branch
    %10 = sbr.rel target = $region3
  $region8: #{vgg_forward.1} parent=0 // loop_exit
    _

</llo_original>
